<compile_context>
chip_gen: v6e
topology: v6e:2x2x1
jax: 0.10.0
libtpu: 0.0.40
codegen_flags: <defaults>
</compile_context>

<pallas_src>
import numpy as np

import jax
import jax.numpy as jnp
from jax.experimental import pallas as pl
from jax.experimental.pallas import tpu as pltpu


# ----------------------------------------------------------------------------
# The fused Pallas kernel (one grid step == one batch item)
# ----------------------------------------------------------------------------
def _autoencoder_kernel(
    x_ref,
    e1w, e1b, e2w, e2b, e3w, e3b, e4w, e4b,
    muw, mub, dfw, dfb, d1w, d1b,
    d2w, d2b, d3w, d3b, d4w, d4b,
    o_ref,
    act1, act2, act3, act4, dpad1, dpad2, dpad3,
):
    f32, bf16 = jnp.float32, jnp.bfloat16

    def band_conv(read_rows, w_ref, b_ref, kh, oh, relu):
        # out[y, x*Cout + o] = sum_p (act[p:p+oh, :] @ Band[p])[y, x*Cout + o] + bias
        acc = jnp.dot(read_rows(0).astype(bf16), w_ref[0], preferred_element_type=f32)
        for p in range(1, kh):
            acc = acc + jnp.dot(read_rows(p).astype(bf16), w_ref[p],
                                preferred_element_type=f32)
        acc = acc + b_ref[...]
        return jnp.maximum(acc, 0.0) if relu else acc

    # ---- encoder: 28x28x1 -> 20x20x4 -> 12x12x8 -> 4x4x16 -> 2x2x32 ----
    act1[...] = band_conv(lambda p: x_ref[0, 0, p:p + 20, :], e1w, e1b, 9, 20, True)
    act2[...] = band_conv(lambda p: act1[p:p + 12, :], e2w, e2b, 9, 12, True)
    act3[...] = band_conv(lambda p: act2[p:p + 4, :], e3w, e3b, 9, 4, True)
    act4[...] = band_conv(lambda p: act3[p:p + 2, :], e4w, e4b, 3, 2, True)

    # ---- latent FCs (eval path: z = mu; sigma_fc output is unused and skipped) ----
    # TODO(synk): training-mode reparameterize (z = mu + eps*sigma with randn) not implemented.
    mu = (jnp.dot(act4[0:1, :].astype(bf16), muw[0], preferred_element_type=f32)
          + jnp.dot(act4[1:2, :].astype(bf16), muw[1], preferred_element_type=f32)
          + mub[...])                                                          # (1, 32)
    im = jnp.dot(mu.astype(bf16), dfw[...], preferred_element_type=f32) + dfb[...]  # (1, 64)

    # ---- dec1: ConvTranspose2d(64,16,5) on a 1x1 input == dense matmul ----
    # Its rows land directly inside dec2's zero-padded (21, 5*16) input slab (only the
    # non-zero column band of the conceptual 21x(21*16) padded input is materialised).
    dpad1[...] = jnp.zeros_like(dpad1)
    im_b = im.astype(bf16)
    for p in range(5):
        row = jnp.dot(im_b, d1w[p], preferred_element_type=f32) + d1b[...]     # (1, 80)
        dpad1[8 + p:9 + p, 0:80] = jnp.maximum(row, 0.0)

    # ---- decoder conv-transposes as convs over (column-trimmed) zero-padded slabs ----
    a = band_conv(lambda p: dpad1[p:p + 13, :], d2w, d2b, 9, 13, True)         # (13, 52)
    dpad2[...] = jnp.zeros_like(dpad2)
    dpad2[7:20, 0:52] = a

    a = band_conv(lambda p: dpad2[p:p + 20, :], d3w, d3b, 8, 20, True)         # (20, 40)
    dpad3[...] = jnp.zeros_like(dpad3)
    dpad3[8:28, 0:40] = a

    a = band_conv(lambda p: dpad3[p:p + 28, :], d4w, d4b, 9, 28, False)        # (28, 28)
    o_ref[0, 0, :, :] = a.astype(o_ref.dtype)


# ----------------------------------------------------------------------------
# Weight preparation (tiny XLA ops outside the kernel, PyTorch layouts in)
# ----------------------------------------------------------------------------
def _band_weights(w_conv, w_in):
    """Conv weight (Cout, Cin, kh, kw) -> banded per-kernel-row matmul weights (bf16).

    Band[p, u*Cin + c, x*Cout + o] = w_conv[o, c, p, u - x]  (0 when u-x outside [0, kw)).
    """
    cout, cin, kh, kw = w_conv.shape
    ow = w_in - kw + 1
    sel = np.zeros((kw, w_in, ow), np.float32)
    for q in range(kw):
        sel[q, q:q + ow, :] = np.eye(ow, dtype=np.float32)
    band = jnp.einsum("ocpq,qux->pucxo", w_conv, jnp.asarray(sel))
    return band.reshape(kh, w_in * cin, ow * cout).astype(jnp.bfloat16)


def _bias_row(b, ow):
    """(Cout,) bias -> (1, ow*Cout) channels-last row, f32."""
    return jnp.tile(b, ow)[None, :].astype(jnp.float32)


def _transpose_to_conv(w_t):
    """ConvTranspose2d weight (Cin, Cout, kh, kw) -> equivalent Conv2d weight."""
    return jnp.flip(w_t, axis=(2, 3)).transpose(1, 0, 2, 3)


def _prepare_operands(params):
    """PyTorch-layout params -> the 20 VMEM operands consumed by the fused kernel."""
    ops = [
        _band_weights(params["enc1_w"], 28), _bias_row(params["enc1_b"], 20),
        _band_weights(params["enc2_w"], 20), _bias_row(params["enc2_b"], 12),
        _band_weights(params["enc3_w"], 12), _bias_row(params["enc3_b"], 4),
        _band_weights(params["enc4_w"], 4), _bias_row(params["enc4_b"], 2),
    ]
    # mu_fc columns permuted from NCHW flatten (c*4 + y*2 + x) to channels-last (y, x*32 + c).
    wmu = params["mu_fc_w"].reshape(32, 32, 2, 2).transpose(2, 3, 1, 0).reshape(2, 64, 32)
    ops += [wmu.astype(jnp.bfloat16), params["mu_fc_b"][None, :].astype(jnp.float32)]
    ops += [params["decode_fc_w"].T.astype(jnp.bfloat16),
            params["decode_fc_b"][None, :].astype(jnp.float32)]
    # dec1 (1x1 input): weight as (kh, Cin, kw*Cout) so each output row is one matmul.
    wd1 = params["dec1_w"].transpose(2, 0, 3, 1).reshape(5, 64, 80)
    ops += [wd1.astype(jnp.bfloat16), _bias_row(params["dec1_b"], 5)]
    # dec2..dec4: conv-transpose == conv of the (k-1)-zero-padded input with flipped
    # weights.  Only the K-rows that touch non-zero (un-padded) input columns are kept:
    #   dec2: padded 21x21x16, live x in [8,12]  -> K rows 128:208  (336 -> 80)
    #   dec3: padded 27x27x4,  live x in [7,19]  -> K rows  28:80   (108 -> 52)
    #   dec4: padded 36x36x2,  live x in [8,27]  -> K rows  16:56   ( 72 -> 40)
    ops += [_band_weights(_transpose_to_conv(params["dec2_w"]), 21)[:, 128:208, :],
            _bias_row(params["dec2_b"], 13)]
    ops += [_band_weights(_transpose_to_conv(params["dec3_w"]), 27)[:, 28:80, :],
            _bias_row(params["dec3_b"], 20)]
    ops += [_band_weights(_transpose_to_conv(params["dec4_w"]), 36)[:, 16:56, :],
            _bias_row(params["dec4_b"], 28)]
    return ops


# ----------------------------------------------------------------------------
# Forward pass (matches AutoEncoder.forward, eval mode)
# ----------------------------------------------------------------------------
def autoencoder_forward(params, x):
    B = x.shape[0]
    assert x.shape[1:] == (1, 28, 28), x.shape
    ops = _prepare_operands(params)

    def full_block(shape):
        nd = len(shape)
        return pl.BlockSpec(shape, lambda b, _nd=nd: (0,) * _nd)

    in_specs = [pl.BlockSpec((1, 1, 28, 28), lambda b: (b, 0, 0, 0))]
    in_specs += [full_block(o.shape) for o in ops]

    macs_per_item = (20 * 28 * 80 * 9 + 12 * 80 * 96 * 9 + 4 * 96 * 64 * 9
                     + 2 * 64 * 64 * 3 + 128 * 32 + 32 * 64 + 5 * 64 * 80
                     + 13 * 80 * 52 * 9 + 20 * 52 * 40 * 8 + 28 * 40 * 28 * 9)
    weight_bytes = sum(int(o.size) * o.dtype.itemsize for o in ops)
    cost = pl.CostEstimate(flops=2 * macs_per_item * B, transcendentals=0,
                           bytes_accessed=2 * int(x.size) * 4 + weight_bytes)

    return pl.pallas_call(
        _autoencoder_kernel,
        out_shape=jax.ShapeDtypeStruct((B, 1, 28, 28), jnp.float32),
        grid=(B,),
        in_specs=in_specs,
        out_specs=pl.BlockSpec((1, 1, 28, 28), lambda b: (b, 0, 0, 0)),
        scratch_shapes=[
            pltpu.VMEM((20, 80), jnp.float32),   # enc1 out  (20x20x4, channels-last rows)
            pltpu.VMEM((12, 96), jnp.float32),   # enc2 out  (12x12x8)
            pltpu.VMEM((4, 64), jnp.float32),    # enc3 out  (4x4x16)
            pltpu.VMEM((2, 64), jnp.float32),    # enc4 out  (2x2x32)
            pltpu.VMEM((21, 80), jnp.float32),   # dec2 padded input, live columns only
            pltpu.VMEM((27, 52), jnp.float32),   # dec3 padded input, live columns only
            pltpu.VMEM((36, 40), jnp.float32),   # dec4 padded input, live columns only
        ],
        compiler_params=pltpu.CompilerParams(dimension_semantics=("parallel",)),
        cost_estimate=cost,
    )(x, *ops)


# ----------------------------------------------------------------------------
# Parameters (deterministic synthetic init, PyTorch shapes)
# ----------------------------------------------------------------------------
def init_params(key):
    shapes = {
        "enc1_w": (4, 1, 9, 9), "enc1_b": (4,),
        "enc2_w": (8, 4, 9, 9), "enc2_b": (8,),
        "enc3_w": (16, 8, 9, 9), "enc3_b": (16,),
        "enc4_w": (32, 16, 3, 3), "enc4_b": (32,),
        "sigma_fc_w": (32, 128), "sigma_fc_b": (32,),
        "mu_fc_w": (32, 128), "mu_fc_b": (32,),
        "decode_fc_w": (64, 32), "decode_fc_b": (64,),
        "dec1_w": (64, 16, 5, 5), "dec1_b": (16,),
        "dec2_w": (16, 4, 9, 9), "dec2_b": (4,),
        "dec3_w": (4, 2, 8, 8), "dec3_b": (2,),
        "dec4_w": (2, 1, 9, 9), "dec4_b": (1,),
    }
    params = {}
    keys = jax.random.split(key, len(shapes))
    for k, (name, shape) in zip(keys, sorted(shapes.items())):
        params[name] = 0.05 * jax.random.normal(k, shape, dtype=jnp.float32)
    return params


# ----------------------------------------------------------------------------
# Plain-JAX reference (im2col formulation) with matching matmul precision
# ----------------------------------------------------------------------------
def _mm(a, b):
    return jnp.dot(a.astype(jnp.bfloat16), b.astype(jnp.bfloat16),
                   preferred_element_type=jnp.float32)


def reference_forward(params, x):
    def im2col(x, kh, kw):
        B, C, H, W = x.shape
        oh, ow = H - kh + 1, W - kw + 1
        cols = [x[:, :, p:p + oh, q:q + ow] for p in range(kh) for q in range(kw)]
        pat = jnp.stack(cols, 0).reshape(kh, kw, B, C, oh, ow)
        pat = pat.transpose(2, 4, 5, 3, 0, 1).reshape(B * oh * ow, C * kh * kw)
        return pat, oh, ow

    def conv(x, w, b, relu):
        cout = w.shape[0]
        B = x.shape[0]
        pat, oh, ow = im2col(x, w.shape[2], w.shape[3])
        out = _mm(pat, w.reshape(cout, -1).T) + b
        if relu:
            out = jnp.maximum(out, 0.0)
        return out.reshape(B, oh, ow, cout).transpose(0, 3, 1, 2)

    def conv_t(x, w, b, relu):
        kh, kw = w.shape[2], w.shape[3]
        xp = jnp.pad(x, ((0, 0), (0, 0), (kh - 1, kh - 1), (kw - 1, kw - 1)))
        return conv(xp, jnp.flip(w, (2, 3)).transpose(1, 0, 2, 3), b, relu)

    h = conv(x, params["enc1_w"], params["enc1_b"], True)
    h = conv(h, params["enc2_w"], params["enc2_b"], True)
    h = conv(h, params["enc3_w"], params["enc3_b"], True)
    h = conv(h, params["enc4_w"], params["enc4_b"], True)
    vec = h.reshape(x.shape[0], -1)
    mu = _mm(vec, params["mu_fc_w"].T) + params["mu_fc_b"]
    im = _mm(mu, params["decode_fc_w"].T) + params["decode_fc_b"]
    im = im[:, :, None, None]
    h = conv_t(im, params["dec1_w"], params["dec1_b"], True)
    h = conv_t(h, params["dec2_w"], params["dec2_b"], True)
    h = conv_t(h, params["dec3_w"], params["dec3_b"], True)
    return conv_t(h, params["dec4_w"], params["dec4_b"], False)


# ----------------------------------------------------------------------------
if __name__ == "__main__":
    key = jax.random.PRNGKey(0)
    pkey, xkey = jax.random.split(key)
    params = init_params(pkey)

    # Spatial size fixed by the architecture (2*2*32 FC flatten): 28x28, 1 channel.
    x = jax.random.normal(xkey, (2, 1, 28, 28), dtype=jnp.float32)

    y = jax.block_until_ready(jax.jit(autoencoder_forward)(params, x))
    assert y.shape == (2, 1, 28, 28), y.shape
    assert bool(jnp.all(jnp.isfinite(y)))

    # Numerical check against a plain-JAX reference using the same matmul precision.
    ref = jax.block_until_ready(jax.jit(reference_forward)(params, x))
    rel = float(jnp.max(jnp.abs(y - ref)) / (jnp.max(jnp.abs(ref)) + 1e-8))
    assert rel < 5e-3, f"mismatch vs reference: rel={rel:.3e}"

    print("KERNEL_OK")
</pallas_src>

<mosaic_0001>
module attributes {stable_mosaic.version = 11 : i64} {
  func.func @_autoencoder_kernel(%arg0: i32, %arg1: memref<1x1x28x28xf32, #tpu.memory_space<vmem>>, %arg2: memref<9x28x80xbf16, #tpu.memory_space<vmem>>, %arg3: memref<1x80xf32, #tpu.memory_space<vmem>>, %arg4: memref<9x80x96xbf16, #tpu.memory_space<vmem>>, %arg5: memref<1x96xf32, #tpu.memory_space<vmem>>, %arg6: memref<9x96x64xbf16, #tpu.memory_space<vmem>>, %arg7: memref<1x64xf32, #tpu.memory_space<vmem>>, %arg8: memref<3x64x64xbf16, #tpu.memory_space<vmem>>, %arg9: memref<1x64xf32, #tpu.memory_space<vmem>>, %arg10: memref<2x64x32xbf16, #tpu.memory_space<vmem>>, %arg11: memref<1x32xf32, #tpu.memory_space<vmem>>, %arg12: memref<32x64xbf16, #tpu.memory_space<vmem>>, %arg13: memref<1x64xf32, #tpu.memory_space<vmem>>, %arg14: memref<5x64x80xbf16, #tpu.memory_space<vmem>>, %arg15: memref<1x80xf32, #tpu.memory_space<vmem>>, %arg16: memref<9x80x52xbf16, #tpu.memory_space<vmem>>, %arg17: memref<1x52xf32, #tpu.memory_space<vmem>>, %arg18: memref<8x52x40xbf16, #tpu.memory_space<vmem>>, %arg19: memref<1x40xf32, #tpu.memory_space<vmem>>, %arg20: memref<9x40x28xbf16, #tpu.memory_space<vmem>>, %arg21: memref<1x28xf32, #tpu.memory_space<vmem>>, %arg22: memref<1x1x28x28xf32, #tpu.memory_space<vmem>>, %arg23: memref<20x80xf32, #tpu.memory_space<vmem>>, %arg24: memref<12x96xf32, #tpu.memory_space<vmem>>, %arg25: memref<4x64xf32, #tpu.memory_space<vmem>>, %arg26: memref<2x64xf32, #tpu.memory_space<vmem>>, %arg27: memref<21x80xf32, #tpu.memory_space<vmem>>, %arg28: memref<27x52xf32, #tpu.memory_space<vmem>>, %arg29: memref<36x40xf32, #tpu.memory_space<vmem>>) attributes {dimension_semantics = [#tpu.dimension_semantics<parallel>], iteration_bounds = array<i64: 2>, scalar_prefetch = 0 : i64, scratch_operands = 7 : i64, tpu.core_type = #tpu.core_type<tc>, window_params = [{transform_indices = @transform_0, window_bounds = array<i64: 1, 1, 28, 28>}, {pipeline_mode = #tpu.pipeline_mode<synchronous>, transform_indices = @transform_1, window_bounds = array<i64: 9, 28, 80>}, {pipeline_mode = #tpu.pipeline_mode<synchronous>, transform_indices = @transform_2, window_bounds = array<i64: 1, 80>}, {pipeline_mode = #tpu.pipeline_mode<synchronous>, transform_indices = @transform_3, window_bounds = array<i64: 9, 80, 96>}, {pipeline_mode = #tpu.pipeline_mode<synchronous>, transform_indices = @transform_4, window_bounds = array<i64: 1, 96>}, {pipeline_mode = #tpu.pipeline_mode<synchronous>, transform_indices = @transform_5, window_bounds = array<i64: 9, 96, 64>}, {pipeline_mode = #tpu.pipeline_mode<synchronous>, transform_indices = @transform_6, window_bounds = array<i64: 1, 64>}, {pipeline_mode = #tpu.pipeline_mode<synchronous>, transform_indices = @transform_7, window_bounds = array<i64: 3, 64, 64>}, {pipeline_mode = #tpu.pipeline_mode<synchronous>, transform_indices = @transform_8, window_bounds = array<i64: 1, 64>}, {pipeline_mode = #tpu.pipeline_mode<synchronous>, transform_indices = @transform_9, window_bounds = array<i64: 2, 64, 32>}, {pipeline_mode = #tpu.pipeline_mode<synchronous>, transform_indices = @transform_10, window_bounds = array<i64: 1, 32>}, {pipeline_mode = #tpu.pipeline_mode<synchronous>, transform_indices = @transform_11, window_bounds = array<i64: 32, 64>}, {pipeline_mode = #tpu.pipeline_mode<synchronous>, transform_indices = @transform_12, window_bounds = array<i64: 1, 64>}, {pipeline_mode = #tpu.pipeline_mode<synchronous>, transform_indices = @transform_13, window_bounds = array<i64: 5, 64, 80>}, {pipeline_mode = #tpu.pipeline_mode<synchronous>, transform_indices = @transform_14, window_bounds = array<i64: 1, 80>}, {pipeline_mode = #tpu.pipeline_mode<synchronous>, transform_indices = @transform_15, window_bounds = array<i64: 9, 80, 52>}, {pipeline_mode = #tpu.pipeline_mode<synchronous>, transform_indices = @transform_16, window_bounds = array<i64: 1, 52>}, {pipeline_mode = #tpu.pipeline_mode<synchronous>, transform_indices = @transform_17, window_bounds = array<i64: 8, 52, 40>}, {pipeline_mode = #tpu.pipeline_mode<synchronous>, transform_indices = @transform_18, window_bounds = array<i64: 1, 40>}, {pipeline_mode = #tpu.pipeline_mode<synchronous>, transform_indices = @transform_19, window_bounds = array<i64: 9, 40, 28>}, {pipeline_mode = #tpu.pipeline_mode<synchronous>, transform_indices = @transform_20, window_bounds = array<i64: 1, 28>}, {transform_indices = @transform_21, window_bounds = array<i64: 1, 1, 28, 28>}]} {
    %c0 = arith.constant 0 : index
    %c0_0 = arith.constant 0 : index
    %c0_1 = arith.constant 0 : index
    %c0_2 = arith.constant 0 : index
    %0 = vector.load %arg1[%c0, %c0_0, %c0_1, %c0_2] : memref<1x1x28x28xf32, #tpu.memory_space<vmem>>, vector<1x1x20x28xf32>
    %1 = vector.shape_cast %0 : vector<1x1x20x28xf32> to vector<20x28xf32>
    %2 = arith.truncf %1 : vector<20x28xf32> to vector<20x28xbf16>
    %c0_3 = arith.constant 0 : index
    %c0_4 = arith.constant 0 : index
    %c0_5 = arith.constant 0 : index
    %3 = vector.load %arg2[%c0_3, %c0_4, %c0_5] : memref<9x28x80xbf16, #tpu.memory_space<vmem>>, vector<1x28x80xbf16>
    %4 = vector.shape_cast %3 : vector<1x28x80xbf16> to vector<28x80xbf16>
    %cst = arith.constant dense<0.000000e+00> : vector<20x80xf32>
    %5 = tpu.matmul %2, %4, %cst {dimension_numbers = #tpu.dot_dimension_numbers<[1], [0], [0], [1], [0, 0, 1, 1], [], []>} : vector<20x28xbf16>, vector<28x80xbf16>, vector<20x80xf32> -> vector<20x80xf32>
    %c0_6 = arith.constant 0 : index
    %c0_7 = arith.constant 0 : index
    %c1 = arith.constant 1 : index
    %c0_8 = arith.constant 0 : index
    %6 = vector.load %arg1[%c0_6, %c0_7, %c1, %c0_8] : memref<1x1x28x28xf32, #tpu.memory_space<vmem>>, vector<1x1x20x28xf32>
    %7 = vector.shape_cast %6 : vector<1x1x20x28xf32> to vector<20x28xf32>
    %8 = arith.truncf %7 : vector<20x28xf32> to vector<20x28xbf16>
    %c1_9 = arith.constant 1 : index
    %c0_10 = arith.constant 0 : index
    %c0_11 = arith.constant 0 : index
    %9 = vector.load %arg2[%c1_9, %c0_10, %c0_11] : memref<9x28x80xbf16, #tpu.memory_space<vmem>>, vector<1x28x80xbf16>
    %10 = vector.shape_cast %9 : vector<1x28x80xbf16> to vector<28x80xbf16>
    %cst_12 = arith.constant dense<0.000000e+00> : vector<20x80xf32>
    %11 = tpu.matmul %8, %10, %cst_12 {dimension_numbers = #tpu.dot_dimension_numbers<[1], [0], [0], [1], [0, 0, 1, 1], [], []>} : vector<20x28xbf16>, vector<28x80xbf16>, vector<20x80xf32> -> vector<20x80xf32>
    %12 = arith.addf %5, %11 : vector<20x80xf32>
    %c0_13 = arith.constant 0 : index
    %c0_14 = arith.constant 0 : index
    %c2 = arith.constant 2 : index
    %c0_15 = arith.constant 0 : index
    %13 = vector.load %arg1[%c0_13, %c0_14, %c2, %c0_15] : memref<1x1x28x28xf32, #tpu.memory_space<vmem>>, vector<1x1x20x28xf32>
    %14 = vector.shape_cast %13 : vector<1x1x20x28xf32> to vector<20x28xf32>
    %15 = arith.truncf %14 : vector<20x28xf32> to vector<20x28xbf16>
    %c2_16 = arith.constant 2 : index
    %c0_17 = arith.constant 0 : index
    %c0_18 = arith.constant 0 : index
    %16 = vector.load %arg2[%c2_16, %c0_17, %c0_18] : memref<9x28x80xbf16, #tpu.memory_space<vmem>>, vector<1x28x80xbf16>
    %17 = vector.shape_cast %16 : vector<1x28x80xbf16> to vector<28x80xbf16>
    %cst_19 = arith.constant dense<0.000000e+00> : vector<20x80xf32>
    %18 = tpu.matmul %15, %17, %cst_19 {dimension_numbers = #tpu.dot_dimension_numbers<[1], [0], [0], [1], [0, 0, 1, 1], [], []>} : vector<20x28xbf16>, vector<28x80xbf16>, vector<20x80xf32> -> vector<20x80xf32>
    %19 = arith.addf %12, %18 : vector<20x80xf32>
    %c0_20 = arith.constant 0 : index
    %c0_21 = arith.constant 0 : index
    %c3 = arith.constant 3 : index
    %c0_22 = arith.constant 0 : index
    %20 = vector.load %arg1[%c0_20, %c0_21, %c3, %c0_22] : memref<1x1x28x28xf32, #tpu.memory_space<vmem>>, vector<1x1x20x28xf32>
    %21 = vector.shape_cast %20 : vector<1x1x20x28xf32> to vector<20x28xf32>
    %22 = arith.truncf %21 : vector<20x28xf32> to vector<20x28xbf16>
    %c3_23 = arith.constant 3 : index
    %c0_24 = arith.constant 0 : index
    %c0_25 = arith.constant 0 : index
    %23 = vector.load %arg2[%c3_23, %c0_24, %c0_25] : memref<9x28x80xbf16, #tpu.memory_space<vmem>>, vector<1x28x80xbf16>
    %24 = vector.shape_cast %23 : vector<1x28x80xbf16> to vector<28x80xbf16>
    %cst_26 = arith.constant dense<0.000000e+00> : vector<20x80xf32>
    %25 = tpu.matmul %22, %24, %cst_26 {dimension_numbers = #tpu.dot_dimension_numbers<[1], [0], [0], [1], [0, 0, 1, 1], [], []>} : vector<20x28xbf16>, vector<28x80xbf16>, vector<20x80xf32> -> vector<20x80xf32>
    %26 = arith.addf %19, %25 : vector<20x80xf32>
    %c0_27 = arith.constant 0 : index
    %c0_28 = arith.constant 0 : index
    %c4 = arith.constant 4 : index
    %c0_29 = arith.constant 0 : index
    %27 = vector.load %arg1[%c0_27, %c0_28, %c4, %c0_29] : memref<1x1x28x28xf32, #tpu.memory_space<vmem>>, vector<1x1x20x28xf32>
    %28 = vector.shape_cast %27 : vector<1x1x20x28xf32> to vector<20x28xf32>
    %29 = arith.truncf %28 : vector<20x28xf32> to vector<20x28xbf16>
    %c4_30 = arith.constant 4 : index
    %c0_31 = arith.constant 0 : index
    %c0_32 = arith.constant 0 : index
    %30 = vector.load %arg2[%c4_30, %c0_31, %c0_32] : memref<9x28x80xbf16, #tpu.memory_space<vmem>>, vector<1x28x80xbf16>
    %31 = vector.shape_cast %30 : vector<1x28x80xbf16> to vector<28x80xbf16>
    %cst_33 = arith.constant dense<0.000000e+00> : vector<20x80xf32>
    %32 = tpu.matmul %29, %31, %cst_33 {dimension_numbers = #tpu.dot_dimension_numbers<[1], [0], [0], [1], [0, 0, 1, 1], [], []>} : vector<20x28xbf16>, vector<28x80xbf16>, vector<20x80xf32> -> vector<20x80xf32>
    %33 = arith.addf %26, %32 : vector<20x80xf32>
    %c0_34 = arith.constant 0 : index
    %c0_35 = arith.constant 0 : index
    %c5 = arith.constant 5 : index
    %c0_36 = arith.constant 0 : index
    %34 = vector.load %arg1[%c0_34, %c0_35, %c5, %c0_36] : memref<1x1x28x28xf32, #tpu.memory_space<vmem>>, vector<1x1x20x28xf32>
    %35 = vector.shape_cast %34 : vector<1x1x20x28xf32> to vector<20x28xf32>
    %36 = arith.truncf %35 : vector<20x28xf32> to vector<20x28xbf16>
    %c5_37 = arith.constant 5 : index
    %c0_38 = arith.constant 0 : index
    %c0_39 = arith.constant 0 : index
    %37 = vector.load %arg2[%c5_37, %c0_38, %c0_39] : memref<9x28x80xbf16, #tpu.memory_space<vmem>>, vector<1x28x80xbf16>
    %38 = vector.shape_cast %37 : vector<1x28x80xbf16> to vector<28x80xbf16>
    %cst_40 = arith.constant dense<0.000000e+00> : vector<20x80xf32>
    %39 = tpu.matmul %36, %38, %cst_40 {dimension_numbers = #tpu.dot_dimension_numbers<[1], [0], [0], [1], [0, 0, 1, 1], [], []>} : vector<20x28xbf16>, vector<28x80xbf16>, vector<20x80xf32> -> vector<20x80xf32>
    %40 = arith.addf %33, %39 : vector<20x80xf32>
    %c0_41 = arith.constant 0 : index
    %c0_42 = arith.constant 0 : index
    %c6 = arith.constant 6 : index
    %c0_43 = arith.constant 0 : index
    %41 = vector.load %arg1[%c0_41, %c0_42, %c6, %c0_43] : memref<1x1x28x28xf32, #tpu.memory_space<vmem>>, vector<1x1x20x28xf32>
    %42 = vector.shape_cast %41 : vector<1x1x20x28xf32> to vector<20x28xf32>
    %43 = arith.truncf %42 : vector<20x28xf32> to vector<20x28xbf16>
    %c6_44 = arith.constant 6 : index
    %c0_45 = arith.constant 0 : index
    %c0_46 = arith.constant 0 : index
    %44 = vector.load %arg2[%c6_44, %c0_45, %c0_46] : memref<9x28x80xbf16, #tpu.memory_space<vmem>>, vector<1x28x80xbf16>
    %45 = vector.shape_cast %44 : vector<1x28x80xbf16> to vector<28x80xbf16>
    %cst_47 = arith.constant dense<0.000000e+00> : vector<20x80xf32>
    %46 = tpu.matmul %43, %45, %cst_47 {dimension_numbers = #tpu.dot_dimension_numbers<[1], [0], [0], [1], [0, 0, 1, 1], [], []>} : vector<20x28xbf16>, vector<28x80xbf16>, vector<20x80xf32> -> vector<20x80xf32>
    %47 = arith.addf %40, %46 : vector<20x80xf32>
    %c0_48 = arith.constant 0 : index
    %c0_49 = arith.constant 0 : index
    %c7 = arith.constant 7 : index
    %c0_50 = arith.constant 0 : index
    %48 = vector.load %arg1[%c0_48, %c0_49, %c7, %c0_50] : memref<1x1x28x28xf32, #tpu.memory_space<vmem>>, vector<1x1x20x28xf32>
    %49 = vector.shape_cast %48 : vector<1x1x20x28xf32> to vector<20x28xf32>
    %50 = arith.truncf %49 : vector<20x28xf32> to vector<20x28xbf16>
    %c7_51 = arith.constant 7 : index
    %c0_52 = arith.constant 0 : index
    %c0_53 = arith.constant 0 : index
    %51 = vector.load %arg2[%c7_51, %c0_52, %c0_53] : memref<9x28x80xbf16, #tpu.memory_space<vmem>>, vector<1x28x80xbf16>
    %52 = vector.shape_cast %51 : vector<1x28x80xbf16> to vector<28x80xbf16>
    %cst_54 = arith.constant dense<0.000000e+00> : vector<20x80xf32>
    %53 = tpu.matmul %50, %52, %cst_54 {dimension_numbers = #tpu.dot_dimension_numbers<[1], [0], [0], [1], [0, 0, 1, 1], [], []>} : vector<20x28xbf16>, vector<28x80xbf16>, vector<20x80xf32> -> vector<20x80xf32>
    %54 = arith.addf %47, %53 : vector<20x80xf32>
    %c0_55 = arith.constant 0 : index
    %c0_56 = arith.constant 0 : index
    %c8 = arith.constant 8 : index
    %c0_57 = arith.constant 0 : index
    %55 = vector.load %arg1[%c0_55, %c0_56, %c8, %c0_57] : memref<1x1x28x28xf32, #tpu.memory_space<vmem>>, vector<1x1x20x28xf32>
    %56 = vector.shape_cast %55 : vector<1x1x20x28xf32> to vector<20x28xf32>
    %57 = arith.truncf %56 : vector<20x28xf32> to vector<20x28xbf16>
    %c8_58 = arith.constant 8 : index
    %c0_59 = arith.constant 0 : index
    %c0_60 = arith.constant 0 : index
    %58 = vector.load %arg2[%c8_58, %c0_59, %c0_60] : memref<9x28x80xbf16, #tpu.memory_space<vmem>>, vector<1x28x80xbf16>
    %59 = vector.shape_cast %58 : vector<1x28x80xbf16> to vector<28x80xbf16>
    %cst_61 = arith.constant dense<0.000000e+00> : vector<20x80xf32>
    %60 = tpu.matmul %57, %59, %cst_61 {dimension_numbers = #tpu.dot_dimension_numbers<[1], [0], [0], [1], [0, 0, 1, 1], [], []>} : vector<20x28xbf16>, vector<28x80xbf16>, vector<20x80xf32> -> vector<20x80xf32>
    %61 = arith.addf %54, %60 : vector<20x80xf32>
    %c0_62 = arith.constant 0 : index
    %c0_63 = arith.constant 0 : index
    %62 = vector.load %arg3[%c0_62, %c0_63] : memref<1x80xf32, #tpu.memory_space<vmem>>, vector<1x80xf32>
    %63 = vector.broadcast %62 : vector<1x80xf32> to vector<20x80xf32>
    %64 = arith.addf %61, %63 : vector<20x80xf32>
    %cst_64 = arith.constant 0.000000e+00 : f32
    %65 = vector.broadcast %cst_64 : f32 to vector<20x80xf32>
    %66 = arith.maximumf %64, %65 : vector<20x80xf32>
    %c0_65 = arith.constant 0 : index
    %c0_66 = arith.constant 0 : index
    %67 = vector.load %arg23[%c0_65, %c0_66] : memref<20x80xf32, #tpu.memory_space<vmem>>, vector<20x80xf32>
    tpu.vector_store %arg23[%c0_65, %c0_66], %66 {strides = array<i32>} : memref<20x80xf32, #tpu.memory_space<vmem>>, vector<20x80xf32>,
    %c0_67 = arith.constant 0 : index
    %c0_68 = arith.constant 0 : index
    %68 = vector.load %arg23[%c0_67, %c0_68] : memref<20x80xf32, #tpu.memory_space<vmem>>, vector<12x80xf32>
    %69 = arith.truncf %68 : vector<12x80xf32> to vector<12x80xbf16>
    %c0_69 = arith.constant 0 : index
    %c0_70 = arith.constant 0 : index
    %c0_71 = arith.constant 0 : index
    %70 = vector.load %arg4[%c0_69, %c0_70, %c0_71] : memref<9x80x96xbf16, #tpu.memory_space<vmem>>, vector<1x80x96xbf16>
    %71 = vector.shape_cast %70 : vector<1x80x96xbf16> to vector<80x96xbf16>
    %cst_72 = arith.constant dense<0.000000e+00> : vector<12x96xf32>
    %72 = tpu.matmul %69, %71, %cst_72 {dimension_numbers = #tpu.dot_dimension_numbers<[1], [0], [0], [1], [0, 0, 1, 1], [], []>} : vector<12x80xbf16>, vector<80x96xbf16>, vector<12x96xf32> -> vector<12x96xf32>
    %c1_73 = arith.constant 1 : index
    %c0_74 = arith.constant 0 : index
    %73 = vector.load %arg23[%c1_73, %c0_74] : memref<20x80xf32, #tpu.memory_space<vmem>>, vector<12x80xf32>
    %74 = arith.truncf %73 : vector<12x80xf32> to vector<12x80xbf16>
    %c1_75 = arith.constant 1 : index
    %c0_76 = arith.constant 0 : index
    %c0_77 = arith.constant 0 : index
    %75 = vector.load %arg4[%c1_75, %c0_76, %c0_77] : memref<9x80x96xbf16, #tpu.memory_space<vmem>>, vector<1x80x96xbf16>
    %76 = vector.shape_cast %75 : vector<1x80x96xbf16> to vector<80x96xbf16>
    %cst_78 = arith.constant dense<0.000000e+00> : vector<12x96xf32>
    %77 = tpu.matmul %74, %76, %cst_78 {dimension_numbers = #tpu.dot_dimension_numbers<[1], [0], [0], [1], [0, 0, 1, 1], [], []>} : vector<12x80xbf16>, vector<80x96xbf16>, vector<12x96xf32> -> vector<12x96xf32>
    %78 = arith.addf %72, %77 : vector<12x96xf32>
    %c2_79 = arith.constant 2 : index
    %c0_80 = arith.constant 0 : index
    %79 = vector.load %arg23[%c2_79, %c0_80] : memref<20x80xf32, #tpu.memory_space<vmem>>, vector<12x80xf32>
    %80 = arith.truncf %79 : vector<12x80xf32> to vector<12x80xbf16>
    %c2_81 = arith.constant 2 : index
    %c0_82 = arith.constant 0 : index
    %c0_83 = arith.constant 0 : index
    %81 = vector.load %arg4[%c2_81, %c0_82, %c0_83] : memref<9x80x96xbf16, #tpu.memory_space<vmem>>, vector<1x80x96xbf16>
    %82 = vector.shape_cast %81 : vector<1x80x96xbf16> to vector<80x96xbf16>
    %cst_84 = arith.constant dense<0.000000e+00> : vector<12x96xf32>
    %83 = tpu.matmul %80, %82, %cst_84 {dimension_numbers = #tpu.dot_dimension_numbers<[1], [0], [0], [1], [0, 0, 1, 1], [], []>} : vector<12x80xbf16>, vector<80x96xbf16>, vector<12x96xf32> -> vector<12x96xf32>
    %84 = arith.addf %78, %83 : vector<12x96xf32>
    %c3_85 = arith.constant 3 : index
    %c0_86 = arith.constant 0 : index
    %85 = vector.load %arg23[%c3_85, %c0_86] : memref<20x80xf32, #tpu.memory_space<vmem>>, vector<12x80xf32>
    %86 = arith.truncf %85 : vector<12x80xf32> to vector<12x80xbf16>
    %c3_87 = arith.constant 3 : index
    %c0_88 = arith.constant 0 : index
    %c0_89 = arith.constant 0 : index
    %87 = vector.load %arg4[%c3_87, %c0_88, %c0_89] : memref<9x80x96xbf16, #tpu.memory_space<vmem>>, vector<1x80x96xbf16>
    %88 = vector.shape_cast %87 : vector<1x80x96xbf16> to vector<80x96xbf16>
    %cst_90 = arith.constant dense<0.000000e+00> : vector<12x96xf32>
    %89 = tpu.matmul %86, %88, %cst_90 {dimension_numbers = #tpu.dot_dimension_numbers<[1], [0], [0], [1], [0, 0, 1, 1], [], []>} : vector<12x80xbf16>, vector<80x96xbf16>, vector<12x96xf32> -> vector<12x96xf32>
    %90 = arith.addf %84, %89 : vector<12x96xf32>
    %c4_91 = arith.constant 4 : index
    %c0_92 = arith.constant 0 : index
    %91 = vector.load %arg23[%c4_91, %c0_92] : memref<20x80xf32, #tpu.memory_space<vmem>>, vector<12x80xf32>
    %92 = arith.truncf %91 : vector<12x80xf32> to vector<12x80xbf16>
    %c4_93 = arith.constant 4 : index
    %c0_94 = arith.constant 0 : index
    %c0_95 = arith.constant 0 : index
    %93 = vector.load %arg4[%c4_93, %c0_94, %c0_95] : memref<9x80x96xbf16, #tpu.memory_space<vmem>>, vector<1x80x96xbf16>
    %94 = vector.shape_cast %93 : vector<1x80x96xbf16> to vector<80x96xbf16>
    %cst_96 = arith.constant dense<0.000000e+00> : vector<12x96xf32>
    %95 = tpu.matmul %92, %94, %cst_96 {dimension_numbers = #tpu.dot_dimension_numbers<[1], [0], [0], [1], [0, 0, 1, 1], [], []>} : vector<12x80xbf16>, vector<80x96xbf16>, vector<12x96xf32> -> vector<12x96xf32>
    %96 = arith.addf %90, %95 : vector<12x96xf32>
    %c5_97 = arith.constant 5 : index
    %c0_98 = arith.constant 0 : index
    %97 = vector.load %arg23[%c5_97, %c0_98] : memref<20x80xf32, #tpu.memory_space<vmem>>, vector<12x80xf32>
    %98 = arith.truncf %97 : vector<12x80xf32> to vector<12x80xbf16>
    %c5_99 = arith.constant 5 : index
    %c0_100 = arith.constant 0 : index
    %c0_101 = arith.constant 0 : index
    %99 = vector.load %arg4[%c5_99, %c0_100, %c0_101] : memref<9x80x96xbf16, #tpu.memory_space<vmem>>, vector<1x80x96xbf16>
    %100 = vector.shape_cast %99 : vector<1x80x96xbf16> to vector<80x96xbf16>
    %cst_102 = arith.constant dense<0.000000e+00> : vector<12x96xf32>
    %101 = tpu.matmul %98, %100, %cst_102 {dimension_numbers = #tpu.dot_dimension_numbers<[1], [0], [0], [1], [0, 0, 1, 1], [], []>} : vector<12x80xbf16>, vector<80x96xbf16>, vector<12x96xf32> -> vector<12x96xf32>
    %102 = arith.addf %96, %101 : vector<12x96xf32>
    %c6_103 = arith.constant 6 : index
    %c0_104 = arith.constant 0 : index
    %103 = vector.load %arg23[%c6_103, %c0_104] : memref<20x80xf32, #tpu.memory_space<vmem>>, vector<12x80xf32>
    %104 = arith.truncf %103 : vector<12x80xf32> to vector<12x80xbf16>
    %c6_105 = arith.constant 6 : index
    %c0_106 = arith.constant 0 : index
    %c0_107 = arith.constant 0 : index
    %105 = vector.load %arg4[%c6_105, %c0_106, %c0_107] : memref<9x80x96xbf16, #tpu.memory_space<vmem>>, vector<1x80x96xbf16>
    %106 = vector.shape_cast %105 : vector<1x80x96xbf16> to vector<80x96xbf16>
    %cst_108 = arith.constant dense<0.000000e+00> : vector<12x96xf32>
    %107 = tpu.matmul %104, %106, %cst_108 {dimension_numbers = #tpu.dot_dimension_numbers<[1], [0], [0], [1], [0, 0, 1, 1], [], []>} : vector<12x80xbf16>, vector<80x96xbf16>, vector<12x96xf32> -> vector<12x96xf32>
    %108 = arith.addf %102, %107 : vector<12x96xf32>
    %c7_109 = arith.constant 7 : index
    %c0_110 = arith.constant 0 : index
    %109 = vector.load %arg23[%c7_109, %c0_110] : memref<20x80xf32, #tpu.memory_space<vmem>>, vector<12x80xf32>
    %110 = arith.truncf %109 : vector<12x80xf32> to vector<12x80xbf16>
    %c7_111 = arith.constant 7 : index
    %c0_112 = arith.constant 0 : index
    %c0_113 = arith.constant 0 : index
    %111 = vector.load %arg4[%c7_111, %c0_112, %c0_113] : memref<9x80x96xbf16, #tpu.memory_space<vmem>>, vector<1x80x96xbf16>
    %112 = vector.shape_cast %111 : vector<1x80x96xbf16> to vector<80x96xbf16>
    %cst_114 = arith.constant dense<0.000000e+00> : vector<12x96xf32>
    %113 = tpu.matmul %110, %112, %cst_114 {dimension_numbers = #tpu.dot_dimension_numbers<[1], [0], [0], [1], [0, 0, 1, 1], [], []>} : vector<12x80xbf16>, vector<80x96xbf16>, vector<12x96xf32> -> vector<12x96xf32>
    %114 = arith.addf %108, %113 : vector<12x96xf32>
    %c8_115 = arith.constant 8 : index
    %c0_116 = arith.constant 0 : index
    %115 = vector.load %arg23[%c8_115, %c0_116] : memref<20x80xf32, #tpu.memory_space<vmem>>, vector<12x80xf32>
    %116 = arith.truncf %115 : vector<12x80xf32> to vector<12x80xbf16>
    %c8_117 = arith.constant 8 : index
    %c0_118 = arith.constant 0 : index
    %c0_119 = arith.constant 0 : index
    %117 = vector.load %arg4[%c8_117, %c0_118, %c0_119] : memref<9x80x96xbf16, #tpu.memory_space<vmem>>, vector<1x80x96xbf16>
    %118 = vector.shape_cast %117 : vector<1x80x96xbf16> to vector<80x96xbf16>
    %cst_120 = arith.constant dense<0.000000e+00> : vector<12x96xf32>
    %119 = tpu.matmul %116, %118, %cst_120 {dimension_numbers = #tpu.dot_dimension_numbers<[1], [0], [0], [1], [0, 0, 1, 1], [], []>} : vector<12x80xbf16>, vector<80x96xbf16>, vector<12x96xf32> -> vector<12x96xf32>
    %120 = arith.addf %114, %119 : vector<12x96xf32>
    %c0_121 = arith.constant 0 : index
    %c0_122 = arith.constant 0 : index
    %121 = vector.load %arg5[%c0_121, %c0_122] : memref<1x96xf32, #tpu.memory_space<vmem>>, vector<1x96xf32>
    %122 = vector.broadcast %121 : vector<1x96xf32> to vector<12x96xf32>
    %123 = arith.addf %120, %122 : vector<12x96xf32>
    %cst_123 = arith.constant 0.000000e+00 : f32
    %124 = vector.broadcast %cst_123 : f32 to vector<12x96xf32>
    %125 = arith.maximumf %123, %124 : vector<12x96xf32>
    %c0_124 = arith.constant 0 : index
    %c0_125 = arith.constant 0 : index
    %126 = vector.load %arg24[%c0_124, %c0_125] : memref<12x96xf32, #tpu.memory_space<vmem>>, vector<12x96xf32>
    tpu.vector_store %arg24[%c0_124, %c0_125], %125 {strides = array<i32>} : memref<12x96xf32, #tpu.memory_space<vmem>>, vector<12x96xf32>,
    %c0_126 = arith.constant 0 : index
    %c0_127 = arith.constant 0 : index
    %127 = vector.load %arg24[%c0_126, %c0_127] : memref<12x96xf32, #tpu.memory_space<vmem>>, vector<4x96xf32>
    %128 = arith.truncf %127 : vector<4x96xf32> to vector<4x96xbf16>
    %c0_128 = arith.constant 0 : index
    %c0_129 = arith.constant 0 : index
    %c0_130 = arith.constant 0 : index
    %129 = vector.load %arg6[%c0_128, %c0_129, %c0_130] : memref<9x96x64xbf16, #tpu.memory_space<vmem>>, vector<1x96x64xbf16>
    %130 = vector.shape_cast %129 : vector<1x96x64xbf16> to vector<96x64xbf16>
    %cst_131 = arith.constant dense<0.000000e+00> : vector<4x64xf32>
    %131 = tpu.matmul %128, %130, %cst_131 {dimension_numbers = #tpu.dot_dimension_numbers<[1], [0], [0], [1], [0, 0, 1, 1], [], []>} : vector<4x96xbf16>, vector<96x64xbf16>, vector<4x64xf32> -> vector<4x64xf32>
    %c1_132 = arith.constant 1 : index
    %c0_133 = arith.constant 0 : index
    %132 = vector.load %arg24[%c1_132, %c0_133] : memref<12x96xf32, #tpu.memory_space<vmem>>, vector<4x96xf32>
    %133 = arith.truncf %132 : vector<4x96xf32> to vector<4x96xbf16>
    %c1_134 = arith.constant 1 : index
    %c0_135 = arith.constant 0 : index
    %c0_136 = arith.constant 0 : index
    %134 = vector.load %arg6[%c1_134, %c0_135, %c0_136] : memref<9x96x64xbf16, #tpu.memory_space<vmem>>, vector<1x96x64xbf16>
    %135 = vector.shape_cast %134 : vector<1x96x64xbf16> to vector<96x64xbf16>
    %cst_137 = arith.constant dense<0.000000e+00> : vector<4x64xf32>
    %136 = tpu.matmul %133, %135, %cst_137 {dimension_numbers = #tpu.dot_dimension_numbers<[1], [0], [0], [1], [0, 0, 1, 1], [], []>} : vector<4x96xbf16>, vector<96x64xbf16>, vector<4x64xf32> -> vector<4x64xf32>
    %137 = arith.addf %131, %136 : vector<4x64xf32>
    %c2_138 = arith.constant 2 : index
    %c0_139 = arith.constant 0 : index
    %138 = vector.load %arg24[%c2_138, %c0_139] : memref<12x96xf32, #tpu.memory_space<vmem>>, vector<4x96xf32>
    %139 = arith.truncf %138 : vector<4x96xf32> to vector<4x96xbf16>
    %c2_140 = arith.constant 2 : index
    %c0_141 = arith.constant 0 : index
    %c0_142 = arith.constant 0 : index
    %140 = vector.load %arg6[%c2_140, %c0_141, %c0_142] : memref<9x96x64xbf16, #tpu.memory_space<vmem>>, vector<1x96x64xbf16>
    %141 = vector.shape_cast %140 : vector<1x96x64xbf16> to vector<96x64xbf16>
    %cst_143 = arith.constant dense<0.000000e+00> : vector<4x64xf32>
    %142 = tpu.matmul %139, %141, %cst_143 {dimension_numbers = #tpu.dot_dimension_numbers<[1], [0], [0], [1], [0, 0, 1, 1], [], []>} : vector<4x96xbf16>, vector<96x64xbf16>, vector<4x64xf32> -> vector<4x64xf32>
    %143 = arith.addf %137, %142 : vector<4x64xf32>
    %c3_144 = arith.constant 3 : index
    %c0_145 = arith.constant 0 : index
    %144 = vector.load %arg24[%c3_144, %c0_145] : memref<12x96xf32, #tpu.memory_space<vmem>>, vector<4x96xf32>
    %145 = arith.truncf %144 : vector<4x96xf32> to vector<4x96xbf16>
    %c3_146 = arith.constant 3 : index
    %c0_147 = arith.constant 0 : index
    %c0_148 = arith.constant 0 : index
    %146 = vector.load %arg6[%c3_146, %c0_147, %c0_148] : memref<9x96x64xbf16, #tpu.memory_space<vmem>>, vector<1x96x64xbf16>
    %147 = vector.shape_cast %146 : vector<1x96x64xbf16> to vector<96x64xbf16>
    %cst_149 = arith.constant dense<0.000000e+00> : vector<4x64xf32>
    %148 = tpu.matmul %145, %147, %cst_149 {dimension_numbers = #tpu.dot_dimension_numbers<[1], [0], [0], [1], [0, 0, 1, 1], [], []>} : vector<4x96xbf16>, vector<96x64xbf16>, vector<4x64xf32> -> vector<4x64xf32>
    %149 = arith.addf %143, %148 : vector<4x64xf32>
    %c4_150 = arith.constant 4 : index
    %c0_151 = arith.constant 0 : index
    %150 = vector.load %arg24[%c4_150, %c0_151] : memref<12x96xf32, #tpu.memory_space<vmem>>, vector<4x96xf32>
    %151 = arith.truncf %150 : vector<4x96xf32> to vector<4x96xbf16>
    %c4_152 = arith.constant 4 : index
    %c0_153 = arith.constant 0 : index
    %c0_154 = arith.constant 0 : index
    %152 = vector.load %arg6[%c4_152, %c0_153, %c0_154] : memref<9x96x64xbf16, #tpu.memory_space<vmem>>, vector<1x96x64xbf16>
    %153 = vector.shape_cast %152 : vector<1x96x64xbf16> to vector<96x64xbf16>
    %cst_155 = arith.constant dense<0.000000e+00> : vector<4x64xf32>
    %154 = tpu.matmul %151, %153, %cst_155 {dimension_numbers = #tpu.dot_dimension_numbers<[1], [0], [0], [1], [0, 0, 1, 1], [], []>} : vector<4x96xbf16>, vector<96x64xbf16>, vector<4x64xf32> -> vector<4x64xf32>
    %155 = arith.addf %149, %154 : vector<4x64xf32>
    %c5_156 = arith.constant 5 : index
    %c0_157 = arith.constant 0 : index
    %156 = vector.load %arg24[%c5_156, %c0_157] : memref<12x96xf32, #tpu.memory_space<vmem>>, vector<4x96xf32>
    %157 = arith.truncf %156 : vector<4x96xf32> to vector<4x96xbf16>
    %c5_158 = arith.constant 5 : index
    %c0_159 = arith.constant 0 : index
    %c0_160 = arith.constant 0 : index
    %158 = vector.load %arg6[%c5_158, %c0_159, %c0_160] : memref<9x96x64xbf16, #tpu.memory_space<vmem>>, vector<1x96x64xbf16>
    %159 = vector.shape_cast %158 : vector<1x96x64xbf16> to vector<96x64xbf16>
    %cst_161 = arith.constant dense<0.000000e+00> : vector<4x64xf32>
    %160 = tpu.matmul %157, %159, %cst_161 {dimension_numbers = #tpu.dot_dimension_numbers<[1], [0], [0], [1], [0, 0, 1, 1], [], []>} : vector<4x96xbf16>, vector<96x64xbf16>, vector<4x64xf32> -> vector<4x64xf32>
    %161 = arith.addf %155, %160 : vector<4x64xf32>
    %c6_162 = arith.constant 6 : index
    %c0_163 = arith.constant 0 : index
    %162 = vector.load %arg24[%c6_162, %c0_163] : memref<12x96xf32, #tpu.memory_space<vmem>>, vector<4x96xf32>
    %163 = arith.truncf %162 : vector<4x96xf32> to vector<4x96xbf16>
    %c6_164 = arith.constant 6 : index
    %c0_165 = arith.constant 0 : index
    %c0_166 = arith.constant 0 : index
    %164 = vector.load %arg6[%c6_164, %c0_165, %c0_166] : memref<9x96x64xbf16, #tpu.memory_space<vmem>>, vector<1x96x64xbf16>
    %165 = vector.shape_cast %164 : vector<1x96x64xbf16> to vector<96x64xbf16>
    %cst_167 = arith.constant dense<0.000000e+00> : vector<4x64xf32>
    %166 = tpu.matmul %163, %165, %cst_167 {dimension_numbers = #tpu.dot_dimension_numbers<[1], [0], [0], [1], [0, 0, 1, 1], [], []>} : vector<4x96xbf16>, vector<96x64xbf16>, vector<4x64xf32> -> vector<4x64xf32>
    %167 = arith.addf %161, %166 : vector<4x64xf32>
    %c7_168 = arith.constant 7 : index
    %c0_169 = arith.constant 0 : index
    %168 = vector.load %arg24[%c7_168, %c0_169] : memref<12x96xf32, #tpu.memory_space<vmem>>, vector<4x96xf32>
    %169 = arith.truncf %168 : vector<4x96xf32> to vector<4x96xbf16>
    %c7_170 = arith.constant 7 : index
    %c0_171 = arith.constant 0 : index
    %c0_172 = arith.constant 0 : index
    %170 = vector.load %arg6[%c7_170, %c0_171, %c0_172] : memref<9x96x64xbf16, #tpu.memory_space<vmem>>, vector<1x96x64xbf16>
    %171 = vector.shape_cast %170 : vector<1x96x64xbf16> to vector<96x64xbf16>
    %cst_173 = arith.constant dense<0.000000e+00> : vector<4x64xf32>
    %172 = tpu.matmul %169, %171, %cst_173 {dimension_numbers = #tpu.dot_dimension_numbers<[1], [0], [0], [1], [0, 0, 1, 1], [], []>} : vector<4x96xbf16>, vector<96x64xbf16>, vector<4x64xf32> -> vector<4x64xf32>
    %173 = arith.addf %167, %172 : vector<4x64xf32>
    %c8_174 = arith.constant 8 : index
    %c0_175 = arith.constant 0 : index
    %174 = vector.load %arg24[%c8_174, %c0_175] : memref<12x96xf32, #tpu.memory_space<vmem>>, vector<4x96xf32>
    %175 = arith.truncf %174 : vector<4x96xf32> to vector<4x96xbf16>
    %c8_176 = arith.constant 8 : index
    %c0_177 = arith.constant 0 : index
    %c0_178 = arith.constant 0 : index
    %176 = vector.load %arg6[%c8_176, %c0_177, %c0_178] : memref<9x96x64xbf16, #tpu.memory_space<vmem>>, vector<1x96x64xbf16>
    %177 = vector.shape_cast %176 : vector<1x96x64xbf16> to vector<96x64xbf16>
    %cst_179 = arith.constant dense<0.000000e+00> : vector<4x64xf32>
    %178 = tpu.matmul %175, %177, %cst_179 {dimension_numbers = #tpu.dot_dimension_numbers<[1], [0], [0], [1], [0, 0, 1, 1], [], []>} : vector<4x96xbf16>, vector<96x64xbf16>, vector<4x64xf32> -> vector<4x64xf32>
    %179 = arith.addf %173, %178 : vector<4x64xf32>
    %c0_180 = arith.constant 0 : index
    %c0_181 = arith.constant 0 : index
    %180 = vector.load %arg7[%c0_180, %c0_181] : memref<1x64xf32, #tpu.memory_space<vmem>>, vector<1x64xf32>
    %181 = vector.broadcast %180 : vector<1x64xf32> to vector<4x64xf32>
    %182 = arith.addf %179, %181 : vector<4x64xf32>
    %cst_182 = arith.constant 0.000000e+00 : f32
    %183 = vector.broadcast %cst_182 : f32 to vector<4x64xf32>
    %184 = arith.maximumf %182, %183 : vector<4x64xf32>
    %c0_183 = arith.constant 0 : index
    %c0_184 = arith.constant 0 : index
    %185 = vector.load %arg25[%c0_183, %c0_184] : memref<4x64xf32, #tpu.memory_space<vmem>>, vector<4x64xf32>
    tpu.vector_store %arg25[%c0_183, %c0_184], %184 {strides = array<i32>} : memref<4x64xf32, #tpu.memory_space<vmem>>, vector<4x64xf32>,
    %c0_185 = arith.constant 0 : index
    %c0_186 = arith.constant 0 : index
    %186 = vector.load %arg25[%c0_185, %c0_186] : memref<4x64xf32, #tpu.memory_space<vmem>>, vector<2x64xf32>
    %187 = arith.truncf %186 : vector<2x64xf32> to vector<2x64xbf16>
    %c0_187 = arith.constant 0 : index
    %c0_188 = arith.constant 0 : index
    %c0_189 = arith.constant 0 : index
    %188 = vector.load %arg8[%c0_187, %c0_188, %c0_189] : memref<3x64x64xbf16, #tpu.memory_space<vmem>>, vector<1x64x64xbf16>
    %189 = vector.shape_cast %188 : vector<1x64x64xbf16> to vector<64x64xbf16>
    %cst_190 = arith.constant dense<0.000000e+00> : vector<2x64xf32>
    %190 = tpu.matmul %187, %189, %cst_190 {dimension_numbers = #tpu.dot_dimension_numbers<[1], [0], [0], [1], [0, 0, 1, 1], [], []>} : vector<2x64xbf16>, vector<64x64xbf16>, vector<2x64xf32> -> vector<2x64xf32>
    %c1_191 = arith.constant 1 : index
    %c0_192 = arith.constant 0 : index
    %191 = vector.load %arg25[%c1_191, %c0_192] : memref<4x64xf32, #tpu.memory_space<vmem>>, vector<2x64xf32>
    %192 = arith.truncf %191 : vector<2x64xf32> to vector<2x64xbf16>
    %c1_193 = arith.constant 1 : index
    %c0_194 = arith.constant 0 : index
    %c0_195 = arith.constant 0 : index
    %193 = vector.load %arg8[%c1_193, %c0_194, %c0_195] : memref<3x64x64xbf16, #tpu.memory_space<vmem>>, vector<1x64x64xbf16>
    %194 = vector.shape_cast %193 : vector<1x64x64xbf16> to vector<64x64xbf16>
    %cst_196 = arith.constant dense<0.000000e+00> : vector<2x64xf32>
    %195 = tpu.matmul %192, %194, %cst_196 {dimension_numbers = #tpu.dot_dimension_numbers<[1], [0], [0], [1], [0, 0, 1, 1], [], []>} : vector<2x64xbf16>, vector<64x64xbf16>, vector<2x64xf32> -> vector<2x64xf32>
    %196 = arith.addf %190, %195 : vector<2x64xf32>
    %c2_197 = arith.constant 2 : index
    %c0_198 = arith.constant 0 : index
    %197 = vector.load %arg25[%c2_197, %c0_198] : memref<4x64xf32, #tpu.memory_space<vmem>>, vector<2x64xf32>
    %198 = arith.truncf %197 : vector<2x64xf32> to vector<2x64xbf16>
    %c2_199 = arith.constant 2 : index
    %c0_200 = arith.constant 0 : index
    %c0_201 = arith.constant 0 : index
    %199 = vector.load %arg8[%c2_199, %c0_200, %c0_201] : memref<3x64x64xbf16, #tpu.memory_space<vmem>>, vector<1x64x64xbf16>
    %200 = vector.shape_cast %199 : vector<1x64x64xbf16> to vector<64x64xbf16>
    %cst_202 = arith.constant dense<0.000000e+00> : vector<2x64xf32>
    %201 = tpu.matmul %198, %200, %cst_202 {dimension_numbers = #tpu.dot_dimension_numbers<[1], [0], [0], [1], [0, 0, 1, 1], [], []>} : vector<2x64xbf16>, vector<64x64xbf16>, vector<2x64xf32> -> vector<2x64xf32>
    %202 = arith.addf %196, %201 : vector<2x64xf32>
    %c0_203 = arith.constant 0 : index
    %c0_204 = arith.constant 0 : index
    %203 = vector.load %arg9[%c0_203, %c0_204] : memref<1x64xf32, #tpu.memory_space<vmem>>, vector<1x64xf32>
    %204 = vector.broadcast %203 : vector<1x64xf32> to vector<2x64xf32>
    %205 = arith.addf %202, %204 : vector<2x64xf32>
    %cst_205 = arith.constant 0.000000e+00 : f32
    %206 = vector.broadcast %cst_205 : f32 to vector<2x64xf32>
    %207 = arith.maximumf %205, %206 : vector<2x64xf32>
    %c0_206 = arith.constant 0 : index
    %c0_207 = arith.constant 0 : index
    %208 = vector.load %arg26[%c0_206, %c0_207] : memref<2x64xf32, #tpu.memory_space<vmem>>, vector<2x64xf32>
    tpu.vector_store %arg26[%c0_206, %c0_207], %207 {strides = array<i32>} : memref<2x64xf32, #tpu.memory_space<vmem>>, vector<2x64xf32>,
    %c0_208 = arith.constant 0 : index
    %c0_209 = arith.constant 0 : index
    %209 = vector.load %arg26[%c0_208, %c0_209] : memref<2x64xf32, #tpu.memory_space<vmem>>, vector<1x64xf32>
    %210 = arith.truncf %209 : vector<1x64xf32> to vector<1x64xbf16>
    %c0_210 = arith.constant 0 : index
    %c0_211 = arith.constant 0 : index
    %c0_212 = arith.constant 0 : index
    %211 = vector.load %arg10[%c0_210, %c0_211, %c0_212] : memref<2x64x32xbf16, #tpu.memory_space<vmem>>, vector<1x64x32xbf16>
    %212 = vector.shape_cast %211 : vector<1x64x32xbf16> to vector<64x32xbf16>
    %cst_213 = arith.constant dense<0.000000e+00> : vector<1x32xf32>
    %213 = tpu.matmul %210, %212, %cst_213 {dimension_numbers = #tpu.dot_dimension_numbers<[1], [0], [0], [1], [0, 0, 1, 1], [], []>} : vector<1x64xbf16>, vector<64x32xbf16>, vector<1x32xf32> -> vector<1x32xf32>
    %c1_214 = arith.constant 1 : index
    %c0_215 = arith.constant 0 : index
    %214 = vector.load %arg26[%c1_214, %c0_215] : memref<2x64xf32, #tpu.memory_space<vmem>>, vector<1x64xf32>
    %215 = arith.truncf %214 : vector<1x64xf32> to vector<1x64xbf16>
    %c1_216 = arith.constant 1 : index
    %c0_217 = arith.constant 0 : index
    %c0_218 = arith.constant 0 : index
    %216 = vector.load %arg10[%c1_216, %c0_217, %c0_218] : memref<2x64x32xbf16, #tpu.memory_space<vmem>>, vector<1x64x32xbf16>
    %217 = vector.shape_cast %216 : vector<1x64x32xbf16> to vector<64x32xbf16>
    %cst_219 = arith.constant dense<0.000000e+00> : vector<1x32xf32>
    %218 = tpu.matmul %215, %217, %cst_219 {dimension_numbers = #tpu.dot_dimension_numbers<[1], [0], [0], [1], [0, 0, 1, 1], [], []>} : vector<1x64xbf16>, vector<64x32xbf16>, vector<1x32xf32> -> vector<1x32xf32>
    %219 = arith.addf %213, %218 : vector<1x32xf32>
    %c0_220 = arith.constant 0 : index
    %c0_221 = arith.constant 0 : index
    %220 = vector.load %arg11[%c0_220, %c0_221] : memref<1x32xf32, #tpu.memory_space<vmem>>, vector<1x32xf32>
    %221 = arith.addf %219, %220 : vector<1x32xf32>
    %222 = arith.truncf %221 : vector<1x32xf32> to vector<1x32xbf16>
    %c0_222 = arith.constant 0 : index
    %c0_223 = arith.constant 0 : index
    %223 = vector.load %arg12[%c0_222, %c0_223] : memref<32x64xbf16, #tpu.memory_space<vmem>>, vector<32x64xbf16>
    %cst_224 = arith.constant dense<0.000000e+00> : vector<1x64xf32>
    %224 = tpu.matmul %222, %223, %cst_224 {dimension_numbers = #tpu.dot_dimension_numbers<[1], [0], [0], [1], [0, 0, 1, 1], [], []>} : vector<1x32xbf16>, vector<32x64xbf16>, vector<1x64xf32> -> vector<1x64xf32>
    %c0_225 = arith.constant 0 : index
    %c0_226 = arith.constant 0 : index
    %225 = vector.load %arg13[%c0_225, %c0_226] : memref<1x64xf32, #tpu.memory_space<vmem>>, vector<1x64xf32>
    %226 = arith.addf %224, %225 : vector<1x64xf32>
    %cst_227 = arith.constant 0.000000e+00 : f32
    %227 = vector.broadcast %cst_227 : f32 to vector<21x80xf32>
    %c0_228 = arith.constant 0 : index
    %c0_229 = arith.constant 0 : index
    %228 = vector.load %arg27[%c0_228, %c0_229] : memref<21x80xf32, #tpu.memory_space<vmem>>, vector<21x80xf32>
    tpu.vector_store %arg27[%c0_228, %c0_229], %227 {strides = array<i32>} : memref<21x80xf32, #tpu.memory_space<vmem>>, vector<21x80xf32>,
    %229 = arith.truncf %226 : vector<1x64xf32> to vector<1x64xbf16>
    %c0_230 = arith.constant 0 : index
    %c0_231 = arith.constant 0 : index
    %c0_232 = arith.constant 0 : index
    %230 = vector.load %arg14[%c0_230, %c0_231, %c0_232] : memref<5x64x80xbf16, #tpu.memory_space<vmem>>, vector<1x64x80xbf16>
    %231 = vector.shape_cast %230 : vector<1x64x80xbf16> to vector<64x80xbf16>
    %cst_233 = arith.constant dense<0.000000e+00> : vector<1x80xf32>
    %232 = tpu.matmul %229, %231, %cst_233 {dimension_numbers = #tpu.dot_dimension_numbers<[1], [0], [0], [1], [0, 0, 1, 1], [], []>} : vector<1x64xbf16>, vector<64x80xbf16>, vector<1x80xf32> -> vector<1x80xf32>
    %c0_234 = arith.constant 0 : index
    %c0_235 = arith.constant 0 : index
    %233 = vector.load %arg15[%c0_234, %c0_235] : memref<1x80xf32, #tpu.memory_space<vmem>>, vector<1x80xf32>
    %234 = arith.addf %232, %233 : vector<1x80xf32>
    %cst_236 = arith.constant 0.000000e+00 : f32
    %235 = vector.broadcast %cst_236 : f32 to vector<1x80xf32>
    %236 = arith.maximumf %234, %235 : vector<1x80xf32>
    %c8_237 = arith.constant 8 : index
    %c0_238 = arith.constant 0 : index
    %237 = vector.load %arg27[%c8_237, %c0_238] : memref<21x80xf32, #tpu.memory_space<vmem>>, vector<1x80xf32>
    tpu.vector_store %arg27[%c8_237, %c0_238], %236 {strides = array<i32>} : memref<21x80xf32, #tpu.memory_space<vmem>>, vector<1x80xf32>,
    %c1_239 = arith.constant 1 : index
    %c0_240 = arith.constant 0 : index
    %c0_241 = arith.constant 0 : index
    %238 = vector.load %arg14[%c1_239, %c0_240, %c0_241] : memref<5x64x80xbf16, #tpu.memory_space<vmem>>, vector<1x64x80xbf16>
    %239 = vector.shape_cast %238 : vector<1x64x80xbf16> to vector<64x80xbf16>
    %cst_242 = arith.constant dense<0.000000e+00> : vector<1x80xf32>
    %240 = tpu.matmul %229, %239, %cst_242 {dimension_numbers = #tpu.dot_dimension_numbers<[1], [0], [0], [1], [0, 0, 1, 1], [], []>} : vector<1x64xbf16>, vector<64x80xbf16>, vector<1x80xf32> -> vector<1x80xf32>
    %c0_243 = arith.constant 0 : index
    %c0_244 = arith.constant 0 : index
    %241 = vector.load %arg15[%c0_243, %c0_244] : memref<1x80xf32, #tpu.memory_space<vmem>>, vector<1x80xf32>
    %242 = arith.addf %240, %241 : vector<1x80xf32>
    %cst_245 = arith.constant 0.000000e+00 : f32
    %243 = vector.broadcast %cst_245 : f32 to vector<1x80xf32>
    %244 = arith.maximumf %242, %243 : vector<1x80xf32>
    %c9 = arith.constant 9 : index
    %c0_246 = arith.constant 0 : index
    %245 = vector.load %arg27[%c9, %c0_246] : memref<21x80xf32, #tpu.memory_space<vmem>>, vector<1x80xf32>
    tpu.vector_store %arg27[%c9, %c0_246], %244 {strides = array<i32>} : memref<21x80xf32, #tpu.memory_space<vmem>>, vector<1x80xf32>,
    %c2_247 = arith.constant 2 : index
    %c0_248 = arith.constant 0 : index
    %c0_249 = arith.constant 0 : index
    %246 = vector.load %arg14[%c2_247, %c0_248, %c0_249] : memref<5x64x80xbf16, #tpu.memory_space<vmem>>, vector<1x64x80xbf16>
    %247 = vector.shape_cast %246 : vector<1x64x80xbf16> to vector<64x80xbf16>
    %cst_250 = arith.constant dense<0.000000e+00> : vector<1x80xf32>
    %248 = tpu.matmul %229, %247, %cst_250 {dimension_numbers = #tpu.dot_dimension_numbers<[1], [0], [0], [1], [0, 0, 1, 1], [], []>} : vector<1x64xbf16>, vector<64x80xbf16>, vector<1x80xf32> -> vector<1x80xf32>
    %c0_251 = arith.constant 0 : index
    %c0_252 = arith.constant 0 : index
    %249 = vector.load %arg15[%c0_251, %c0_252] : memref<1x80xf32, #tpu.memory_space<vmem>>, vector<1x80xf32>
    %250 = arith.addf %248, %249 : vector<1x80xf32>
    %cst_253 = arith.constant 0.000000e+00 : f32
    %251 = vector.broadcast %cst_253 : f32 to vector<1x80xf32>
    %252 = arith.maximumf %250, %251 : vector<1x80xf32>
    %c10 = arith.constant 10 : index
    %c0_254 = arith.constant 0 : index
    %253 = vector.load %arg27[%c10, %c0_254] : memref<21x80xf32, #tpu.memory_space<vmem>>, vector<1x80xf32>
    tpu.vector_store %arg27[%c10, %c0_254], %252 {strides = array<i32>} : memref<21x80xf32, #tpu.memory_space<vmem>>, vector<1x80xf32>,
    %c3_255 = arith.constant 3 : index
    %c0_256 = arith.constant 0 : index
    %c0_257 = arith.constant 0 : index
    %254 = vector.load %arg14[%c3_255, %c0_256, %c0_257] : memref<5x64x80xbf16, #tpu.memory_space<vmem>>, vector<1x64x80xbf16>
    %255 = vector.shape_cast %254 : vector<1x64x80xbf16> to vector<64x80xbf16>
    %cst_258 = arith.constant dense<0.000000e+00> : vector<1x80xf32>
    %256 = tpu.matmul %229, %255, %cst_258 {dimension_numbers = #tpu.dot_dimension_numbers<[1], [0], [0], [1], [0, 0, 1, 1], [], []>} : vector<1x64xbf16>, vector<64x80xbf16>, vector<1x80xf32> -> vector<1x80xf32>
    %c0_259 = arith.constant 0 : index
    %c0_260 = arith.constant 0 : index
    %257 = vector.load %arg15[%c0_259, %c0_260] : memref<1x80xf32, #tpu.memory_space<vmem>>, vector<1x80xf32>
    %258 = arith.addf %256, %257 : vector<1x80xf32>
    %cst_261 = arith.constant 0.000000e+00 : f32
    %259 = vector.broadcast %cst_261 : f32 to vector<1x80xf32>
    %260 = arith.maximumf %258, %259 : vector<1x80xf32>
    %c11 = arith.constant 11 : index
    %c0_262 = arith.constant 0 : index
    %261 = vector.load %arg27[%c11, %c0_262] : memref<21x80xf32, #tpu.memory_space<vmem>>, vector<1x80xf32>
    tpu.vector_store %arg27[%c11, %c0_262], %260 {strides = array<i32>} : memref<21x80xf32, #tpu.memory_space<vmem>>, vector<1x80xf32>,
    %c4_263 = arith.constant 4 : index
    %c0_264 = arith.constant 0 : index
    %c0_265 = arith.constant 0 : index
    %262 = vector.load %arg14[%c4_263, %c0_264, %c0_265] : memref<5x64x80xbf16, #tpu.memory_space<vmem>>, vector<1x64x80xbf16>
    %263 = vector.shape_cast %262 : vector<1x64x80xbf16> to vector<64x80xbf16>
    %cst_266 = arith.constant dense<0.000000e+00> : vector<1x80xf32>
    %264 = tpu.matmul %229, %263, %cst_266 {dimension_numbers = #tpu.dot_dimension_numbers<[1], [0], [0], [1], [0, 0, 1, 1], [], []>} : vector<1x64xbf16>, vector<64x80xbf16>, vector<1x80xf32> -> vector<1x80xf32>
    %c0_267 = arith.constant 0 : index
    %c0_268 = arith.constant 0 : index
    %265 = vector.load %arg15[%c0_267, %c0_268] : memref<1x80xf32, #tpu.memory_space<vmem>>, vector<1x80xf32>
    %266 = arith.addf %264, %265 : vector<1x80xf32>
    %cst_269 = arith.constant 0.000000e+00 : f32
    %267 = vector.broadcast %cst_269 : f32 to vector<1x80xf32>
    %268 = arith.maximumf %266, %267 : vector<1x80xf32>
    %c12 = arith.constant 12 : index
    %c0_270 = arith.constant 0 : index
    %269 = vector.load %arg27[%c12, %c0_270] : memref<21x80xf32, #tpu.memory_space<vmem>>, vector<1x80xf32>
    tpu.vector_store %arg27[%c12, %c0_270], %268 {strides = array<i32>} : memref<21x80xf32, #tpu.memory_space<vmem>>, vector<1x80xf32>,
    %c0_271 = arith.constant 0 : index
    %c0_272 = arith.constant 0 : index
    %270 = vector.load %arg27[%c0_271, %c0_272] : memref<21x80xf32, #tpu.memory_space<vmem>>, vector<13x80xf32>
    %271 = arith.truncf %270 : vector<13x80xf32> to vector<13x80xbf16>
    %c0_273 = arith.constant 0 : index
    %c0_274 = arith.constant 0 : index
    %c0_275 = arith.constant 0 : index
    %272 = vector.load %arg16[%c0_273, %c0_274, %c0_275] : memref<9x80x52xbf16, #tpu.memory_space<vmem>>, vector<1x80x52xbf16>
    %273 = vector.shape_cast %272 : vector<1x80x52xbf16> to vector<80x52xbf16>
    %cst_276 = arith.constant dense<0.000000e+00> : vector<13x52xf32>
    %274 = tpu.matmul %271, %273, %cst_276 {dimension_numbers = #tpu.dot_dimension_numbers<[1], [0], [0], [1], [0, 0, 1, 1], [], []>} : vector<13x80xbf16>, vector<80x52xbf16>, vector<13x52xf32> -> vector<13x52xf32>
    %c1_277 = arith.constant 1 : index
    %c0_278 = arith.constant 0 : index
    %275 = vector.load %arg27[%c1_277, %c0_278] : memref<21x80xf32, #tpu.memory_space<vmem>>, vector<13x80xf32>
    %276 = arith.truncf %275 : vector<13x80xf32> to vector<13x80xbf16>
    %c1_279 = arith.constant 1 : index
    %c0_280 = arith.constant 0 : index
    %c0_281 = arith.constant 0 : index
    %277 = vector.load %arg16[%c1_279, %c0_280, %c0_281] : memref<9x80x52xbf16, #tpu.memory_space<vmem>>, vector<1x80x52xbf16>
    %278 = vector.shape_cast %277 : vector<1x80x52xbf16> to vector<80x52xbf16>
    %cst_282 = arith.constant dense<0.000000e+00> : vector<13x52xf32>
    %279 = tpu.matmul %276, %278, %cst_282 {dimension_numbers = #tpu.dot_dimension_numbers<[1], [0], [0], [1], [0, 0, 1, 1], [], []>} : vector<13x80xbf16>, vector<80x52xbf16>, vector<13x52xf32> -> vector<13x52xf32>
    %280 = arith.addf %274, %279 : vector<13x52xf32>
    %c2_283 = arith.constant 2 : index
    %c0_284 = arith.constant 0 : index
    %281 = vector.load %arg27[%c2_283, %c0_284] : memref<21x80xf32, #tpu.memory_space<vmem>>, vector<13x80xf32>
    %282 = arith.truncf %281 : vector<13x80xf32> to vector<13x80xbf16>
    %c2_285 = arith.constant 2 : index
    %c0_286 = arith.constant 0 : index
    %c0_287 = arith.constant 0 : index
    %283 = vector.load %arg16[%c2_285, %c0_286, %c0_287] : memref<9x80x52xbf16, #tpu.memory_space<vmem>>, vector<1x80x52xbf16>
    %284 = vector.shape_cast %283 : vector<1x80x52xbf16> to vector<80x52xbf16>
    %cst_288 = arith.constant dense<0.000000e+00> : vector<13x52xf32>
    %285 = tpu.matmul %282, %284, %cst_288 {dimension_numbers = #tpu.dot_dimension_numbers<[1], [0], [0], [1], [0, 0, 1, 1], [], []>} : vector<13x80xbf16>, vector<80x52xbf16>, vector<13x52xf32> -> vector<13x52xf32>
    %286 = arith.addf %280, %285 : vector<13x52xf32>
    %c3_289 = arith.constant 3 : index
    %c0_290 = arith.constant 0 : index
    %287 = vector.load %arg27[%c3_289, %c0_290] : memref<21x80xf32, #tpu.memory_space<vmem>>, vector<13x80xf32>
    %288 = arith.truncf %287 : vector<13x80xf32> to vector<13x80xbf16>
    %c3_291 = arith.constant 3 : index
    %c0_292 = arith.constant 0 : index
    %c0_293 = arith.constant 0 : index
    %289 = vector.load %arg16[%c3_291, %c0_292, %c0_293] : memref<9x80x52xbf16, #tpu.memory_space<vmem>>, vector<1x80x52xbf16>
    %290 = vector.shape_cast %289 : vector<1x80x52xbf16> to vector<80x52xbf16>
    %cst_294 = arith.constant dense<0.000000e+00> : vector<13x52xf32>
    %291 = tpu.matmul %288, %290, %cst_294 {dimension_numbers = #tpu.dot_dimension_numbers<[1], [0], [0], [1], [0, 0, 1, 1], [], []>} : vector<13x80xbf16>, vector<80x52xbf16>, vector<13x52xf32> -> vector<13x52xf32>
    %292 = arith.addf %286, %291 : vector<13x52xf32>
    %c4_295 = arith.constant 4 : index
    %c0_296 = arith.constant 0 : index
    %293 = vector.load %arg27[%c4_295, %c0_296] : memref<21x80xf32, #tpu.memory_space<vmem>>, vector<13x80xf32>
    %294 = arith.truncf %293 : vector<13x80xf32> to vector<13x80xbf16>
    %c4_297 = arith.constant 4 : index
    %c0_298 = arith.constant 0 : index
    %c0_299 = arith.constant 0 : index
    %295 = vector.load %arg16[%c4_297, %c0_298, %c0_299] : memref<9x80x52xbf16, #tpu.memory_space<vmem>>, vector<1x80x52xbf16>
    %296 = vector.shape_cast %295 : vector<1x80x52xbf16> to vector<80x52xbf16>
    %cst_300 = arith.constant dense<0.000000e+00> : vector<13x52xf32>
    %297 = tpu.matmul %294, %296, %cst_300 {dimension_numbers = #tpu.dot_dimension_numbers<[1], [0], [0], [1], [0, 0, 1, 1], [], []>} : vector<13x80xbf16>, vector<80x52xbf16>, vector<13x52xf32> -> vector<13x52xf32>
    %298 = arith.addf %292, %297 : vector<13x52xf32>
    %c5_301 = arith.constant 5 : index
    %c0_302 = arith.constant 0 : index
    %299 = vector.load %arg27[%c5_301, %c0_302] : memref<21x80xf32, #tpu.memory_space<vmem>>, vector<13x80xf32>
    %300 = arith.truncf %299 : vector<13x80xf32> to vector<13x80xbf16>
    %c5_303 = arith.constant 5 : index
    %c0_304 = arith.constant 0 : index
    %c0_305 = arith.constant 0 : index
    %301 = vector.load %arg16[%c5_303, %c0_304, %c0_305] : memref<9x80x52xbf16, #tpu.memory_space<vmem>>, vector<1x80x52xbf16>
    %302 = vector.shape_cast %301 : vector<1x80x52xbf16> to vector<80x52xbf16>
    %cst_306 = arith.constant dense<0.000000e+00> : vector<13x52xf32>
    %303 = tpu.matmul %300, %302, %cst_306 {dimension_numbers = #tpu.dot_dimension_numbers<[1], [0], [0], [1], [0, 0, 1, 1], [], []>} : vector<13x80xbf16>, vector<80x52xbf16>, vector<13x52xf32> -> vector<13x52xf32>
    %304 = arith.addf %298, %303 : vector<13x52xf32>
    %c6_307 = arith.constant 6 : index
    %c0_308 = arith.constant 0 : index
    %305 = vector.load %arg27[%c6_307, %c0_308] : memref<21x80xf32, #tpu.memory_space<vmem>>, vector<13x80xf32>
    %306 = arith.truncf %305 : vector<13x80xf32> to vector<13x80xbf16>
    %c6_309 = arith.constant 6 : index
    %c0_310 = arith.constant 0 : index
    %c0_311 = arith.constant 0 : index
    %307 = vector.load %arg16[%c6_309, %c0_310, %c0_311] : memref<9x80x52xbf16, #tpu.memory_space<vmem>>, vector<1x80x52xbf16>
    %308 = vector.shape_cast %307 : vector<1x80x52xbf16> to vector<80x52xbf16>
    %cst_312 = arith.constant dense<0.000000e+00> : vector<13x52xf32>
    %309 = tpu.matmul %306, %308, %cst_312 {dimension_numbers = #tpu.dot_dimension_numbers<[1], [0], [0], [1], [0, 0, 1, 1], [], []>} : vector<13x80xbf16>, vector<80x52xbf16>, vector<13x52xf32> -> vector<13x52xf32>
    %310 = arith.addf %304, %309 : vector<13x52xf32>
    %c7_313 = arith.constant 7 : index
    %c0_314 = arith.constant 0 : index
    %311 = vector.load %arg27[%c7_313, %c0_314] : memref<21x80xf32, #tpu.memory_space<vmem>>, vector<13x80xf32>
    %312 = arith.truncf %311 : vector<13x80xf32> to vector<13x80xbf16>
    %c7_315 = arith.constant 7 : index
    %c0_316 = arith.constant 0 : index
    %c0_317 = arith.constant 0 : index
    %313 = vector.load %arg16[%c7_315, %c0_316, %c0_317] : memref<9x80x52xbf16, #tpu.memory_space<vmem>>, vector<1x80x52xbf16>
    %314 = vector.shape_cast %313 : vector<1x80x52xbf16> to vector<80x52xbf16>
    %cst_318 = arith.constant dense<0.000000e+00> : vector<13x52xf32>
    %315 = tpu.matmul %312, %314, %cst_318 {dimension_numbers = #tpu.dot_dimension_numbers<[1], [0], [0], [1], [0, 0, 1, 1], [], []>} : vector<13x80xbf16>, vector<80x52xbf16>, vector<13x52xf32> -> vector<13x52xf32>
    %316 = arith.addf %310, %315 : vector<13x52xf32>
    %c8_319 = arith.constant 8 : index
    %c0_320 = arith.constant 0 : index
    %317 = vector.load %arg27[%c8_319, %c0_320] : memref<21x80xf32, #tpu.memory_space<vmem>>, vector<13x80xf32>
    %318 = arith.truncf %317 : vector<13x80xf32> to vector<13x80xbf16>
    %c8_321 = arith.constant 8 : index
    %c0_322 = arith.constant 0 : index
    %c0_323 = arith.constant 0 : index
    %319 = vector.load %arg16[%c8_321, %c0_322, %c0_323] : memref<9x80x52xbf16, #tpu.memory_space<vmem>>, vector<1x80x52xbf16>
    %320 = vector.shape_cast %319 : vector<1x80x52xbf16> to vector<80x52xbf16>
    %cst_324 = arith.constant dense<0.000000e+00> : vector<13x52xf32>
    %321 = tpu.matmul %318, %320, %cst_324 {dimension_numbers = #tpu.dot_dimension_numbers<[1], [0], [0], [1], [0, 0, 1, 1], [], []>} : vector<13x80xbf16>, vector<80x52xbf16>, vector<13x52xf32> -> vector<13x52xf32>
    %322 = arith.addf %316, %321 : vector<13x52xf32>
    %c0_325 = arith.constant 0 : index
    %c0_326 = arith.constant 0 : index
    %323 = vector.load %arg17[%c0_325, %c0_326] : memref<1x52xf32, #tpu.memory_space<vmem>>, vector<1x52xf32>
    %324 = vector.broadcast %323 : vector<1x52xf32> to vector<13x52xf32>
    %325 = arith.addf %322, %324 : vector<13x52xf32>
    %cst_327 = arith.constant 0.000000e+00 : f32
    %326 = vector.broadcast %cst_327 : f32 to vector<13x52xf32>
    %327 = arith.maximumf %325, %326 : vector<13x52xf32>
    %cst_328 = arith.constant 0.000000e+00 : f32
    %328 = vector.broadcast %cst_328 : f32 to vector<27x52xf32>
    %c0_329 = arith.constant 0 : index
    %c0_330 = arith.constant 0 : index
    %329 = vector.load %arg28[%c0_329, %c0_330] : memref<27x52xf32, #tpu.memory_space<vmem>>, vector<27x52xf32>
    tpu.vector_store %arg28[%c0_329, %c0_330], %328 {strides = array<i32>} : memref<27x52xf32, #tpu.memory_space<vmem>>, vector<27x52xf32>,
    %c7_331 = arith.constant 7 : index
    %c0_332 = arith.constant 0 : index
    %330 = vector.load %arg28[%c7_331, %c0_332] : memref<27x52xf32, #tpu.memory_space<vmem>>, vector<13x52xf32>
    tpu.vector_store %arg28[%c7_331, %c0_332], %327 {strides = array<i32>} : memref<27x52xf32, #tpu.memory_space<vmem>>, vector<13x52xf32>,
    %c0_333 = arith.constant 0 : index
    %c0_334 = arith.constant 0 : index
    %331 = vector.load %arg28[%c0_333, %c0_334] : memref<27x52xf32, #tpu.memory_space<vmem>>, vector<20x52xf32>
    %332 = arith.truncf %331 : vector<20x52xf32> to vector<20x52xbf16>
    %c0_335 = arith.constant 0 : index
    %c0_336 = arith.constant 0 : index
    %c0_337 = arith.constant 0 : index
    %333 = vector.load %arg18[%c0_335, %c0_336, %c0_337] : memref<8x52x40xbf16, #tpu.memory_space<vmem>>, vector<1x52x40xbf16>
    %334 = vector.shape_cast %333 : vector<1x52x40xbf16> to vector<52x40xbf16>
    %cst_338 = arith.constant dense<0.000000e+00> : vector<20x40xf32>
    %335 = tpu.matmul %332, %334, %cst_338 {dimension_numbers = #tpu.dot_dimension_numbers<[1], [0], [0], [1], [0, 0, 1, 1], [], []>} : vector<20x52xbf16>, vector<52x40xbf16>, vector<20x40xf32> -> vector<20x40xf32>
    %c1_339 = arith.constant 1 : index
    %c0_340 = arith.constant 0 : index
    %336 = vector.load %arg28[%c1_339, %c0_340] : memref<27x52xf32, #tpu.memory_space<vmem>>, vector<20x52xf32>
    %337 = arith.truncf %336 : vector<20x52xf32> to vector<20x52xbf16>
    %c1_341 = arith.constant 1 : index
    %c0_342 = arith.constant 0 : index
    %c0_343 = arith.constant 0 : index
    %338 = vector.load %arg18[%c1_341, %c0_342, %c0_343] : memref<8x52x40xbf16, #tpu.memory_space<vmem>>, vector<1x52x40xbf16>
    %339 = vector.shape_cast %338 : vector<1x52x40xbf16> to vector<52x40xbf16>
    %cst_344 = arith.constant dense<0.000000e+00> : vector<20x40xf32>
    %340 = tpu.matmul %337, %339, %cst_344 {dimension_numbers = #tpu.dot_dimension_numbers<[1], [0], [0], [1], [0, 0, 1, 1], [], []>} : vector<20x52xbf16>, vector<52x40xbf16>, vector<20x40xf32> -> vector<20x40xf32>
    %341 = arith.addf %335, %340 : vector<20x40xf32>
    %c2_345 = arith.constant 2 : index
    %c0_346 = arith.constant 0 : index
    %342 = vector.load %arg28[%c2_345, %c0_346] : memref<27x52xf32, #tpu.memory_space<vmem>>, vector<20x52xf32>
    %343 = arith.truncf %342 : vector<20x52xf32> to vector<20x52xbf16>
    %c2_347 = arith.constant 2 : index
    %c0_348 = arith.constant 0 : index
    %c0_349 = arith.constant 0 : index
    %344 = vector.load %arg18[%c2_347, %c0_348, %c0_349] : memref<8x52x40xbf16, #tpu.memory_space<vmem>>, vector<1x52x40xbf16>
    %345 = vector.shape_cast %344 : vector<1x52x40xbf16> to vector<52x40xbf16>
    %cst_350 = arith.constant dense<0.000000e+00> : vector<20x40xf32>
    %346 = tpu.matmul %343, %345, %cst_350 {dimension_numbers = #tpu.dot_dimension_numbers<[1], [0], [0], [1], [0, 0, 1, 1], [], []>} : vector<20x52xbf16>, vector<52x40xbf16>, vector<20x40xf32> -> vector<20x40xf32>
    %347 = arith.addf %341, %346 : vector<20x40xf32>
    %c3_351 = arith.constant 3 : index
    %c0_352 = arith.constant 0 : index
    %348 = vector.load %arg28[%c3_351, %c0_352] : memref<27x52xf32, #tpu.memory_space<vmem>>, vector<20x52xf32>
    %349 = arith.truncf %348 : vector<20x52xf32> to vector<20x52xbf16>
    %c3_353 = arith.constant 3 : index
    %c0_354 = arith.constant 0 : index
    %c0_355 = arith.constant 0 : index
    %350 = vector.load %arg18[%c3_353, %c0_354, %c0_355] : memref<8x52x40xbf16, #tpu.memory_space<vmem>>, vector<1x52x40xbf16>
    %351 = vector.shape_cast %350 : vector<1x52x40xbf16> to vector<52x40xbf16>
    %cst_356 = arith.constant dense<0.000000e+00> : vector<20x40xf32>
    %352 = tpu.matmul %349, %351, %cst_356 {dimension_numbers = #tpu.dot_dimension_numbers<[1], [0], [0], [1], [0, 0, 1, 1], [], []>} : vector<20x52xbf16>, vector<52x40xbf16>, vector<20x40xf32> -> vector<20x40xf32>
    %353 = arith.addf %347, %352 : vector<20x40xf32>
    %c4_357 = arith.constant 4 : index
    %c0_358 = arith.constant 0 : index
    %354 = vector.load %arg28[%c4_357, %c0_358] : memref<27x52xf32, #tpu.memory_space<vmem>>, vector<20x52xf32>
    %355 = arith.truncf %354 : vector<20x52xf32> to vector<20x52xbf16>
    %c4_359 = arith.constant 4 : index
    %c0_360 = arith.constant 0 : index
    %c0_361 = arith.constant 0 : index
    %356 = vector.load %arg18[%c4_359, %c0_360, %c0_361] : memref<8x52x40xbf16, #tpu.memory_space<vmem>>, vector<1x52x40xbf16>
    %357 = vector.shape_cast %356 : vector<1x52x40xbf16> to vector<52x40xbf16>
    %cst_362 = arith.constant dense<0.000000e+00> : vector<20x40xf32>
    %358 = tpu.matmul %355, %357, %cst_362 {dimension_numbers = #tpu.dot_dimension_numbers<[1], [0], [0], [1], [0, 0, 1, 1], [], []>} : vector<20x52xbf16>, vector<52x40xbf16>, vector<20x40xf32> -> vector<20x40xf32>
    %359 = arith.addf %353, %358 : vector<20x40xf32>
    %c5_363 = arith.constant 5 : index
    %c0_364 = arith.constant 0 : index
    %360 = vector.load %arg28[%c5_363, %c0_364] : memref<27x52xf32, #tpu.memory_space<vmem>>, vector<20x52xf32>
    %361 = arith.truncf %360 : vector<20x52xf32> to vector<20x52xbf16>
    %c5_365 = arith.constant 5 : index
    %c0_366 = arith.constant 0 : index
    %c0_367 = arith.constant 0 : index
    %362 = vector.load %arg18[%c5_365, %c0_366, %c0_367] : memref<8x52x40xbf16, #tpu.memory_space<vmem>>, vector<1x52x40xbf16>
    %363 = vector.shape_cast %362 : vector<1x52x40xbf16> to vector<52x40xbf16>
    %cst_368 = arith.constant dense<0.000000e+00> : vector<20x40xf32>
    %364 = tpu.matmul %361, %363, %cst_368 {dimension_numbers = #tpu.dot_dimension_numbers<[1], [0], [0], [1], [0, 0, 1, 1], [], []>} : vector<20x52xbf16>, vector<52x40xbf16>, vector<20x40xf32> -> vector<20x40xf32>
    %365 = arith.addf %359, %364 : vector<20x40xf32>
    %c6_369 = arith.constant 6 : index
    %c0_370 = arith.constant 0 : index
    %366 = vector.load %arg28[%c6_369, %c0_370] : memref<27x52xf32, #tpu.memory_space<vmem>>, vector<20x52xf32>
    %367 = arith.truncf %366 : vector<20x52xf32> to vector<20x52xbf16>
    %c6_371 = arith.constant 6 : index
    %c0_372 = arith.constant 0 : index
    %c0_373 = arith.constant 0 : index
    %368 = vector.load %arg18[%c6_371, %c0_372, %c0_373] : memref<8x52x40xbf16, #tpu.memory_space<vmem>>, vector<1x52x40xbf16>
    %369 = vector.shape_cast %368 : vector<1x52x40xbf16> to vector<52x40xbf16>
    %cst_374 = arith.constant dense<0.000000e+00> : vector<20x40xf32>
    %370 = tpu.matmul %367, %369, %cst_374 {dimension_numbers = #tpu.dot_dimension_numbers<[1], [0], [0], [1], [0, 0, 1, 1], [], []>} : vector<20x52xbf16>, vector<52x40xbf16>, vector<20x40xf32> -> vector<20x40xf32>
    %371 = arith.addf %365, %370 : vector<20x40xf32>
    %c7_375 = arith.constant 7 : index
    %c0_376 = arith.constant 0 : index
    %372 = vector.load %arg28[%c7_375, %c0_376] : memref<27x52xf32, #tpu.memory_space<vmem>>, vector<20x52xf32>
    %373 = arith.truncf %372 : vector<20x52xf32> to vector<20x52xbf16>
    %c7_377 = arith.constant 7 : index
    %c0_378 = arith.constant 0 : index
    %c0_379 = arith.constant 0 : index
    %374 = vector.load %arg18[%c7_377, %c0_378, %c0_379] : memref<8x52x40xbf16, #tpu.memory_space<vmem>>, vector<1x52x40xbf16>
    %375 = vector.shape_cast %374 : vector<1x52x40xbf16> to vector<52x40xbf16>
    %cst_380 = arith.constant dense<0.000000e+00> : vector<20x40xf32>
    %376 = tpu.matmul %373, %375, %cst_380 {dimension_numbers = #tpu.dot_dimension_numbers<[1], [0], [0], [1], [0, 0, 1, 1], [], []>} : vector<20x52xbf16>, vector<52x40xbf16>, vector<20x40xf32> -> vector<20x40xf32>
    %377 = arith.addf %371, %376 : vector<20x40xf32>
    %c0_381 = arith.constant 0 : index
    %c0_382 = arith.constant 0 : index
    %378 = vector.load %arg19[%c0_381, %c0_382] : memref<1x40xf32, #tpu.memory_space<vmem>>, vector<1x40xf32>
    %379 = vector.broadcast %378 : vector<1x40xf32> to vector<20x40xf32>
    %380 = arith.addf %377, %379 : vector<20x40xf32>
    %cst_383 = arith.constant 0.000000e+00 : f32
    %381 = vector.broadcast %cst_383 : f32 to vector<20x40xf32>
    %382 = arith.maximumf %380, %381 : vector<20x40xf32>
    %cst_384 = arith.constant 0.000000e+00 : f32
    %383 = vector.broadcast %cst_384 : f32 to vector<36x40xf32>
    %c0_385 = arith.constant 0 : index
    %c0_386 = arith.constant 0 : index
    %384 = vector.load %arg29[%c0_385, %c0_386] : memref<36x40xf32, #tpu.memory_space<vmem>>, vector<36x40xf32>
    tpu.vector_store %arg29[%c0_385, %c0_386], %383 {strides = array<i32>} : memref<36x40xf32, #tpu.memory_space<vmem>>, vector<36x40xf32>,
    %c8_387 = arith.constant 8 : index
    %c0_388 = arith.constant 0 : index
    %385 = vector.load %arg29[%c8_387, %c0_388] : memref<36x40xf32, #tpu.memory_space<vmem>>, vector<20x40xf32>
    tpu.vector_store %arg29[%c8_387, %c0_388], %382 {strides = array<i32>} : memref<36x40xf32, #tpu.memory_space<vmem>>, vector<20x40xf32>,
    %c0_389 = arith.constant 0 : index
    %c0_390 = arith.constant 0 : index
    %386 = vector.load %arg29[%c0_389, %c0_390] : memref<36x40xf32, #tpu.memory_space<vmem>>, vector<28x40xf32>
    %387 = arith.truncf %386 : vector<28x40xf32> to vector<28x40xbf16>
    %c0_391 = arith.constant 0 : index
    %c0_392 = arith.constant 0 : index
    %c0_393 = arith.constant 0 : index
    %388 = vector.load %arg20[%c0_391, %c0_392, %c0_393] : memref<9x40x28xbf16, #tpu.memory_space<vmem>>, vector<1x40x28xbf16>
    %389 = vector.shape_cast %388 : vector<1x40x28xbf16> to vector<40x28xbf16>
    %cst_394 = arith.constant dense<0.000000e+00> : vector<28x28xf32>
    %390 = tpu.matmul %387, %389, %cst_394 {dimension_numbers = #tpu.dot_dimension_numbers<[1], [0], [0], [1], [0, 0, 1, 1], [], []>} : vector<28x40xbf16>, vector<40x28xbf16>, vector<28x28xf32> -> vector<28x28xf32>
    %c1_395 = arith.constant 1 : index
    %c0_396 = arith.constant 0 : index
    %391 = vector.load %arg29[%c1_395, %c0_396] : memref<36x40xf32, #tpu.memory_space<vmem>>, vector<28x40xf32>
    %392 = arith.truncf %391 : vector<28x40xf32> to vector<28x40xbf16>
    %c1_397 = arith.constant 1 : index
    %c0_398 = arith.constant 0 : index
    %c0_399 = arith.constant 0 : index
    %393 = vector.load %arg20[%c1_397, %c0_398, %c0_399] : memref<9x40x28xbf16, #tpu.memory_space<vmem>>, vector<1x40x28xbf16>
    %394 = vector.shape_cast %393 : vector<1x40x28xbf16> to vector<40x28xbf16>
    %cst_400 = arith.constant dense<0.000000e+00> : vector<28x28xf32>
    %395 = tpu.matmul %392, %394, %cst_400 {dimension_numbers = #tpu.dot_dimension_numbers<[1], [0], [0], [1], [0, 0, 1, 1], [], []>} : vector<28x40xbf16>, vector<40x28xbf16>, vector<28x28xf32> -> vector<28x28xf32>
    %396 = arith.addf %390, %395 : vector<28x28xf32>
    %c2_401 = arith.constant 2 : index
    %c0_402 = arith.constant 0 : index
    %397 = vector.load %arg29[%c2_401, %c0_402] : memref<36x40xf32, #tpu.memory_space<vmem>>, vector<28x40xf32>
    %398 = arith.truncf %397 : vector<28x40xf32> to vector<28x40xbf16>
    %c2_403 = arith.constant 2 : index
    %c0_404 = arith.constant 0 : index
    %c0_405 = arith.constant 0 : index
    %399 = vector.load %arg20[%c2_403, %c0_404, %c0_405] : memref<9x40x28xbf16, #tpu.memory_space<vmem>>, vector<1x40x28xbf16>
    %400 = vector.shape_cast %399 : vector<1x40x28xbf16> to vector<40x28xbf16>
    %cst_406 = arith.constant dense<0.000000e+00> : vector<28x28xf32>
    %401 = tpu.matmul %398, %400, %cst_406 {dimension_numbers = #tpu.dot_dimension_numbers<[1], [0], [0], [1], [0, 0, 1, 1], [], []>} : vector<28x40xbf16>, vector<40x28xbf16>, vector<28x28xf32> -> vector<28x28xf32>
    %402 = arith.addf %396, %401 : vector<28x28xf32>
    %c3_407 = arith.constant 3 : index
    %c0_408 = arith.constant 0 : index
    %403 = vector.load %arg29[%c3_407, %c0_408] : memref<36x40xf32, #tpu.memory_space<vmem>>, vector<28x40xf32>
    %404 = arith.truncf %403 : vector<28x40xf32> to vector<28x40xbf16>
    %c3_409 = arith.constant 3 : index
    %c0_410 = arith.constant 0 : index
    %c0_411 = arith.constant 0 : index
    %405 = vector.load %arg20[%c3_409, %c0_410, %c0_411] : memref<9x40x28xbf16, #tpu.memory_space<vmem>>, vector<1x40x28xbf16>
    %406 = vector.shape_cast %405 : vector<1x40x28xbf16> to vector<40x28xbf16>
    %cst_412 = arith.constant dense<0.000000e+00> : vector<28x28xf32>
    %407 = tpu.matmul %404, %406, %cst_412 {dimension_numbers = #tpu.dot_dimension_numbers<[1], [0], [0], [1], [0, 0, 1, 1], [], []>} : vector<28x40xbf16>, vector<40x28xbf16>, vector<28x28xf32> -> vector<28x28xf32>
    %408 = arith.addf %402, %407 : vector<28x28xf32>
    %c4_413 = arith.constant 4 : index
    %c0_414 = arith.constant 0 : index
    %409 = vector.load %arg29[%c4_413, %c0_414] : memref<36x40xf32, #tpu.memory_space<vmem>>, vector<28x40xf32>
    %410 = arith.truncf %409 : vector<28x40xf32> to vector<28x40xbf16>
    %c4_415 = arith.constant 4 : index
    %c0_416 = arith.constant 0 : index
    %c0_417 = arith.constant 0 : index
    %411 = vector.load %arg20[%c4_415, %c0_416, %c0_417] : memref<9x40x28xbf16, #tpu.memory_space<vmem>>, vector<1x40x28xbf16>
    %412 = vector.shape_cast %411 : vector<1x40x28xbf16> to vector<40x28xbf16>
    %cst_418 = arith.constant dense<0.000000e+00> : vector<28x28xf32>
    %413 = tpu.matmul %410, %412, %cst_418 {dimension_numbers = #tpu.dot_dimension_numbers<[1], [0], [0], [1], [0, 0, 1, 1], [], []>} : vector<28x40xbf16>, vector<40x28xbf16>, vector<28x28xf32> -> vector<28x28xf32>
    %414 = arith.addf %408, %413 : vector<28x28xf32>
    %c5_419 = arith.constant 5 : index
    %c0_420 = arith.constant 0 : index
    %415 = vector.load %arg29[%c5_419, %c0_420] : memref<36x40xf32, #tpu.memory_space<vmem>>, vector<28x40xf32>
    %416 = arith.truncf %415 : vector<28x40xf32> to vector<28x40xbf16>
    %c5_421 = arith.constant 5 : index
    %c0_422 = arith.constant 0 : index
    %c0_423 = arith.constant 0 : index
    %417 = vector.load %arg20[%c5_421, %c0_422, %c0_423] : memref<9x40x28xbf16, #tpu.memory_space<vmem>>, vector<1x40x28xbf16>
    %418 = vector.shape_cast %417 : vector<1x40x28xbf16> to vector<40x28xbf16>
    %cst_424 = arith.constant dense<0.000000e+00> : vector<28x28xf32>
    %419 = tpu.matmul %416, %418, %cst_424 {dimension_numbers = #tpu.dot_dimension_numbers<[1], [0], [0], [1], [0, 0, 1, 1], [], []>} : vector<28x40xbf16>, vector<40x28xbf16>, vector<28x28xf32> -> vector<28x28xf32>
    %420 = arith.addf %414, %419 : vector<28x28xf32>
    %c6_425 = arith.constant 6 : index
    %c0_426 = arith.constant 0 : index
    %421 = vector.load %arg29[%c6_425, %c0_426] : memref<36x40xf32, #tpu.memory_space<vmem>>, vector<28x40xf32>
    %422 = arith.truncf %421 : vector<28x40xf32> to vector<28x40xbf16>
    %c6_427 = arith.constant 6 : index
    %c0_428 = arith.constant 0 : index
    %c0_429 = arith.constant 0 : index
    %423 = vector.load %arg20[%c6_427, %c0_428, %c0_429] : memref<9x40x28xbf16, #tpu.memory_space<vmem>>, vector<1x40x28xbf16>
    %424 = vector.shape_cast %423 : vector<1x40x28xbf16> to vector<40x28xbf16>
    %cst_430 = arith.constant dense<0.000000e+00> : vector<28x28xf32>
    %425 = tpu.matmul %422, %424, %cst_430 {dimension_numbers = #tpu.dot_dimension_numbers<[1], [0], [0], [1], [0, 0, 1, 1], [], []>} : vector<28x40xbf16>, vector<40x28xbf16>, vector<28x28xf32> -> vector<28x28xf32>
    %426 = arith.addf %420, %425 : vector<28x28xf32>
    %c7_431 = arith.constant 7 : index
    %c0_432 = arith.constant 0 : index
    %427 = vector.load %arg29[%c7_431, %c0_432] : memref<36x40xf32, #tpu.memory_space<vmem>>, vector<28x40xf32>
    %428 = arith.truncf %427 : vector<28x40xf32> to vector<28x40xbf16>
    %c7_433 = arith.constant 7 : index
    %c0_434 = arith.constant 0 : index
    %c0_435 = arith.constant 0 : index
    %429 = vector.load %arg20[%c7_433, %c0_434, %c0_435] : memref<9x40x28xbf16, #tpu.memory_space<vmem>>, vector<1x40x28xbf16>
    %430 = vector.shape_cast %429 : vector<1x40x28xbf16> to vector<40x28xbf16>
    %cst_436 = arith.constant dense<0.000000e+00> : vector<28x28xf32>
    %431 = tpu.matmul %428, %430, %cst_436 {dimension_numbers = #tpu.dot_dimension_numbers<[1], [0], [0], [1], [0, 0, 1, 1], [], []>} : vector<28x40xbf16>, vector<40x28xbf16>, vector<28x28xf32> -> vector<28x28xf32>
    %432 = arith.addf %426, %431 : vector<28x28xf32>
    %c8_437 = arith.constant 8 : index
    %c0_438 = arith.constant 0 : index
    %433 = vector.load %arg29[%c8_437, %c0_438] : memref<36x40xf32, #tpu.memory_space<vmem>>, vector<28x40xf32>
    %434 = arith.truncf %433 : vector<28x40xf32> to vector<28x40xbf16>
    %c8_439 = arith.constant 8 : index
    %c0_440 = arith.constant 0 : index
    %c0_441 = arith.constant 0 : index
    %435 = vector.load %arg20[%c8_439, %c0_440, %c0_441] : memref<9x40x28xbf16, #tpu.memory_space<vmem>>, vector<1x40x28xbf16>
    %436 = vector.shape_cast %435 : vector<1x40x28xbf16> to vector<40x28xbf16>
    %cst_442 = arith.constant dense<0.000000e+00> : vector<28x28xf32>
    %437 = tpu.matmul %434, %436, %cst_442 {dimension_numbers = #tpu.dot_dimension_numbers<[1], [0], [0], [1], [0, 0, 1, 1], [], []>} : vector<28x40xbf16>, vector<40x28xbf16>, vector<28x28xf32> -> vector<28x28xf32>
    %438 = arith.addf %432, %437 : vector<28x28xf32>
    %c0_443 = arith.constant 0 : index
    %c0_444 = arith.constant 0 : index
    %439 = vector.load %arg21[%c0_443, %c0_444] : memref<1x28xf32, #tpu.memory_space<vmem>>, vector<1x28xf32>
    %440 = vector.broadcast %439 : vector<1x28xf32> to vector<28x28xf32>
    %441 = arith.addf %438, %440 : vector<28x28xf32>
    %c0_445 = arith.constant 0 : index
    %c0_446 = arith.constant 0 : index
    %c0_447 = arith.constant 0 : index
    %c0_448 = arith.constant 0 : index
    %442 = vector.load %arg22[%c0_445, %c0_446, %c0_447, %c0_448] : memref<1x1x28x28xf32, #tpu.memory_space<vmem>>, vector<1x1x28x28xf32>
    %443 = vector.shape_cast %442 : vector<1x1x28x28xf32> to vector<28x28xf32>
    %444 = vector.shape_cast %441 : vector<28x28xf32> to vector<1x1x28x28xf32>
    tpu.vector_store %arg22[%c0_445, %c0_446, %c0_447, %c0_448], %444 {strides = array<i32>} : memref<1x1x28x28xf32, #tpu.memory_space<vmem>>, vector<1x1x28x28xf32>,
    return
  }
  func.func @transform_0(%arg0: i32) -> (i32, i32, i32, i32) {
    %c0_i32 = arith.constant 0 : i32
    %c0_i32_0 = arith.constant 0 : i32
    %c0_i32_1 = arith.constant 0 : i32
    %c0_i32_2 = arith.constant 0 : i32
    return %arg0, %c0_i32, %c0_i32_0, %c0_i32_1 : i32, i32, i32, i32
  }
  func.func @transform_1(%arg0: i32) -> (i32, i32, i32) {
    %c0_i32 = arith.constant 0 : i32
    %c0_i32_0 = arith.constant 0 : i32
    %c0_i32_1 = arith.constant 0 : i32
    %c0_i32_2 = arith.constant 0 : i32
    return %c0_i32, %c0_i32_0, %c0_i32_1 : i32, i32, i32
  }
  func.func @transform_2(%arg0: i32) -> (i32, i32) {
    %c0_i32 = arith.constant 0 : i32
    %c0_i32_0 = arith.constant 0 : i32
    %c0_i32_1 = arith.constant 0 : i32
    return %c0_i32, %c0_i32_0 : i32, i32
  }
  func.func @transform_3(%arg0: i32) -> (i32, i32, i32) {
    %c0_i32 = arith.constant 0 : i32
    %c0_i32_0 = arith.constant 0 : i32
    %c0_i32_1 = arith.constant 0 : i32
    %c0_i32_2 = arith.constant 0 : i32
    return %c0_i32, %c0_i32_0, %c0_i32_1 : i32, i32, i32
  }
  func.func @transform_4(%arg0: i32) -> (i32, i32) {
    %c0_i32 = arith.constant 0 : i32
    %c0_i32_0 = arith.constant 0 : i32
    %c0_i32_1 = arith.constant 0 : i32
    return %c0_i32, %c0_i32_0 : i32, i32
  }
  func.func @transform_5(%arg0: i32) -> (i32, i32, i32) {
    %c0_i32 = arith.constant 0 : i32
    %c0_i32_0 = arith.constant 0 : i32
    %c0_i32_1 = arith.constant 0 : i32
    %c0_i32_2 = arith.constant 0 : i32
    return %c0_i32, %c0_i32_0, %c0_i32_1 : i32, i32, i32
  }
  func.func @transform_6(%arg0: i32) -> (i32, i32) {
    %c0_i32 = arith.constant 0 : i32
    %c0_i32_0 = arith.constant 0 : i32
    %c0_i32_1 = arith.constant 0 : i32
    return %c0_i32, %c0_i32_0 : i32, i32
  }
  func.func @transform_7(%arg0: i32) -> (i32, i32, i32) {
    %c0_i32 = arith.constant 0 : i32
    %c0_i32_0 = arith.constant 0 : i32
    %c0_i32_1 = arith.constant 0 : i32
    %c0_i32_2 = arith.constant 0 : i32
    return %c0_i32, %c0_i32_0, %c0_i32_1 : i32, i32, i32
  }
  func.func @transform_8(%arg0: i32) -> (i32, i32) {
    %c0_i32 = arith.constant 0 : i32
    %c0_i32_0 = arith.constant 0 : i32
    %c0_i32_1 = arith.constant 0 : i32
    return %c0_i32, %c0_i32_0 : i32, i32
  }
  func.func @transform_9(%arg0: i32) -> (i32, i32, i32) {
    %c0_i32 = arith.constant 0 : i32
    %c0_i32_0 = arith.constant 0 : i32
    %c0_i32_1 = arith.constant 0 : i32
    %c0_i32_2 = arith.constant 0 : i32
    return %c0_i32, %c0_i32_0, %c0_i32_1 : i32, i32, i32
  }
  func.func @transform_10(%arg0: i32) -> (i32, i32) {
    %c0_i32 = arith.constant 0 : i32
    %c0_i32_0 = arith.constant 0 : i32
    %c0_i32_1 = arith.constant 0 : i32
    return %c0_i32, %c0_i32_0 : i32, i32
  }
  func.func @transform_11(%arg0: i32) -> (i32, i32) {
    %c0_i32 = arith.constant 0 : i32
    %c0_i32_0 = arith.constant 0 : i32
    %c0_i32_1 = arith.constant 0 : i32
    return %c0_i32, %c0_i32_0 : i32, i32
  }
  func.func @transform_12(%arg0: i32) -> (i32, i32) {
    %c0_i32 = arith.constant 0 : i32
    %c0_i32_0 = arith.constant 0 : i32
    %c0_i32_1 = arith.constant 0 : i32
    return %c0_i32, %c0_i32_0 : i32, i32
  }
  func.func @transform_13(%arg0: i32) -> (i32, i32, i32) {
    %c0_i32 = arith.constant 0 : i32
    %c0_i32_0 = arith.constant 0 : i32
    %c0_i32_1 = arith.constant 0 : i32
    %c0_i32_2 = arith.constant 0 : i32
    return %c0_i32, %c0_i32_0, %c0_i32_1 : i32, i32, i32
  }
  func.func @transform_14(%arg0: i32) -> (i32, i32) {
    %c0_i32 = arith.constant 0 : i32
    %c0_i32_0 = arith.constant 0 : i32
    %c0_i32_1 = arith.constant 0 : i32
    return %c0_i32, %c0_i32_0 : i32, i32
  }
  func.func @transform_15(%arg0: i32) -> (i32, i32, i32) {
    %c0_i32 = arith.constant 0 : i32
    %c0_i32_0 = arith.constant 0 : i32
    %c0_i32_1 = arith.constant 0 : i32
    %c0_i32_2 = arith.constant 0 : i32
    return %c0_i32, %c0_i32_0, %c0_i32_1 : i32, i32, i32
  }
  func.func @transform_16(%arg0: i32) -> (i32, i32) {
    %c0_i32 = arith.constant 0 : i32
    %c0_i32_0 = arith.constant 0 : i32
    %c0_i32_1 = arith.constant 0 : i32
    return %c0_i32, %c0_i32_0 : i32, i32
  }
  func.func @transform_17(%arg0: i32) -> (i32, i32, i32) {
    %c0_i32 = arith.constant 0 : i32
    %c0_i32_0 = arith.constant 0 : i32
    %c0_i32_1 = arith.constant 0 : i32
    %c0_i32_2 = arith.constant 0 : i32
    return %c0_i32, %c0_i32_0, %c0_i32_1 : i32, i32, i32
  }
  func.func @transform_18(%arg0: i32) -> (i32, i32) {
    %c0_i32 = arith.constant 0 : i32
    %c0_i32_0 = arith.constant 0 : i32
    %c0_i32_1 = arith.constant 0 : i32
    return %c0_i32, %c0_i32_0 : i32, i32
  }
  func.func @transform_19(%arg0: i32) -> (i32, i32, i32) {
    %c0_i32 = arith.constant 0 : i32
    %c0_i32_0 = arith.constant 0 : i32
    %c0_i32_1 = arith.constant 0 : i32
    %c0_i32_2 = arith.constant 0 : i32
    return %c0_i32, %c0_i32_0, %c0_i32_1 : i32, i32, i32
  }
  func.func @transform_20(%arg0: i32) -> (i32, i32) {
    %c0_i32 = arith.constant 0 : i32
    %c0_i32_0 = arith.constant 0 : i32
    %c0_i32_1 = arith.constant 0 : i32
    return %c0_i32, %c0_i32_0 : i32, i32
  }
  func.func @transform_21(%arg0: i32) -> (i32, i32, i32, i32) {
    %c0_i32 = arith.constant 0 : i32
    %c0_i32_0 = arith.constant 0 : i32
    %c0_i32_1 = arith.constant 0 : i32
    %c0_i32_2 = arith.constant 0 : i32
    return %arg0, %c0_i32, %c0_i32_0, %c0_i32_1 : i32, i32, i32, i32
  }
}

</mosaic_0001>

<llo_original>
// kernel: tile.43
$region0: #{tile.43}
  #allocation0 [shape = 's32[1]{0}', space=sflag, size = 0x4, scoped, tag = 'scoped memory for tile.43']
  %s0 = inlined_call_operand.vmem [shape: f32[4], index: 0, kind: input, shape index: {}]
  %s1 = inlined_call_operand.vmem [shape: f32[20,4], index: 1, kind: output, shape index: {}]
  // Predicated region
  $region2: #{tile.43} parent=0 // pred_check
    _
  $region3: #{tile.43} parent=0 // pred_check_branch
    %3 = sbr.rel (0) target = $region5
  $region4: #{tile.43} parent=0 // pred_region
    _
  $region5: #{tile.43} parent=0 // pred_fallthru
    _
  %v4 = vld [vmem:[%s0] ss:$0 sm:$0xff]
  %5 = vst [vmem:[%s1] sm:$0xff] %v4
  %s6 = scalar_lea.vmem %s1, 8
  %7 = vst [vmem:[%s6] sm:$0xff] %v4
  %s8 = scalar_lea.vmem %s1, 16
  %9 = vst [vmem:[%s8] sm:$0xff] %v4

// kernel: tile.44
$region0: #{tile.44}
  %s0 = inlined_call_operand.vmem [shape: f32[20,4], index: 0, kind: input, shape index: {}]
  %s1 = inlined_call_operand.vmem [shape: f32[1,80], index: 1, kind: output, shape index: {}]
  $region1: #{tile.44} parent=0
    #allocation0 [shape = 'u8[4096]{0}', space=vmem, size = 0x1000, scoped, tag = 'scoped mem for output reshape']
    %v2 = vld [vmem:[%s0] sm:$0x1]
    %vm3 = vcmask 31744
    %4 = vst.msk [vmem:[#allocation0] sm:$0x1] %vm3, %v2
    %s5 = scalar_lea.vmem %s0, 19
    %v6 = vld [vmem:[%s5] sm:$0x1]
    %7 = vrot.lane.b32.xlu0 %v6, 76
    %v8 = vpop.permute.xlu0 %7
    %vm9 = vcmask 654944
    %10 = vst.msk [vmem:[#allocation0] sm:$0x1] %vm9, %v8
    %s11 = scalar_lea.vmem %s0, 18
    %v12 = vld [vmem:[%s11] sm:$0x1]
    %13 = vrot.lane.b32.xlu0 %v12, 72
    %v14 = vpop.permute.xlu0 %13
    %vm15 = vcmask 622144
    %16 = vst.msk [vmem:[#allocation0] sm:$0x1] %vm15, %v14
    %s17 = scalar_lea.vmem %s0, 17
    %v18 = vld [vmem:[%s17] sm:$0x1]
    %19 = vrot.lane.b32.xlu0 %v18, 68
    %v20 = vpop.permute.xlu0 %19
    %vm21 = vcmask 589344
    %22 = vst.msk [vmem:[#allocation0] sm:$0x1] %vm21, %v20
    %s23 = scalar_lea.vmem %s0, 16
    %v24 = vld [vmem:[%s23] sm:$0x1]
    %25 = vrot.lane.b32.xlu0 %v24, 64
    %v26 = vpop.permute.xlu0 %25
    %vm27 = vcmask 556544
    %28 = vst.msk [vmem:[#allocation0] sm:$0x1] %vm27, %v26
    %s29 = scalar_lea.vmem %s0, 15
    %v30 = vld [vmem:[%s29] sm:$0x1]
    %31 = vrot.lane.b32.xlu0 %v30, 60
    %v32 = vpop.permute.xlu0 %31
    %vm33 = vcmask 523744
    %34 = vst.msk [vmem:[#allocation0] sm:$0x1] %vm33, %v32
    %s35 = scalar_lea.vmem %s0, 14
    %v36 = vld [vmem:[%s35] sm:$0x1]
    %37 = vrot.lane.b32.xlu0 %v36, 56
    %v38 = vpop.permute.xlu0 %37
    %vm39 = vcmask 490944
    %40 = vst.msk [vmem:[#allocation0] sm:$0x1] %vm39, %v38
    %s41 = scalar_lea.vmem %s0, 13
    %v42 = vld [vmem:[%s41] sm:$0x1]
    %43 = vrot.lane.b32.xlu0 %v42, 52
    %v44 = vpop.permute.xlu0 %43
    %vm45 = vcmask 458144
    %46 = vst.msk [vmem:[#allocation0] sm:$0x1] %vm45, %v44
    %s47 = scalar_lea.vmem %s0, 12
    %v48 = vld [vmem:[%s47] sm:$0x1]
    %49 = vrot.lane.b32.xlu0 %v48, 48
    %v50 = vpop.permute.xlu0 %49
    %vm51 = vcmask 425344
    %52 = vst.msk [vmem:[#allocation0] sm:$0x1] %vm51, %v50
    %s53 = scalar_lea.vmem %s0, 11
    %v54 = vld [vmem:[%s53] sm:$0x1]
    %55 = vrot.lane.b32.xlu0 %v54, 44
    %v56 = vpop.permute.xlu0 %55
    %vm57 = vcmask 392544
    %58 = vst.msk [vmem:[#allocation0] sm:$0x1] %vm57, %v56
    %s59 = scalar_lea.vmem %s0, 10
    %v60 = vld [vmem:[%s59] sm:$0x1]
    %61 = vrot.lane.b32.xlu0 %v60, 40
    %v62 = vpop.permute.xlu0 %61
    %vm63 = vcmask 359744
    %64 = vst.msk [vmem:[#allocation0] sm:$0x1] %vm63, %v62
    %s65 = scalar_lea.vmem %s0, 9
    %v66 = vld [vmem:[%s65] sm:$0x1]
    %67 = vrot.lane.b32.xlu0 %v66, 36
    %v68 = vpop.permute.xlu0 %67
    %vm69 = vcmask 326944
    %70 = vst.msk [vmem:[#allocation0] sm:$0x1] %vm69, %v68
    %s71 = scalar_lea.vmem %s0, 8
    %v72 = vld [vmem:[%s71] sm:$0x1]
    %73 = vrot.lane.b32.xlu0 %v72, 32
    %v74 = vpop.permute.xlu0 %73
    %vm75 = vcmask 294144
    %76 = vst.msk [vmem:[#allocation0] sm:$0x1] %vm75, %v74
    %s77 = scalar_lea.vmem %s0, 7
    %v78 = vld [vmem:[%s77] sm:$0x1]
    %79 = vrot.lane.b32.xlu0 %v78, 28
    %v80 = vpop.permute.xlu0 %79
    %vm81 = vcmask 261344
    %82 = vst.msk [vmem:[#allocation0] sm:$0x1] %vm81, %v80
    %s83 = scalar_lea.vmem %s0, 6
    %v84 = vld [vmem:[%s83] sm:$0x1]
    %85 = vrot.lane.b32.xlu0 %v84, 24
    %v86 = vpop.permute.xlu0 %85
    %vm87 = vcmask 228544
    %88 = vst.msk [vmem:[#allocation0] sm:$0x1] %vm87, %v86
    %s89 = scalar_lea.vmem %s0, 5
    %v90 = vld [vmem:[%s89] sm:$0x1]
    %91 = vrot.lane.b32.xlu0 %v90, 20
    %v92 = vpop.permute.xlu0 %91
    %vm93 = vcmask 195744
    %94 = vst.msk [vmem:[#allocation0] sm:$0x1] %vm93, %v92
    %s95 = scalar_lea.vmem %s0, 4
    %v96 = vld [vmem:[%s95] sm:$0x1]
    %97 = vrot.lane.b32.xlu0 %v96, 16
    %v98 = vpop.permute.xlu0 %97
    %vm99 = vcmask 162944
    %100 = vst.msk [vmem:[#allocation0] sm:$0x1] %vm99, %v98
    %s101 = scalar_lea.vmem %s0, 3
    %v102 = vld [vmem:[%s101] sm:$0x1]
    %103 = vrot.lane.b32.xlu0 %v102, 12
    %v104 = vpop.permute.xlu0 %103
    %vm105 = vcmask 130144
    %106 = vst.msk [vmem:[#allocation0] sm:$0x1] %vm105, %v104
    %s107 = scalar_lea.vmem %s0, 2
    %v108 = vld [vmem:[%s107] sm:$0x1]
    %109 = vrot.lane.b32.xlu0 %v108, 8
    %v110 = vpop.permute.xlu0 %109
    %vm111 = vcmask 97344
    %112 = vst.msk [vmem:[#allocation0] sm:$0x1] %vm111, %v110
    %s113 = scalar_lea.vmem %s0, 1
    %v114 = vld [vmem:[%s113] sm:$0x1]
    %115 = vrot.lane.b32.xlu0 %v114, 4
    %v116 = vpop.permute.xlu0 %115
    %vm117 = vcmask 64544
    %118 = vst.msk [vmem:[#allocation0] sm:$0x1] %vm117, %v116
    %s120 = sshll.u32 1, 1
    %s121 = ssub.s32 %s120, 1
    %v123 = vld [vmem:[#allocation0] sm:%s121]
    %s124 = sshll.u32 1, 1
    %s125 = ssub.s32 %s124, 1
    %126 = vst [vmem:[%s1] sm:%s125] %v123

// kernel: tile.73
$region0: #{tile.73}
  #allocation0 [shape = 's32[1]{0}', space=sflag, size = 0x4, scoped, tag = 'scoped memory for tile.73']
  %s0 = inlined_call_operand.vmem [shape: f32[2], index: 0, kind: input, shape index: {}]
  %s1 = inlined_call_operand.vmem [shape: f32[20,2], index: 1, kind: output, shape index: {}]
  // Predicated region
  $region2: #{tile.73} parent=0 // pred_check
    _
  $region3: #{tile.73} parent=0 // pred_check_branch
    %3 = sbr.rel (0) target = $region5
  $region4: #{tile.73} parent=0 // pred_region
    _
  $region5: #{tile.73} parent=0 // pred_fallthru
    _
  %v4 = vld [vmem:[%s0] ss:$0 sm:$0xff]
  %5 = vst [vmem:[%s1] sm:$0xff] %v4
  %s6 = scalar_lea.vmem %s1, 8
  %7 = vst [vmem:[%s6] sm:$0xff] %v4
  %s8 = scalar_lea.vmem %s1, 16
  %9 = vst [vmem:[%s8] sm:$0xff] %v4

// kernel: tile.74
$region0: #{tile.74}
  %s0 = inlined_call_operand.vmem [shape: f32[20,2], index: 0, kind: input, shape index: {}]
  %s1 = inlined_call_operand.vmem [shape: f32[1,40], index: 1, kind: output, shape index: {}]
  $region1: #{tile.74} parent=0
    #allocation0 [shape = 'u8[4096]{0}', space=vmem, size = 0x1000, scoped, tag = 'scoped mem for output reshape']
    %v2 = vld [vmem:[%s0] sm:$0x1]
    %vm3 = vcmask 15360
    %4 = vst.msk [vmem:[#allocation0] sm:$0x1] %vm3, %v2
    %s5 = scalar_lea.vmem %s0, 19
    %v6 = vld [vmem:[%s5] sm:$0x1]
    %7 = vrot.lane.b32.xlu0 %v6, 38
    %v8 = vpop.permute.xlu0 %7
    %vm9 = vcmask 326960
    %10 = vst.msk [vmem:[#allocation0] sm:$0x1] %vm9, %v8
    %s11 = scalar_lea.vmem %s0, 18
    %v12 = vld [vmem:[%s11] sm:$0x1]
    %13 = vrot.lane.b32.xlu0 %v12, 36
    %v14 = vpop.permute.xlu0 %13
    %vm15 = vcmask 310560
    %16 = vst.msk [vmem:[#allocation0] sm:$0x1] %vm15, %v14
    %s17 = scalar_lea.vmem %s0, 17
    %v18 = vld [vmem:[%s17] sm:$0x1]
    %19 = vrot.lane.b32.xlu0 %v18, 34
    %v20 = vpop.permute.xlu0 %19
    %vm21 = vcmask 294160
    %22 = vst.msk [vmem:[#allocation0] sm:$0x1] %vm21, %v20
    %s23 = scalar_lea.vmem %s0, 16
    %v24 = vld [vmem:[%s23] sm:$0x1]
    %25 = vrot.lane.b32.xlu0 %v24, 32
    %v26 = vpop.permute.xlu0 %25
    %vm27 = vcmask 277760
    %28 = vst.msk [vmem:[#allocation0] sm:$0x1] %vm27, %v26
    %s29 = scalar_lea.vmem %s0, 15
    %v30 = vld [vmem:[%s29] sm:$0x1]
    %31 = vrot.lane.b32.xlu0 %v30, 30
    %v32 = vpop.permute.xlu0 %31
    %vm33 = vcmask 261360
    %34 = vst.msk [vmem:[#allocation0] sm:$0x1] %vm33, %v32
    %s35 = scalar_lea.vmem %s0, 14
    %v36 = vld [vmem:[%s35] sm:$0x1]
    %37 = vrot.lane.b32.xlu0 %v36, 28
    %v38 = vpop.permute.xlu0 %37
    %vm39 = vcmask 244960
    %40 = vst.msk [vmem:[#allocation0] sm:$0x1] %vm39, %v38
    %s41 = scalar_lea.vmem %s0, 13
    %v42 = vld [vmem:[%s41] sm:$0x1]
    %43 = vrot.lane.b32.xlu0 %v42, 26
    %v44 = vpop.permute.xlu0 %43
    %vm45 = vcmask 228560
    %46 = vst.msk [vmem:[#allocation0] sm:$0x1] %vm45, %v44
    %s47 = scalar_lea.vmem %s0, 12
    %v48 = vld [vmem:[%s47] sm:$0x1]
    %49 = vrot.lane.b32.xlu0 %v48, 24
    %v50 = vpop.permute.xlu0 %49
    %vm51 = vcmask 212160
    %52 = vst.msk [vmem:[#allocation0] sm:$0x1] %vm51, %v50
    %s53 = scalar_lea.vmem %s0, 11
    %v54 = vld [vmem:[%s53] sm:$0x1]
    %55 = vrot.lane.b32.xlu0 %v54, 22
    %v56 = vpop.permute.xlu0 %55
    %vm57 = vcmask 195760
    %58 = vst.msk [vmem:[#allocation0] sm:$0x1] %vm57, %v56
    %s59 = scalar_lea.vmem %s0, 10
    %v60 = vld [vmem:[%s59] sm:$0x1]
    %61 = vrot.lane.b32.xlu0 %v60, 20
    %v62 = vpop.permute.xlu0 %61
    %vm63 = vcmask 179360
    %64 = vst.msk [vmem:[#allocation0] sm:$0x1] %vm63, %v62
    %s65 = scalar_lea.vmem %s0, 9
    %v66 = vld [vmem:[%s65] sm:$0x1]
    %67 = vrot.lane.b32.xlu0 %v66, 18
    %v68 = vpop.permute.xlu0 %67
    %vm69 = vcmask 162960
    %70 = vst.msk [vmem:[#allocation0] sm:$0x1] %vm69, %v68
    %s71 = scalar_lea.vmem %s0, 8
    %v72 = vld [vmem:[%s71] sm:$0x1]
    %73 = vrot.lane.b32.xlu0 %v72, 16
    %v74 = vpop.permute.xlu0 %73
    %vm75 = vcmask 146560
    %76 = vst.msk [vmem:[#allocation0] sm:$0x1] %vm75, %v74
    %s77 = scalar_lea.vmem %s0, 7
    %v78 = vld [vmem:[%s77] sm:$0x1]
    %79 = vrot.lane.b32.xlu0 %v78, 14
    %v80 = vpop.permute.xlu0 %79
    %vm81 = vcmask 130160
    %82 = vst.msk [vmem:[#allocation0] sm:$0x1] %vm81, %v80
    %s83 = scalar_lea.vmem %s0, 6
    %v84 = vld [vmem:[%s83] sm:$0x1]
    %85 = vrot.lane.b32.xlu0 %v84, 12
    %v86 = vpop.permute.xlu0 %85
    %vm87 = vcmask 113760
    %88 = vst.msk [vmem:[#allocation0] sm:$0x1] %vm87, %v86
    %s89 = scalar_lea.vmem %s0, 5
    %v90 = vld [vmem:[%s89] sm:$0x1]
    %91 = vrot.lane.b32.xlu0 %v90, 10
    %v92 = vpop.permute.xlu0 %91
    %vm93 = vcmask 97360
    %94 = vst.msk [vmem:[#allocation0] sm:$0x1] %vm93, %v92
    %s95 = scalar_lea.vmem %s0, 4
    %v96 = vld [vmem:[%s95] sm:$0x1]
    %97 = vrot.lane.b32.xlu0 %v96, 8
    %v98 = vpop.permute.xlu0 %97
    %vm99 = vcmask 80960
    %100 = vst.msk [vmem:[#allocation0] sm:$0x1] %vm99, %v98
    %s101 = scalar_lea.vmem %s0, 3
    %v102 = vld [vmem:[%s101] sm:$0x1]
    %103 = vrot.lane.b32.xlu0 %v102, 6
    %v104 = vpop.permute.xlu0 %103
    %vm105 = vcmask 64560
    %106 = vst.msk [vmem:[#allocation0] sm:$0x1] %vm105, %v104
    %s107 = scalar_lea.vmem %s0, 2
    %v108 = vld [vmem:[%s107] sm:$0x1]
    %109 = vrot.lane.b32.xlu0 %v108, 4
    %v110 = vpop.permute.xlu0 %109
    %vm111 = vcmask 48160
    %112 = vst.msk [vmem:[#allocation0] sm:$0x1] %vm111, %v110
    %s113 = scalar_lea.vmem %s0, 1
    %v114 = vld [vmem:[%s113] sm:$0x1]
    %115 = vrot.lane.b32.xlu0 %v114, 2
    %v116 = vpop.permute.xlu0 %115
    %vm117 = vcmask 31760
    %118 = vst.msk [vmem:[#allocation0] sm:$0x1] %vm117, %v116
    %s120 = sshll.u32 1, 1
    %s121 = ssub.s32 %s120, 1
    %v123 = vld [vmem:[#allocation0] sm:%s121]
    %s124 = sshll.u32 1, 1
    %s125 = ssub.s32 %s124, 1
    %126 = vst [vmem:[%s1] sm:%s125] %v123

// kernel: tile.48
$region0: #{tile.48}
  #allocation0 [shape = 's32[1]{0}', space=sflag, size = 0x4, scoped, tag = 'scoped memory for tile.48']
  %s0 = inlined_call_operand.vmem [shape: f32[8], index: 0, kind: input, shape index: {}]
  %s1 = inlined_call_operand.vmem [shape: f32[12,8], index: 1, kind: output, shape index: {}]
  // Predicated region
  $region2: #{tile.48} parent=0 // pred_check
    _
  $region3: #{tile.48} parent=0 // pred_check_branch
    %3 = sbr.rel (0) target = $region5
  $region4: #{tile.48} parent=0 // pred_region
    _
  $region5: #{tile.48} parent=0 // pred_fallthru
    _
  %v4 = vld [vmem:[%s0] ss:$0 sm:$0xff]
  %5 = vst [vmem:[%s1] sm:$0xff] %v4
  %s6 = scalar_lea.vmem %s1, 8
  %7 = vst [vmem:[%s6] sm:$0xff] %v4

// kernel: tile.49
$region0: #{tile.49}
  %s0 = inlined_call_operand.vmem [shape: f32[12,8], index: 0, kind: input, shape index: {}]
  %s1 = inlined_call_operand.vmem [shape: f32[1,96], index: 1, kind: output, shape index: {}]
  $region1: #{tile.49} parent=0
    #allocation0 [shape = 'u8[4096]{0}', space=vmem, size = 0x1000, scoped, tag = 'scoped mem for output reshape']
    %v2 = vld [vmem:[%s0] sm:$0x1]
    %vm3 = vcmask 64512
    %4 = vst.msk [vmem:[#allocation0] sm:$0x1] %vm3, %v2
    %s5 = scalar_lea.vmem %s0, 11
    %v6 = vld [vmem:[%s5] sm:$0x1]
    %7 = vrot.lane.b32.xlu0 %v6, 88
    %v8 = vpop.permute.xlu0 %7
    %vm9 = vcmask 786112
    %10 = vst.msk [vmem:[#allocation0] sm:$0x1] %vm9, %v8
    %s11 = scalar_lea.vmem %s0, 10
    %v12 = vld [vmem:[%s11] sm:$0x1]
    %13 = vrot.lane.b32.xlu0 %v12, 80
    %v14 = vpop.permute.xlu0 %13
    %vm15 = vcmask 720512
    %16 = vst.msk [vmem:[#allocation0] sm:$0x1] %vm15, %v14
    %s17 = scalar_lea.vmem %s0, 9
    %v18 = vld [vmem:[%s17] sm:$0x1]
    %19 = vrot.lane.b32.xlu0 %v18, 72
    %v20 = vpop.permute.xlu0 %19
    %vm21 = vcmask 654912
    %22 = vst.msk [vmem:[#allocation0] sm:$0x1] %vm21, %v20
    %s23 = scalar_lea.vmem %s0, 8
    %v24 = vld [vmem:[%s23] sm:$0x1]
    %25 = vrot.lane.b32.xlu0 %v24, 64
    %v26 = vpop.permute.xlu0 %25
    %vm27 = vcmask 589312
    %28 = vst.msk [vmem:[#allocation0] sm:$0x1] %vm27, %v26
    %s29 = scalar_lea.vmem %s0, 7
    %v30 = vld [vmem:[%s29] sm:$0x1]
    %31 = vrot.lane.b32.xlu0 %v30, 56
    %v32 = vpop.permute.xlu0 %31
    %vm33 = vcmask 523712
    %34 = vst.msk [vmem:[#allocation0] sm:$0x1] %vm33, %v32
    %s35 = scalar_lea.vmem %s0, 6
    %v36 = vld [vmem:[%s35] sm:$0x1]
    %37 = vrot.lane.b32.xlu0 %v36, 48
    %v38 = vpop.permute.xlu0 %37
    %vm39 = vcmask 458112
    %40 = vst.msk [vmem:[#allocation0] sm:$0x1] %vm39, %v38
    %s41 = scalar_lea.vmem %s0, 5
    %v42 = vld [vmem:[%s41] sm:$0x1]
    %43 = vrot.lane.b32.xlu0 %v42, 40
    %v44 = vpop.permute.xlu0 %43
    %vm45 = vcmask 392512
    %46 = vst.msk [vmem:[#allocation0] sm:$0x1] %vm45, %v44
    %s47 = scalar_lea.vmem %s0, 4
    %v48 = vld [vmem:[%s47] sm:$0x1]
    %49 = vrot.lane.b32.xlu0 %v48, 32
    %v50 = vpop.permute.xlu0 %49
    %vm51 = vcmask 326912
    %52 = vst.msk [vmem:[#allocation0] sm:$0x1] %vm51, %v50
    %s53 = scalar_lea.vmem %s0, 3
    %v54 = vld [vmem:[%s53] sm:$0x1]
    %55 = vrot.lane.b32.xlu0 %v54, 24
    %v56 = vpop.permute.xlu0 %55
    %vm57 = vcmask 261312
    %58 = vst.msk [vmem:[#allocation0] sm:$0x1] %vm57, %v56
    %s59 = scalar_lea.vmem %s0, 2
    %v60 = vld [vmem:[%s59] sm:$0x1]
    %61 = vrot.lane.b32.xlu0 %v60, 16
    %v62 = vpop.permute.xlu0 %61
    %vm63 = vcmask 195712
    %64 = vst.msk [vmem:[#allocation0] sm:$0x1] %vm63, %v62
    %s65 = scalar_lea.vmem %s0, 1
    %v66 = vld [vmem:[%s65] sm:$0x1]
    %67 = vrot.lane.b32.xlu0 %v66, 8
    %v68 = vpop.permute.xlu0 %67
    %vm69 = vcmask 130112
    %70 = vst.msk [vmem:[#allocation0] sm:$0x1] %vm69, %v68
    %s72 = sshll.u32 1, 1
    %s73 = ssub.s32 %s72, 1
    %v75 = vld [vmem:[#allocation0] sm:%s73]
    %s76 = sshll.u32 1, 1
    %s77 = ssub.s32 %s76, 1
    %78 = vst [vmem:[%s1] sm:%s77] %v75

// kernel: tile.68
$region0: #{tile.68}
  #allocation0 [shape = 's32[1]{0}', space=sflag, size = 0x4, scoped, tag = 'scoped memory for tile.68']
  %s0 = inlined_call_operand.vmem [shape: f32[4], index: 0, kind: input, shape index: {}]
  %s1 = inlined_call_operand.vmem [shape: f32[13,4], index: 1, kind: output, shape index: {}]
  // Predicated region
  $region2: #{tile.68} parent=0 // pred_check
    _
  $region3: #{tile.68} parent=0 // pred_check_branch
    %3 = sbr.rel (0) target = $region5
  $region4: #{tile.68} parent=0 // pred_region
    _
  $region5: #{tile.68} parent=0 // pred_fallthru
    _
  %v4 = vld [vmem:[%s0] ss:$0 sm:$0xff]
  %5 = vst [vmem:[%s1] sm:$0xff] %v4
  %s6 = scalar_lea.vmem %s1, 8
  %7 = vst [vmem:[%s6] sm:$0xff] %v4

// kernel: tile.69
$region0: #{tile.69}
  %s0 = inlined_call_operand.vmem [shape: f32[13,4], index: 0, kind: input, shape index: {}]
  %s1 = inlined_call_operand.vmem [shape: f32[1,52], index: 1, kind: output, shape index: {}]
  $region1: #{tile.69} parent=0
    #allocation0 [shape = 'u8[4096]{0}', space=vmem, size = 0x1000, scoped, tag = 'scoped mem for output reshape']
    %v2 = vld [vmem:[%s0] sm:$0x1]
    %vm3 = vcmask 31744
    %4 = vst.msk [vmem:[#allocation0] sm:$0x1] %vm3, %v2
    %s5 = scalar_lea.vmem %s0, 12
    %v6 = vld [vmem:[%s5] sm:$0x1]
    %7 = vrot.lane.b32.xlu0 %v6, 48
    %v8 = vpop.permute.xlu0 %7
    %vm9 = vcmask 425344
    %10 = vst.msk [vmem:[#allocation0] sm:$0x1] %vm9, %v8
    %s11 = scalar_lea.vmem %s0, 11
    %v12 = vld [vmem:[%s11] sm:$0x1]
    %13 = vrot.lane.b32.xlu0 %v12, 44
    %v14 = vpop.permute.xlu0 %13
    %vm15 = vcmask 392544
    %16 = vst.msk [vmem:[#allocation0] sm:$0x1] %vm15, %v14
    %s17 = scalar_lea.vmem %s0, 10
    %v18 = vld [vmem:[%s17] sm:$0x1]
    %19 = vrot.lane.b32.xlu0 %v18, 40
    %v20 = vpop.permute.xlu0 %19
    %vm21 = vcmask 359744
    %22 = vst.msk [vmem:[#allocation0] sm:$0x1] %vm21, %v20
    %s23 = scalar_lea.vmem %s0, 9
    %v24 = vld [vmem:[%s23] sm:$0x1]
    %25 = vrot.lane.b32.xlu0 %v24, 36
    %v26 = vpop.permute.xlu0 %25
    %vm27 = vcmask 326944
    %28 = vst.msk [vmem:[#allocation0] sm:$0x1] %vm27, %v26
    %s29 = scalar_lea.vmem %s0, 8
    %v30 = vld [vmem:[%s29] sm:$0x1]
    %31 = vrot.lane.b32.xlu0 %v30, 32
    %v32 = vpop.permute.xlu0 %31
    %vm33 = vcmask 294144
    %34 = vst.msk [vmem:[#allocation0] sm:$0x1] %vm33, %v32
    %s35 = scalar_lea.vmem %s0, 7
    %v36 = vld [vmem:[%s35] sm:$0x1]
    %37 = vrot.lane.b32.xlu0 %v36, 28
    %v38 = vpop.permute.xlu0 %37
    %vm39 = vcmask 261344
    %40 = vst.msk [vmem:[#allocation0] sm:$0x1] %vm39, %v38
    %s41 = scalar_lea.vmem %s0, 6
    %v42 = vld [vmem:[%s41] sm:$0x1]
    %43 = vrot.lane.b32.xlu0 %v42, 24
    %v44 = vpop.permute.xlu0 %43
    %vm45 = vcmask 228544
    %46 = vst.msk [vmem:[#allocation0] sm:$0x1] %vm45, %v44
    %s47 = scalar_lea.vmem %s0, 5
    %v48 = vld [vmem:[%s47] sm:$0x1]
    %49 = vrot.lane.b32.xlu0 %v48, 20
    %v50 = vpop.permute.xlu0 %49
    %vm51 = vcmask 195744
    %52 = vst.msk [vmem:[#allocation0] sm:$0x1] %vm51, %v50
    %s53 = scalar_lea.vmem %s0, 4
    %v54 = vld [vmem:[%s53] sm:$0x1]
    %55 = vrot.lane.b32.xlu0 %v54, 16
    %v56 = vpop.permute.xlu0 %55
    %vm57 = vcmask 162944
    %58 = vst.msk [vmem:[#allocation0] sm:$0x1] %vm57, %v56
    %s59 = scalar_lea.vmem %s0, 3
    %v60 = vld [vmem:[%s59] sm:$0x1]
    %61 = vrot.lane.b32.xlu0 %v60, 12
    %v62 = vpop.permute.xlu0 %61
    %vm63 = vcmask 130144
    %64 = vst.msk [vmem:[#allocation0] sm:$0x1] %vm63, %v62
    %s65 = scalar_lea.vmem %s0, 2
    %v66 = vld [vmem:[%s65] sm:$0x1]
    %67 = vrot.lane.b32.xlu0 %v66, 8
    %v68 = vpop.permute.xlu0 %67
    %vm69 = vcmask 97344
    %70 = vst.msk [vmem:[#allocation0] sm:$0x1] %vm69, %v68
    %s71 = scalar_lea.vmem %s0, 1
    %v72 = vld [vmem:[%s71] sm:$0x1]
    %73 = vrot.lane.b32.xlu0 %v72, 4
    %v74 = vpop.permute.xlu0 %73
    %vm75 = vcmask 64544
    %76 = vst.msk [vmem:[#allocation0] sm:$0x1] %vm75, %v74
    %s78 = sshll.u32 1, 1
    %s79 = ssub.s32 %s78, 1
    %v81 = vld [vmem:[#allocation0] sm:%s79]
    %s82 = sshll.u32 1, 1
    %s83 = ssub.s32 %s82, 1
    %84 = vst [vmem:[%s1] sm:%s83] %v81

// kernel: tile.63
$region0: #{tile.63}
  #allocation0 [shape = 's32[1]{0}', space=sflag, size = 0x4, scoped, tag = 'scoped memory for tile.63']
  %s0 = inlined_call_operand.vmem [shape: f32[16], index: 0, kind: input, shape index: {}]
  %s1 = inlined_call_operand.vmem [shape: f32[5,16], index: 1, kind: output, shape index: {}]
  // Predicated region
  $region2: #{tile.63} parent=0 // pred_check
    _
  $region3: #{tile.63} parent=0 // pred_check_branch
    %3 = sbr.rel (0) target = $region5
  $region4: #{tile.63} parent=0 // pred_region
    _
  $region5: #{tile.63} parent=0 // pred_fallthru
    _
  %v4 = vld [vmem:[%s0] ss:$0 sm:$0xff]
  %5 = vst [vmem:[%s1] sm:$0xff] %v4

// kernel: tile.64
$region0: #{tile.64}
  %s0 = inlined_call_operand.vmem [shape: f32[5,16], index: 0, kind: input, shape index: {}]
  %s1 = inlined_call_operand.vmem [shape: f32[1,80], index: 1, kind: output, shape index: {}]
  $region1: #{tile.64} parent=0
    #allocation0 [shape = 'u8[4096]{0}', space=vmem, size = 0x1000, scoped, tag = 'scoped mem for output reshape']
    %v2 = vld [vmem:[%s0] sm:$0x1]
    %vm3 = vcmask 130048
    %4 = vst.msk [vmem:[#allocation0] sm:$0x1] %vm3, %v2
    %s5 = scalar_lea.vmem %s0, 4
    %v6 = vld [vmem:[%s5] sm:$0x1]
    %7 = vrot.lane.b32.xlu0 %v6, 64
    %v8 = vpop.permute.xlu0 %7
    %vm9 = vcmask 654848
    %10 = vst.msk [vmem:[#allocation0] sm:$0x1] %vm9, %v8
    %s11 = scalar_lea.vmem %s0, 3
    %v12 = vld [vmem:[%s11] sm:$0x1]
    %13 = vrot.lane.b32.xlu0 %v12, 48
    %v14 = vpop.permute.xlu0 %13
    %vm15 = vcmask 523648
    %16 = vst.msk [vmem:[#allocation0] sm:$0x1] %vm15, %v14
    %s17 = scalar_lea.vmem %s0, 2
    %v18 = vld [vmem:[%s17] sm:$0x1]
    %19 = vrot.lane.b32.xlu0 %v18, 32
    %v20 = vpop.permute.xlu0 %19
    %vm21 = vcmask 392448
    %22 = vst.msk [vmem:[#allocation0] sm:$0x1] %vm21, %v20
    %s23 = scalar_lea.vmem %s0, 1
    %v24 = vld [vmem:[%s23] sm:$0x1]
    %25 = vrot.lane.b32.xlu0 %v24, 16
    %v26 = vpop.permute.xlu0 %25
    %vm27 = vcmask 261248
    %28 = vst.msk [vmem:[#allocation0] sm:$0x1] %vm27, %v26
    %s30 = sshll.u32 1, 1
    %s31 = ssub.s32 %s30, 1
    %v33 = vld [vmem:[#allocation0] sm:%s31]
    %s34 = sshll.u32 1, 1
    %s35 = ssub.s32 %s34, 1
    %36 = vst [vmem:[%s1] sm:%s35] %v33

// kernel: tile.53
$region0: #{tile.53}
  #allocation0 [shape = 's32[1]{0}', space=sflag, size = 0x4, scoped, tag = 'scoped memory for tile.53']
  %s0 = inlined_call_operand.vmem [shape: f32[16], index: 0, kind: input, shape index: {}]
  %s1 = inlined_call_operand.vmem [shape: f32[4,16], index: 1, kind: output, shape index: {}]
  // Predicated region
  $region2: #{tile.53} parent=0 // pred_check
    _
  $region3: #{tile.53} parent=0 // pred_check_branch
    %3 = sbr.rel (0) target = $region5
  $region4: #{tile.53} parent=0 // pred_region
    _
  $region5: #{tile.53} parent=0 // pred_fallthru
    _
  %v4 = vld [vmem:[%s0] ss:$0 sm:$0xff]
  %5 = vst [vmem:[%s1] sm:$0xf] %v4

// kernel: tile.54
$region0: #{tile.54}
  %s0 = inlined_call_operand.vmem [shape: f32[4,16], index: 0, kind: input, shape index: {}]
  %s1 = inlined_call_operand.vmem [shape: f32[1,64], index: 1, kind: output, shape index: {}]
  $region1: #{tile.54} parent=0
    #allocation0 [shape = 'u8[4096]{0}', space=vmem, size = 0x1000, scoped, tag = 'scoped mem for output reshape']
    #allocation1 [shape = 'u8[4096]{0}', space=vmem, size = 0x1000, scoped, tag = 'scoped mem for input reshape']
    %s3 = sshll.u32 1, 4
    %s4 = ssub.s32 %s3, 1
    %v5 = vld [vmem:[%s0] sm:%s4]
    %6 = vst [vmem:[#allocation1] sm:%s4] %v5
    %v7 = vld [vmem:[#allocation1] sm:$0x1]
    %vm8 = vcmask 130048
    %9 = vst.msk [vmem:[#allocation0] sm:$0x1] %vm8, %v7
    %s10 = scalar_lea.vmem [#allocation1], 3
    %v11 = vld [vmem:[%s10] sm:$0x1]
    %12 = vrot.lane.b32.xlu0 %v11, 48
    %v13 = vpop.permute.xlu0 %12
    %vm14 = vcmask 523648
    %15 = vst.msk [vmem:[#allocation0] sm:$0x1] %vm14, %v13
    %s16 = scalar_lea.vmem [#allocation1], 2
    %v17 = vld [vmem:[%s16] sm:$0x1]
    %18 = vrot.lane.b32.xlu0 %v17, 32
    %v19 = vpop.permute.xlu0 %18
    %vm20 = vcmask 392448
    %21 = vst.msk [vmem:[#allocation0] sm:$0x1] %vm20, %v19
    %s22 = scalar_lea.vmem [#allocation1], 1
    %v23 = vld [vmem:[%s22] sm:$0x1]
    %24 = vrot.lane.b32.xlu0 %v23, 16
    %v25 = vpop.permute.xlu0 %24
    %vm26 = vcmask 261248
    %27 = vst.msk [vmem:[#allocation0] sm:$0x1] %vm26, %v25
    %s29 = sshll.u32 1, 1
    %s30 = ssub.s32 %s29, 1
    %v32 = vld [vmem:[#allocation0] sm:%s30]
    %s33 = sshll.u32 1, 1
    %s34 = ssub.s32 %s33, 1
    %35 = vst [vmem:[%s1] sm:%s34] %v32

// kernel: tile.58
$region0: #{tile.58}
  #allocation0 [shape = 's32[1]{0}', space=sflag, size = 0x4, scoped, tag = 'scoped memory for tile.58']
  %s0 = inlined_call_operand.vmem [shape: f32[32], index: 0, kind: input, shape index: {}]
  %s1 = inlined_call_operand.vmem [shape: f32[2,32], index: 1, kind: output, shape index: {}]
  // Predicated region
  $region2: #{tile.58} parent=0 // pred_check
    _
  $region3: #{tile.58} parent=0 // pred_check_branch
    %3 = sbr.rel (0) target = $region5
  $region4: #{tile.58} parent=0 // pred_region
    _
  $region5: #{tile.58} parent=0 // pred_fallthru
    _
  %v4 = vld [vmem:[%s0] ss:$0 sm:$0xff]
  %5 = vst [vmem:[%s1] sm:$0x3] %v4

// kernel: tile.59
$region0: #{tile.59}
  %s0 = inlined_call_operand.vmem [shape: f32[2,32], index: 0, kind: input, shape index: {}]
  %s1 = inlined_call_operand.vmem [shape: f32[1,64], index: 1, kind: output, shape index: {}]
  $region1: #{tile.59} parent=0
    #allocation0 [shape = 'u8[4096]{0}', space=vmem, size = 0x1000, scoped, tag = 'scoped mem for output reshape']
    #allocation1 [shape = 'u8[4096]{0}', space=vmem, size = 0x1000, scoped, tag = 'scoped mem for input reshape']
    %s3 = sshll.u32 1, 2
    %s4 = ssub.s32 %s3, 1
    %v5 = vld [vmem:[%s0] sm:%s4]
    %6 = vst [vmem:[#allocation1] sm:%s4] %v5
    %v7 = vld [vmem:[#allocation1] sm:$0x1]
    %vm8 = vcmask 261120
    %9 = vst.msk [vmem:[#allocation0] sm:$0x1] %vm8, %v7
    %s10 = scalar_lea.vmem [#allocation1], 1
    %v11 = vld [vmem:[%s10] sm:$0x1]
    %12 = vrot.lane.b32.xlu0 %v11, 32
    %v13 = vpop.permute.xlu0 %12
    %vm14 = vcmask 523520
    %15 = vst.msk [vmem:[#allocation0] sm:$0x1] %vm14, %v13
    %s17 = sshll.u32 1, 1
    %s18 = ssub.s32 %s17, 1
    %v20 = vld [vmem:[#allocation0] sm:%s18]
    %s21 = sshll.u32 1, 1
    %s22 = ssub.s32 %s21, 1
    %23 = vst [vmem:[%s1] sm:%s22] %v20

// kernel: autoencoder_forward.1
$region0: #{autoencoder_forward.1}
  #allocation0 [shape = 'u32[]', space=smem, size = 0x4, offset = 0x4, fixed_abs, tag = 'smem constant byte address 0x4 - core index']
  #allocation1 [shape = 'u32[144,128]{1,0:T(1,128)}', space=vmem, size = 0x12000, scoped, tag = 'internal scratch']
  #allocation2 [shape = 'f32[20,80]{1,0:T(8,128)}', space=vmem, size = 0x3000, scoped, tag = 'scratch operand']
  #allocation3 [shape = 'f32[12,96]{1,0:T(8,128)}', space=vmem, size = 0x2000, scoped, tag = 'scratch operand']
  #allocation4 [shape = 'f32[4,64]{1,0:T(4,128)}', space=vmem, size = 0x800, scoped, tag = 'scratch operand']
  #allocation5 [shape = 'f32[2,64]{1,0:T(2,128)}', space=vmem, size = 0x400, scoped, tag = 'scratch operand']
  #allocation6 [shape = 'f32[21,80]{1,0:T(8,128)}', space=vmem, size = 0x3000, scoped, tag = 'scratch operand']
  #allocation7 [shape = 'f32[27,52]{1,0:T(8,128)}', space=vmem, size = 0x4000, scoped, tag = 'scratch operand']
  #allocation8 [shape = 'f32[36,40]{1,0:T(8,128)}', space=vmem, size = 0x5000, scoped, tag = 'scratch operand']
  %s0 = inlined_call_operand.vmem [shape: f32[2,1,28,28], index: 0, kind: input, shape index: {}]
  %s1 = inlined_call_operand.vmem [shape: bf16[9,28,80], index: 1, kind: input, shape index: {}]
  %s2 = inlined_call_operand.vmem [shape: f32[1,80], index: 2, kind: input, shape index: {}]
  %s3 = inlined_call_operand.vmem [shape: bf16[9,80,96], index: 3, kind: input, shape index: {}]
  %s4 = inlined_call_operand.vmem [shape: f32[1,96], index: 4, kind: input, shape index: {}]
  %s5 = inlined_call_operand.vmem [shape: bf16[9,96,64], index: 5, kind: input, shape index: {}]
  %s6 = inlined_call_operand.vmem [shape: f32[1,64], index: 6, kind: input, shape index: {}]
  %s7 = inlined_call_operand.vmem [shape: bf16[3,64,64], index: 7, kind: input, shape index: {}]
  %s8 = inlined_call_operand.vmem [shape: f32[1,64], index: 8, kind: input, shape index: {}]
  %s9 = inlined_call_operand.vmem [shape: bf16[2,64,32], index: 9, kind: input, shape index: {}]
  %s10 = inlined_call_operand.vmem [shape: f32[1,32], index: 10, kind: input, shape index: {}]
  %s11 = inlined_call_operand.vmem [shape: bf16[32,64], index: 11, kind: input, shape index: {}]
  %s12 = inlined_call_operand.vmem [shape: f32[1,64], index: 12, kind: input, shape index: {}]
  %s13 = inlined_call_operand.vmem [shape: bf16[5,64,80], index: 13, kind: input, shape index: {}]
  %s14 = inlined_call_operand.vmem [shape: f32[1,80], index: 14, kind: input, shape index: {}]
  %s15 = inlined_call_operand.vmem [shape: bf16[9,80,52], index: 15, kind: input, shape index: {}]
  %s16 = inlined_call_operand.vmem [shape: f32[1,52], index: 16, kind: input, shape index: {}]
  %s17 = inlined_call_operand.vmem [shape: bf16[8,52,40], index: 17, kind: input, shape index: {}]
  %s18 = inlined_call_operand.vmem [shape: f32[1,40], index: 18, kind: input, shape index: {}]
  %s19 = inlined_call_operand.vmem [shape: bf16[9,40,28], index: 19, kind: input, shape index: {}]
  %s20 = inlined_call_operand.vmem [shape: f32[1,28], index: 20, kind: input, shape index: {}]
  %s21 = inlined_call_operand.vmem [shape: f32[2,1,28,28], index: 21, kind: output, shape index: {}]
  %s22 = sld [smem:[#allocation0]]
  $region117: #{autoencoder_forward.1} parent=0
    _
  %s24 = ssub.s32 1, %s22
  %s25 = scalar_select 0, %s24, %s22
  loop: start=0, step=1, limit=4
  $region2: #{autoencoder_forward.1} parent=0 // loop_pre_header
    _
  $region3: #{autoencoder_forward.1} parent=0 // loop_header
    %s27 = sphi 0, %s31
    %p28 = scmp.ge.s32.totalorder %s27, 4
    %s37 = sphi 0, %s39
    %s40 = sphi 0, %s37
    %s41 = sphi 0, %s40
    %s57 = sphi 0, %s41
    %s61 = sphi 0, %s61
    %s63 = sphi 0, %s61
    %s64 = sphi 0, %s63
    %s78 = sphi 0, %s64
    %s82 = sphi 0, %s82
    %s84 = sphi 0, %s82
    %s85 = sphi 0, %s84
    %s99 = sphi 0, %s85
    %s103 = sphi 0, %s103
    %s105 = sphi 0, %s103
    %s106 = sphi 0, %s105
    %s120 = sphi 0, %s106
    %s124 = sphi 0, %s124
    %s126 = sphi 0, %s124
    %s127 = sphi 0, %s126
    %s141 = sphi 0, %s127
    %s145 = sphi 0, %s145
    %s147 = sphi 0, %s145
    %s148 = sphi 0, %s147
    %s162 = sphi 0, %s148
    %s166 = sphi 0, %s166
    %s168 = sphi 0, %s166
    %s169 = sphi 0, %s168
    %s183 = sphi 0, %s169
    %s187 = sphi 0, %s187
    %s189 = sphi 0, %s187
    %s190 = sphi 0, %s189
    %s204 = sphi 0, %s190
    %s208 = sphi 0, %s208
    %s210 = sphi 0, %s208
    %s211 = sphi 0, %s210
    %s225 = sphi 0, %s211
    %s229 = sphi 0, %s229
    %s231 = sphi 0, %s229
    %s232 = sphi 0, %s231
    %s246 = sphi 0, %s232
    %s250 = sphi 0, %s250
    %s252 = sphi 0, %s250
    %s253 = sphi 0, %s252
    %s267 = sphi 0, %s253
    %s271 = sphi 0, %s271
    %s273 = sphi 0, %s271
    %s274 = sphi 0, %s273
    %s288 = sphi 0, %s274
    %s292 = sphi 0, %s292
    %s294 = sphi 0, %s292
    %s295 = sphi 0, %s294
    %s309 = sphi 0, %s295
    %s313 = sphi 0, %s313
    %s315 = sphi 0, %s313
    %s316 = sphi 0, %s315
    %s330 = sphi 0, %s316
    %s334 = sphi 0, %s334
    %s336 = sphi 0, %s334
    %s337 = sphi 0, %s336
    %s351 = sphi 0, %s337
    %s355 = sphi 0, %s355
    %s357 = sphi 0, %s355
    %s358 = sphi 0, %s357
    %s372 = sphi 0, %s358
    %s376 = sphi 0, %s376
    %s378 = sphi 0, %s376
    %s379 = sphi 0, %s378
    %s393 = sphi 0, %s379
    %s397 = sphi 0, %s397
    %s399 = sphi 0, %s397
    %s400 = sphi 0, %s399
    %s414 = sphi 0, %s400
    %s418 = sphi 0, %s418
    %s420 = sphi 0, %s418
    %s421 = sphi 0, %s420
    %s435 = sphi 0, %s421
    %s439 = sphi 0, %s439
    %s441 = sphi 0, %s439
    %s442 = sphi 0, %s441
    %s456 = sphi 0, %s442
    %s460 = sphi 0, %s460
    %s462 = sphi 0, %s460
    %s463 = sphi 0, %s462
    %s477 = sphi 0, %s463
    %s483 = sphi 0, %s485
    %s486 = sphi 0, %s483
    %s487 = sphi 0, %s486
    %s503 = sphi 0, %s487
  $region4: #{autoencoder_forward.1} parent=0 // loop_header_branch
    %30 = sbr.rel (%p28) target = $region8
  $region5: #{autoencoder_forward.1} parent=0 // loop_body
    %s32 = ssub.s32 %s27, 1
    %s33 = ssub.s32 %s27, 2
    %s34 = sadd.s32 %s27, 1
    %s35 = ssub.s32 %s27, %s34
    %p36 = scmp.eq.s32.totalorder %s35, 0
    %s38 = sadd.s32 %s37, 1
    %s39 = scalar_select %p36, %s37, %s38
    %p42 = pneg %p36
    %p43 = scmp.eq.s32.totalorder %s27, 1
    %p44 = por %p42, %p43
    %p45 = scmp.ne.s32.totalorder %s37, %s40
    %p46 = scmp.eq.s32.totalorder %s27, 0
    %p47 = por %p45, %p46
    %p48 = scmp.ne.s32.totalorder %s37, %s40
    %p49 = scmp.eq.s32.totalorder %s32, 1
    %p50 = por %p48, %p49
    %p51 = scmp.ne.s32.totalorder %s40, %s41
    %p52 = scmp.eq.s32.totalorder %s32, 0
    %p53 = por %p51, %p52
    %p54 = scmp.ne.s32.totalorder %s40, %s41
    %p55 = scmp.eq.s32.totalorder %s33, 1
    %p56 = por %p54, %p55
    %p58 = scmp.ne.s32.totalorder %s41, %s57
    %p59 = scmp.eq.s32.totalorder %s33, 0
    %p60 = por %p58, %p59
    %s62 = sadd.s32 %s61, 1
    %p65 = scmp.eq.s32.totalorder %s27, 1
    %p66 = scmp.ne.s32.totalorder %s61, %s63
    %p67 = scmp.eq.s32.totalorder %s27, 0
    %p68 = por %p66, %p67
    %p69 = scmp.ne.s32.totalorder %s61, %s63
    %p70 = scmp.eq.s32.totalorder %s32, 1
    %p71 = por %p69, %p70
    %p72 = scmp.ne.s32.totalorder %s63, %s64
    %p73 = scmp.eq.s32.totalorder %s32, 0
    %p74 = por %p72, %p73
    %p75 = scmp.ne.s32.totalorder %s63, %s64
    %p76 = scmp.eq.s32.totalorder %s33, 1
    %p77 = por %p75, %p76
    %p79 = scmp.ne.s32.totalorder %s64, %s78
    %p80 = scmp.eq.s32.totalorder %s33, 0
    %p81 = por %p79, %p80
    %s83 = sadd.s32 %s82, 1
    %p86 = scmp.eq.s32.totalorder %s27, 1
    %p87 = scmp.ne.s32.totalorder %s82, %s84
    %p88 = scmp.eq.s32.totalorder %s27, 0
    %p89 = por %p87, %p88
    %p90 = scmp.ne.s32.totalorder %s82, %s84
    %p91 = scmp.eq.s32.totalorder %s32, 1
    %p92 = por %p90, %p91
    %p93 = scmp.ne.s32.totalorder %s84, %s85
    %p94 = scmp.eq.s32.totalorder %s32, 0
    %p95 = por %p93, %p94
    %p96 = scmp.ne.s32.totalorder %s84, %s85
    %p97 = scmp.eq.s32.totalorder %s33, 1
    %p98 = por %p96, %p97
    %p100 = scmp.ne.s32.totalorder %s85, %s99
    %p101 = scmp.eq.s32.totalorder %s33, 0
    %p102 = por %p100, %p101
    %s104 = sadd.s32 %s103, 1
    %p107 = scmp.eq.s32.totalorder %s27, 1
    %p108 = scmp.ne.s32.totalorder %s103, %s105
    %p109 = scmp.eq.s32.totalorder %s27, 0
    %p110 = por %p108, %p109
    %p111 = scmp.ne.s32.totalorder %s103, %s105
    %p112 = scmp.eq.s32.totalorder %s32, 1
    %p113 = por %p111, %p112
    %p114 = scmp.ne.s32.totalorder %s105, %s106
    %p115 = scmp.eq.s32.totalorder %s32, 0
    %p116 = por %p114, %p115
    %p117 = scmp.ne.s32.totalorder %s105, %s106
    %p118 = scmp.eq.s32.totalorder %s33, 1
    %p119 = por %p117, %p118
    %p121 = scmp.ne.s32.totalorder %s106, %s120
    %p122 = scmp.eq.s32.totalorder %s33, 0
    %p123 = por %p121, %p122
    %s125 = sadd.s32 %s124, 1
    %p128 = scmp.eq.s32.totalorder %s27, 1
    %p129 = scmp.ne.s32.totalorder %s124, %s126
    %p130 = scmp.eq.s32.totalorder %s27, 0
    %p131 = por %p129, %p130
    %p132 = scmp.ne.s32.totalorder %s124, %s126
    %p133 = scmp.eq.s32.totalorder %s32, 1
    %p134 = por %p132, %p133
    %p135 = scmp.ne.s32.totalorder %s126, %s127
    %p136 = scmp.eq.s32.totalorder %s32, 0
    %p137 = por %p135, %p136
    %p138 = scmp.ne.s32.totalorder %s126, %s127
    %p139 = scmp.eq.s32.totalorder %s33, 1
    %p140 = por %p138, %p139
    %p142 = scmp.ne.s32.totalorder %s127, %s141
    %p143 = scmp.eq.s32.totalorder %s33, 0
    %p144 = por %p142, %p143
    %s146 = sadd.s32 %s145, 1
    %p149 = scmp.eq.s32.totalorder %s27, 1
    %p150 = scmp.ne.s32.totalorder %s145, %s147
    %p151 = scmp.eq.s32.totalorder %s27, 0
    %p152 = por %p150, %p151
    %p153 = scmp.ne.s32.totalorder %s145, %s147
    %p154 = scmp.eq.s32.totalorder %s32, 1
    %p155 = por %p153, %p154
    %p156 = scmp.ne.s32.totalorder %s147, %s148
    %p157 = scmp.eq.s32.totalorder %s32, 0
    %p158 = por %p156, %p157
    %p159 = scmp.ne.s32.totalorder %s147, %s148
    %p160 = scmp.eq.s32.totalorder %s33, 1
    %p161 = por %p159, %p160
    %p163 = scmp.ne.s32.totalorder %s148, %s162
    %p164 = scmp.eq.s32.totalorder %s33, 0
    %p165 = por %p163, %p164
    %s167 = sadd.s32 %s166, 1
    %p170 = scmp.eq.s32.totalorder %s27, 1
    %p171 = scmp.ne.s32.totalorder %s166, %s168
    %p172 = scmp.eq.s32.totalorder %s27, 0
    %p173 = por %p171, %p172
    %p174 = scmp.ne.s32.totalorder %s166, %s168
    %p175 = scmp.eq.s32.totalorder %s32, 1
    %p176 = por %p174, %p175
    %p177 = scmp.ne.s32.totalorder %s168, %s169
    %p178 = scmp.eq.s32.totalorder %s32, 0
    %p179 = por %p177, %p178
    %p180 = scmp.ne.s32.totalorder %s168, %s169
    %p181 = scmp.eq.s32.totalorder %s33, 1
    %p182 = por %p180, %p181
    %p184 = scmp.ne.s32.totalorder %s169, %s183
    %p185 = scmp.eq.s32.totalorder %s33, 0
    %p186 = por %p184, %p185
    %s188 = sadd.s32 %s187, 1
    %p191 = scmp.eq.s32.totalorder %s27, 1
    %p192 = scmp.ne.s32.totalorder %s187, %s189
    %p193 = scmp.eq.s32.totalorder %s27, 0
    %p194 = por %p192, %p193
    %p195 = scmp.ne.s32.totalorder %s187, %s189
    %p196 = scmp.eq.s32.totalorder %s32, 1
    %p197 = por %p195, %p196
    %p198 = scmp.ne.s32.totalorder %s189, %s190
    %p199 = scmp.eq.s32.totalorder %s32, 0
    %p200 = por %p198, %p199
    %p201 = scmp.ne.s32.totalorder %s189, %s190
    %p202 = scmp.eq.s32.totalorder %s33, 1
    %p203 = por %p201, %p202
    %p205 = scmp.ne.s32.totalorder %s190, %s204
    %p206 = scmp.eq.s32.totalorder %s33, 0
    %p207 = por %p205, %p206
    %s209 = sadd.s32 %s208, 1
    %p212 = scmp.eq.s32.totalorder %s27, 1
    %p213 = scmp.ne.s32.totalorder %s208, %s210
    %p214 = scmp.eq.s32.totalorder %s27, 0
    %p215 = por %p213, %p214
    %p216 = scmp.ne.s32.totalorder %s208, %s210
    %p217 = scmp.eq.s32.totalorder %s32, 1
    %p218 = por %p216, %p217
    %p219 = scmp.ne.s32.totalorder %s210, %s211
    %p220 = scmp.eq.s32.totalorder %s32, 0
    %p221 = por %p219, %p220
    %p222 = scmp.ne.s32.totalorder %s210, %s211
    %p223 = scmp.eq.s32.totalorder %s33, 1
    %p224 = por %p222, %p223
    %p226 = scmp.ne.s32.totalorder %s211, %s225
    %p227 = scmp.eq.s32.totalorder %s33, 0
    %p228 = por %p226, %p227
    %s230 = sadd.s32 %s229, 1
    %p233 = scmp.eq.s32.totalorder %s27, 1
    %p234 = scmp.ne.s32.totalorder %s229, %s231
    %p235 = scmp.eq.s32.totalorder %s27, 0
    %p236 = por %p234, %p235
    %p237 = scmp.ne.s32.totalorder %s229, %s231
    %p238 = scmp.eq.s32.totalorder %s32, 1
    %p239 = por %p237, %p238
    %p240 = scmp.ne.s32.totalorder %s231, %s232
    %p241 = scmp.eq.s32.totalorder %s32, 0
    %p242 = por %p240, %p241
    %p243 = scmp.ne.s32.totalorder %s231, %s232
    %p244 = scmp.eq.s32.totalorder %s33, 1
    %p245 = por %p243, %p244
    %p247 = scmp.ne.s32.totalorder %s232, %s246
    %p248 = scmp.eq.s32.totalorder %s33, 0
    %p249 = por %p247, %p248
    %s251 = sadd.s32 %s250, 1
    %p254 = scmp.eq.s32.totalorder %s27, 1
    %p255 = scmp.ne.s32.totalorder %s250, %s252
    %p256 = scmp.eq.s32.totalorder %s27, 0
    %p257 = por %p255, %p256
    %p258 = scmp.ne.s32.totalorder %s250, %s252
    %p259 = scmp.eq.s32.totalorder %s32, 1
    %p260 = por %p258, %p259
    %p261 = scmp.ne.s32.totalorder %s252, %s253
    %p262 = scmp.eq.s32.totalorder %s32, 0
    %p263 = por %p261, %p262
    %p264 = scmp.ne.s32.totalorder %s252, %s253
    %p265 = scmp.eq.s32.totalorder %s33, 1
    %p266 = por %p264, %p265
    %p268 = scmp.ne.s32.totalorder %s253, %s267
    %p269 = scmp.eq.s32.totalorder %s33, 0
    %p270 = por %p268, %p269
    %s272 = sadd.s32 %s271, 1
    %p275 = scmp.eq.s32.totalorder %s27, 1
    %p276 = scmp.ne.s32.totalorder %s271, %s273
    %p277 = scmp.eq.s32.totalorder %s27, 0
    %p278 = por %p276, %p277
    %p279 = scmp.ne.s32.totalorder %s271, %s273
    %p280 = scmp.eq.s32.totalorder %s32, 1
    %p281 = por %p279, %p280
    %p282 = scmp.ne.s32.totalorder %s273, %s274
    %p283 = scmp.eq.s32.totalorder %s32, 0
    %p284 = por %p282, %p283
    %p285 = scmp.ne.s32.totalorder %s273, %s274
    %p286 = scmp.eq.s32.totalorder %s33, 1
    %p287 = por %p285, %p286
    %p289 = scmp.ne.s32.totalorder %s274, %s288
    %p290 = scmp.eq.s32.totalorder %s33, 0
    %p291 = por %p289, %p290
    %s293 = sadd.s32 %s292, 1
    %p296 = scmp.eq.s32.totalorder %s27, 1
    %p297 = scmp.ne.s32.totalorder %s292, %s294
    %p298 = scmp.eq.s32.totalorder %s27, 0
    %p299 = por %p297, %p298
    %p300 = scmp.ne.s32.totalorder %s292, %s294
    %p301 = scmp.eq.s32.totalorder %s32, 1
    %p302 = por %p300, %p301
    %p303 = scmp.ne.s32.totalorder %s294, %s295
    %p304 = scmp.eq.s32.totalorder %s32, 0
    %p305 = por %p303, %p304
    %p306 = scmp.ne.s32.totalorder %s294, %s295
    %p307 = scmp.eq.s32.totalorder %s33, 1
    %p308 = por %p306, %p307
    %p310 = scmp.ne.s32.totalorder %s295, %s309
    %p311 = scmp.eq.s32.totalorder %s33, 0
    %p312 = por %p310, %p311
    %s314 = sadd.s32 %s313, 1
    %p317 = scmp.eq.s32.totalorder %s27, 1
    %p318 = scmp.ne.s32.totalorder %s313, %s315
    %p319 = scmp.eq.s32.totalorder %s27, 0
    %p320 = por %p318, %p319
    %p321 = scmp.ne.s32.totalorder %s313, %s315
    %p322 = scmp.eq.s32.totalorder %s32, 1
    %p323 = por %p321, %p322
    %p324 = scmp.ne.s32.totalorder %s315, %s316
    %p325 = scmp.eq.s32.totalorder %s32, 0
    %p326 = por %p324, %p325
    %p327 = scmp.ne.s32.totalorder %s315, %s316
    %p328 = scmp.eq.s32.totalorder %s33, 1
    %p329 = por %p327, %p328
    %p331 = scmp.ne.s32.totalorder %s316, %s330
    %p332 = scmp.eq.s32.totalorder %s33, 0
    %p333 = por %p331, %p332
    %s335 = sadd.s32 %s334, 1
    %p338 = scmp.eq.s32.totalorder %s27, 1
    %p339 = scmp.ne.s32.totalorder %s334, %s336
    %p340 = scmp.eq.s32.totalorder %s27, 0
    %p341 = por %p339, %p340
    %p342 = scmp.ne.s32.totalorder %s334, %s336
    %p343 = scmp.eq.s32.totalorder %s32, 1
    %p344 = por %p342, %p343
    %p345 = scmp.ne.s32.totalorder %s336, %s337
    %p346 = scmp.eq.s32.totalorder %s32, 0
    %p347 = por %p345, %p346
    %p348 = scmp.ne.s32.totalorder %s336, %s337
    %p349 = scmp.eq.s32.totalorder %s33, 1
    %p350 = por %p348, %p349
    %p352 = scmp.ne.s32.totalorder %s337, %s351
    %p353 = scmp.eq.s32.totalorder %s33, 0
    %p354 = por %p352, %p353
    %s356 = sadd.s32 %s355, 1
    %p359 = scmp.eq.s32.totalorder %s27, 1
    %p360 = scmp.ne.s32.totalorder %s355, %s357
    %p361 = scmp.eq.s32.totalorder %s27, 0
    %p362 = por %p360, %p361
    %p363 = scmp.ne.s32.totalorder %s355, %s357
    %p364 = scmp.eq.s32.totalorder %s32, 1
    %p365 = por %p363, %p364
    %p366 = scmp.ne.s32.totalorder %s357, %s358
    %p367 = scmp.eq.s32.totalorder %s32, 0
    %p368 = por %p366, %p367
    %p369 = scmp.ne.s32.totalorder %s357, %s358
    %p370 = scmp.eq.s32.totalorder %s33, 1
    %p371 = por %p369, %p370
    %p373 = scmp.ne.s32.totalorder %s358, %s372
    %p374 = scmp.eq.s32.totalorder %s33, 0
    %p375 = por %p373, %p374
    %s377 = sadd.s32 %s376, 1
    %p380 = scmp.eq.s32.totalorder %s27, 1
    %p381 = scmp.ne.s32.totalorder %s376, %s378
    %p382 = scmp.eq.s32.totalorder %s27, 0
    %p383 = por %p381, %p382
    %p384 = scmp.ne.s32.totalorder %s376, %s378
    %p385 = scmp.eq.s32.totalorder %s32, 1
    %p386 = por %p384, %p385
    %p387 = scmp.ne.s32.totalorder %s378, %s379
    %p388 = scmp.eq.s32.totalorder %s32, 0
    %p389 = por %p387, %p388
    %p390 = scmp.ne.s32.totalorder %s378, %s379
    %p391 = scmp.eq.s32.totalorder %s33, 1
    %p392 = por %p390, %p391
    %p394 = scmp.ne.s32.totalorder %s379, %s393
    %p395 = scmp.eq.s32.totalorder %s33, 0
    %p396 = por %p394, %p395
    %s398 = sadd.s32 %s397, 1
    %p401 = scmp.eq.s32.totalorder %s27, 1
    %p402 = scmp.ne.s32.totalorder %s397, %s399
    %p403 = scmp.eq.s32.totalorder %s27, 0
    %p404 = por %p402, %p403
    %p405 = scmp.ne.s32.totalorder %s397, %s399
    %p406 = scmp.eq.s32.totalorder %s32, 1
    %p407 = por %p405, %p406
    %p408 = scmp.ne.s32.totalorder %s399, %s400
    %p409 = scmp.eq.s32.totalorder %s32, 0
    %p410 = por %p408, %p409
    %p411 = scmp.ne.s32.totalorder %s399, %s400
    %p412 = scmp.eq.s32.totalorder %s33, 1
    %p413 = por %p411, %p412
    %p415 = scmp.ne.s32.totalorder %s400, %s414
    %p416 = scmp.eq.s32.totalorder %s33, 0
    %p417 = por %p415, %p416
    %s419 = sadd.s32 %s418, 1
    %p422 = scmp.eq.s32.totalorder %s27, 1
    %p423 = scmp.ne.s32.totalorder %s418, %s420
    %p424 = scmp.eq.s32.totalorder %s27, 0
    %p425 = por %p423, %p424
    %p426 = scmp.ne.s32.totalorder %s418, %s420
    %p427 = scmp.eq.s32.totalorder %s32, 1
    %p428 = por %p426, %p427
    %p429 = scmp.ne.s32.totalorder %s420, %s421
    %p430 = scmp.eq.s32.totalorder %s32, 0
    %p431 = por %p429, %p430
    %p432 = scmp.ne.s32.totalorder %s420, %s421
    %p433 = scmp.eq.s32.totalorder %s33, 1
    %p434 = por %p432, %p433
    %p436 = scmp.ne.s32.totalorder %s421, %s435
    %p437 = scmp.eq.s32.totalorder %s33, 0
    %p438 = por %p436, %p437
    %s440 = sadd.s32 %s439, 1
    %p443 = scmp.eq.s32.totalorder %s27, 1
    %p444 = scmp.ne.s32.totalorder %s439, %s441
    %p445 = scmp.eq.s32.totalorder %s27, 0
    %p446 = por %p444, %p445
    %p447 = scmp.ne.s32.totalorder %s439, %s441
    %p448 = scmp.eq.s32.totalorder %s32, 1
    %p449 = por %p447, %p448
    %p450 = scmp.ne.s32.totalorder %s441, %s442
    %p451 = scmp.eq.s32.totalorder %s32, 0
    %p452 = por %p450, %p451
    %p453 = scmp.ne.s32.totalorder %s441, %s442
    %p454 = scmp.eq.s32.totalorder %s33, 1
    %p455 = por %p453, %p454
    %p457 = scmp.ne.s32.totalorder %s442, %s456
    %p458 = scmp.eq.s32.totalorder %s33, 0
    %p459 = por %p457, %p458
    %s461 = sadd.s32 %s460, 1
    %p464 = scmp.eq.s32.totalorder %s27, 1
    %p465 = scmp.ne.s32.totalorder %s460, %s462
    %p466 = scmp.eq.s32.totalorder %s27, 0
    %p467 = por %p465, %p466
    %p468 = scmp.ne.s32.totalorder %s460, %s462
    %p469 = scmp.eq.s32.totalorder %s32, 1
    %p470 = por %p468, %p469
    %p471 = scmp.ne.s32.totalorder %s462, %s463
    %p472 = scmp.eq.s32.totalorder %s32, 0
    %p473 = por %p471, %p472
    %p474 = scmp.ne.s32.totalorder %s462, %s463
    %p475 = scmp.eq.s32.totalorder %s33, 1
    %p476 = por %p474, %p475
    %p478 = scmp.ne.s32.totalorder %s463, %s477
    %p479 = scmp.eq.s32.totalorder %s33, 0
    %p480 = por %p478, %p479
    %s481 = ssub.s32 %s27, %s34
    %p482 = scmp.eq.s32.totalorder %s481, 0
    %s484 = sadd.s32 %s483, 1
    %s485 = scalar_select %p482, %s483, %s484
    %p488 = pneg %p482
    %p489 = scmp.eq.s32.totalorder %s27, 1
    %p490 = por %p488, %p489
    %p491 = scmp.ne.s32.totalorder %s483, %s486
    %p492 = scmp.eq.s32.totalorder %s27, 0
    %p493 = por %p491, %p492
    %p494 = scmp.ne.s32.totalorder %s483, %s486
    %p495 = scmp.eq.s32.totalorder %s32, 1
    %p496 = por %p494, %p495
    %p497 = scmp.ne.s32.totalorder %s486, %s487
    %p498 = scmp.eq.s32.totalorder %s32, 0
    %p499 = por %p497, %p498
    %p500 = scmp.ne.s32.totalorder %s486, %s487
    %p501 = scmp.eq.s32.totalorder %s33, 1
    %p502 = por %p500, %p501
    %p504 = scmp.ne.s32.totalorder %s487, %s503
    %p505 = scmp.eq.s32.totalorder %s33, 0
    %p506 = por %p504, %p505
    %p507 = scmp.le.s32.totalorder 1, %s27
    %p508 = scmp.lt.s32.totalorder %s27, 3
    %p509 = pnand %p507, %p508
    %p510 = pneg %p509
    // Predicated region
    $region9: #{autoencoder_forward.1} parent=5 // pred_check
      _
    $region10: #{autoencoder_forward.1} parent=5 // pred_check_branch
      %512 = sbr.rel (%p509) target = $region12
    $region11: #{autoencoder_forward.1} parent=5 // pred_region
      %s513 = ssub.s32 %s27, 1
      // Predicated region
      $region13: #{autoencoder_forward.1} parent=11 // pred_check
        %p514 = pneg %p74
      $region14: #{autoencoder_forward.1} parent=11 // pred_check_branch
        %516 = sbr.rel (%p514) target = $region16
      $region15: #{autoencoder_forward.1} parent=11 // pred_region
        _
      $region16: #{autoencoder_forward.1} parent=11 // pred_fallthru
        _
      // Predicated region
      $region17: #{autoencoder_forward.1} parent=11 // pred_check
        %p517 = pneg %p95
      $region18: #{autoencoder_forward.1} parent=11 // pred_check_branch
        %519 = sbr.rel (%p517) target = $region20
      $region19: #{autoencoder_forward.1} parent=11 // pred_region
        _
      $region20: #{autoencoder_forward.1} parent=11 // pred_fallthru
        _
      // Predicated region
      $region21: #{autoencoder_forward.1} parent=11 // pred_check
        %p520 = pneg %p116
      $region22: #{autoencoder_forward.1} parent=11 // pred_check_branch
        %522 = sbr.rel (%p520) target = $region24
      $region23: #{autoencoder_forward.1} parent=11 // pred_region
        _
      $region24: #{autoencoder_forward.1} parent=11 // pred_fallthru
        _
      // Predicated region
      $region25: #{autoencoder_forward.1} parent=11 // pred_check
        %p523 = pneg %p137
      $region26: #{autoencoder_forward.1} parent=11 // pred_check_branch
        %525 = sbr.rel (%p523) target = $region28
      $region27: #{autoencoder_forward.1} parent=11 // pred_region
        _
      $region28: #{autoencoder_forward.1} parent=11 // pred_fallthru
        _
      // Predicated region
      $region29: #{autoencoder_forward.1} parent=11 // pred_check
        %p526 = pneg %p158
      $region30: #{autoencoder_forward.1} parent=11 // pred_check_branch
        %528 = sbr.rel (%p526) target = $region32
      $region31: #{autoencoder_forward.1} parent=11 // pred_region
        _
      $region32: #{autoencoder_forward.1} parent=11 // pred_fallthru
        _
      // Predicated region
      $region33: #{autoencoder_forward.1} parent=11 // pred_check
        %p529 = pneg %p179
      $region34: #{autoencoder_forward.1} parent=11 // pred_check_branch
        %531 = sbr.rel (%p529) target = $region36
      $region35: #{autoencoder_forward.1} parent=11 // pred_region
        _
      $region36: #{autoencoder_forward.1} parent=11 // pred_fallthru
        _
      // Predicated region
      $region37: #{autoencoder_forward.1} parent=11 // pred_check
        %p532 = pneg %p200
      $region38: #{autoencoder_forward.1} parent=11 // pred_check_branch
        %534 = sbr.rel (%p532) target = $region40
      $region39: #{autoencoder_forward.1} parent=11 // pred_region
        _
      $region40: #{autoencoder_forward.1} parent=11 // pred_fallthru
        _
      // Predicated region
      $region41: #{autoencoder_forward.1} parent=11 // pred_check
        %p535 = pneg %p221
      $region42: #{autoencoder_forward.1} parent=11 // pred_check_branch
        %537 = sbr.rel (%p535) target = $region44
      $region43: #{autoencoder_forward.1} parent=11 // pred_region
        _
      $region44: #{autoencoder_forward.1} parent=11 // pred_fallthru
        _
      // Predicated region
      $region45: #{autoencoder_forward.1} parent=11 // pred_check
        %p538 = pneg %p242
      $region46: #{autoencoder_forward.1} parent=11 // pred_check_branch
        %540 = sbr.rel (%p538) target = $region48
      $region47: #{autoencoder_forward.1} parent=11 // pred_region
        _
      $region48: #{autoencoder_forward.1} parent=11 // pred_fallthru
        _
      // Predicated region
      $region49: #{autoencoder_forward.1} parent=11 // pred_check
        %p541 = pneg %p263
      $region50: #{autoencoder_forward.1} parent=11 // pred_check_branch
        %543 = sbr.rel (%p541) target = $region52
      $region51: #{autoencoder_forward.1} parent=11 // pred_region
        _
      $region52: #{autoencoder_forward.1} parent=11 // pred_fallthru
        _
      // Predicated region
      $region53: #{autoencoder_forward.1} parent=11 // pred_check
        %p544 = pneg %p284
      $region54: #{autoencoder_forward.1} parent=11 // pred_check_branch
        %546 = sbr.rel (%p544) target = $region56
      $region55: #{autoencoder_forward.1} parent=11 // pred_region
        _
      $region56: #{autoencoder_forward.1} parent=11 // pred_fallthru
        _
      // Predicated region
      $region57: #{autoencoder_forward.1} parent=11 // pred_check
        %p547 = pneg %p305
      $region58: #{autoencoder_forward.1} parent=11 // pred_check_branch
        %549 = sbr.rel (%p547) target = $region60
      $region59: #{autoencoder_forward.1} parent=11 // pred_region
        _
      $region60: #{autoencoder_forward.1} parent=11 // pred_fallthru
        _
      // Predicated region
      $region61: #{autoencoder_forward.1} parent=11 // pred_check
        %p550 = pneg %p326
      $region62: #{autoencoder_forward.1} parent=11 // pred_check_branch
        %552 = sbr.rel (%p550) target = $region64
      $region63: #{autoencoder_forward.1} parent=11 // pred_region
        _
      $region64: #{autoencoder_forward.1} parent=11 // pred_fallthru
        _
      // Predicated region
      $region65: #{autoencoder_forward.1} parent=11 // pred_check
        %p553 = pneg %p347
      $region66: #{autoencoder_forward.1} parent=11 // pred_check_branch
        %555 = sbr.rel (%p553) target = $region68
      $region67: #{autoencoder_forward.1} parent=11 // pred_region
        _
      $region68: #{autoencoder_forward.1} parent=11 // pred_fallthru
        _
      // Predicated region
      $region69: #{autoencoder_forward.1} parent=11 // pred_check
        %p556 = pneg %p368
      $region70: #{autoencoder_forward.1} parent=11 // pred_check_branch
        %558 = sbr.rel (%p556) target = $region72
      $region71: #{autoencoder_forward.1} parent=11 // pred_region
        _
      $region72: #{autoencoder_forward.1} parent=11 // pred_fallthru
        _
      // Predicated region
      $region73: #{autoencoder_forward.1} parent=11 // pred_check
        %p559 = pneg %p389
      $region74: #{autoencoder_forward.1} parent=11 // pred_check_branch
        %561 = sbr.rel (%p559) target = $region76
      $region75: #{autoencoder_forward.1} parent=11 // pred_region
        _
      $region76: #{autoencoder_forward.1} parent=11 // pred_fallthru
        _
      // Predicated region
      $region77: #{autoencoder_forward.1} parent=11 // pred_check
        %p562 = pneg %p410
      $region78: #{autoencoder_forward.1} parent=11 // pred_check_branch
        %564 = sbr.rel (%p562) target = $region80
      $region79: #{autoencoder_forward.1} parent=11 // pred_region
        _
      $region80: #{autoencoder_forward.1} parent=11 // pred_fallthru
        _
      // Predicated region
      $region81: #{autoencoder_forward.1} parent=11 // pred_check
        %p565 = pneg %p431
      $region82: #{autoencoder_forward.1} parent=11 // pred_check_branch
        %567 = sbr.rel (%p565) target = $region84
      $region83: #{autoencoder_forward.1} parent=11 // pred_region
        _
      $region84: #{autoencoder_forward.1} parent=11 // pred_fallthru
        _
      // Predicated region
      $region85: #{autoencoder_forward.1} parent=11 // pred_check
        %p568 = pneg %p452
      $region86: #{autoencoder_forward.1} parent=11 // pred_check_branch
        %570 = sbr.rel (%p568) target = $region88
      $region87: #{autoencoder_forward.1} parent=11 // pred_region
        _
      $region88: #{autoencoder_forward.1} parent=11 // pred_fallthru
        _
      // Predicated region
      $region89: #{autoencoder_forward.1} parent=11 // pred_check
        %p571 = pneg %p473
      $region90: #{autoencoder_forward.1} parent=11 // pred_check_branch
        %573 = sbr.rel (%p571) target = $region92
      $region91: #{autoencoder_forward.1} parent=11 // pred_region
        _
      $region92: #{autoencoder_forward.1} parent=11 // pred_fallthru
        _
    $region12: #{autoencoder_forward.1} parent=5 // pred_fallthru
      _
    %p574 = scmp.lt.s32.totalorder %s27, 2
    // Predicated region
    $region93: #{autoencoder_forward.1} parent=5 // pred_check
      %p575 = pneg %p574
    $region94: #{autoencoder_forward.1} parent=5 // pred_check_branch
      %577 = sbr.rel (%p575) target = $region96
    $region95: #{autoencoder_forward.1} parent=5 // pred_region
      // Predicated region
      $region97: #{autoencoder_forward.1} parent=95 // pred_check
        %p578 = pneg %p47
      $region98: #{autoencoder_forward.1} parent=95 // pred_check_branch
        %580 = sbr.rel (%p578) target = $region100
      $region99: #{autoencoder_forward.1} parent=95 // pred_region
        %p581 = scmp.lt.s32.totalorder %s27, 1
        %s582 = scalar_select %p581, %s27, 1
        %s583 = smul.addr %s582, 4
        %s584 = smul.addr %s583, 8
        %s585 = scalar_lea.vmem %s0, %s584
      $region100: #{autoencoder_forward.1} parent=95 // pred_fallthru
        _
    $region96: #{autoencoder_forward.1} parent=5 // pred_fallthru
      _
    %p586 = scmp.le.s32.totalorder 1, %s27
    %p587 = scmp.lt.s32.totalorder %s27, 3
    %p588 = pnand %p586, %p587
    %p589 = pneg %p588
    // Predicated region
    $region101: #{autoencoder_forward.1} parent=5 // pred_check
      _
    $region102: #{autoencoder_forward.1} parent=5 // pred_check_branch
      %591 = sbr.rel (%p588) target = $region104
    $region103: #{autoencoder_forward.1} parent=5 // pred_region
      %s592 = ssub.s32 %s27, 1
      %p593 = scmp.lt.s32.totalorder %s32, 1
      %s594 = scalar_select %p593, %s32, 1
      %s595 = smul.addr %s594, 4
      %s596 = smul.addr %s595, 8
      %s597 = scalar_lea.vmem %s0, %s596
      %p598 = pneg %p53
      %p599 = pneg %p50
      %p600 = pneg %p74
      %p601 = pneg %p71
      %p602 = pneg %p95
      %p603 = pneg %p92
      %p604 = pneg %p116
      %p605 = pneg %p113
      %p606 = pneg %p137
      %p607 = pneg %p134
      %p608 = pneg %p158
      %p609 = pneg %p155
      %p610 = pneg %p179
      %p611 = pneg %p176
      %p612 = pneg %p200
      %p613 = pneg %p197
      %p614 = pneg %p221
      %p615 = pneg %p218
      %p616 = pneg %p242
      %p617 = pneg %p239
      %p618 = pneg %p263
      %p619 = pneg %p260
      %p620 = pneg %p284
      %p621 = pneg %p281
      %p622 = pneg %p305
      %p623 = pneg %p302
      %p624 = pneg %p326
      %p625 = pneg %p323
      %p626 = pneg %p347
      %p627 = pneg %p344
      %p628 = pneg %p368
      %p629 = pneg %p365
      %p630 = pneg %p389
      %p631 = pneg %p386
      %p632 = pneg %p410
      %p633 = pneg %p407
      %p634 = pneg %p431
      %p635 = pneg %p428
      %p636 = pneg %p452
      %p637 = pneg %p449
      %p638 = pneg %p473
      %p639 = pneg %p470
      %p640 = pneg %p499
      %p641 = pneg %p496
      %p642 = scmp.lt.s32.totalorder %s32, 1
      %s643 = scalar_select %p642, %s32, 1
      %s644 = smul.addr %s643, 4
      %s645 = smul.addr %s644, 8
      %s646 = scalar_lea.vmem %s21, %s645
      %p647 = scmp.lt.s32.totalorder %s32, 1
      %s648 = scalar_select %p647, %s32, 1
      %s649 = smul.addr %s648, 4
      %s650 = smul.addr %s649, 8
      %s651 = scalar_lea.vmem %s0, %s650
      %p652 = scmp.lt.s32.totalorder %s32, 1
      %s653 = scalar_select %p652, %s32, 1
      %s654 = smul.addr %s653, 4
      %s655 = smul.addr %s654, 8
      %s656 = scalar_lea.vmem %s21, %s655
      %v658 = vld [vmem:[%s651] sm:$0xff]
      %v659 = vld [vmem:[%s651 + $0x8] sm:$0xff]
      %v660 = vld [vmem:[%s651 + $0x10] sm:$0xf]
      %v661 = vpack.c.bf16 %v659, %v658
      %v662 = vpack.c.bf16 %v660, %v660
      %v663 = vld [vmem:[%s1] sm:$0xf]
      %v664 = vld [vmem:[%s1 + $0x4] sm:$0xf]
      %v665 = vld [vmem:[%s1 + $0x8] sm:$0xf]
      %v666 = vld [vmem:[%s1 + $0xc] sm:$0x3]
      %v667 = vld [vmem:[%s651 + $0x1] sm:$0xff]
      %v668 = vld [vmem:[%s651 + $0x9] sm:$0xff]
      %v669 = vld [vmem:[%s651 + $0x11] sm:$0xf]
      %v670 = vpack.c.bf16 %v668, %v667
      %v671 = vpack.c.bf16 %v669, %v669
      %s672 = scalar_lea.vmem %s1, 16
      %v673 = vld [vmem:[%s672] sm:$0xf]
      %v674 = vld [vmem:[%s672 + $0x4] sm:$0xf]
      %v675 = vld [vmem:[%s672 + $0x8] sm:$0xf]
      %v676 = vld [vmem:[%s672 + $0xc] sm:$0x3]
      %v681 = vunpack.c.l.b16 %v673
      %v682 = vunpack.c.l.b16 %v674
      %v683 = vunpack.c.l.b16 %v675
      %v684 = vunpack.c.l.b16 %v676
      %v685 = vpack.c.b16 %v682, %v681
      %v686 = vpack.c.b16 %v684, %v683
      %vm688 = vcmask 228352
      %v690 = vsel %vm688, %v670, 0
      %v693 = vsel %vm688, %v671, 0
      %vm695 = vcmask 1045504
      %v697 = vsel %vm695, %v686, 0
      %699 = vmatprep.subr.bf16.mxu0 0
      %700 = vmatpush1.bf16.msra.mxu0 0
      %701 = vmatprep.subr.bf16.mxu0 0
      %702 = vmatpush1.bf16.msra.mxu0 0
      %703 = vmatprep.subr.bf16.mxu0 0
      %704 = vmatpush1.bf16.msra.mxu0 0
      %705 = vmatprep.subr.bf16.mxu0 0
      %706 = vmatpush1.bf16.msra.mxu0 0
      %707 = vmatprep.subr.bf16.mxu0 0
      %708 = vmatpush1.bf16.msra.mxu0 0
      %709 = vmatprep.subr.bf16.mxu0 0
      %710 = vmatpush1.bf16.msra.mxu0 0
      %711 = vmatprep.subr.bf16.mxu0 0
      %712 = vmatpush1.bf16.msra.mxu0 %v697
      %713 = vmatprep.subr.bf16.mxu0 0
      %714 = vmatpush1.bf16.msra.mxu0 %v685
      %715 = vmatprep.subr.bf16.mxu0 0
      %716 = vmatpush2.bf16.msra.mxu0 0
      %717 = vmatprep.subr.bf16.mxu0 0
      %718 = vmatpush2.bf16.msra.mxu0 0
      %719 = vmatprep.subr.bf16.mxu0 0
      %720 = vmatpush2.bf16.msra.mxu0 0
      %721 = vmatprep.subr.bf16.mxu0 0
      %722 = vmatpush2.bf16.msra.mxu0 0
      %723 = vmatprep.subr.bf16.mxu0 0
      %724 = vmatpush2.bf16.msra.mxu0 0
      %725 = vmatprep.subr.bf16.mxu0 0
      %726 = vmatpush2.bf16.msra.mxu0 0
      %727 = vmatprep.subr.bf16.mxu0 0
      %728 = vmatpush2.bf16.msra.mxu0 0
      %729 = vmatprep.subr.bf16.mxu0 0
      %730 = vmatpush2.bf16.msra.mxu0 0
      %731 = vmatprep.mubr.bf16.mxu0 0
      %732 = vmatmul.mubr.bf16.gmra.mxu0 %v690
      %v733 = vpop.f32.mrf.mxu0
      %v734 = vadd.f32 0.0, %v733
      %v735 = vpop.f32.mrf.mxu0
      %v736 = vpop.f32.mrf.mxu0
      %v737 = vadd.f32 0.0, %v736
      %v738 = vpop.f32.mrf.mxu0
      %739 = vmatprep.mubr.bf16.mxu0 0
      %740 = vmatmul.mubr.bf16.gmra.mxu0 %v693
      %v741 = vpop.f32.mrf.mxu0
      %v742 = vadd.f32 0.0, %v741
      %v743 = vpop.f32.mrf.mxu0
      %v744 = vpop.f32.mrf.mxu0
      %v745 = vpop.f32.mrf.mxu0
      %746 = vdwg.mxu0
      %v751 = vunpack.c.l.b16 %v663
      %v752 = vunpack.c.l.b16 %v664
      %v753 = vunpack.c.l.b16 %v665
      %v754 = vunpack.c.l.b16 %v666
      %v755 = vpack.c.b16 %v752, %v751
      %v756 = vpack.c.b16 %v754, %v753
      %v759 = vsel %vm688, %v661, 0
      %v762 = vsel %vm688, %v662, 0
      %v765 = vsel %vm695, %v756, 0
      %767 = vmatprep.subr.bf16.mxu0 0
      %768 = vmatpush1.bf16.msra.mxu0 0
      %769 = vmatprep.subr.bf16.mxu0 0
      %770 = vmatpush1.bf16.msra.mxu0 0
      %771 = vmatprep.subr.bf16.mxu0 0
      %772 = vmatpush1.bf16.msra.mxu0 0
      %773 = vmatprep.subr.bf16.mxu0 0
      %774 = vmatpush1.bf16.msra.mxu0 0
      %775 = vmatprep.subr.bf16.mxu0 0
      %776 = vmatpush1.bf16.msra.mxu0 0
      %777 = vmatprep.subr.bf16.mxu0 0
      %778 = vmatpush1.bf16.msra.mxu0 0
      %779 = vmatprep.subr.bf16.mxu0 0
      %780 = vmatpush1.bf16.msra.mxu0 %v765
      %781 = vmatprep.subr.bf16.mxu0 0
      %782 = vmatpush1.bf16.msra.mxu0 %v755
      %783 = vmatprep.subr.bf16.mxu0 0
      %784 = vmatpush2.bf16.msra.mxu0 0
      %785 = vmatprep.subr.bf16.mxu0 0
      %786 = vmatpush2.bf16.msra.mxu0 0
      %787 = vmatprep.subr.bf16.mxu0 0
      %788 = vmatpush2.bf16.msra.mxu0 0
      %789 = vmatprep.subr.bf16.mxu0 0
      %790 = vmatpush2.bf16.msra.mxu0 0
      %791 = vmatprep.subr.bf16.mxu0 0
      %792 = vmatpush2.bf16.msra.mxu0 0
      %793 = vmatprep.subr.bf16.mxu0 0
      %794 = vmatpush2.bf16.msra.mxu0 0
      %795 = vmatprep.subr.bf16.mxu0 0
      %796 = vmatpush2.bf16.msra.mxu0 0
      %797 = vmatprep.subr.bf16.mxu0 0
      %798 = vmatpush2.bf16.msra.mxu0 0
      %799 = vmatprep.mubr.bf16.mxu0 0
      %800 = vmatmul.mubr.bf16.gmra.mxu0 %v759
      %v801 = vpop.f32.mrf.mxu0
      %v802 = vadd.f32 %v734, %v801
      %v803 = vpop.f32.mrf.mxu0
      %v804 = vpop.f32.mrf.mxu0
      %v805 = vadd.f32 %v737, %v804
      %v806 = vpop.f32.mrf.mxu0
      %807 = vmatprep.mubr.bf16.mxu0 0
      %808 = vmatmul.mubr.bf16.gmra.mxu0 %v762
      %v809 = vpop.f32.mrf.mxu0
      %v810 = vadd.f32 %v742, %v809
      %v811 = vpop.f32.mrf.mxu0
      %v812 = vpop.f32.mrf.mxu0
      %v813 = vpop.f32.mrf.mxu0
      %814 = vdwg.mxu0
      %v815 = vld [vmem:[%s651 + $0x2] sm:$0xff]
      %v816 = vld [vmem:[%s651 + $0xa] sm:$0xff]
      %v817 = vld [vmem:[%s651 + $0x12] sm:$0xf]
      %v818 = vpack.c.bf16 %v816, %v815
      %v819 = vpack.c.bf16 %v817, %v817
      %s820 = scalar_lea.vmem %s1, 32
      %v821 = vld [vmem:[%s820] sm:$0xf]
      %v822 = vld [vmem:[%s820 + $0x4] sm:$0xf]
      %v823 = vld [vmem:[%s820 + $0x8] sm:$0xf]
      %v824 = vld [vmem:[%s820 + $0xc] sm:$0x3]
      %v829 = vunpack.c.l.b16 %v821
      %v830 = vunpack.c.l.b16 %v822
      %v831 = vunpack.c.l.b16 %v823
      %v832 = vunpack.c.l.b16 %v824
      %v833 = vpack.c.b16 %v830, %v829
      %v834 = vpack.c.b16 %v832, %v831
      %v837 = vsel %vm688, %v818, 0
      %v840 = vsel %vm688, %v819, 0
      %v843 = vsel %vm695, %v834, 0
      %845 = vmatprep.subr.bf16.mxu0 0
      %846 = vmatpush1.bf16.msra.mxu0 0
      %847 = vmatprep.subr.bf16.mxu0 0
      %848 = vmatpush1.bf16.msra.mxu0 0
      %849 = vmatprep.subr.bf16.mxu0 0
      %850 = vmatpush1.bf16.msra.mxu0 0
      %851 = vmatprep.subr.bf16.mxu0 0
      %852 = vmatpush1.bf16.msra.mxu0 0
      %853 = vmatprep.subr.bf16.mxu0 0
      %854 = vmatpush1.bf16.msra.mxu0 0
      %855 = vmatprep.subr.bf16.mxu0 0
      %856 = vmatpush1.bf16.msra.mxu0 0
      %857 = vmatprep.subr.bf16.mxu0 0
      %858 = vmatpush1.bf16.msra.mxu0 %v843
      %859 = vmatprep.subr.bf16.mxu0 0
      %860 = vmatpush1.bf16.msra.mxu0 %v833
      %861 = vmatprep.subr.bf16.mxu0 0
      %862 = vmatpush2.bf16.msra.mxu0 0
      %863 = vmatprep.subr.bf16.mxu0 0
      %864 = vmatpush2.bf16.msra.mxu0 0
      %865 = vmatprep.subr.bf16.mxu0 0
      %866 = vmatpush2.bf16.msra.mxu0 0
      %867 = vmatprep.subr.bf16.mxu0 0
      %868 = vmatpush2.bf16.msra.mxu0 0
      %869 = vmatprep.subr.bf16.mxu0 0
      %870 = vmatpush2.bf16.msra.mxu0 0
      %871 = vmatprep.subr.bf16.mxu0 0
      %872 = vmatpush2.bf16.msra.mxu0 0
      %873 = vmatprep.subr.bf16.mxu0 0
      %874 = vmatpush2.bf16.msra.mxu0 0
      %875 = vmatprep.subr.bf16.mxu0 0
      %876 = vmatpush2.bf16.msra.mxu0 0
      %877 = vmatprep.mubr.bf16.mxu0 0
      %878 = vmatmul.mubr.bf16.gmra.mxu0 %v837
      %v879 = vpop.f32.mrf.mxu0
      %v880 = vadd.f32 0.0, %v879
      %v881 = vpop.f32.mrf.mxu0
      %v882 = vpop.f32.mrf.mxu0
      %v883 = vadd.f32 0.0, %v882
      %v884 = vpop.f32.mrf.mxu0
      %885 = vmatprep.mubr.bf16.mxu0 0
      %886 = vmatmul.mubr.bf16.gmra.mxu0 %v840
      %v887 = vpop.f32.mrf.mxu0
      %v888 = vadd.f32 0.0, %v887
      %v889 = vpop.f32.mrf.mxu0
      %v890 = vpop.f32.mrf.mxu0
      %v891 = vpop.f32.mrf.mxu0
      %892 = vdwg.mxu0
      %v893 = vadd.f32 %v802, %v880
      %v894 = vadd.f32 %v805, %v883
      %v895 = vadd.f32 %v810, %v888
      %v896 = vld [vmem:[%s651 + $0x3] sm:$0xff]
      %v897 = vld [vmem:[%s651 + $0xb] sm:$0xff]
      %v898 = vld [vmem:[%s651 + $0x13] sm:$0xf]
      %v899 = vpack.c.bf16 %v897, %v896
      %v900 = vpack.c.bf16 %v898, %v898
      %s901 = scalar_lea.vmem %s1, 48
      %v902 = vld [vmem:[%s901] sm:$0xf]
      %v903 = vld [vmem:[%s901 + $0x4] sm:$0xf]
      %v904 = vld [vmem:[%s901 + $0x8] sm:$0xf]
      %v905 = vld [vmem:[%s901 + $0xc] sm:$0x3]
      %v910 = vunpack.c.l.b16 %v902
      %v911 = vunpack.c.l.b16 %v903
      %v912 = vunpack.c.l.b16 %v904
      %v913 = vunpack.c.l.b16 %v905
      %v914 = vpack.c.b16 %v911, %v910
      %v915 = vpack.c.b16 %v913, %v912
      %v918 = vsel %vm688, %v899, 0
      %v921 = vsel %vm688, %v900, 0
      %v924 = vsel %vm695, %v915, 0
      %926 = vmatprep.subr.bf16.mxu0 0
      %927 = vmatpush1.bf16.msra.mxu0 0
      %928 = vmatprep.subr.bf16.mxu0 0
      %929 = vmatpush1.bf16.msra.mxu0 0
      %930 = vmatprep.subr.bf16.mxu0 0
      %931 = vmatpush1.bf16.msra.mxu0 0
      %932 = vmatprep.subr.bf16.mxu0 0
      %933 = vmatpush1.bf16.msra.mxu0 0
      %934 = vmatprep.subr.bf16.mxu0 0
      %935 = vmatpush1.bf16.msra.mxu0 0
      %936 = vmatprep.subr.bf16.mxu0 0
      %937 = vmatpush1.bf16.msra.mxu0 0
      %938 = vmatprep.subr.bf16.mxu0 0
      %939 = vmatpush1.bf16.msra.mxu0 %v924
      %940 = vmatprep.subr.bf16.mxu0 0
      %941 = vmatpush1.bf16.msra.mxu0 %v914
      %942 = vmatprep.subr.bf16.mxu0 0
      %943 = vmatpush2.bf16.msra.mxu0 0
      %944 = vmatprep.subr.bf16.mxu0 0
      %945 = vmatpush2.bf16.msra.mxu0 0
      %946 = vmatprep.subr.bf16.mxu0 0
      %947 = vmatpush2.bf16.msra.mxu0 0
      %948 = vmatprep.subr.bf16.mxu0 0
      %949 = vmatpush2.bf16.msra.mxu0 0
      %950 = vmatprep.subr.bf16.mxu0 0
      %951 = vmatpush2.bf16.msra.mxu0 0
      %952 = vmatprep.subr.bf16.mxu0 0
      %953 = vmatpush2.bf16.msra.mxu0 0
      %954 = vmatprep.subr.bf16.mxu0 0
      %955 = vmatpush2.bf16.msra.mxu0 0
      %956 = vmatprep.subr.bf16.mxu0 0
      %957 = vmatpush2.bf16.msra.mxu0 0
      %958 = vmatprep.mubr.bf16.mxu0 0
      %959 = vmatmul.mubr.bf16.gmra.mxu0 %v918
      %v960 = vpop.f32.mrf.mxu0
      %v961 = vadd.f32 0.0, %v960
      %v962 = vpop.f32.mrf.mxu0
      %v963 = vpop.f32.mrf.mxu0
      %v964 = vadd.f32 0.0, %v963
      %v965 = vpop.f32.mrf.mxu0
      %966 = vmatprep.mubr.bf16.mxu0 0
      %967 = vmatmul.mubr.bf16.gmra.mxu0 %v921
      %v968 = vpop.f32.mrf.mxu0
      %v969 = vadd.f32 0.0, %v968
      %v970 = vpop.f32.mrf.mxu0
      %v971 = vpop.f32.mrf.mxu0
      %v972 = vpop.f32.mrf.mxu0
      %973 = vdwg.mxu0
      %v974 = vadd.f32 %v893, %v961
      %v975 = vadd.f32 %v894, %v964
      %v976 = vadd.f32 %v895, %v969
      %v977 = vld [vmem:[%s651 + $0x4] sm:$0xff]
      %v978 = vld [vmem:[%s651 + $0xc] sm:$0xff]
      %v979 = vld [vmem:[%s651 + $0x14] sm:$0xf]
      %v980 = vpack.c.bf16 %v978, %v977
      %v981 = vpack.c.bf16 %v979, %v979
      %s982 = scalar_lea.vmem %s1, 64
      %v983 = vld [vmem:[%s982] sm:$0xf]
      %v984 = vld [vmem:[%s982 + $0x4] sm:$0xf]
      %v985 = vld [vmem:[%s982 + $0x8] sm:$0xf]
      %v986 = vld [vmem:[%s982 + $0xc] sm:$0x3]
      %v991 = vunpack.c.l.b16 %v983
      %v992 = vunpack.c.l.b16 %v984
      %v993 = vunpack.c.l.b16 %v985
      %v994 = vunpack.c.l.b16 %v986
      %v995 = vpack.c.b16 %v992, %v991
      %v996 = vpack.c.b16 %v994, %v993
      %v999 = vsel %vm688, %v980, 0
      %v1002 = vsel %vm688, %v981, 0
      %v1005 = vsel %vm695, %v996, 0
      %1007 = vmatprep.subr.bf16.mxu0 0
      %1008 = vmatpush1.bf16.msra.mxu0 0
      %1009 = vmatprep.subr.bf16.mxu0 0
      %1010 = vmatpush1.bf16.msra.mxu0 0
      %1011 = vmatprep.subr.bf16.mxu0 0
      %1012 = vmatpush1.bf16.msra.mxu0 0
      %1013 = vmatprep.subr.bf16.mxu0 0
      %1014 = vmatpush1.bf16.msra.mxu0 0
      %1015 = vmatprep.subr.bf16.mxu0 0
      %1016 = vmatpush1.bf16.msra.mxu0 0
      %1017 = vmatprep.subr.bf16.mxu0 0
      %1018 = vmatpush1.bf16.msra.mxu0 0
      %1019 = vmatprep.subr.bf16.mxu0 0
      %1020 = vmatpush1.bf16.msra.mxu0 %v1005
      %1021 = vmatprep.subr.bf16.mxu0 0
      %1022 = vmatpush1.bf16.msra.mxu0 %v995
      %1023 = vmatprep.subr.bf16.mxu0 0
      %1024 = vmatpush2.bf16.msra.mxu0 0
      %1025 = vmatprep.subr.bf16.mxu0 0
      %1026 = vmatpush2.bf16.msra.mxu0 0
      %1027 = vmatprep.subr.bf16.mxu0 0
      %1028 = vmatpush2.bf16.msra.mxu0 0
      %1029 = vmatprep.subr.bf16.mxu0 0
      %1030 = vmatpush2.bf16.msra.mxu0 0
      %1031 = vmatprep.subr.bf16.mxu0 0
      %1032 = vmatpush2.bf16.msra.mxu0 0
      %1033 = vmatprep.subr.bf16.mxu0 0
      %1034 = vmatpush2.bf16.msra.mxu0 0
      %1035 = vmatprep.subr.bf16.mxu0 0
      %1036 = vmatpush2.bf16.msra.mxu0 0
      %1037 = vmatprep.subr.bf16.mxu0 0
      %1038 = vmatpush2.bf16.msra.mxu0 0
      %1039 = vmatprep.mubr.bf16.mxu0 0
      %1040 = vmatmul.mubr.bf16.gmra.mxu0 %v999
      %v1041 = vpop.f32.mrf.mxu0
      %v1042 = vadd.f32 0.0, %v1041
      %v1043 = vpop.f32.mrf.mxu0
      %v1044 = vpop.f32.mrf.mxu0
      %v1045 = vadd.f32 0.0, %v1044
      %v1046 = vpop.f32.mrf.mxu0
      %1047 = vmatprep.mubr.bf16.mxu0 0
      %1048 = vmatmul.mubr.bf16.gmra.mxu0 %v1002
      %v1049 = vpop.f32.mrf.mxu0
      %v1050 = vadd.f32 0.0, %v1049
      %v1051 = vpop.f32.mrf.mxu0
      %v1052 = vpop.f32.mrf.mxu0
      %v1053 = vpop.f32.mrf.mxu0
      %1054 = vdwg.mxu0
      %v1055 = vadd.f32 %v974, %v1042
      %v1056 = vadd.f32 %v975, %v1045
      %v1057 = vadd.f32 %v976, %v1050
      %v1058 = vld [vmem:[%s651 + $0x5] sm:$0xff]
      %v1059 = vld [vmem:[%s651 + $0xd] sm:$0xff]
      %v1060 = vld [vmem:[%s651 + $0x15] sm:$0xf]
      %v1061 = vpack.c.bf16 %v1059, %v1058
      %v1062 = vpack.c.bf16 %v1060, %v1060
      %s1063 = scalar_lea.vmem %s1, 80
      %v1064 = vld [vmem:[%s1063] sm:$0xf]
      %v1065 = vld [vmem:[%s1063 + $0x4] sm:$0xf]
      %v1066 = vld [vmem:[%s1063 + $0x8] sm:$0xf]
      %v1067 = vld [vmem:[%s1063 + $0xc] sm:$0x3]
      %v1072 = vunpack.c.l.b16 %v1064
      %v1073 = vunpack.c.l.b16 %v1065
      %v1074 = vunpack.c.l.b16 %v1066
      %v1075 = vunpack.c.l.b16 %v1067
      %v1076 = vpack.c.b16 %v1073, %v1072
      %v1077 = vpack.c.b16 %v1075, %v1074
      %v1080 = vsel %vm688, %v1061, 0
      %v1083 = vsel %vm688, %v1062, 0
      %v1086 = vsel %vm695, %v1077, 0
      %1088 = vmatprep.subr.bf16.mxu0 0
      %1089 = vmatpush1.bf16.msra.mxu0 0
      %1090 = vmatprep.subr.bf16.mxu0 0
      %1091 = vmatpush1.bf16.msra.mxu0 0
      %1092 = vmatprep.subr.bf16.mxu0 0
      %1093 = vmatpush1.bf16.msra.mxu0 0
      %1094 = vmatprep.subr.bf16.mxu0 0
      %1095 = vmatpush1.bf16.msra.mxu0 0
      %1096 = vmatprep.subr.bf16.mxu0 0
      %1097 = vmatpush1.bf16.msra.mxu0 0
      %1098 = vmatprep.subr.bf16.mxu0 0
      %1099 = vmatpush1.bf16.msra.mxu0 0
      %1100 = vmatprep.subr.bf16.mxu0 0
      %1101 = vmatpush1.bf16.msra.mxu0 %v1086
      %1102 = vmatprep.subr.bf16.mxu0 0
      %1103 = vmatpush1.bf16.msra.mxu0 %v1076
      %1104 = vmatprep.subr.bf16.mxu0 0
      %1105 = vmatpush2.bf16.msra.mxu0 0
      %1106 = vmatprep.subr.bf16.mxu0 0
      %1107 = vmatpush2.bf16.msra.mxu0 0
      %1108 = vmatprep.subr.bf16.mxu0 0
      %1109 = vmatpush2.bf16.msra.mxu0 0
      %1110 = vmatprep.subr.bf16.mxu0 0
      %1111 = vmatpush2.bf16.msra.mxu0 0
      %1112 = vmatprep.subr.bf16.mxu0 0
      %1113 = vmatpush2.bf16.msra.mxu0 0
      %1114 = vmatprep.subr.bf16.mxu0 0
      %1115 = vmatpush2.bf16.msra.mxu0 0
      %1116 = vmatprep.subr.bf16.mxu0 0
      %1117 = vmatpush2.bf16.msra.mxu0 0
      %1118 = vmatprep.subr.bf16.mxu0 0
      %1119 = vmatpush2.bf16.msra.mxu0 0
      %1120 = vmatprep.mubr.bf16.mxu0 0
      %1121 = vmatmul.mubr.bf16.gmra.mxu0 %v1080
      %v1122 = vpop.f32.mrf.mxu0
      %v1123 = vadd.f32 0.0, %v1122
      %v1124 = vpop.f32.mrf.mxu0
      %v1125 = vpop.f32.mrf.mxu0
      %v1126 = vadd.f32 0.0, %v1125
      %v1127 = vpop.f32.mrf.mxu0
      %1128 = vmatprep.mubr.bf16.mxu0 0
      %1129 = vmatmul.mubr.bf16.gmra.mxu0 %v1083
      %v1130 = vpop.f32.mrf.mxu0
      %v1131 = vadd.f32 0.0, %v1130
      %v1132 = vpop.f32.mrf.mxu0
      %v1133 = vpop.f32.mrf.mxu0
      %v1134 = vpop.f32.mrf.mxu0
      %1135 = vdwg.mxu0
      %v1136 = vadd.f32 %v1055, %v1123
      %v1137 = vadd.f32 %v1056, %v1126
      %v1138 = vadd.f32 %v1057, %v1131
      %v1139 = vld [vmem:[%s651 + $0x6] sm:$0xff]
      %v1140 = vld [vmem:[%s651 + $0xe] sm:$0xff]
      %v1141 = vld [vmem:[%s651 + $0x16] sm:$0xf]
      %v1142 = vpack.c.bf16 %v1140, %v1139
      %v1143 = vpack.c.bf16 %v1141, %v1141
      %s1144 = scalar_lea.vmem %s1, 96
      %v1145 = vld [vmem:[%s1144] sm:$0xf]
      %v1146 = vld [vmem:[%s1144 + $0x4] sm:$0xf]
      %v1147 = vld [vmem:[%s1144 + $0x8] sm:$0xf]
      %v1148 = vld [vmem:[%s1144 + $0xc] sm:$0x3]
      %v1153 = vunpack.c.l.b16 %v1145
      %v1154 = vunpack.c.l.b16 %v1146
      %v1155 = vunpack.c.l.b16 %v1147
      %v1156 = vunpack.c.l.b16 %v1148
      %v1157 = vpack.c.b16 %v1154, %v1153
      %v1158 = vpack.c.b16 %v1156, %v1155
      %v1161 = vsel %vm688, %v1142, 0
      %v1164 = vsel %vm688, %v1143, 0
      %v1167 = vsel %vm695, %v1158, 0
      %1169 = vmatprep.subr.bf16.mxu0 0
      %1170 = vmatpush1.bf16.msra.mxu0 0
      %1171 = vmatprep.subr.bf16.mxu0 0
      %1172 = vmatpush1.bf16.msra.mxu0 0
      %1173 = vmatprep.subr.bf16.mxu0 0
      %1174 = vmatpush1.bf16.msra.mxu0 0
      %1175 = vmatprep.subr.bf16.mxu0 0
      %1176 = vmatpush1.bf16.msra.mxu0 0
      %1177 = vmatprep.subr.bf16.mxu0 0
      %1178 = vmatpush1.bf16.msra.mxu0 0
      %1179 = vmatprep.subr.bf16.mxu0 0
      %1180 = vmatpush1.bf16.msra.mxu0 0
      %1181 = vmatprep.subr.bf16.mxu0 0
      %1182 = vmatpush1.bf16.msra.mxu0 %v1167
      %1183 = vmatprep.subr.bf16.mxu0 0
      %1184 = vmatpush1.bf16.msra.mxu0 %v1157
      %1185 = vmatprep.subr.bf16.mxu0 0
      %1186 = vmatpush2.bf16.msra.mxu0 0
      %1187 = vmatprep.subr.bf16.mxu0 0
      %1188 = vmatpush2.bf16.msra.mxu0 0
      %1189 = vmatprep.subr.bf16.mxu0 0
      %1190 = vmatpush2.bf16.msra.mxu0 0
      %1191 = vmatprep.subr.bf16.mxu0 0
      %1192 = vmatpush2.bf16.msra.mxu0 0
      %1193 = vmatprep.subr.bf16.mxu0 0
      %1194 = vmatpush2.bf16.msra.mxu0 0
      %1195 = vmatprep.subr.bf16.mxu0 0
      %1196 = vmatpush2.bf16.msra.mxu0 0
      %1197 = vmatprep.subr.bf16.mxu0 0
      %1198 = vmatpush2.bf16.msra.mxu0 0
      %1199 = vmatprep.subr.bf16.mxu0 0
      %1200 = vmatpush2.bf16.msra.mxu0 0
      %1201 = vmatprep.mubr.bf16.mxu0 0
      %1202 = vmatmul.mubr.bf16.gmra.mxu0 %v1161
      %v1203 = vpop.f32.mrf.mxu0
      %v1204 = vadd.f32 0.0, %v1203
      %v1205 = vpop.f32.mrf.mxu0
      %v1206 = vpop.f32.mrf.mxu0
      %v1207 = vadd.f32 0.0, %v1206
      %v1208 = vpop.f32.mrf.mxu0
      %1209 = vmatprep.mubr.bf16.mxu0 0
      %1210 = vmatmul.mubr.bf16.gmra.mxu0 %v1164
      %v1211 = vpop.f32.mrf.mxu0
      %v1212 = vadd.f32 0.0, %v1211
      %v1213 = vpop.f32.mrf.mxu0
      %v1214 = vpop.f32.mrf.mxu0
      %v1215 = vpop.f32.mrf.mxu0
      %1216 = vdwg.mxu0
      %v1217 = vadd.f32 %v1136, %v1204
      %v1218 = vadd.f32 %v1137, %v1207
      %v1219 = vadd.f32 %v1138, %v1212
      %v1220 = vld [vmem:[%s651 + $0x7] sm:$0xff]
      %v1221 = vld [vmem:[%s651 + $0xf] sm:$0xff]
      %v1222 = vld [vmem:[%s651 + $0x17] sm:$0xf]
      %v1223 = vpack.c.bf16 %v1221, %v1220
      %v1224 = vpack.c.bf16 %v1222, %v1222
      %s1225 = scalar_lea.vmem %s1, 112
      %v1226 = vld [vmem:[%s1225] sm:$0xf]
      %v1227 = vld [vmem:[%s1225 + $0x4] sm:$0xf]
      %v1228 = vld [vmem:[%s1225 + $0x8] sm:$0xf]
      %v1229 = vld [vmem:[%s1225 + $0xc] sm:$0x3]
      %v1234 = vunpack.c.l.b16 %v1226
      %v1235 = vunpack.c.l.b16 %v1227
      %v1236 = vunpack.c.l.b16 %v1228
      %v1237 = vunpack.c.l.b16 %v1229
      %v1238 = vpack.c.b16 %v1235, %v1234
      %v1239 = vpack.c.b16 %v1237, %v1236
      %v1242 = vsel %vm688, %v1223, 0
      %v1245 = vsel %vm688, %v1224, 0
      %v1248 = vsel %vm695, %v1239, 0
      %1250 = vmatprep.subr.bf16.mxu0 0
      %1251 = vmatpush1.bf16.msra.mxu0 0
      %1252 = vmatprep.subr.bf16.mxu0 0
      %1253 = vmatpush1.bf16.msra.mxu0 0
      %1254 = vmatprep.subr.bf16.mxu0 0
      %1255 = vmatpush1.bf16.msra.mxu0 0
      %1256 = vmatprep.subr.bf16.mxu0 0
      %1257 = vmatpush1.bf16.msra.mxu0 0
      %1258 = vmatprep.subr.bf16.mxu0 0
      %1259 = vmatpush1.bf16.msra.mxu0 0
      %1260 = vmatprep.subr.bf16.mxu0 0
      %1261 = vmatpush1.bf16.msra.mxu0 0
      %1262 = vmatprep.subr.bf16.mxu0 0
      %1263 = vmatpush1.bf16.msra.mxu0 %v1248
      %1264 = vmatprep.subr.bf16.mxu0 0
      %1265 = vmatpush1.bf16.msra.mxu0 %v1238
      %1266 = vmatprep.subr.bf16.mxu0 0
      %1267 = vmatpush2.bf16.msra.mxu0 0
      %1268 = vmatprep.subr.bf16.mxu0 0
      %1269 = vmatpush2.bf16.msra.mxu0 0
      %1270 = vmatprep.subr.bf16.mxu0 0
      %1271 = vmatpush2.bf16.msra.mxu0 0
      %1272 = vmatprep.subr.bf16.mxu0 0
      %1273 = vmatpush2.bf16.msra.mxu0 0
      %1274 = vmatprep.subr.bf16.mxu0 0
      %1275 = vmatpush2.bf16.msra.mxu0 0
      %1276 = vmatprep.subr.bf16.mxu0 0
      %1277 = vmatpush2.bf16.msra.mxu0 0
      %1278 = vmatprep.subr.bf16.mxu0 0
      %1279 = vmatpush2.bf16.msra.mxu0 0
      %1280 = vmatprep.subr.bf16.mxu0 0
      %1281 = vmatpush2.bf16.msra.mxu0 0
      %1282 = vmatprep.mubr.bf16.mxu0 0
      %1283 = vmatmul.mubr.bf16.gmra.mxu0 %v1242
      %v1284 = vpop.f32.mrf.mxu0
      %v1285 = vadd.f32 0.0, %v1284
      %v1286 = vpop.f32.mrf.mxu0
      %v1287 = vpop.f32.mrf.mxu0
      %v1288 = vadd.f32 0.0, %v1287
      %v1289 = vpop.f32.mrf.mxu0
      %1290 = vmatprep.mubr.bf16.mxu0 0
      %1291 = vmatmul.mubr.bf16.gmra.mxu0 %v1245
      %v1292 = vpop.f32.mrf.mxu0
      %v1293 = vadd.f32 0.0, %v1292
      %v1294 = vpop.f32.mrf.mxu0
      %v1295 = vpop.f32.mrf.mxu0
      %v1296 = vpop.f32.mrf.mxu0
      %1297 = vdwg.mxu0
      %v1298 = vadd.f32 %v1217, %v1285
      %v1299 = vadd.f32 %v1218, %v1288
      %v1300 = vadd.f32 %v1219, %v1293
      %v1301 = vld [vmem:[%s651 + $0x8] sm:$0xff]
      %v1302 = vld [vmem:[%s651 + $0x10] sm:$0xff]
      %v1303 = vld [vmem:[%s651 + $0x18] sm:$0xf]
      %v1304 = vpack.c.bf16 %v1302, %v1301
      %v1305 = vpack.c.bf16 %v1303, %v1303
      %s1306 = scalar_lea.vmem %s1, 128
      %v1307 = vld [vmem:[%s1306] sm:$0xf]
      %v1308 = vld [vmem:[%s1306 + $0x4] sm:$0xf]
      %v1309 = vld [vmem:[%s1306 + $0x8] sm:$0xf]
      %v1310 = vld [vmem:[%s1306 + $0xc] sm:$0x3]
      %v1315 = vunpack.c.l.b16 %v1307
      %v1316 = vunpack.c.l.b16 %v1308
      %v1317 = vunpack.c.l.b16 %v1309
      %v1318 = vunpack.c.l.b16 %v1310
      %v1319 = vpack.c.b16 %v1316, %v1315
      %v1320 = vpack.c.b16 %v1318, %v1317
      %v1323 = vsel %vm688, %v1304, 0
      %v1326 = vsel %vm688, %v1305, 0
      %v1329 = vsel %vm695, %v1320, 0
      %1331 = vmatprep.subr.bf16.mxu0 0
      %1332 = vmatpush1.bf16.msra.mxu0 0
      %1333 = vmatprep.subr.bf16.mxu0 0
      %1334 = vmatpush1.bf16.msra.mxu0 0
      %1335 = vmatprep.subr.bf16.mxu0 0
      %1336 = vmatpush1.bf16.msra.mxu0 0
      %1337 = vmatprep.subr.bf16.mxu0 0
      %1338 = vmatpush1.bf16.msra.mxu0 0
      %1339 = vmatprep.subr.bf16.mxu0 0
      %1340 = vmatpush1.bf16.msra.mxu0 0
      %1341 = vmatprep.subr.bf16.mxu0 0
      %1342 = vmatpush1.bf16.msra.mxu0 0
      %1343 = vmatprep.subr.bf16.mxu0 0
      %1344 = vmatpush1.bf16.msra.mxu0 %v1329
      %1345 = vmatprep.subr.bf16.mxu0 0
      %1346 = vmatpush1.bf16.msra.mxu0 %v1319
      %1347 = vmatprep.subr.bf16.mxu0 0
      %1348 = vmatpush2.bf16.msra.mxu0 0
      %1349 = vmatprep.subr.bf16.mxu0 0
      %1350 = vmatpush2.bf16.msra.mxu0 0
      %1351 = vmatprep.subr.bf16.mxu0 0
      %1352 = vmatpush2.bf16.msra.mxu0 0
      %1353 = vmatprep.subr.bf16.mxu0 0
      %1354 = vmatpush2.bf16.msra.mxu0 0
      %1355 = vmatprep.subr.bf16.mxu0 0
      %1356 = vmatpush2.bf16.msra.mxu0 0
      %1357 = vmatprep.subr.bf16.mxu0 0
      %1358 = vmatpush2.bf16.msra.mxu0 0
      %1359 = vmatprep.subr.bf16.mxu0 0
      %1360 = vmatpush2.bf16.msra.mxu0 0
      %1361 = vmatprep.subr.bf16.mxu0 0
      %1362 = vmatpush2.bf16.msra.mxu0 0
      %1363 = vmatprep.mubr.bf16.mxu0 0
      %1364 = vmatmul.mubr.bf16.gmra.mxu0 %v1323
      %v1365 = vpop.f32.mrf.mxu0
      %v1366 = vadd.f32 0.0, %v1365
      %v1367 = vpop.f32.mrf.mxu0
      %v1368 = vpop.f32.mrf.mxu0
      %v1369 = vadd.f32 0.0, %v1368
      %v1370 = vpop.f32.mrf.mxu0
      %1371 = vmatprep.mubr.bf16.mxu0 0
      %1372 = vmatmul.mubr.bf16.gmra.mxu0 %v1326
      %v1373 = vpop.f32.mrf.mxu0
      %v1374 = vadd.f32 0.0, %v1373
      %v1375 = vpop.f32.mrf.mxu0
      %v1376 = vpop.f32.mrf.mxu0
      %v1377 = vpop.f32.mrf.mxu0
      %1378 = vdwg.mxu0
      %v1379 = vadd.f32 %v1298, %v1366
      %v1380 = vadd.f32 %v1299, %v1369
      %v1381 = vadd.f32 %v1300, %v1374
      %v1382 = vld [vmem:[%s2] sm:$0x1]
      %v1384 = vlaneseq
      %v1385 = vshrl.u32 %v1384, 7
      %v1386 = vsub.s32 0, %v1385
      %v1387 = vrot.slane %v1382, %v1386
      %v1389 = vadd.f32 %v1379, %v1387
      %v1390 = vadd.f32 %v1380, %v1387
      %v1391 = vadd.f32 %v1381, %v1387
      %v1392 = vmax.f32 %v1389, 0.0
      %v1393 = vmax.f32 %v1390, 0.0
      %v1394 = vmax.f32 %v1391, 0.0
      %vm1395 = vcmask 654336
      %1396 = vst.msk [vmem:[#allocation2] sm:$0xff] %vm1395, %v1392
      %1397 = vst.msk [vmem:[#allocation2 + $0x8] sm:$0xff] %vm1395, %v1393
      %vm1398 = vcmask 650240
      %1399 = vst.msk [vmem:[#allocation2 + $0x10] sm:$0xf] %vm1398, %v1394
      %v1400 = vld [vmem:[#allocation2] sm:$0xff]
      %v1401 = vld [vmem:[#allocation2 + $0x8] sm:$0xf]
      %v1402 = vpack.c.bf16 %v1401, %v1400
      %v1403 = vld [vmem:[%s3] sm:$0xf]
      %v1404 = vld [vmem:[%s3 + $0x4] sm:$0xf]
      %v1405 = vld [vmem:[%s3 + $0x8] sm:$0xf]
      %v1406 = vld [vmem:[%s3 + $0xc] sm:$0xf]
      %v1407 = vld [vmem:[%s3 + $0x10] sm:$0xf]
      %v1408 = vld [vmem:[%s3 + $0x14] sm:$0xf]
      %v1409 = vld [vmem:[%s3 + $0x18] sm:$0xf]
      %v1410 = vld [vmem:[%s3 + $0x1c] sm:$0xf]
      %v1411 = vld [vmem:[%s3 + $0x20] sm:$0xf]
      %v1412 = vld [vmem:[%s3 + $0x24] sm:$0xf]
      %v1413 = vld [vmem:[#allocation2 + $0x1] sm:$0xff]
      %v1414 = vld [vmem:[#allocation2 + $0x9] sm:$0xf]
      %v1415 = vpack.c.bf16 %v1414, %v1413
      %s1416 = scalar_lea.vmem %s3, 40
      %v1417 = vld [vmem:[%s1416] sm:$0xf]
      %v1418 = vld [vmem:[%s1416 + $0x4] sm:$0xf]
      %v1419 = vld [vmem:[%s1416 + $0x8] sm:$0xf]
      %v1420 = vld [vmem:[%s1416 + $0xc] sm:$0xf]
      %v1421 = vld [vmem:[%s1416 + $0x10] sm:$0xf]
      %v1422 = vld [vmem:[%s1416 + $0x14] sm:$0xf]
      %v1423 = vld [vmem:[%s1416 + $0x18] sm:$0xf]
      %v1424 = vld [vmem:[%s1416 + $0x1c] sm:$0xf]
      %v1425 = vld [vmem:[%s1416 + $0x20] sm:$0xf]
      %v1426 = vld [vmem:[%s1416 + $0x24] sm:$0xf]
      %v1437 = vunpack.c.l.b16 %v1417
      %v1438 = vunpack.c.l.b16 %v1418
      %v1439 = vunpack.c.l.b16 %v1419
      %v1440 = vunpack.c.l.b16 %v1420
      %v1441 = vunpack.c.l.b16 %v1421
      %v1442 = vunpack.c.l.b16 %v1422
      %v1443 = vunpack.c.l.b16 %v1423
      %v1444 = vunpack.c.l.b16 %v1424
      %v1445 = vunpack.c.l.b16 %v1425
      %v1446 = vunpack.c.l.b16 %v1426
      %v1447 = vpack.c.b16 %v1438, %v1437
      %v1448 = vpack.c.b16 %v1440, %v1439
      %v1449 = vpack.c.b16 %v1442, %v1441
      %v1450 = vpack.c.b16 %v1444, %v1443
      %v1451 = vpack.c.b16 %v1446, %v1445
      %v1458 = vsel %vm1395, %v1415, 0
      %1460 = vmatprep.subr.bf16.mxu0 0
      %1461 = vmatpush1.bf16.msra.mxu0 0
      %1462 = vmatprep.subr.bf16.mxu0 0
      %1463 = vmatpush1.bf16.msra.mxu0 0
      %1464 = vmatprep.subr.bf16.mxu0 0
      %1465 = vmatpush1.bf16.msra.mxu0 0
      %1466 = vmatprep.subr.bf16.mxu0 0
      %1467 = vmatpush1.bf16.msra.mxu0 %v1451
      %1468 = vmatprep.subr.bf16.mxu0 0
      %1469 = vmatpush1.bf16.msra.mxu0 %v1450
      %1470 = vmatprep.subr.bf16.mxu0 0
      %1471 = vmatpush1.bf16.msra.mxu0 %v1449
      %1472 = vmatprep.subr.bf16.mxu0 0
      %1473 = vmatpush1.bf16.msra.mxu0 %v1448
      %1474 = vmatprep.subr.bf16.mxu0 0
      %1475 = vmatpush1.bf16.msra.mxu0 %v1447
      %1476 = vmatprep.subr.bf16.mxu0 0
      %1477 = vmatpush2.bf16.msra.mxu0 0
      %1478 = vmatprep.subr.bf16.mxu0 0
      %1479 = vmatpush2.bf16.msra.mxu0 0
      %1480 = vmatprep.subr.bf16.mxu0 0
      %1481 = vmatpush2.bf16.msra.mxu0 0
      %1482 = vmatprep.subr.bf16.mxu0 0
      %1483 = vmatpush2.bf16.msra.mxu0 0
      %1484 = vmatprep.subr.bf16.mxu0 0
      %1485 = vmatpush2.bf16.msra.mxu0 0
      %1486 = vmatprep.subr.bf16.mxu0 0
      %1487 = vmatpush2.bf16.msra.mxu0 0
      %1488 = vmatprep.subr.bf16.mxu0 0
      %1489 = vmatpush2.bf16.msra.mxu0 0
      %1490 = vmatprep.subr.bf16.mxu0 0
      %1491 = vmatpush2.bf16.msra.mxu0 0
      %1492 = vmatprep.mubr.bf16.mxu0 0
      %1493 = vmatmul.mubr.bf16.gmra.mxu0 %v1458
      %v1494 = vpop.f32.mrf.mxu0
      %v1495 = vadd.f32 0.0, %v1494
      %v1496 = vpop.f32.mrf.mxu0
      %v1497 = vpop.f32.mrf.mxu0
      %v1498 = vadd.f32 0.0, %v1497
      %v1499 = vpop.f32.mrf.mxu0
      %1500 = vdwg.mxu0
      %v1511 = vunpack.c.l.b16 %v1403
      %v1512 = vunpack.c.l.b16 %v1404
      %v1513 = vunpack.c.l.b16 %v1405
      %v1514 = vunpack.c.l.b16 %v1406
      %v1515 = vunpack.c.l.b16 %v1407
      %v1516 = vunpack.c.l.b16 %v1408
      %v1517 = vunpack.c.l.b16 %v1409
      %v1518 = vunpack.c.l.b16 %v1410
      %v1519 = vunpack.c.l.b16 %v1411
      %v1520 = vunpack.c.l.b16 %v1412
      %v1521 = vpack.c.b16 %v1512, %v1511
      %v1522 = vpack.c.b16 %v1514, %v1513
      %v1523 = vpack.c.b16 %v1516, %v1515
      %v1524 = vpack.c.b16 %v1518, %v1517
      %v1525 = vpack.c.b16 %v1520, %v1519
      %v1532 = vsel %vm1395, %v1402, 0
      %1534 = vmatprep.subr.bf16.mxu0 0
      %1535 = vmatpush1.bf16.msra.mxu0 0
      %1536 = vmatprep.subr.bf16.mxu0 0
      %1537 = vmatpush1.bf16.msra.mxu0 0
      %1538 = vmatprep.subr.bf16.mxu0 0
      %1539 = vmatpush1.bf16.msra.mxu0 0
      %1540 = vmatprep.subr.bf16.mxu0 0
      %1541 = vmatpush1.bf16.msra.mxu0 %v1525
      %1542 = vmatprep.subr.bf16.mxu0 0
      %1543 = vmatpush1.bf16.msra.mxu0 %v1524
      %1544 = vmatprep.subr.bf16.mxu0 0
      %1545 = vmatpush1.bf16.msra.mxu0 %v1523
      %1546 = vmatprep.subr.bf16.mxu0 0
      %1547 = vmatpush1.bf16.msra.mxu0 %v1522
      %1548 = vmatprep.subr.bf16.mxu0 0
      %1549 = vmatpush1.bf16.msra.mxu0 %v1521
      %1550 = vmatprep.subr.bf16.mxu0 0
      %1551 = vmatpush2.bf16.msra.mxu0 0
      %1552 = vmatprep.subr.bf16.mxu0 0
      %1553 = vmatpush2.bf16.msra.mxu0 0
      %1554 = vmatprep.subr.bf16.mxu0 0
      %1555 = vmatpush2.bf16.msra.mxu0 0
      %1556 = vmatprep.subr.bf16.mxu0 0
      %1557 = vmatpush2.bf16.msra.mxu0 0
      %1558 = vmatprep.subr.bf16.mxu0 0
      %1559 = vmatpush2.bf16.msra.mxu0 0
      %1560 = vmatprep.subr.bf16.mxu0 0
      %1561 = vmatpush2.bf16.msra.mxu0 0
      %1562 = vmatprep.subr.bf16.mxu0 0
      %1563 = vmatpush2.bf16.msra.mxu0 0
      %1564 = vmatprep.subr.bf16.mxu0 0
      %1565 = vmatpush2.bf16.msra.mxu0 0
      %1566 = vmatprep.mubr.bf16.mxu0 0
      %1567 = vmatmul.mubr.bf16.gmra.mxu0 %v1532
      %v1568 = vpop.f32.mrf.mxu0
      %v1569 = vadd.f32 %v1495, %v1568
      %v1570 = vpop.f32.mrf.mxu0
      %v1571 = vpop.f32.mrf.mxu0
      %v1572 = vadd.f32 %v1498, %v1571
      %v1573 = vpop.f32.mrf.mxu0
      %1574 = vdwg.mxu0
      %v1575 = vld [vmem:[#allocation2 + $0x2] sm:$0xff]
      %v1576 = vld [vmem:[#allocation2 + $0xa] sm:$0xf]
      %v1577 = vpack.c.bf16 %v1576, %v1575
      %s1578 = scalar_lea.vmem %s3, 80
      %v1579 = vld [vmem:[%s1578] sm:$0xf]
      %v1580 = vld [vmem:[%s1578 + $0x4] sm:$0xf]
      %v1581 = vld [vmem:[%s1578 + $0x8] sm:$0xf]
      %v1582 = vld [vmem:[%s1578 + $0xc] sm:$0xf]
      %v1583 = vld [vmem:[%s1578 + $0x10] sm:$0xf]
      %v1584 = vld [vmem:[%s1578 + $0x14] sm:$0xf]
      %v1585 = vld [vmem:[%s1578 + $0x18] sm:$0xf]
      %v1586 = vld [vmem:[%s1578 + $0x1c] sm:$0xf]
      %v1587 = vld [vmem:[%s1578 + $0x20] sm:$0xf]
      %v1588 = vld [vmem:[%s1578 + $0x24] sm:$0xf]
      %v1599 = vunpack.c.l.b16 %v1579
      %v1600 = vunpack.c.l.b16 %v1580
      %v1601 = vunpack.c.l.b16 %v1581
      %v1602 = vunpack.c.l.b16 %v1582
      %v1603 = vunpack.c.l.b16 %v1583
      %v1604 = vunpack.c.l.b16 %v1584
      %v1605 = vunpack.c.l.b16 %v1585
      %v1606 = vunpack.c.l.b16 %v1586
      %v1607 = vunpack.c.l.b16 %v1587
      %v1608 = vunpack.c.l.b16 %v1588
      %v1609 = vpack.c.b16 %v1600, %v1599
      %v1610 = vpack.c.b16 %v1602, %v1601
      %v1611 = vpack.c.b16 %v1604, %v1603
      %v1612 = vpack.c.b16 %v1606, %v1605
      %v1613 = vpack.c.b16 %v1608, %v1607
      %v1620 = vsel %vm1395, %v1577, 0
      %1622 = vmatprep.subr.bf16.mxu0 0
      %1623 = vmatpush1.bf16.msra.mxu0 0
      %1624 = vmatprep.subr.bf16.mxu0 0
      %1625 = vmatpush1.bf16.msra.mxu0 0
      %1626 = vmatprep.subr.bf16.mxu0 0
      %1627 = vmatpush1.bf16.msra.mxu0 0
      %1628 = vmatprep.subr.bf16.mxu0 0
      %1629 = vmatpush1.bf16.msra.mxu0 %v1613
      %1630 = vmatprep.subr.bf16.mxu0 0
      %1631 = vmatpush1.bf16.msra.mxu0 %v1612
      %1632 = vmatprep.subr.bf16.mxu0 0
      %1633 = vmatpush1.bf16.msra.mxu0 %v1611
      %1634 = vmatprep.subr.bf16.mxu0 0
      %1635 = vmatpush1.bf16.msra.mxu0 %v1610
      %1636 = vmatprep.subr.bf16.mxu0 0
      %1637 = vmatpush1.bf16.msra.mxu0 %v1609
      %1638 = vmatprep.subr.bf16.mxu0 0
      %1639 = vmatpush2.bf16.msra.mxu0 0
      %1640 = vmatprep.subr.bf16.mxu0 0
      %1641 = vmatpush2.bf16.msra.mxu0 0
      %1642 = vmatprep.subr.bf16.mxu0 0
      %1643 = vmatpush2.bf16.msra.mxu0 0
      %1644 = vmatprep.subr.bf16.mxu0 0
      %1645 = vmatpush2.bf16.msra.mxu0 0
      %1646 = vmatprep.subr.bf16.mxu0 0
      %1647 = vmatpush2.bf16.msra.mxu0 0
      %1648 = vmatprep.subr.bf16.mxu0 0
      %1649 = vmatpush2.bf16.msra.mxu0 0
      %1650 = vmatprep.subr.bf16.mxu0 0
      %1651 = vmatpush2.bf16.msra.mxu0 0
      %1652 = vmatprep.subr.bf16.mxu0 0
      %1653 = vmatpush2.bf16.msra.mxu0 0
      %1654 = vmatprep.mubr.bf16.mxu0 0
      %1655 = vmatmul.mubr.bf16.gmra.mxu0 %v1620
      %v1656 = vpop.f32.mrf.mxu0
      %v1657 = vadd.f32 0.0, %v1656
      %v1658 = vpop.f32.mrf.mxu0
      %v1659 = vpop.f32.mrf.mxu0
      %v1660 = vadd.f32 0.0, %v1659
      %v1661 = vpop.f32.mrf.mxu0
      %1662 = vdwg.mxu0
      %v1663 = vadd.f32 %v1569, %v1657
      %v1664 = vadd.f32 %v1572, %v1660
      %v1665 = vld [vmem:[#allocation2 + $0x3] sm:$0xff]
      %v1666 = vld [vmem:[#allocation2 + $0xb] sm:$0xf]
      %v1667 = vpack.c.bf16 %v1666, %v1665
      %s1668 = scalar_lea.vmem %s3, 120
      %v1669 = vld [vmem:[%s1668] sm:$0xf]
      %v1670 = vld [vmem:[%s1668 + $0x4] sm:$0xf]
      %v1671 = vld [vmem:[%s1668 + $0x8] sm:$0xf]
      %v1672 = vld [vmem:[%s1668 + $0xc] sm:$0xf]
      %v1673 = vld [vmem:[%s1668 + $0x10] sm:$0xf]
      %v1674 = vld [vmem:[%s1668 + $0x14] sm:$0xf]
      %v1675 = vld [vmem:[%s1668 + $0x18] sm:$0xf]
      %v1676 = vld [vmem:[%s1668 + $0x1c] sm:$0xf]
      %v1677 = vld [vmem:[%s1668 + $0x20] sm:$0xf]
      %v1678 = vld [vmem:[%s1668 + $0x24] sm:$0xf]
      %v1689 = vunpack.c.l.b16 %v1669
      %v1690 = vunpack.c.l.b16 %v1670
      %v1691 = vunpack.c.l.b16 %v1671
      %v1692 = vunpack.c.l.b16 %v1672
      %v1693 = vunpack.c.l.b16 %v1673
      %v1694 = vunpack.c.l.b16 %v1674
      %v1695 = vunpack.c.l.b16 %v1675
      %v1696 = vunpack.c.l.b16 %v1676
      %v1697 = vunpack.c.l.b16 %v1677
      %v1698 = vunpack.c.l.b16 %v1678
      %v1699 = vpack.c.b16 %v1690, %v1689
      %v1700 = vpack.c.b16 %v1692, %v1691
      %v1701 = vpack.c.b16 %v1694, %v1693
      %v1702 = vpack.c.b16 %v1696, %v1695
      %v1703 = vpack.c.b16 %v1698, %v1697
      %v1710 = vsel %vm1395, %v1667, 0
      %1712 = vmatprep.subr.bf16.mxu0 0
      %1713 = vmatpush1.bf16.msra.mxu0 0
      %1714 = vmatprep.subr.bf16.mxu0 0
      %1715 = vmatpush1.bf16.msra.mxu0 0
      %1716 = vmatprep.subr.bf16.mxu0 0
      %1717 = vmatpush1.bf16.msra.mxu0 0
      %1718 = vmatprep.subr.bf16.mxu0 0
      %1719 = vmatpush1.bf16.msra.mxu0 %v1703
      %1720 = vmatprep.subr.bf16.mxu0 0
      %1721 = vmatpush1.bf16.msra.mxu0 %v1702
      %1722 = vmatprep.subr.bf16.mxu0 0
      %1723 = vmatpush1.bf16.msra.mxu0 %v1701
      %1724 = vmatprep.subr.bf16.mxu0 0
      %1725 = vmatpush1.bf16.msra.mxu0 %v1700
      %1726 = vmatprep.subr.bf16.mxu0 0
      %1727 = vmatpush1.bf16.msra.mxu0 %v1699
      %1728 = vmatprep.subr.bf16.mxu0 0
      %1729 = vmatpush2.bf16.msra.mxu0 0
      %1730 = vmatprep.subr.bf16.mxu0 0
      %1731 = vmatpush2.bf16.msra.mxu0 0
      %1732 = vmatprep.subr.bf16.mxu0 0
      %1733 = vmatpush2.bf16.msra.mxu0 0
      %1734 = vmatprep.subr.bf16.mxu0 0
      %1735 = vmatpush2.bf16.msra.mxu0 0
      %1736 = vmatprep.subr.bf16.mxu0 0
      %1737 = vmatpush2.bf16.msra.mxu0 0
      %1738 = vmatprep.subr.bf16.mxu0 0
      %1739 = vmatpush2.bf16.msra.mxu0 0
      %1740 = vmatprep.subr.bf16.mxu0 0
      %1741 = vmatpush2.bf16.msra.mxu0 0
      %1742 = vmatprep.subr.bf16.mxu0 0
      %1743 = vmatpush2.bf16.msra.mxu0 0
      %1744 = vmatprep.mubr.bf16.mxu0 0
      %1745 = vmatmul.mubr.bf16.gmra.mxu0 %v1710
      %v1746 = vpop.f32.mrf.mxu0
      %v1747 = vadd.f32 0.0, %v1746
      %v1748 = vpop.f32.mrf.mxu0
      %v1749 = vpop.f32.mrf.mxu0
      %v1750 = vadd.f32 0.0, %v1749
      %v1751 = vpop.f32.mrf.mxu0
      %1752 = vdwg.mxu0
      %v1753 = vadd.f32 %v1663, %v1747
      %v1754 = vadd.f32 %v1664, %v1750
      %v1755 = vld [vmem:[#allocation2 + $0x4] sm:$0xff]
      %v1756 = vld [vmem:[#allocation2 + $0xc] sm:$0xf]
      %v1757 = vpack.c.bf16 %v1756, %v1755
      %s1758 = scalar_lea.vmem %s3, 160
      %v1759 = vld [vmem:[%s1758] sm:$0xf]
      %v1760 = vld [vmem:[%s1758 + $0x4] sm:$0xf]
      %v1761 = vld [vmem:[%s1758 + $0x8] sm:$0xf]
      %v1762 = vld [vmem:[%s1758 + $0xc] sm:$0xf]
      %v1763 = vld [vmem:[%s1758 + $0x10] sm:$0xf]
      %v1764 = vld [vmem:[%s1758 + $0x14] sm:$0xf]
      %v1765 = vld [vmem:[%s1758 + $0x18] sm:$0xf]
      %v1766 = vld [vmem:[%s1758 + $0x1c] sm:$0xf]
      %v1767 = vld [vmem:[%s1758 + $0x20] sm:$0xf]
      %v1768 = vld [vmem:[%s1758 + $0x24] sm:$0xf]
      %v1779 = vunpack.c.l.b16 %v1759
      %v1780 = vunpack.c.l.b16 %v1760
      %v1781 = vunpack.c.l.b16 %v1761
      %v1782 = vunpack.c.l.b16 %v1762
      %v1783 = vunpack.c.l.b16 %v1763
      %v1784 = vunpack.c.l.b16 %v1764
      %v1785 = vunpack.c.l.b16 %v1765
      %v1786 = vunpack.c.l.b16 %v1766
      %v1787 = vunpack.c.l.b16 %v1767
      %v1788 = vunpack.c.l.b16 %v1768
      %v1789 = vpack.c.b16 %v1780, %v1779
      %v1790 = vpack.c.b16 %v1782, %v1781
      %v1791 = vpack.c.b16 %v1784, %v1783
      %v1792 = vpack.c.b16 %v1786, %v1785
      %v1793 = vpack.c.b16 %v1788, %v1787
      %v1800 = vsel %vm1395, %v1757, 0
      %1802 = vmatprep.subr.bf16.mxu0 0
      %1803 = vmatpush1.bf16.msra.mxu0 0
      %1804 = vmatprep.subr.bf16.mxu0 0
      %1805 = vmatpush1.bf16.msra.mxu0 0
      %1806 = vmatprep.subr.bf16.mxu0 0
      %1807 = vmatpush1.bf16.msra.mxu0 0
      %1808 = vmatprep.subr.bf16.mxu0 0
      %1809 = vmatpush1.bf16.msra.mxu0 %v1793
      %1810 = vmatprep.subr.bf16.mxu0 0
      %1811 = vmatpush1.bf16.msra.mxu0 %v1792
      %1812 = vmatprep.subr.bf16.mxu0 0
      %1813 = vmatpush1.bf16.msra.mxu0 %v1791
      %1814 = vmatprep.subr.bf16.mxu0 0
      %1815 = vmatpush1.bf16.msra.mxu0 %v1790
      %1816 = vmatprep.subr.bf16.mxu0 0
      %1817 = vmatpush1.bf16.msra.mxu0 %v1789
      %1818 = vmatprep.subr.bf16.mxu0 0
      %1819 = vmatpush2.bf16.msra.mxu0 0
      %1820 = vmatprep.subr.bf16.mxu0 0
      %1821 = vmatpush2.bf16.msra.mxu0 0
      %1822 = vmatprep.subr.bf16.mxu0 0
      %1823 = vmatpush2.bf16.msra.mxu0 0
      %1824 = vmatprep.subr.bf16.mxu0 0
      %1825 = vmatpush2.bf16.msra.mxu0 0
      %1826 = vmatprep.subr.bf16.mxu0 0
      %1827 = vmatpush2.bf16.msra.mxu0 0
      %1828 = vmatprep.subr.bf16.mxu0 0
      %1829 = vmatpush2.bf16.msra.mxu0 0
      %1830 = vmatprep.subr.bf16.mxu0 0
      %1831 = vmatpush2.bf16.msra.mxu0 0
      %1832 = vmatprep.subr.bf16.mxu0 0
      %1833 = vmatpush2.bf16.msra.mxu0 0
      %1834 = vmatprep.mubr.bf16.mxu0 0
      %1835 = vmatmul.mubr.bf16.gmra.mxu0 %v1800
      %v1836 = vpop.f32.mrf.mxu0
      %v1837 = vadd.f32 0.0, %v1836
      %v1838 = vpop.f32.mrf.mxu0
      %v1839 = vpop.f32.mrf.mxu0
      %v1840 = vadd.f32 0.0, %v1839
      %v1841 = vpop.f32.mrf.mxu0
      %1842 = vdwg.mxu0
      %v1843 = vadd.f32 %v1753, %v1837
      %v1844 = vadd.f32 %v1754, %v1840
      %v1845 = vld [vmem:[#allocation2 + $0x5] sm:$0xff]
      %v1846 = vld [vmem:[#allocation2 + $0xd] sm:$0xf]
      %v1847 = vpack.c.bf16 %v1846, %v1845
      %s1848 = scalar_lea.vmem %s3, 200
      %v1849 = vld [vmem:[%s1848] sm:$0xf]
      %v1850 = vld [vmem:[%s1848 + $0x4] sm:$0xf]
      %v1851 = vld [vmem:[%s1848 + $0x8] sm:$0xf]
      %v1852 = vld [vmem:[%s1848 + $0xc] sm:$0xf]
      %v1853 = vld [vmem:[%s1848 + $0x10] sm:$0xf]
      %v1854 = vld [vmem:[%s1848 + $0x14] sm:$0xf]
      %v1855 = vld [vmem:[%s1848 + $0x18] sm:$0xf]
      %v1856 = vld [vmem:[%s1848 + $0x1c] sm:$0xf]
      %v1857 = vld [vmem:[%s1848 + $0x20] sm:$0xf]
      %v1858 = vld [vmem:[%s1848 + $0x24] sm:$0xf]
      %v1869 = vunpack.c.l.b16 %v1849
      %v1870 = vunpack.c.l.b16 %v1850
      %v1871 = vunpack.c.l.b16 %v1851
      %v1872 = vunpack.c.l.b16 %v1852
      %v1873 = vunpack.c.l.b16 %v1853
      %v1874 = vunpack.c.l.b16 %v1854
      %v1875 = vunpack.c.l.b16 %v1855
      %v1876 = vunpack.c.l.b16 %v1856
      %v1877 = vunpack.c.l.b16 %v1857
      %v1878 = vunpack.c.l.b16 %v1858
      %v1879 = vpack.c.b16 %v1870, %v1869
      %v1880 = vpack.c.b16 %v1872, %v1871
      %v1881 = vpack.c.b16 %v1874, %v1873
      %v1882 = vpack.c.b16 %v1876, %v1875
      %v1883 = vpack.c.b16 %v1878, %v1877
      %v1890 = vsel %vm1395, %v1847, 0
      %1892 = vmatprep.subr.bf16.mxu0 0
      %1893 = vmatpush1.bf16.msra.mxu0 0
      %1894 = vmatprep.subr.bf16.mxu0 0
      %1895 = vmatpush1.bf16.msra.mxu0 0
      %1896 = vmatprep.subr.bf16.mxu0 0
      %1897 = vmatpush1.bf16.msra.mxu0 0
      %1898 = vmatprep.subr.bf16.mxu0 0
      %1899 = vmatpush1.bf16.msra.mxu0 %v1883
      %1900 = vmatprep.subr.bf16.mxu0 0
      %1901 = vmatpush1.bf16.msra.mxu0 %v1882
      %1902 = vmatprep.subr.bf16.mxu0 0
      %1903 = vmatpush1.bf16.msra.mxu0 %v1881
      %1904 = vmatprep.subr.bf16.mxu0 0
      %1905 = vmatpush1.bf16.msra.mxu0 %v1880
      %1906 = vmatprep.subr.bf16.mxu0 0
      %1907 = vmatpush1.bf16.msra.mxu0 %v1879
      %1908 = vmatprep.subr.bf16.mxu0 0
      %1909 = vmatpush2.bf16.msra.mxu0 0
      %1910 = vmatprep.subr.bf16.mxu0 0
      %1911 = vmatpush2.bf16.msra.mxu0 0
      %1912 = vmatprep.subr.bf16.mxu0 0
      %1913 = vmatpush2.bf16.msra.mxu0 0
      %1914 = vmatprep.subr.bf16.mxu0 0
      %1915 = vmatpush2.bf16.msra.mxu0 0
      %1916 = vmatprep.subr.bf16.mxu0 0
      %1917 = vmatpush2.bf16.msra.mxu0 0
      %1918 = vmatprep.subr.bf16.mxu0 0
      %1919 = vmatpush2.bf16.msra.mxu0 0
      %1920 = vmatprep.subr.bf16.mxu0 0
      %1921 = vmatpush2.bf16.msra.mxu0 0
      %1922 = vmatprep.subr.bf16.mxu0 0
      %1923 = vmatpush2.bf16.msra.mxu0 0
      %1924 = vmatprep.mubr.bf16.mxu0 0
      %1925 = vmatmul.mubr.bf16.gmra.mxu0 %v1890
      %v1926 = vpop.f32.mrf.mxu0
      %v1927 = vadd.f32 0.0, %v1926
      %v1928 = vpop.f32.mrf.mxu0
      %v1929 = vpop.f32.mrf.mxu0
      %v1930 = vadd.f32 0.0, %v1929
      %v1931 = vpop.f32.mrf.mxu0
      %1932 = vdwg.mxu0
      %v1933 = vadd.f32 %v1843, %v1927
      %v1934 = vadd.f32 %v1844, %v1930
      %v1935 = vld [vmem:[#allocation2 + $0x6] sm:$0xff]
      %v1936 = vld [vmem:[#allocation2 + $0xe] sm:$0xf]
      %v1937 = vpack.c.bf16 %v1936, %v1935
      %s1938 = scalar_lea.vmem %s3, 240
      %v1939 = vld [vmem:[%s1938] sm:$0xf]
      %v1940 = vld [vmem:[%s1938 + $0x4] sm:$0xf]
      %v1941 = vld [vmem:[%s1938 + $0x8] sm:$0xf]
      %v1942 = vld [vmem:[%s1938 + $0xc] sm:$0xf]
      %v1943 = vld [vmem:[%s1938 + $0x10] sm:$0xf]
      %v1944 = vld [vmem:[%s1938 + $0x14] sm:$0xf]
      %v1945 = vld [vmem:[%s1938 + $0x18] sm:$0xf]
      %v1946 = vld [vmem:[%s1938 + $0x1c] sm:$0xf]
      %v1947 = vld [vmem:[%s1938 + $0x20] sm:$0xf]
      %v1948 = vld [vmem:[%s1938 + $0x24] sm:$0xf]
      %v1959 = vunpack.c.l.b16 %v1939
      %v1960 = vunpack.c.l.b16 %v1940
      %v1961 = vunpack.c.l.b16 %v1941
      %v1962 = vunpack.c.l.b16 %v1942
      %v1963 = vunpack.c.l.b16 %v1943
      %v1964 = vunpack.c.l.b16 %v1944
      %v1965 = vunpack.c.l.b16 %v1945
      %v1966 = vunpack.c.l.b16 %v1946
      %v1967 = vunpack.c.l.b16 %v1947
      %v1968 = vunpack.c.l.b16 %v1948
      %v1969 = vpack.c.b16 %v1960, %v1959
      %v1970 = vpack.c.b16 %v1962, %v1961
      %v1971 = vpack.c.b16 %v1964, %v1963
      %v1972 = vpack.c.b16 %v1966, %v1965
      %v1973 = vpack.c.b16 %v1968, %v1967
      %v1980 = vsel %vm1395, %v1937, 0
      %1982 = vmatprep.subr.bf16.mxu0 0
      %1983 = vmatpush1.bf16.msra.mxu0 0
      %1984 = vmatprep.subr.bf16.mxu0 0
      %1985 = vmatpush1.bf16.msra.mxu0 0
      %1986 = vmatprep.subr.bf16.mxu0 0
      %1987 = vmatpush1.bf16.msra.mxu0 0
      %1988 = vmatprep.subr.bf16.mxu0 0
      %1989 = vmatpush1.bf16.msra.mxu0 %v1973
      %1990 = vmatprep.subr.bf16.mxu0 0
      %1991 = vmatpush1.bf16.msra.mxu0 %v1972
      %1992 = vmatprep.subr.bf16.mxu0 0
      %1993 = vmatpush1.bf16.msra.mxu0 %v1971
      %1994 = vmatprep.subr.bf16.mxu0 0
      %1995 = vmatpush1.bf16.msra.mxu0 %v1970
      %1996 = vmatprep.subr.bf16.mxu0 0
      %1997 = vmatpush1.bf16.msra.mxu0 %v1969
      %1998 = vmatprep.subr.bf16.mxu0 0
      %1999 = vmatpush2.bf16.msra.mxu0 0
      %2000 = vmatprep.subr.bf16.mxu0 0
      %2001 = vmatpush2.bf16.msra.mxu0 0
      %2002 = vmatprep.subr.bf16.mxu0 0
      %2003 = vmatpush2.bf16.msra.mxu0 0
      %2004 = vmatprep.subr.bf16.mxu0 0
      %2005 = vmatpush2.bf16.msra.mxu0 0
      %2006 = vmatprep.subr.bf16.mxu0 0
      %2007 = vmatpush2.bf16.msra.mxu0 0
      %2008 = vmatprep.subr.bf16.mxu0 0
      %2009 = vmatpush2.bf16.msra.mxu0 0
      %2010 = vmatprep.subr.bf16.mxu0 0
      %2011 = vmatpush2.bf16.msra.mxu0 0
      %2012 = vmatprep.subr.bf16.mxu0 0
      %2013 = vmatpush2.bf16.msra.mxu0 0
      %2014 = vmatprep.mubr.bf16.mxu0 0
      %2015 = vmatmul.mubr.bf16.gmra.mxu0 %v1980
      %v2016 = vpop.f32.mrf.mxu0
      %v2017 = vadd.f32 0.0, %v2016
      %v2018 = vpop.f32.mrf.mxu0
      %v2019 = vpop.f32.mrf.mxu0
      %v2020 = vadd.f32 0.0, %v2019
      %v2021 = vpop.f32.mrf.mxu0
      %2022 = vdwg.mxu0
      %v2023 = vadd.f32 %v1933, %v2017
      %v2024 = vadd.f32 %v1934, %v2020
      %v2025 = vld [vmem:[#allocation2 + $0x7] sm:$0xff]
      %v2026 = vld [vmem:[#allocation2 + $0xf] sm:$0xf]
      %v2027 = vpack.c.bf16 %v2026, %v2025
      %s2028 = scalar_lea.vmem %s3, 280
      %v2029 = vld [vmem:[%s2028] sm:$0xf]
      %v2030 = vld [vmem:[%s2028 + $0x4] sm:$0xf]
      %v2031 = vld [vmem:[%s2028 + $0x8] sm:$0xf]
      %v2032 = vld [vmem:[%s2028 + $0xc] sm:$0xf]
      %v2033 = vld [vmem:[%s2028 + $0x10] sm:$0xf]
      %v2034 = vld [vmem:[%s2028 + $0x14] sm:$0xf]
      %v2035 = vld [vmem:[%s2028 + $0x18] sm:$0xf]
      %v2036 = vld [vmem:[%s2028 + $0x1c] sm:$0xf]
      %v2037 = vld [vmem:[%s2028 + $0x20] sm:$0xf]
      %v2038 = vld [vmem:[%s2028 + $0x24] sm:$0xf]
      %v2049 = vunpack.c.l.b16 %v2029
      %v2050 = vunpack.c.l.b16 %v2030
      %v2051 = vunpack.c.l.b16 %v2031
      %v2052 = vunpack.c.l.b16 %v2032
      %v2053 = vunpack.c.l.b16 %v2033
      %v2054 = vunpack.c.l.b16 %v2034
      %v2055 = vunpack.c.l.b16 %v2035
      %v2056 = vunpack.c.l.b16 %v2036
      %v2057 = vunpack.c.l.b16 %v2037
      %v2058 = vunpack.c.l.b16 %v2038
      %v2059 = vpack.c.b16 %v2050, %v2049
      %v2060 = vpack.c.b16 %v2052, %v2051
      %v2061 = vpack.c.b16 %v2054, %v2053
      %v2062 = vpack.c.b16 %v2056, %v2055
      %v2063 = vpack.c.b16 %v2058, %v2057
      %v2070 = vsel %vm1395, %v2027, 0
      %2072 = vmatprep.subr.bf16.mxu0 0
      %2073 = vmatpush1.bf16.msra.mxu0 0
      %2074 = vmatprep.subr.bf16.mxu0 0
      %2075 = vmatpush1.bf16.msra.mxu0 0
      %2076 = vmatprep.subr.bf16.mxu0 0
      %2077 = vmatpush1.bf16.msra.mxu0 0
      %2078 = vmatprep.subr.bf16.mxu0 0
      %2079 = vmatpush1.bf16.msra.mxu0 %v2063
      %2080 = vmatprep.subr.bf16.mxu0 0
      %2081 = vmatpush1.bf16.msra.mxu0 %v2062
      %2082 = vmatprep.subr.bf16.mxu0 0
      %2083 = vmatpush1.bf16.msra.mxu0 %v2061
      %2084 = vmatprep.subr.bf16.mxu0 0
      %2085 = vmatpush1.bf16.msra.mxu0 %v2060
      %2086 = vmatprep.subr.bf16.mxu0 0
      %2087 = vmatpush1.bf16.msra.mxu0 %v2059
      %2088 = vmatprep.subr.bf16.mxu0 0
      %2089 = vmatpush2.bf16.msra.mxu0 0
      %2090 = vmatprep.subr.bf16.mxu0 0
      %2091 = vmatpush2.bf16.msra.mxu0 0
      %2092 = vmatprep.subr.bf16.mxu0 0
      %2093 = vmatpush2.bf16.msra.mxu0 0
      %2094 = vmatprep.subr.bf16.mxu0 0
      %2095 = vmatpush2.bf16.msra.mxu0 0
      %2096 = vmatprep.subr.bf16.mxu0 0
      %2097 = vmatpush2.bf16.msra.mxu0 0
      %2098 = vmatprep.subr.bf16.mxu0 0
      %2099 = vmatpush2.bf16.msra.mxu0 0
      %2100 = vmatprep.subr.bf16.mxu0 0
      %2101 = vmatpush2.bf16.msra.mxu0 0
      %2102 = vmatprep.subr.bf16.mxu0 0
      %2103 = vmatpush2.bf16.msra.mxu0 0
      %2104 = vmatprep.mubr.bf16.mxu0 0
      %2105 = vmatmul.mubr.bf16.gmra.mxu0 %v2070
      %v2106 = vpop.f32.mrf.mxu0
      %v2107 = vadd.f32 0.0, %v2106
      %v2108 = vpop.f32.mrf.mxu0
      %v2109 = vpop.f32.mrf.mxu0
      %v2110 = vadd.f32 0.0, %v2109
      %v2111 = vpop.f32.mrf.mxu0
      %2112 = vdwg.mxu0
      %v2113 = vadd.f32 %v2023, %v2107
      %v2114 = vadd.f32 %v2024, %v2110
      %v2115 = vld [vmem:[#allocation2 + $0x8] sm:$0xff]
      %v2116 = vld [vmem:[#allocation2 + $0x10] sm:$0xf]
      %v2117 = vpack.c.bf16 %v2116, %v2115
      %s2118 = scalar_lea.vmem %s3, 320
      %v2119 = vld [vmem:[%s2118] sm:$0xf]
      %v2120 = vld [vmem:[%s2118 + $0x4] sm:$0xf]
      %v2121 = vld [vmem:[%s2118 + $0x8] sm:$0xf]
      %v2122 = vld [vmem:[%s2118 + $0xc] sm:$0xf]
      %v2123 = vld [vmem:[%s2118 + $0x10] sm:$0xf]
      %v2124 = vld [vmem:[%s2118 + $0x14] sm:$0xf]
      %v2125 = vld [vmem:[%s2118 + $0x18] sm:$0xf]
      %v2126 = vld [vmem:[%s2118 + $0x1c] sm:$0xf]
      %v2127 = vld [vmem:[%s2118 + $0x20] sm:$0xf]
      %v2128 = vld [vmem:[%s2118 + $0x24] sm:$0xf]
      %v2139 = vunpack.c.l.b16 %v2119
      %v2140 = vunpack.c.l.b16 %v2120
      %v2141 = vunpack.c.l.b16 %v2121
      %v2142 = vunpack.c.l.b16 %v2122
      %v2143 = vunpack.c.l.b16 %v2123
      %v2144 = vunpack.c.l.b16 %v2124
      %v2145 = vunpack.c.l.b16 %v2125
      %v2146 = vunpack.c.l.b16 %v2126
      %v2147 = vunpack.c.l.b16 %v2127
      %v2148 = vunpack.c.l.b16 %v2128
      %v2149 = vpack.c.b16 %v2140, %v2139
      %v2150 = vpack.c.b16 %v2142, %v2141
      %v2151 = vpack.c.b16 %v2144, %v2143
      %v2152 = vpack.c.b16 %v2146, %v2145
      %v2153 = vpack.c.b16 %v2148, %v2147
      %v2160 = vsel %vm1395, %v2117, 0
      %2162 = vmatprep.subr.bf16.mxu0 0
      %2163 = vmatpush1.bf16.msra.mxu0 0
      %2164 = vmatprep.subr.bf16.mxu0 0
      %2165 = vmatpush1.bf16.msra.mxu0 0
      %2166 = vmatprep.subr.bf16.mxu0 0
      %2167 = vmatpush1.bf16.msra.mxu0 0
      %2168 = vmatprep.subr.bf16.mxu0 0
      %2169 = vmatpush1.bf16.msra.mxu0 %v2153
      %2170 = vmatprep.subr.bf16.mxu0 0
      %2171 = vmatpush1.bf16.msra.mxu0 %v2152
      %2172 = vmatprep.subr.bf16.mxu0 0
      %2173 = vmatpush1.bf16.msra.mxu0 %v2151
      %2174 = vmatprep.subr.bf16.mxu0 0
      %2175 = vmatpush1.bf16.msra.mxu0 %v2150
      %2176 = vmatprep.subr.bf16.mxu0 0
      %2177 = vmatpush1.bf16.msra.mxu0 %v2149
      %2178 = vmatprep.subr.bf16.mxu0 0
      %2179 = vmatpush2.bf16.msra.mxu0 0
      %2180 = vmatprep.subr.bf16.mxu0 0
      %2181 = vmatpush2.bf16.msra.mxu0 0
      %2182 = vmatprep.subr.bf16.mxu0 0
      %2183 = vmatpush2.bf16.msra.mxu0 0
      %2184 = vmatprep.subr.bf16.mxu0 0
      %2185 = vmatpush2.bf16.msra.mxu0 0
      %2186 = vmatprep.subr.bf16.mxu0 0
      %2187 = vmatpush2.bf16.msra.mxu0 0
      %2188 = vmatprep.subr.bf16.mxu0 0
      %2189 = vmatpush2.bf16.msra.mxu0 0
      %2190 = vmatprep.subr.bf16.mxu0 0
      %2191 = vmatpush2.bf16.msra.mxu0 0
      %2192 = vmatprep.subr.bf16.mxu0 0
      %2193 = vmatpush2.bf16.msra.mxu0 0
      %2194 = vmatprep.mubr.bf16.mxu0 0
      %2195 = vmatmul.mubr.bf16.gmra.mxu0 %v2160
      %v2196 = vpop.f32.mrf.mxu0
      %v2197 = vadd.f32 0.0, %v2196
      %v2198 = vpop.f32.mrf.mxu0
      %v2199 = vpop.f32.mrf.mxu0
      %v2200 = vadd.f32 0.0, %v2199
      %v2201 = vpop.f32.mrf.mxu0
      %2202 = vdwg.mxu0
      %v2203 = vadd.f32 %v2113, %v2197
      %v2204 = vadd.f32 %v2114, %v2200
      %v2205 = vld [vmem:[%s4] sm:$0x1]
      %v2207 = vlaneseq
      %v2208 = vshrl.u32 %v2207, 7
      %v2209 = vsub.s32 0, %v2208
      %v2210 = vrot.slane %v2205, %v2209
      %v2212 = vadd.f32 %v2203, %v2210
      %v2213 = vadd.f32 %v2204, %v2210
      %v2214 = vmax.f32 %v2212, 0.0
      %v2215 = vmax.f32 %v2213, 0.0
      %vm2216 = vcmask 785408
      %2217 = vst.msk [vmem:[#allocation3] sm:$0xff] %vm2216, %v2214
      %vm2218 = vcmask 781312
      %2219 = vst.msk [vmem:[#allocation3 + $0x8] sm:$0xf] %vm2218, %v2215
      %v2220 = vld [vmem:[#allocation3] sm:$0xf]
      %v2221 = vpack.c.bf16 %v2220, %v2220
      %v2222 = vld [vmem:[%s5] sm:$0xf]
      %v2223 = vld [vmem:[%s5 + $0x4] sm:$0xf]
      %v2224 = vld [vmem:[%s5 + $0x8] sm:$0xf]
      %v2225 = vld [vmem:[%s5 + $0xc] sm:$0xf]
      %v2226 = vld [vmem:[%s5 + $0x10] sm:$0xf]
      %v2227 = vld [vmem:[%s5 + $0x14] sm:$0xf]
      %v2228 = vld [vmem:[%s5 + $0x18] sm:$0xf]
      %v2229 = vld [vmem:[%s5 + $0x1c] sm:$0xf]
      %v2230 = vld [vmem:[%s5 + $0x20] sm:$0xf]
      %v2231 = vld [vmem:[%s5 + $0x24] sm:$0xf]
      %v2232 = vld [vmem:[%s5 + $0x28] sm:$0xf]
      %v2233 = vld [vmem:[%s5 + $0x2c] sm:$0xf]
      %v2234 = vld [vmem:[#allocation3 + $0x1] sm:$0xf]
      %v2235 = vpack.c.bf16 %v2234, %v2234
      %s2236 = scalar_lea.vmem %s5, 48
      %v2237 = vld [vmem:[%s2236] sm:$0xf]
      %v2238 = vld [vmem:[%s2236 + $0x4] sm:$0xf]
      %v2239 = vld [vmem:[%s2236 + $0x8] sm:$0xf]
      %v2240 = vld [vmem:[%s2236 + $0xc] sm:$0xf]
      %v2241 = vld [vmem:[%s2236 + $0x10] sm:$0xf]
      %v2242 = vld [vmem:[%s2236 + $0x14] sm:$0xf]
      %v2243 = vld [vmem:[%s2236 + $0x18] sm:$0xf]
      %v2244 = vld [vmem:[%s2236 + $0x1c] sm:$0xf]
      %v2245 = vld [vmem:[%s2236 + $0x20] sm:$0xf]
      %v2246 = vld [vmem:[%s2236 + $0x24] sm:$0xf]
      %v2247 = vld [vmem:[%s2236 + $0x28] sm:$0xf]
      %v2248 = vld [vmem:[%s2236 + $0x2c] sm:$0xf]
      %v2261 = vunpack.c.l.b16 %v2237
      %v2262 = vunpack.c.l.b16 %v2238
      %v2263 = vunpack.c.l.b16 %v2239
      %v2264 = vunpack.c.l.b16 %v2240
      %v2265 = vunpack.c.l.b16 %v2241
      %v2266 = vunpack.c.l.b16 %v2242
      %v2267 = vunpack.c.l.b16 %v2243
      %v2268 = vunpack.c.l.b16 %v2244
      %v2269 = vunpack.c.l.b16 %v2245
      %v2270 = vunpack.c.l.b16 %v2246
      %v2271 = vunpack.c.l.b16 %v2247
      %v2272 = vunpack.c.l.b16 %v2248
      %v2273 = vpack.c.b16 %v2262, %v2261
      %v2274 = vpack.c.b16 %v2264, %v2263
      %v2275 = vpack.c.b16 %v2266, %v2265
      %v2276 = vpack.c.b16 %v2268, %v2267
      %v2277 = vpack.c.b16 %v2270, %v2269
      %v2278 = vpack.c.b16 %v2272, %v2271
      %v2286 = vsel %vm2216, %v2235, 0
      %2288 = vmatprep.subr.bf16.mxu0 0
      %2289 = vmatpush1.bf16.msra.mxu0 0
      %2290 = vmatprep.subr.bf16.mxu0 0
      %2291 = vmatpush1.bf16.msra.mxu0 0
      %2292 = vmatprep.subr.bf16.mxu0 0
      %2293 = vmatpush1.bf16.msra.mxu0 %v2278
      %2294 = vmatprep.subr.bf16.mxu0 0
      %2295 = vmatpush1.bf16.msra.mxu0 %v2277
      %2296 = vmatprep.subr.bf16.mxu0 0
      %2297 = vmatpush1.bf16.msra.mxu0 %v2276
      %2298 = vmatprep.subr.bf16.mxu0 0
      %2299 = vmatpush1.bf16.msra.mxu0 %v2275
      %2300 = vmatprep.subr.bf16.mxu0 0
      %2301 = vmatpush1.bf16.msra.mxu0 %v2274
      %2302 = vmatprep.subr.bf16.mxu0 0
      %2303 = vmatpush1.bf16.msra.mxu0 %v2273
      %2304 = vmatprep.subr.bf16.mxu0 0
      %2305 = vmatpush2.bf16.msra.mxu0 0
      %2306 = vmatprep.subr.bf16.mxu0 0
      %2307 = vmatpush2.bf16.msra.mxu0 0
      %2308 = vmatprep.subr.bf16.mxu0 0
      %2309 = vmatpush2.bf16.msra.mxu0 0
      %2310 = vmatprep.subr.bf16.mxu0 0
      %2311 = vmatpush2.bf16.msra.mxu0 0
      %2312 = vmatprep.subr.bf16.mxu0 0
      %2313 = vmatpush2.bf16.msra.mxu0 0
      %2314 = vmatprep.subr.bf16.mxu0 0
      %2315 = vmatpush2.bf16.msra.mxu0 0
      %2316 = vmatprep.subr.bf16.mxu0 0
      %2317 = vmatpush2.bf16.msra.mxu0 0
      %2318 = vmatprep.subr.bf16.mxu0 0
      %2319 = vmatpush2.bf16.msra.mxu0 0
      %2320 = vmatprep.mubr.bf16.mxu0 0
      %2321 = vmatmul.mubr.bf16.gmra.mxu0 %v2286
      %v2322 = vpop.f32.mrf.mxu0
      %v2323 = vadd.f32 0.0, %v2322
      %v2324 = vpop.f32.mrf.mxu0
      %v2325 = vpop.f32.mrf.mxu0
      %v2326 = vpop.f32.mrf.mxu0
      %2327 = vdwg.mxu0
      %v2340 = vunpack.c.l.b16 %v2222
      %v2341 = vunpack.c.l.b16 %v2223
      %v2342 = vunpack.c.l.b16 %v2224
      %v2343 = vunpack.c.l.b16 %v2225
      %v2344 = vunpack.c.l.b16 %v2226
      %v2345 = vunpack.c.l.b16 %v2227
      %v2346 = vunpack.c.l.b16 %v2228
      %v2347 = vunpack.c.l.b16 %v2229
      %v2348 = vunpack.c.l.b16 %v2230
      %v2349 = vunpack.c.l.b16 %v2231
      %v2350 = vunpack.c.l.b16 %v2232
      %v2351 = vunpack.c.l.b16 %v2233
      %v2352 = vpack.c.b16 %v2341, %v2340
      %v2353 = vpack.c.b16 %v2343, %v2342
      %v2354 = vpack.c.b16 %v2345, %v2344
      %v2355 = vpack.c.b16 %v2347, %v2346
      %v2356 = vpack.c.b16 %v2349, %v2348
      %v2357 = vpack.c.b16 %v2351, %v2350
      %v2365 = vsel %vm2216, %v2221, 0
      %2367 = vmatprep.subr.bf16.mxu0 0
      %2368 = vmatpush1.bf16.msra.mxu0 0
      %2369 = vmatprep.subr.bf16.mxu0 0
      %2370 = vmatpush1.bf16.msra.mxu0 0
      %2371 = vmatprep.subr.bf16.mxu0 0
      %2372 = vmatpush1.bf16.msra.mxu0 %v2357
      %2373 = vmatprep.subr.bf16.mxu0 0
      %2374 = vmatpush1.bf16.msra.mxu0 %v2356
      %2375 = vmatprep.subr.bf16.mxu0 0
      %2376 = vmatpush1.bf16.msra.mxu0 %v2355
      %2377 = vmatprep.subr.bf16.mxu0 0
      %2378 = vmatpush1.bf16.msra.mxu0 %v2354
      %2379 = vmatprep.subr.bf16.mxu0 0
      %2380 = vmatpush1.bf16.msra.mxu0 %v2353
      %2381 = vmatprep.subr.bf16.mxu0 0
      %2382 = vmatpush1.bf16.msra.mxu0 %v2352
      %2383 = vmatprep.subr.bf16.mxu0 0
      %2384 = vmatpush2.bf16.msra.mxu0 0
      %2385 = vmatprep.subr.bf16.mxu0 0
      %2386 = vmatpush2.bf16.msra.mxu0 0
      %2387 = vmatprep.subr.bf16.mxu0 0
      %2388 = vmatpush2.bf16.msra.mxu0 0
      %2389 = vmatprep.subr.bf16.mxu0 0
      %2390 = vmatpush2.bf16.msra.mxu0 0
      %2391 = vmatprep.subr.bf16.mxu0 0
      %2392 = vmatpush2.bf16.msra.mxu0 0
      %2393 = vmatprep.subr.bf16.mxu0 0
      %2394 = vmatpush2.bf16.msra.mxu0 0
      %2395 = vmatprep.subr.bf16.mxu0 0
      %2396 = vmatpush2.bf16.msra.mxu0 0
      %2397 = vmatprep.subr.bf16.mxu0 0
      %2398 = vmatpush2.bf16.msra.mxu0 0
      %2399 = vmatprep.mubr.bf16.mxu0 0
      %2400 = vmatmul.mubr.bf16.gmra.mxu0 %v2365
      %v2401 = vpop.f32.mrf.mxu0
      %v2402 = vadd.f32 %v2323, %v2401
      %v2403 = vpop.f32.mrf.mxu0
      %v2404 = vpop.f32.mrf.mxu0
      %v2405 = vpop.f32.mrf.mxu0
      %2406 = vdwg.mxu0
      %v2407 = vld [vmem:[#allocation3 + $0x2] sm:$0xf]
      %v2408 = vpack.c.bf16 %v2407, %v2407
      %s2409 = scalar_lea.vmem %s5, 96
      %v2410 = vld [vmem:[%s2409] sm:$0xf]
      %v2411 = vld [vmem:[%s2409 + $0x4] sm:$0xf]
      %v2412 = vld [vmem:[%s2409 + $0x8] sm:$0xf]
      %v2413 = vld [vmem:[%s2409 + $0xc] sm:$0xf]
      %v2414 = vld [vmem:[%s2409 + $0x10] sm:$0xf]
      %v2415 = vld [vmem:[%s2409 + $0x14] sm:$0xf]
      %v2416 = vld [vmem:[%s2409 + $0x18] sm:$0xf]
      %v2417 = vld [vmem:[%s2409 + $0x1c] sm:$0xf]
      %v2418 = vld [vmem:[%s2409 + $0x20] sm:$0xf]
      %v2419 = vld [vmem:[%s2409 + $0x24] sm:$0xf]
      %v2420 = vld [vmem:[%s2409 + $0x28] sm:$0xf]
      %v2421 = vld [vmem:[%s2409 + $0x2c] sm:$0xf]
      %v2434 = vunpack.c.l.b16 %v2410
      %v2435 = vunpack.c.l.b16 %v2411
      %v2436 = vunpack.c.l.b16 %v2412
      %v2437 = vunpack.c.l.b16 %v2413
      %v2438 = vunpack.c.l.b16 %v2414
      %v2439 = vunpack.c.l.b16 %v2415
      %v2440 = vunpack.c.l.b16 %v2416
      %v2441 = vunpack.c.l.b16 %v2417
      %v2442 = vunpack.c.l.b16 %v2418
      %v2443 = vunpack.c.l.b16 %v2419
      %v2444 = vunpack.c.l.b16 %v2420
      %v2445 = vunpack.c.l.b16 %v2421
      %v2446 = vpack.c.b16 %v2435, %v2434
      %v2447 = vpack.c.b16 %v2437, %v2436
      %v2448 = vpack.c.b16 %v2439, %v2438
      %v2449 = vpack.c.b16 %v2441, %v2440
      %v2450 = vpack.c.b16 %v2443, %v2442
      %v2451 = vpack.c.b16 %v2445, %v2444
      %v2459 = vsel %vm2216, %v2408, 0
      %2461 = vmatprep.subr.bf16.mxu0 0
      %2462 = vmatpush1.bf16.msra.mxu0 0
      %2463 = vmatprep.subr.bf16.mxu0 0
      %2464 = vmatpush1.bf16.msra.mxu0 0
      %2465 = vmatprep.subr.bf16.mxu0 0
      %2466 = vmatpush1.bf16.msra.mxu0 %v2451
      %2467 = vmatprep.subr.bf16.mxu0 0
      %2468 = vmatpush1.bf16.msra.mxu0 %v2450
      %2469 = vmatprep.subr.bf16.mxu0 0
      %2470 = vmatpush1.bf16.msra.mxu0 %v2449
      %2471 = vmatprep.subr.bf16.mxu0 0
      %2472 = vmatpush1.bf16.msra.mxu0 %v2448
      %2473 = vmatprep.subr.bf16.mxu0 0
      %2474 = vmatpush1.bf16.msra.mxu0 %v2447
      %2475 = vmatprep.subr.bf16.mxu0 0
      %2476 = vmatpush1.bf16.msra.mxu0 %v2446
      %2477 = vmatprep.subr.bf16.mxu0 0
      %2478 = vmatpush2.bf16.msra.mxu0 0
      %2479 = vmatprep.subr.bf16.mxu0 0
      %2480 = vmatpush2.bf16.msra.mxu0 0
      %2481 = vmatprep.subr.bf16.mxu0 0
      %2482 = vmatpush2.bf16.msra.mxu0 0
      %2483 = vmatprep.subr.bf16.mxu0 0
      %2484 = vmatpush2.bf16.msra.mxu0 0
      %2485 = vmatprep.subr.bf16.mxu0 0
      %2486 = vmatpush2.bf16.msra.mxu0 0
      %2487 = vmatprep.subr.bf16.mxu0 0
      %2488 = vmatpush2.bf16.msra.mxu0 0
      %2489 = vmatprep.subr.bf16.mxu0 0
      %2490 = vmatpush2.bf16.msra.mxu0 0
      %2491 = vmatprep.subr.bf16.mxu0 0
      %2492 = vmatpush2.bf16.msra.mxu0 0
      %2493 = vmatprep.mubr.bf16.mxu0 0
      %2494 = vmatmul.mubr.bf16.gmra.mxu0 %v2459
      %v2495 = vpop.f32.mrf.mxu0
      %v2496 = vadd.f32 0.0, %v2495
      %v2497 = vpop.f32.mrf.mxu0
      %v2498 = vpop.f32.mrf.mxu0
      %v2499 = vpop.f32.mrf.mxu0
      %2500 = vdwg.mxu0
      %v2501 = vadd.f32 %v2402, %v2496
      %v2502 = vld [vmem:[#allocation3 + $0x3] sm:$0xf]
      %v2503 = vpack.c.bf16 %v2502, %v2502
      %s2504 = scalar_lea.vmem %s5, 144
      %v2505 = vld [vmem:[%s2504] sm:$0xf]
      %v2506 = vld [vmem:[%s2504 + $0x4] sm:$0xf]
      %v2507 = vld [vmem:[%s2504 + $0x8] sm:$0xf]
      %v2508 = vld [vmem:[%s2504 + $0xc] sm:$0xf]
      %v2509 = vld [vmem:[%s2504 + $0x10] sm:$0xf]
      %v2510 = vld [vmem:[%s2504 + $0x14] sm:$0xf]
      %v2511 = vld [vmem:[%s2504 + $0x18] sm:$0xf]
      %v2512 = vld [vmem:[%s2504 + $0x1c] sm:$0xf]
      %v2513 = vld [vmem:[%s2504 + $0x20] sm:$0xf]
      %v2514 = vld [vmem:[%s2504 + $0x24] sm:$0xf]
      %v2515 = vld [vmem:[%s2504 + $0x28] sm:$0xf]
      %v2516 = vld [vmem:[%s2504 + $0x2c] sm:$0xf]
      %v2529 = vunpack.c.l.b16 %v2505
      %v2530 = vunpack.c.l.b16 %v2506
      %v2531 = vunpack.c.l.b16 %v2507
      %v2532 = vunpack.c.l.b16 %v2508
      %v2533 = vunpack.c.l.b16 %v2509
      %v2534 = vunpack.c.l.b16 %v2510
      %v2535 = vunpack.c.l.b16 %v2511
      %v2536 = vunpack.c.l.b16 %v2512
      %v2537 = vunpack.c.l.b16 %v2513
      %v2538 = vunpack.c.l.b16 %v2514
      %v2539 = vunpack.c.l.b16 %v2515
      %v2540 = vunpack.c.l.b16 %v2516
      %v2541 = vpack.c.b16 %v2530, %v2529
      %v2542 = vpack.c.b16 %v2532, %v2531
      %v2543 = vpack.c.b16 %v2534, %v2533
      %v2544 = vpack.c.b16 %v2536, %v2535
      %v2545 = vpack.c.b16 %v2538, %v2537
      %v2546 = vpack.c.b16 %v2540, %v2539
      %v2554 = vsel %vm2216, %v2503, 0
      %2556 = vmatprep.subr.bf16.mxu0 0
      %2557 = vmatpush1.bf16.msra.mxu0 0
      %2558 = vmatprep.subr.bf16.mxu0 0
      %2559 = vmatpush1.bf16.msra.mxu0 0
      %2560 = vmatprep.subr.bf16.mxu0 0
      %2561 = vmatpush1.bf16.msra.mxu0 %v2546
      %2562 = vmatprep.subr.bf16.mxu0 0
      %2563 = vmatpush1.bf16.msra.mxu0 %v2545
      %2564 = vmatprep.subr.bf16.mxu0 0
      %2565 = vmatpush1.bf16.msra.mxu0 %v2544
      %2566 = vmatprep.subr.bf16.mxu0 0
      %2567 = vmatpush1.bf16.msra.mxu0 %v2543
      %2568 = vmatprep.subr.bf16.mxu0 0
      %2569 = vmatpush1.bf16.msra.mxu0 %v2542
      %2570 = vmatprep.subr.bf16.mxu0 0
      %2571 = vmatpush1.bf16.msra.mxu0 %v2541
      %2572 = vmatprep.subr.bf16.mxu0 0
      %2573 = vmatpush2.bf16.msra.mxu0 0
      %2574 = vmatprep.subr.bf16.mxu0 0
      %2575 = vmatpush2.bf16.msra.mxu0 0
      %2576 = vmatprep.subr.bf16.mxu0 0
      %2577 = vmatpush2.bf16.msra.mxu0 0
      %2578 = vmatprep.subr.bf16.mxu0 0
      %2579 = vmatpush2.bf16.msra.mxu0 0
      %2580 = vmatprep.subr.bf16.mxu0 0
      %2581 = vmatpush2.bf16.msra.mxu0 0
      %2582 = vmatprep.subr.bf16.mxu0 0
      %2583 = vmatpush2.bf16.msra.mxu0 0
      %2584 = vmatprep.subr.bf16.mxu0 0
      %2585 = vmatpush2.bf16.msra.mxu0 0
      %2586 = vmatprep.subr.bf16.mxu0 0
      %2587 = vmatpush2.bf16.msra.mxu0 0
      %2588 = vmatprep.mubr.bf16.mxu0 0
      %2589 = vmatmul.mubr.bf16.gmra.mxu0 %v2554
      %v2590 = vpop.f32.mrf.mxu0
      %v2591 = vadd.f32 0.0, %v2590
      %v2592 = vpop.f32.mrf.mxu0
      %v2593 = vpop.f32.mrf.mxu0
      %v2594 = vpop.f32.mrf.mxu0
      %2595 = vdwg.mxu0
      %v2596 = vadd.f32 %v2501, %v2591
      %v2597 = vld [vmem:[#allocation3 + $0x4] sm:$0xf]
      %v2598 = vpack.c.bf16 %v2597, %v2597
      %s2599 = scalar_lea.vmem %s5, 192
      %v2600 = vld [vmem:[%s2599] sm:$0xf]
      %v2601 = vld [vmem:[%s2599 + $0x4] sm:$0xf]
      %v2602 = vld [vmem:[%s2599 + $0x8] sm:$0xf]
      %v2603 = vld [vmem:[%s2599 + $0xc] sm:$0xf]
      %v2604 = vld [vmem:[%s2599 + $0x10] sm:$0xf]
      %v2605 = vld [vmem:[%s2599 + $0x14] sm:$0xf]
      %v2606 = vld [vmem:[%s2599 + $0x18] sm:$0xf]
      %v2607 = vld [vmem:[%s2599 + $0x1c] sm:$0xf]
      %v2608 = vld [vmem:[%s2599 + $0x20] sm:$0xf]
      %v2609 = vld [vmem:[%s2599 + $0x24] sm:$0xf]
      %v2610 = vld [vmem:[%s2599 + $0x28] sm:$0xf]
      %v2611 = vld [vmem:[%s2599 + $0x2c] sm:$0xf]
      %v2624 = vunpack.c.l.b16 %v2600
      %v2625 = vunpack.c.l.b16 %v2601
      %v2626 = vunpack.c.l.b16 %v2602
      %v2627 = vunpack.c.l.b16 %v2603
      %v2628 = vunpack.c.l.b16 %v2604
      %v2629 = vunpack.c.l.b16 %v2605
      %v2630 = vunpack.c.l.b16 %v2606
      %v2631 = vunpack.c.l.b16 %v2607
      %v2632 = vunpack.c.l.b16 %v2608
      %v2633 = vunpack.c.l.b16 %v2609
      %v2634 = vunpack.c.l.b16 %v2610
      %v2635 = vunpack.c.l.b16 %v2611
      %v2636 = vpack.c.b16 %v2625, %v2624
      %v2637 = vpack.c.b16 %v2627, %v2626
      %v2638 = vpack.c.b16 %v2629, %v2628
      %v2639 = vpack.c.b16 %v2631, %v2630
      %v2640 = vpack.c.b16 %v2633, %v2632
      %v2641 = vpack.c.b16 %v2635, %v2634
      %v2649 = vsel %vm2216, %v2598, 0
      %2651 = vmatprep.subr.bf16.mxu0 0
      %2652 = vmatpush1.bf16.msra.mxu0 0
      %2653 = vmatprep.subr.bf16.mxu0 0
      %2654 = vmatpush1.bf16.msra.mxu0 0
      %2655 = vmatprep.subr.bf16.mxu0 0
      %2656 = vmatpush1.bf16.msra.mxu0 %v2641
      %2657 = vmatprep.subr.bf16.mxu0 0
      %2658 = vmatpush1.bf16.msra.mxu0 %v2640
      %2659 = vmatprep.subr.bf16.mxu0 0
      %2660 = vmatpush1.bf16.msra.mxu0 %v2639
      %2661 = vmatprep.subr.bf16.mxu0 0
      %2662 = vmatpush1.bf16.msra.mxu0 %v2638
      %2663 = vmatprep.subr.bf16.mxu0 0
      %2664 = vmatpush1.bf16.msra.mxu0 %v2637
      %2665 = vmatprep.subr.bf16.mxu0 0
      %2666 = vmatpush1.bf16.msra.mxu0 %v2636
      %2667 = vmatprep.subr.bf16.mxu0 0
      %2668 = vmatpush2.bf16.msra.mxu0 0
      %2669 = vmatprep.subr.bf16.mxu0 0
      %2670 = vmatpush2.bf16.msra.mxu0 0
      %2671 = vmatprep.subr.bf16.mxu0 0
      %2672 = vmatpush2.bf16.msra.mxu0 0
      %2673 = vmatprep.subr.bf16.mxu0 0
      %2674 = vmatpush2.bf16.msra.mxu0 0
      %2675 = vmatprep.subr.bf16.mxu0 0
      %2676 = vmatpush2.bf16.msra.mxu0 0
      %2677 = vmatprep.subr.bf16.mxu0 0
      %2678 = vmatpush2.bf16.msra.mxu0 0
      %2679 = vmatprep.subr.bf16.mxu0 0
      %2680 = vmatpush2.bf16.msra.mxu0 0
      %2681 = vmatprep.subr.bf16.mxu0 0
      %2682 = vmatpush2.bf16.msra.mxu0 0
      %2683 = vmatprep.mubr.bf16.mxu0 0
      %2684 = vmatmul.mubr.bf16.gmra.mxu0 %v2649
      %v2685 = vpop.f32.mrf.mxu0
      %v2686 = vadd.f32 0.0, %v2685
      %v2687 = vpop.f32.mrf.mxu0
      %v2688 = vpop.f32.mrf.mxu0
      %v2689 = vpop.f32.mrf.mxu0
      %2690 = vdwg.mxu0
      %v2691 = vadd.f32 %v2596, %v2686
      %v2692 = vld [vmem:[#allocation3 + $0x5] sm:$0xf]
      %v2693 = vpack.c.bf16 %v2692, %v2692
      %s2694 = scalar_lea.vmem %s5, 240
      %v2695 = vld [vmem:[%s2694] sm:$0xf]
      %v2696 = vld [vmem:[%s2694 + $0x4] sm:$0xf]
      %v2697 = vld [vmem:[%s2694 + $0x8] sm:$0xf]
      %v2698 = vld [vmem:[%s2694 + $0xc] sm:$0xf]
      %v2699 = vld [vmem:[%s2694 + $0x10] sm:$0xf]
      %v2700 = vld [vmem:[%s2694 + $0x14] sm:$0xf]
      %v2701 = vld [vmem:[%s2694 + $0x18] sm:$0xf]
      %v2702 = vld [vmem:[%s2694 + $0x1c] sm:$0xf]
      %v2703 = vld [vmem:[%s2694 + $0x20] sm:$0xf]
      %v2704 = vld [vmem:[%s2694 + $0x24] sm:$0xf]
      %v2705 = vld [vmem:[%s2694 + $0x28] sm:$0xf]
      %v2706 = vld [vmem:[%s2694 + $0x2c] sm:$0xf]
      %v2719 = vunpack.c.l.b16 %v2695
      %v2720 = vunpack.c.l.b16 %v2696
      %v2721 = vunpack.c.l.b16 %v2697
      %v2722 = vunpack.c.l.b16 %v2698
      %v2723 = vunpack.c.l.b16 %v2699
      %v2724 = vunpack.c.l.b16 %v2700
      %v2725 = vunpack.c.l.b16 %v2701
      %v2726 = vunpack.c.l.b16 %v2702
      %v2727 = vunpack.c.l.b16 %v2703
      %v2728 = vunpack.c.l.b16 %v2704
      %v2729 = vunpack.c.l.b16 %v2705
      %v2730 = vunpack.c.l.b16 %v2706
      %v2731 = vpack.c.b16 %v2720, %v2719
      %v2732 = vpack.c.b16 %v2722, %v2721
      %v2733 = vpack.c.b16 %v2724, %v2723
      %v2734 = vpack.c.b16 %v2726, %v2725
      %v2735 = vpack.c.b16 %v2728, %v2727
      %v2736 = vpack.c.b16 %v2730, %v2729
      %v2744 = vsel %vm2216, %v2693, 0
      %2746 = vmatprep.subr.bf16.mxu0 0
      %2747 = vmatpush1.bf16.msra.mxu0 0
      %2748 = vmatprep.subr.bf16.mxu0 0
      %2749 = vmatpush1.bf16.msra.mxu0 0
      %2750 = vmatprep.subr.bf16.mxu0 0
      %2751 = vmatpush1.bf16.msra.mxu0 %v2736
      %2752 = vmatprep.subr.bf16.mxu0 0
      %2753 = vmatpush1.bf16.msra.mxu0 %v2735
      %2754 = vmatprep.subr.bf16.mxu0 0
      %2755 = vmatpush1.bf16.msra.mxu0 %v2734
      %2756 = vmatprep.subr.bf16.mxu0 0
      %2757 = vmatpush1.bf16.msra.mxu0 %v2733
      %2758 = vmatprep.subr.bf16.mxu0 0
      %2759 = vmatpush1.bf16.msra.mxu0 %v2732
      %2760 = vmatprep.subr.bf16.mxu0 0
      %2761 = vmatpush1.bf16.msra.mxu0 %v2731
      %2762 = vmatprep.subr.bf16.mxu0 0
      %2763 = vmatpush2.bf16.msra.mxu0 0
      %2764 = vmatprep.subr.bf16.mxu0 0
      %2765 = vmatpush2.bf16.msra.mxu0 0
      %2766 = vmatprep.subr.bf16.mxu0 0
      %2767 = vmatpush2.bf16.msra.mxu0 0
      %2768 = vmatprep.subr.bf16.mxu0 0
      %2769 = vmatpush2.bf16.msra.mxu0 0
      %2770 = vmatprep.subr.bf16.mxu0 0
      %2771 = vmatpush2.bf16.msra.mxu0 0
      %2772 = vmatprep.subr.bf16.mxu0 0
      %2773 = vmatpush2.bf16.msra.mxu0 0
      %2774 = vmatprep.subr.bf16.mxu0 0
      %2775 = vmatpush2.bf16.msra.mxu0 0
      %2776 = vmatprep.subr.bf16.mxu0 0
      %2777 = vmatpush2.bf16.msra.mxu0 0
      %2778 = vmatprep.mubr.bf16.mxu0 0
      %2779 = vmatmul.mubr.bf16.gmra.mxu0 %v2744
      %v2780 = vpop.f32.mrf.mxu0
      %v2781 = vadd.f32 0.0, %v2780
      %v2782 = vpop.f32.mrf.mxu0
      %v2783 = vpop.f32.mrf.mxu0
      %v2784 = vpop.f32.mrf.mxu0
      %2785 = vdwg.mxu0
      %v2786 = vadd.f32 %v2691, %v2781
      %v2787 = vld [vmem:[#allocation3 + $0x6] sm:$0xf]
      %v2788 = vpack.c.bf16 %v2787, %v2787
      %s2789 = scalar_lea.vmem %s5, 288
      %v2790 = vld [vmem:[%s2789] sm:$0xf]
      %v2791 = vld [vmem:[%s2789 + $0x4] sm:$0xf]
      %v2792 = vld [vmem:[%s2789 + $0x8] sm:$0xf]
      %v2793 = vld [vmem:[%s2789 + $0xc] sm:$0xf]
      %v2794 = vld [vmem:[%s2789 + $0x10] sm:$0xf]
      %v2795 = vld [vmem:[%s2789 + $0x14] sm:$0xf]
      %v2796 = vld [vmem:[%s2789 + $0x18] sm:$0xf]
      %v2797 = vld [vmem:[%s2789 + $0x1c] sm:$0xf]
      %v2798 = vld [vmem:[%s2789 + $0x20] sm:$0xf]
      %v2799 = vld [vmem:[%s2789 + $0x24] sm:$0xf]
      %v2800 = vld [vmem:[%s2789 + $0x28] sm:$0xf]
      %v2801 = vld [vmem:[%s2789 + $0x2c] sm:$0xf]
      %v2814 = vunpack.c.l.b16 %v2790
      %v2815 = vunpack.c.l.b16 %v2791
      %v2816 = vunpack.c.l.b16 %v2792
      %v2817 = vunpack.c.l.b16 %v2793
      %v2818 = vunpack.c.l.b16 %v2794
      %v2819 = vunpack.c.l.b16 %v2795
      %v2820 = vunpack.c.l.b16 %v2796
      %v2821 = vunpack.c.l.b16 %v2797
      %v2822 = vunpack.c.l.b16 %v2798
      %v2823 = vunpack.c.l.b16 %v2799
      %v2824 = vunpack.c.l.b16 %v2800
      %v2825 = vunpack.c.l.b16 %v2801
      %v2826 = vpack.c.b16 %v2815, %v2814
      %v2827 = vpack.c.b16 %v2817, %v2816
      %v2828 = vpack.c.b16 %v2819, %v2818
      %v2829 = vpack.c.b16 %v2821, %v2820
      %v2830 = vpack.c.b16 %v2823, %v2822
      %v2831 = vpack.c.b16 %v2825, %v2824
      %v2839 = vsel %vm2216, %v2788, 0
      %2841 = vmatprep.subr.bf16.mxu0 0
      %2842 = vmatpush1.bf16.msra.mxu0 0
      %2843 = vmatprep.subr.bf16.mxu0 0
      %2844 = vmatpush1.bf16.msra.mxu0 0
      %2845 = vmatprep.subr.bf16.mxu0 0
      %2846 = vmatpush1.bf16.msra.mxu0 %v2831
      %2847 = vmatprep.subr.bf16.mxu0 0
      %2848 = vmatpush1.bf16.msra.mxu0 %v2830
      %2849 = vmatprep.subr.bf16.mxu0 0
      %2850 = vmatpush1.bf16.msra.mxu0 %v2829
      %2851 = vmatprep.subr.bf16.mxu0 0
      %2852 = vmatpush1.bf16.msra.mxu0 %v2828
      %2853 = vmatprep.subr.bf16.mxu0 0
      %2854 = vmatpush1.bf16.msra.mxu0 %v2827
      %2855 = vmatprep.subr.bf16.mxu0 0
      %2856 = vmatpush1.bf16.msra.mxu0 %v2826
      %2857 = vmatprep.subr.bf16.mxu0 0
      %2858 = vmatpush2.bf16.msra.mxu0 0
      %2859 = vmatprep.subr.bf16.mxu0 0
      %2860 = vmatpush2.bf16.msra.mxu0 0
      %2861 = vmatprep.subr.bf16.mxu0 0
      %2862 = vmatpush2.bf16.msra.mxu0 0
      %2863 = vmatprep.subr.bf16.mxu0 0
      %2864 = vmatpush2.bf16.msra.mxu0 0
      %2865 = vmatprep.subr.bf16.mxu0 0
      %2866 = vmatpush2.bf16.msra.mxu0 0
      %2867 = vmatprep.subr.bf16.mxu0 0
      %2868 = vmatpush2.bf16.msra.mxu0 0
      %2869 = vmatprep.subr.bf16.mxu0 0
      %2870 = vmatpush2.bf16.msra.mxu0 0
      %2871 = vmatprep.subr.bf16.mxu0 0
      %2872 = vmatpush2.bf16.msra.mxu0 0
      %2873 = vmatprep.mubr.bf16.mxu0 0
      %2874 = vmatmul.mubr.bf16.gmra.mxu0 %v2839
      %v2875 = vpop.f32.mrf.mxu0
      %v2876 = vadd.f32 0.0, %v2875
      %v2877 = vpop.f32.mrf.mxu0
      %v2878 = vpop.f32.mrf.mxu0
      %v2879 = vpop.f32.mrf.mxu0
      %2880 = vdwg.mxu0
      %v2881 = vadd.f32 %v2786, %v2876
      %v2882 = vld [vmem:[#allocation3 + $0x7] sm:$0xf]
      %v2883 = vpack.c.bf16 %v2882, %v2882
      %s2884 = scalar_lea.vmem %s5, 336
      %v2885 = vld [vmem:[%s2884] sm:$0xf]
      %v2886 = vld [vmem:[%s2884 + $0x4] sm:$0xf]
      %v2887 = vld [vmem:[%s2884 + $0x8] sm:$0xf]
      %v2888 = vld [vmem:[%s2884 + $0xc] sm:$0xf]
      %v2889 = vld [vmem:[%s2884 + $0x10] sm:$0xf]
      %v2890 = vld [vmem:[%s2884 + $0x14] sm:$0xf]
      %v2891 = vld [vmem:[%s2884 + $0x18] sm:$0xf]
      %v2892 = vld [vmem:[%s2884 + $0x1c] sm:$0xf]
      %v2893 = vld [vmem:[%s2884 + $0x20] sm:$0xf]
      %v2894 = vld [vmem:[%s2884 + $0x24] sm:$0xf]
      %v2895 = vld [vmem:[%s2884 + $0x28] sm:$0xf]
      %v2896 = vld [vmem:[%s2884 + $0x2c] sm:$0xf]
      %v2909 = vunpack.c.l.b16 %v2885
      %v2910 = vunpack.c.l.b16 %v2886
      %v2911 = vunpack.c.l.b16 %v2887
      %v2912 = vunpack.c.l.b16 %v2888
      %v2913 = vunpack.c.l.b16 %v2889
      %v2914 = vunpack.c.l.b16 %v2890
      %v2915 = vunpack.c.l.b16 %v2891
      %v2916 = vunpack.c.l.b16 %v2892
      %v2917 = vunpack.c.l.b16 %v2893
      %v2918 = vunpack.c.l.b16 %v2894
      %v2919 = vunpack.c.l.b16 %v2895
      %v2920 = vunpack.c.l.b16 %v2896
      %v2921 = vpack.c.b16 %v2910, %v2909
      %v2922 = vpack.c.b16 %v2912, %v2911
      %v2923 = vpack.c.b16 %v2914, %v2913
      %v2924 = vpack.c.b16 %v2916, %v2915
      %v2925 = vpack.c.b16 %v2918, %v2917
      %v2926 = vpack.c.b16 %v2920, %v2919
      %v2934 = vsel %vm2216, %v2883, 0
      %2936 = vmatprep.subr.bf16.mxu0 0
      %2937 = vmatpush1.bf16.msra.mxu0 0
      %2938 = vmatprep.subr.bf16.mxu0 0
      %2939 = vmatpush1.bf16.msra.mxu0 0
      %2940 = vmatprep.subr.bf16.mxu0 0
      %2941 = vmatpush1.bf16.msra.mxu0 %v2926
      %2942 = vmatprep.subr.bf16.mxu0 0
      %2943 = vmatpush1.bf16.msra.mxu0 %v2925
      %2944 = vmatprep.subr.bf16.mxu0 0
      %2945 = vmatpush1.bf16.msra.mxu0 %v2924
      %2946 = vmatprep.subr.bf16.mxu0 0
      %2947 = vmatpush1.bf16.msra.mxu0 %v2923
      %2948 = vmatprep.subr.bf16.mxu0 0
      %2949 = vmatpush1.bf16.msra.mxu0 %v2922
      %2950 = vmatprep.subr.bf16.mxu0 0
      %2951 = vmatpush1.bf16.msra.mxu0 %v2921
      %2952 = vmatprep.subr.bf16.mxu0 0
      %2953 = vmatpush2.bf16.msra.mxu0 0
      %2954 = vmatprep.subr.bf16.mxu0 0
      %2955 = vmatpush2.bf16.msra.mxu0 0
      %2956 = vmatprep.subr.bf16.mxu0 0
      %2957 = vmatpush2.bf16.msra.mxu0 0
      %2958 = vmatprep.subr.bf16.mxu0 0
      %2959 = vmatpush2.bf16.msra.mxu0 0
      %2960 = vmatprep.subr.bf16.mxu0 0
      %2961 = vmatpush2.bf16.msra.mxu0 0
      %2962 = vmatprep.subr.bf16.mxu0 0
      %2963 = vmatpush2.bf16.msra.mxu0 0
      %2964 = vmatprep.subr.bf16.mxu0 0
      %2965 = vmatpush2.bf16.msra.mxu0 0
      %2966 = vmatprep.subr.bf16.mxu0 0
      %2967 = vmatpush2.bf16.msra.mxu0 0
      %2968 = vmatprep.mubr.bf16.mxu0 0
      %2969 = vmatmul.mubr.bf16.gmra.mxu0 %v2934
      %v2970 = vpop.f32.mrf.mxu0
      %v2971 = vadd.f32 0.0, %v2970
      %v2972 = vpop.f32.mrf.mxu0
      %v2973 = vpop.f32.mrf.mxu0
      %v2974 = vpop.f32.mrf.mxu0
      %2975 = vdwg.mxu0
      %v2976 = vadd.f32 %v2881, %v2971
      %v2977 = vld [vmem:[#allocation3 + $0x8] sm:$0xf]
      %v2978 = vpack.c.bf16 %v2977, %v2977
      %s2979 = scalar_lea.vmem %s5, 384
      %v2980 = vld [vmem:[%s2979] sm:$0xf]
      %v2981 = vld [vmem:[%s2979 + $0x4] sm:$0xf]
      %v2982 = vld [vmem:[%s2979 + $0x8] sm:$0xf]
      %v2983 = vld [vmem:[%s2979 + $0xc] sm:$0xf]
      %v2984 = vld [vmem:[%s2979 + $0x10] sm:$0xf]
      %v2985 = vld [vmem:[%s2979 + $0x14] sm:$0xf]
      %v2986 = vld [vmem:[%s2979 + $0x18] sm:$0xf]
      %v2987 = vld [vmem:[%s2979 + $0x1c] sm:$0xf]
      %v2988 = vld [vmem:[%s2979 + $0x20] sm:$0xf]
      %v2989 = vld [vmem:[%s2979 + $0x24] sm:$0xf]
      %v2990 = vld [vmem:[%s2979 + $0x28] sm:$0xf]
      %v2991 = vld [vmem:[%s2979 + $0x2c] sm:$0xf]
      %v3004 = vunpack.c.l.b16 %v2980
      %v3005 = vunpack.c.l.b16 %v2981
      %v3006 = vunpack.c.l.b16 %v2982
      %v3007 = vunpack.c.l.b16 %v2983
      %v3008 = vunpack.c.l.b16 %v2984
      %v3009 = vunpack.c.l.b16 %v2985
      %v3010 = vunpack.c.l.b16 %v2986
      %v3011 = vunpack.c.l.b16 %v2987
      %v3012 = vunpack.c.l.b16 %v2988
      %v3013 = vunpack.c.l.b16 %v2989
      %v3014 = vunpack.c.l.b16 %v2990
      %v3015 = vunpack.c.l.b16 %v2991
      %v3016 = vpack.c.b16 %v3005, %v3004
      %v3017 = vpack.c.b16 %v3007, %v3006
      %v3018 = vpack.c.b16 %v3009, %v3008
      %v3019 = vpack.c.b16 %v3011, %v3010
      %v3020 = vpack.c.b16 %v3013, %v3012
      %v3021 = vpack.c.b16 %v3015, %v3014
      %v3029 = vsel %vm2216, %v2978, 0
      %3031 = vmatprep.subr.bf16.mxu0 0
      %3032 = vmatpush1.bf16.msra.mxu0 0
      %3033 = vmatprep.subr.bf16.mxu0 0
      %3034 = vmatpush1.bf16.msra.mxu0 0
      %3035 = vmatprep.subr.bf16.mxu0 0
      %3036 = vmatpush1.bf16.msra.mxu0 %v3021
      %3037 = vmatprep.subr.bf16.mxu0 0
      %3038 = vmatpush1.bf16.msra.mxu0 %v3020
      %3039 = vmatprep.subr.bf16.mxu0 0
      %3040 = vmatpush1.bf16.msra.mxu0 %v3019
      %3041 = vmatprep.subr.bf16.mxu0 0
      %3042 = vmatpush1.bf16.msra.mxu0 %v3018
      %3043 = vmatprep.subr.bf16.mxu0 0
      %3044 = vmatpush1.bf16.msra.mxu0 %v3017
      %3045 = vmatprep.subr.bf16.mxu0 0
      %3046 = vmatpush1.bf16.msra.mxu0 %v3016
      %3047 = vmatprep.subr.bf16.mxu0 0
      %3048 = vmatpush2.bf16.msra.mxu0 0
      %3049 = vmatprep.subr.bf16.mxu0 0
      %3050 = vmatpush2.bf16.msra.mxu0 0
      %3051 = vmatprep.subr.bf16.mxu0 0
      %3052 = vmatpush2.bf16.msra.mxu0 0
      %3053 = vmatprep.subr.bf16.mxu0 0
      %3054 = vmatpush2.bf16.msra.mxu0 0
      %3055 = vmatprep.subr.bf16.mxu0 0
      %3056 = vmatpush2.bf16.msra.mxu0 0
      %3057 = vmatprep.subr.bf16.mxu0 0
      %3058 = vmatpush2.bf16.msra.mxu0 0
      %3059 = vmatprep.subr.bf16.mxu0 0
      %3060 = vmatpush2.bf16.msra.mxu0 0
      %3061 = vmatprep.subr.bf16.mxu0 0
      %3062 = vmatpush2.bf16.msra.mxu0 0
      %3063 = vmatprep.mubr.bf16.mxu0 0
      %3064 = vmatmul.mubr.bf16.gmra.mxu0 %v3029
      %v3065 = vpop.f32.mrf.mxu0
      %v3066 = vadd.f32 0.0, %v3065
      %v3067 = vpop.f32.mrf.mxu0
      %v3068 = vpop.f32.mrf.mxu0
      %v3069 = vpop.f32.mrf.mxu0
      %3070 = vdwg.mxu0
      %v3071 = vadd.f32 %v2976, %v3066
      %v3072 = vld [vmem:[%s6] sm:$0x1]
      %v3074 = vlaneseq
      %v3075 = vshrl.u32 %v3074, 7
      %v3076 = vsub.s32 0, %v3075
      %v3077 = vrot.slane %v3072, %v3076
      %v3079 = vadd.f32 %v3071, %v3077
      %v3080 = vmax.f32 %v3079, 0.0
      %vm3081 = vcmask 519168
      %3082 = vst.msk [vmem:[#allocation4] sm:$0xf] %vm3081, %v3080
      %v3083 = vld [vmem:[#allocation4] sm:$0x3]
      %v3084 = vpack.c.bf16 %v3083, %v3083
      %v3085 = vld [vmem:[%s7] sm:$0xf]
      %v3086 = vld [vmem:[%s7 + $0x4] sm:$0xf]
      %v3087 = vld [vmem:[%s7 + $0x8] sm:$0xf]
      %v3088 = vld [vmem:[%s7 + $0xc] sm:$0xf]
      %v3089 = vld [vmem:[%s7 + $0x10] sm:$0xf]
      %v3090 = vld [vmem:[%s7 + $0x14] sm:$0xf]
      %v3091 = vld [vmem:[%s7 + $0x18] sm:$0xf]
      %v3092 = vld [vmem:[%s7 + $0x1c] sm:$0xf]
      %v3093 = vld [vmem:[#allocation4 + $0x1] sm:$0x3]
      %v3094 = vpack.c.bf16 %v3093, %v3093
      %s3095 = scalar_lea.vmem %s7, 32
      %v3096 = vld [vmem:[%s3095] sm:$0xf]
      %v3097 = vld [vmem:[%s3095 + $0x4] sm:$0xf]
      %v3098 = vld [vmem:[%s3095 + $0x8] sm:$0xf]
      %v3099 = vld [vmem:[%s3095 + $0xc] sm:$0xf]
      %v3100 = vld [vmem:[%s3095 + $0x10] sm:$0xf]
      %v3101 = vld [vmem:[%s3095 + $0x14] sm:$0xf]
      %v3102 = vld [vmem:[%s3095 + $0x18] sm:$0xf]
      %v3103 = vld [vmem:[%s3095 + $0x1c] sm:$0xf]
      %v3112 = vunpack.c.l.b16 %v3096
      %v3113 = vunpack.c.l.b16 %v3097
      %v3114 = vunpack.c.l.b16 %v3098
      %v3115 = vunpack.c.l.b16 %v3099
      %v3116 = vunpack.c.l.b16 %v3100
      %v3117 = vunpack.c.l.b16 %v3101
      %v3118 = vunpack.c.l.b16 %v3102
      %v3119 = vunpack.c.l.b16 %v3103
      %v3120 = vpack.c.b16 %v3113, %v3112
      %v3121 = vpack.c.b16 %v3115, %v3114
      %v3122 = vpack.c.b16 %v3117, %v3116
      %v3123 = vpack.c.b16 %v3119, %v3118
      %vm3128 = vcmask 523264
      %v3130 = vsel %vm3128, %v3094, 0
      %3132 = vmatprep.subr.bf16.mxu0 0
      %3133 = vmatpush1.bf16.msra.mxu0 0
      %3134 = vmatprep.subr.bf16.mxu0 0
      %3135 = vmatpush1.bf16.msra.mxu0 0
      %3136 = vmatprep.subr.bf16.mxu0 0
      %3137 = vmatpush1.bf16.msra.mxu0 0
      %3138 = vmatprep.subr.bf16.mxu0 0
      %3139 = vmatpush1.bf16.msra.mxu0 0
      %3140 = vmatprep.subr.bf16.mxu0 0
      %3141 = vmatpush1.bf16.msra.mxu0 %v3123
      %3142 = vmatprep.subr.bf16.mxu0 0
      %3143 = vmatpush1.bf16.msra.mxu0 %v3122
      %3144 = vmatprep.subr.bf16.mxu0 0
      %3145 = vmatpush1.bf16.msra.mxu0 %v3121
      %3146 = vmatprep.subr.bf16.mxu0 0
      %3147 = vmatpush1.bf16.msra.mxu0 %v3120
      %3148 = vmatprep.subr.bf16.mxu0 0
      %3149 = vmatpush2.bf16.msra.mxu0 0
      %3150 = vmatprep.subr.bf16.mxu0 0
      %3151 = vmatpush2.bf16.msra.mxu0 0
      %3152 = vmatprep.subr.bf16.mxu0 0
      %3153 = vmatpush2.bf16.msra.mxu0 0
      %3154 = vmatprep.subr.bf16.mxu0 0
      %3155 = vmatpush2.bf16.msra.mxu0 0
      %3156 = vmatprep.subr.bf16.mxu0 0
      %3157 = vmatpush2.bf16.msra.mxu0 0
      %3158 = vmatprep.subr.bf16.mxu0 0
      %3159 = vmatpush2.bf16.msra.mxu0 0
      %3160 = vmatprep.subr.bf16.mxu0 0
      %3161 = vmatpush2.bf16.msra.mxu0 0
      %3162 = vmatprep.subr.bf16.mxu0 0
      %3163 = vmatpush2.bf16.msra.mxu0 0
      %3164 = vmatprep.mubr.bf16.mxu0 0
      %3165 = vmatmul.mubr.bf16.gmra.mxu0 %v3130
      %v3166 = vpop.f32.mrf.mxu0
      %v3167 = vadd.f32 0.0, %v3166
      %v3168 = vpop.f32.mrf.mxu0
      %v3169 = vpop.f32.mrf.mxu0
      %v3170 = vpop.f32.mrf.mxu0
      %3171 = vdwg.mxu0
      %v3180 = vunpack.c.l.b16 %v3085
      %v3181 = vunpack.c.l.b16 %v3086
      %v3182 = vunpack.c.l.b16 %v3087
      %v3183 = vunpack.c.l.b16 %v3088
      %v3184 = vunpack.c.l.b16 %v3089
      %v3185 = vunpack.c.l.b16 %v3090
      %v3186 = vunpack.c.l.b16 %v3091
      %v3187 = vunpack.c.l.b16 %v3092
      %v3188 = vpack.c.b16 %v3181, %v3180
      %v3189 = vpack.c.b16 %v3183, %v3182
      %v3190 = vpack.c.b16 %v3185, %v3184
      %v3191 = vpack.c.b16 %v3187, %v3186
      %v3197 = vsel %vm3128, %v3084, 0
      %3199 = vmatprep.subr.bf16.mxu0 0
      %3200 = vmatpush1.bf16.msra.mxu0 0
      %3201 = vmatprep.subr.bf16.mxu0 0
      %3202 = vmatpush1.bf16.msra.mxu0 0
      %3203 = vmatprep.subr.bf16.mxu0 0
      %3204 = vmatpush1.bf16.msra.mxu0 0
      %3205 = vmatprep.subr.bf16.mxu0 0
      %3206 = vmatpush1.bf16.msra.mxu0 0
      %3207 = vmatprep.subr.bf16.mxu0 0
      %3208 = vmatpush1.bf16.msra.mxu0 %v3191
      %3209 = vmatprep.subr.bf16.mxu0 0
      %3210 = vmatpush1.bf16.msra.mxu0 %v3190
      %3211 = vmatprep.subr.bf16.mxu0 0
      %3212 = vmatpush1.bf16.msra.mxu0 %v3189
      %3213 = vmatprep.subr.bf16.mxu0 0
      %3214 = vmatpush1.bf16.msra.mxu0 %v3188
      %3215 = vmatprep.subr.bf16.mxu0 0
      %3216 = vmatpush2.bf16.msra.mxu0 0
      %3217 = vmatprep.subr.bf16.mxu0 0
      %3218 = vmatpush2.bf16.msra.mxu0 0
      %3219 = vmatprep.subr.bf16.mxu0 0
      %3220 = vmatpush2.bf16.msra.mxu0 0
      %3221 = vmatprep.subr.bf16.mxu0 0
      %3222 = vmatpush2.bf16.msra.mxu0 0
      %3223 = vmatprep.subr.bf16.mxu0 0
      %3224 = vmatpush2.bf16.msra.mxu0 0
      %3225 = vmatprep.subr.bf16.mxu0 0
      %3226 = vmatpush2.bf16.msra.mxu0 0
      %3227 = vmatprep.subr.bf16.mxu0 0
      %3228 = vmatpush2.bf16.msra.mxu0 0
      %3229 = vmatprep.subr.bf16.mxu0 0
      %3230 = vmatpush2.bf16.msra.mxu0 0
      %3231 = vmatprep.mubr.bf16.mxu0 0
      %3232 = vmatmul.mubr.bf16.gmra.mxu0 %v3197
      %v3233 = vpop.f32.mrf.mxu0
      %v3234 = vadd.f32 %v3167, %v3233
      %v3235 = vpop.f32.mrf.mxu0
      %v3236 = vpop.f32.mrf.mxu0
      %v3237 = vpop.f32.mrf.mxu0
      %3238 = vdwg.mxu0
      %v3239 = vld [vmem:[#allocation4 + $0x2] sm:$0x3]
      %v3240 = vpack.c.bf16 %v3239, %v3239
      %s3241 = scalar_lea.vmem %s7, 64
      %v3242 = vld [vmem:[%s3241] sm:$0xf]
      %v3243 = vld [vmem:[%s3241 + $0x4] sm:$0xf]
      %v3244 = vld [vmem:[%s3241 + $0x8] sm:$0xf]
      %v3245 = vld [vmem:[%s3241 + $0xc] sm:$0xf]
      %v3246 = vld [vmem:[%s3241 + $0x10] sm:$0xf]
      %v3247 = vld [vmem:[%s3241 + $0x14] sm:$0xf]
      %v3248 = vld [vmem:[%s3241 + $0x18] sm:$0xf]
      %v3249 = vld [vmem:[%s3241 + $0x1c] sm:$0xf]
      %v3258 = vunpack.c.l.b16 %v3242
      %v3259 = vunpack.c.l.b16 %v3243
      %v3260 = vunpack.c.l.b16 %v3244
      %v3261 = vunpack.c.l.b16 %v3245
      %v3262 = vunpack.c.l.b16 %v3246
      %v3263 = vunpack.c.l.b16 %v3247
      %v3264 = vunpack.c.l.b16 %v3248
      %v3265 = vunpack.c.l.b16 %v3249
      %v3266 = vpack.c.b16 %v3259, %v3258
      %v3267 = vpack.c.b16 %v3261, %v3260
      %v3268 = vpack.c.b16 %v3263, %v3262
      %v3269 = vpack.c.b16 %v3265, %v3264
      %v3275 = vsel %vm3128, %v3240, 0
      %3277 = vmatprep.subr.bf16.mxu0 0
      %3278 = vmatpush1.bf16.msra.mxu0 0
      %3279 = vmatprep.subr.bf16.mxu0 0
      %3280 = vmatpush1.bf16.msra.mxu0 0
      %3281 = vmatprep.subr.bf16.mxu0 0
      %3282 = vmatpush1.bf16.msra.mxu0 0
      %3283 = vmatprep.subr.bf16.mxu0 0
      %3284 = vmatpush1.bf16.msra.mxu0 0
      %3285 = vmatprep.subr.bf16.mxu0 0
      %3286 = vmatpush1.bf16.msra.mxu0 %v3269
      %3287 = vmatprep.subr.bf16.mxu0 0
      %3288 = vmatpush1.bf16.msra.mxu0 %v3268
      %3289 = vmatprep.subr.bf16.mxu0 0
      %3290 = vmatpush1.bf16.msra.mxu0 %v3267
      %3291 = vmatprep.subr.bf16.mxu0 0
      %3292 = vmatpush1.bf16.msra.mxu0 %v3266
      %3293 = vmatprep.subr.bf16.mxu0 0
      %3294 = vmatpush2.bf16.msra.mxu0 0
      %3295 = vmatprep.subr.bf16.mxu0 0
      %3296 = vmatpush2.bf16.msra.mxu0 0
      %3297 = vmatprep.subr.bf16.mxu0 0
      %3298 = vmatpush2.bf16.msra.mxu0 0
      %3299 = vmatprep.subr.bf16.mxu0 0
      %3300 = vmatpush2.bf16.msra.mxu0 0
      %3301 = vmatprep.subr.bf16.mxu0 0
      %3302 = vmatpush2.bf16.msra.mxu0 0
      %3303 = vmatprep.subr.bf16.mxu0 0
      %3304 = vmatpush2.bf16.msra.mxu0 0
      %3305 = vmatprep.subr.bf16.mxu0 0
      %3306 = vmatpush2.bf16.msra.mxu0 0
      %3307 = vmatprep.subr.bf16.mxu0 0
      %3308 = vmatpush2.bf16.msra.mxu0 0
      %3309 = vmatprep.mubr.bf16.mxu0 0
      %3310 = vmatmul.mubr.bf16.gmra.mxu0 %v3275
      %v3311 = vpop.f32.mrf.mxu0
      %v3312 = vadd.f32 0.0, %v3311
      %v3313 = vpop.f32.mrf.mxu0
      %v3314 = vpop.f32.mrf.mxu0
      %v3315 = vpop.f32.mrf.mxu0
      %3316 = vdwg.mxu0
      %v3317 = vadd.f32 %v3234, %v3312
      %v3318 = vld [vmem:[%s8] sm:$0x1]
      %v3320 = vlaneseq
      %v3321 = vshrl.u32 %v3320, 7
      %v3322 = vsub.s32 0, %v3321
      %v3323 = vrot.slane %v3318, %v3322
      %v3325 = vadd.f32 %v3317, %v3323
      %v3326 = vmax.f32 %v3325, 0.0
      %vm3327 = vcmask 517120
      %3328 = vst.msk [vmem:[#allocation5] sm:$0x3] %vm3327, %v3326
      %v3329 = vld [vmem:[#allocation5] sm:$0x1]
      %v3330 = vpack.c.bf16 %v3329, %v3329
      %v3331 = vld [vmem:[%s9] sm:$0xf]
      %v3332 = vld [vmem:[%s9 + $0x4] sm:$0xf]
      %v3333 = vld [vmem:[%s9 + $0x8] sm:$0xf]
      %v3334 = vld [vmem:[%s9 + $0xc] sm:$0xf]
      %v3335 = vld [vmem:[%s9 + $0x10] sm:$0xf]
      %v3336 = vld [vmem:[%s9 + $0x14] sm:$0xf]
      %v3337 = vld [vmem:[%s9 + $0x18] sm:$0xf]
      %v3338 = vld [vmem:[%s9 + $0x1c] sm:$0xf]
      %v3339 = vld [vmem:[#allocation5 + $0x1] sm:$0x1]
      %v3340 = vpack.c.bf16 %v3339, %v3339
      %s3341 = scalar_lea.vmem %s9, 32
      %v3342 = vld [vmem:[%s3341] sm:$0xf]
      %v3343 = vld [vmem:[%s3341 + $0x4] sm:$0xf]
      %v3344 = vld [vmem:[%s3341 + $0x8] sm:$0xf]
      %v3345 = vld [vmem:[%s3341 + $0xc] sm:$0xf]
      %v3346 = vld [vmem:[%s3341 + $0x10] sm:$0xf]
      %v3347 = vld [vmem:[%s3341 + $0x14] sm:$0xf]
      %v3348 = vld [vmem:[%s3341 + $0x18] sm:$0xf]
      %v3349 = vld [vmem:[%s3341 + $0x1c] sm:$0xf]
      %v3358 = vunpack.c.l.b16 %v3342
      %v3359 = vunpack.c.l.b16 %v3343
      %v3360 = vunpack.c.l.b16 %v3344
      %v3361 = vunpack.c.l.b16 %v3345
      %v3362 = vunpack.c.l.b16 %v3346
      %v3363 = vunpack.c.l.b16 %v3347
      %v3364 = vunpack.c.l.b16 %v3348
      %v3365 = vunpack.c.l.b16 %v3349
      %v3366 = vpack.c.b16 %v3359, %v3358
      %v3367 = vpack.c.b16 %v3361, %v3360
      %v3368 = vpack.c.b16 %v3363, %v3362
      %v3369 = vpack.c.b16 %v3365, %v3364
      %v3375 = vsel %vm3128, %v3340, 0
      %3377 = vmatprep.subr.bf16.mxu0 0
      %3378 = vmatpush1.bf16.msra.mxu0 0
      %3379 = vmatprep.subr.bf16.mxu0 0
      %3380 = vmatpush1.bf16.msra.mxu0 0
      %3381 = vmatprep.subr.bf16.mxu0 0
      %3382 = vmatpush1.bf16.msra.mxu0 0
      %3383 = vmatprep.subr.bf16.mxu0 0
      %3384 = vmatpush1.bf16.msra.mxu0 0
      %3385 = vmatprep.subr.bf16.mxu0 0
      %3386 = vmatpush1.bf16.msra.mxu0 %v3369
      %3387 = vmatprep.subr.bf16.mxu0 0
      %3388 = vmatpush1.bf16.msra.mxu0 %v3368
      %3389 = vmatprep.subr.bf16.mxu0 0
      %3390 = vmatpush1.bf16.msra.mxu0 %v3367
      %3391 = vmatprep.subr.bf16.mxu0 0
      %3392 = vmatpush1.bf16.msra.mxu0 %v3366
      %3393 = vmatprep.subr.bf16.mxu0 0
      %3394 = vmatpush2.bf16.msra.mxu0 0
      %3395 = vmatprep.subr.bf16.mxu0 0
      %3396 = vmatpush2.bf16.msra.mxu0 0
      %3397 = vmatprep.subr.bf16.mxu0 0
      %3398 = vmatpush2.bf16.msra.mxu0 0
      %3399 = vmatprep.subr.bf16.mxu0 0
      %3400 = vmatpush2.bf16.msra.mxu0 0
      %3401 = vmatprep.subr.bf16.mxu0 0
      %3402 = vmatpush2.bf16.msra.mxu0 0
      %3403 = vmatprep.subr.bf16.mxu0 0
      %3404 = vmatpush2.bf16.msra.mxu0 0
      %3405 = vmatprep.subr.bf16.mxu0 0
      %3406 = vmatpush2.bf16.msra.mxu0 0
      %3407 = vmatprep.subr.bf16.mxu0 0
      %3408 = vmatpush2.bf16.msra.mxu0 0
      %3409 = vmatprep.mubr.bf16.mxu0 0
      %3410 = vmatmul.mubr.bf16.gmra.mxu0 %v3375
      %v3411 = vpop.f32.mrf.mxu0
      %v3412 = vadd.f32 0.0, %v3411
      %v3413 = vpop.f32.mrf.mxu0
      %v3414 = vpop.f32.mrf.mxu0
      %v3415 = vpop.f32.mrf.mxu0
      %3416 = vdwg.mxu0
      %v3425 = vunpack.c.l.b16 %v3331
      %v3426 = vunpack.c.l.b16 %v3332
      %v3427 = vunpack.c.l.b16 %v3333
      %v3428 = vunpack.c.l.b16 %v3334
      %v3429 = vunpack.c.l.b16 %v3335
      %v3430 = vunpack.c.l.b16 %v3336
      %v3431 = vunpack.c.l.b16 %v3337
      %v3432 = vunpack.c.l.b16 %v3338
      %v3433 = vpack.c.b16 %v3426, %v3425
      %v3434 = vpack.c.b16 %v3428, %v3427
      %v3435 = vpack.c.b16 %v3430, %v3429
      %v3436 = vpack.c.b16 %v3432, %v3431
      %v3442 = vsel %vm3128, %v3330, 0
      %3444 = vmatprep.subr.bf16.mxu0 0
      %3445 = vmatpush1.bf16.msra.mxu0 0
      %3446 = vmatprep.subr.bf16.mxu0 0
      %3447 = vmatpush1.bf16.msra.mxu0 0
      %3448 = vmatprep.subr.bf16.mxu0 0
      %3449 = vmatpush1.bf16.msra.mxu0 0
      %3450 = vmatprep.subr.bf16.mxu0 0
      %3451 = vmatpush1.bf16.msra.mxu0 0
      %3452 = vmatprep.subr.bf16.mxu0 0
      %3453 = vmatpush1.bf16.msra.mxu0 %v3436
      %3454 = vmatprep.subr.bf16.mxu0 0
      %3455 = vmatpush1.bf16.msra.mxu0 %v3435
      %3456 = vmatprep.subr.bf16.mxu0 0
      %3457 = vmatpush1.bf16.msra.mxu0 %v3434
      %3458 = vmatprep.subr.bf16.mxu0 0
      %3459 = vmatpush1.bf16.msra.mxu0 %v3433
      %3460 = vmatprep.subr.bf16.mxu0 0
      %3461 = vmatpush2.bf16.msra.mxu0 0
      %3462 = vmatprep.subr.bf16.mxu0 0
      %3463 = vmatpush2.bf16.msra.mxu0 0
      %3464 = vmatprep.subr.bf16.mxu0 0
      %3465 = vmatpush2.bf16.msra.mxu0 0
      %3466 = vmatprep.subr.bf16.mxu0 0
      %3467 = vmatpush2.bf16.msra.mxu0 0
      %3468 = vmatprep.subr.bf16.mxu0 0
      %3469 = vmatpush2.bf16.msra.mxu0 0
      %3470 = vmatprep.subr.bf16.mxu0 0
      %3471 = vmatpush2.bf16.msra.mxu0 0
      %3472 = vmatprep.subr.bf16.mxu0 0
      %3473 = vmatpush2.bf16.msra.mxu0 0
      %3474 = vmatprep.subr.bf16.mxu0 0
      %3475 = vmatpush2.bf16.msra.mxu0 0
      %3476 = vmatprep.mubr.bf16.mxu0 0
      %3477 = vmatmul.mubr.bf16.gmra.mxu0 %v3442
      %v3478 = vpop.f32.mrf.mxu0
      %v3479 = vadd.f32 %v3412, %v3478
      %v3480 = vpop.f32.mrf.mxu0
      %v3481 = vpop.f32.mrf.mxu0
      %v3482 = vpop.f32.mrf.mxu0
      %3483 = vdwg.mxu0
      %v3484 = vld [vmem:[%s10] sm:$0x1]
      %v3485 = vadd.f32 %v3479, %v3484
      %v3486 = vpack.c.bf16 %v3485, %v3485
      %v3487 = vld [vmem:[%s11] sm:$0xf]
      %v3488 = vld [vmem:[%s11 + $0x4] sm:$0xf]
      %v3489 = vld [vmem:[%s11 + $0x8] sm:$0xf]
      %v3490 = vld [vmem:[%s11 + $0xc] sm:$0xf]
      %v3491 = vld [vmem:[%s12] sm:$0x1]
      %v3496 = vunpack.c.l.b16 %v3487
      %v3497 = vunpack.c.l.b16 %v3488
      %v3498 = vunpack.c.l.b16 %v3489
      %v3499 = vunpack.c.l.b16 %v3490
      %v3500 = vpack.c.b16 %v3497, %v3496
      %v3501 = vpack.c.b16 %v3499, %v3498
      %vm3504 = vcmask 261120
      %v3506 = vsel %vm3504, %v3486, 0
      %3508 = vmatprep.subr.bf16.mxu0 0
      %3509 = vmatpush1.bf16.msra.mxu0 0
      %3510 = vmatprep.subr.bf16.mxu0 0
      %3511 = vmatpush1.bf16.msra.mxu0 0
      %3512 = vmatprep.subr.bf16.mxu0 0
      %3513 = vmatpush1.bf16.msra.mxu0 0
      %3514 = vmatprep.subr.bf16.mxu0 0
      %3515 = vmatpush1.bf16.msra.mxu0 0
      %3516 = vmatprep.subr.bf16.mxu0 0
      %3517 = vmatpush1.bf16.msra.mxu0 0
      %3518 = vmatprep.subr.bf16.mxu0 0
      %3519 = vmatpush1.bf16.msra.mxu0 0
      %3520 = vmatprep.subr.bf16.mxu0 0
      %3521 = vmatpush1.bf16.msra.mxu0 %v3501
      %3522 = vmatprep.subr.bf16.mxu0 0
      %3523 = vmatpush1.bf16.msra.mxu0 %v3500
      %3524 = vmatprep.subr.bf16.mxu0 0
      %3525 = vmatpush2.bf16.msra.mxu0 0
      %3526 = vmatprep.subr.bf16.mxu0 0
      %3527 = vmatpush2.bf16.msra.mxu0 0
      %3528 = vmatprep.subr.bf16.mxu0 0
      %3529 = vmatpush2.bf16.msra.mxu0 0
      %3530 = vmatprep.subr.bf16.mxu0 0
      %3531 = vmatpush2.bf16.msra.mxu0 0
      %3532 = vmatprep.subr.bf16.mxu0 0
      %3533 = vmatpush2.bf16.msra.mxu0 0
      %3534 = vmatprep.subr.bf16.mxu0 0
      %3535 = vmatpush2.bf16.msra.mxu0 0
      %3536 = vmatprep.subr.bf16.mxu0 0
      %3537 = vmatpush2.bf16.msra.mxu0 0
      %3538 = vmatprep.subr.bf16.mxu0 0
      %3539 = vmatpush2.bf16.msra.mxu0 0
      %3540 = vmatprep.mubr.bf16.mxu0 0
      %3541 = vmatmul.mubr.bf16.gmra.mxu0 %v3506
      %v3542 = vpop.f32.mrf.mxu0
      %v3543 = vadd.f32 %v3491, %v3542
      %v3544 = vpop.f32.mrf.mxu0
      %v3545 = vpop.f32.mrf.mxu0
      %v3546 = vpop.f32.mrf.mxu0
      %3547 = vdwg.mxu0
      %3548 = vst.msk [vmem:[#allocation6] sm:$0xff] %vm1395, 0.0
      %3549 = vst.msk [vmem:[#allocation6 + $0x8] sm:$0xff] %vm1395, 0.0
      %vm3550 = vcmask 651264
      %3551 = vst.msk [vmem:[#allocation6 + $0x10] sm:$0x1f] %vm3550, 0.0
      %v3552 = vpack.c.bf16 %v3543, %v3543
      %v3553 = vld [vmem:[%s13] sm:$0xf]
      %v3554 = vld [vmem:[%s13 + $0x4] sm:$0xf]
      %v3555 = vld [vmem:[%s13 + $0x8] sm:$0xf]
      %v3556 = vld [vmem:[%s13 + $0xc] sm:$0xf]
      %v3557 = vld [vmem:[%s13 + $0x10] sm:$0xf]
      %v3558 = vld [vmem:[%s13 + $0x14] sm:$0xf]
      %v3559 = vld [vmem:[%s13 + $0x18] sm:$0xf]
      %v3560 = vld [vmem:[%s13 + $0x1c] sm:$0xf]
      %v3561 = vld [vmem:[%s14] sm:$0x1]
      %v3570 = vunpack.c.l.b16 %v3553
      %v3571 = vunpack.c.l.b16 %v3554
      %v3572 = vunpack.c.l.b16 %v3555
      %v3573 = vunpack.c.l.b16 %v3556
      %v3574 = vunpack.c.l.b16 %v3557
      %v3575 = vunpack.c.l.b16 %v3558
      %v3576 = vunpack.c.l.b16 %v3559
      %v3577 = vunpack.c.l.b16 %v3560
      %v3578 = vpack.c.b16 %v3571, %v3570
      %v3579 = vpack.c.b16 %v3573, %v3572
      %v3580 = vpack.c.b16 %v3575, %v3574
      %v3581 = vpack.c.b16 %v3577, %v3576
      %v3587 = vsel %vm3128, %v3552, 0
      %3589 = vmatprep.subr.bf16.mxu0 0
      %3590 = vmatpush1.bf16.msra.mxu0 0
      %3591 = vmatprep.subr.bf16.mxu0 0
      %3592 = vmatpush1.bf16.msra.mxu0 0
      %3593 = vmatprep.subr.bf16.mxu0 0
      %3594 = vmatpush1.bf16.msra.mxu0 0
      %3595 = vmatprep.subr.bf16.mxu0 0
      %3596 = vmatpush1.bf16.msra.mxu0 0
      %3597 = vmatprep.subr.bf16.mxu0 0
      %3598 = vmatpush1.bf16.msra.mxu0 %v3581
      %3599 = vmatprep.subr.bf16.mxu0 0
      %3600 = vmatpush1.bf16.msra.mxu0 %v3580
      %3601 = vmatprep.subr.bf16.mxu0 0
      %3602 = vmatpush1.bf16.msra.mxu0 %v3579
      %3603 = vmatprep.subr.bf16.mxu0 0
      %3604 = vmatpush1.bf16.msra.mxu0 %v3578
      %3605 = vmatprep.subr.bf16.mxu0 0
      %3606 = vmatpush2.bf16.msra.mxu0 0
      %3607 = vmatprep.subr.bf16.mxu0 0
      %3608 = vmatpush2.bf16.msra.mxu0 0
      %3609 = vmatprep.subr.bf16.mxu0 0
      %3610 = vmatpush2.bf16.msra.mxu0 0
      %3611 = vmatprep.subr.bf16.mxu0 0
      %3612 = vmatpush2.bf16.msra.mxu0 0
      %3613 = vmatprep.subr.bf16.mxu0 0
      %3614 = vmatpush2.bf16.msra.mxu0 0
      %3615 = vmatprep.subr.bf16.mxu0 0
      %3616 = vmatpush2.bf16.msra.mxu0 0
      %3617 = vmatprep.subr.bf16.mxu0 0
      %3618 = vmatpush2.bf16.msra.mxu0 0
      %3619 = vmatprep.subr.bf16.mxu0 0
      %3620 = vmatpush2.bf16.msra.mxu0 0
      %3621 = vmatprep.mubr.bf16.mxu0 0
      %3622 = vmatmul.mubr.bf16.gmra.mxu0 %v3587
      %v3623 = vpop.f32.mrf.mxu0
      %v3624 = vadd.f32 %v3561, %v3623
      %v3625 = vpop.f32.mrf.mxu0
      %v3626 = vpop.f32.mrf.mxu0
      %v3627 = vpop.f32.mrf.mxu0
      %3628 = vdwg.mxu0
      %v3629 = vmax.f32 %v3624, 0.0
      %vm3630 = vcmask 647168
      %3631 = vst.msk [vmem:[#allocation6 + $0x8] sm:$0x1] %vm3630, %v3629
      %s3632 = scalar_lea.vmem %s13, 32
      %v3633 = vld [vmem:[%s3632] sm:$0xf]
      %v3634 = vld [vmem:[%s3632 + $0x4] sm:$0xf]
      %v3635 = vld [vmem:[%s3632 + $0x8] sm:$0xf]
      %v3636 = vld [vmem:[%s3632 + $0xc] sm:$0xf]
      %v3637 = vld [vmem:[%s3632 + $0x10] sm:$0xf]
      %v3638 = vld [vmem:[%s3632 + $0x14] sm:$0xf]
      %v3639 = vld [vmem:[%s3632 + $0x18] sm:$0xf]
      %v3640 = vld [vmem:[%s3632 + $0x1c] sm:$0xf]
      %v3641 = vld [vmem:[%s14] sm:$0x1]
      %v3650 = vunpack.c.l.b16 %v3633
      %v3651 = vunpack.c.l.b16 %v3634
      %v3652 = vunpack.c.l.b16 %v3635
      %v3653 = vunpack.c.l.b16 %v3636
      %v3654 = vunpack.c.l.b16 %v3637
      %v3655 = vunpack.c.l.b16 %v3638
      %v3656 = vunpack.c.l.b16 %v3639
      %v3657 = vunpack.c.l.b16 %v3640
      %v3658 = vpack.c.b16 %v3651, %v3650
      %v3659 = vpack.c.b16 %v3653, %v3652
      %v3660 = vpack.c.b16 %v3655, %v3654
      %v3661 = vpack.c.b16 %v3657, %v3656
      %3666 = vmatprep.subr.bf16.mxu0 0
      %3667 = vmatpush1.bf16.msra.mxu0 0
      %3668 = vmatprep.subr.bf16.mxu0 0
      %3669 = vmatpush1.bf16.msra.mxu0 0
      %3670 = vmatprep.subr.bf16.mxu0 0
      %3671 = vmatpush1.bf16.msra.mxu0 0
      %3672 = vmatprep.subr.bf16.mxu0 0
      %3673 = vmatpush1.bf16.msra.mxu0 0
      %3674 = vmatprep.subr.bf16.mxu0 0
      %3675 = vmatpush1.bf16.msra.mxu0 %v3661
      %3676 = vmatprep.subr.bf16.mxu0 0
      %3677 = vmatpush1.bf16.msra.mxu0 %v3660
      %3678 = vmatprep.subr.bf16.mxu0 0
      %3679 = vmatpush1.bf16.msra.mxu0 %v3659
      %3680 = vmatprep.subr.bf16.mxu0 0
      %3681 = vmatpush1.bf16.msra.mxu0 %v3658
      %3682 = vmatprep.subr.bf16.mxu0 0
      %3683 = vmatpush2.bf16.msra.mxu0 0
      %3684 = vmatprep.subr.bf16.mxu0 0
      %3685 = vmatpush2.bf16.msra.mxu0 0
      %3686 = vmatprep.subr.bf16.mxu0 0
      %3687 = vmatpush2.bf16.msra.mxu0 0
      %3688 = vmatprep.subr.bf16.mxu0 0
      %3689 = vmatpush2.bf16.msra.mxu0 0
      %3690 = vmatprep.subr.bf16.mxu0 0
      %3691 = vmatpush2.bf16.msra.mxu0 0
      %3692 = vmatprep.subr.bf16.mxu0 0
      %3693 = vmatpush2.bf16.msra.mxu0 0
      %3694 = vmatprep.subr.bf16.mxu0 0
      %3695 = vmatpush2.bf16.msra.mxu0 0
      %3696 = vmatprep.subr.bf16.mxu0 0
      %3697 = vmatpush2.bf16.msra.mxu0 0
      %3698 = vmatprep.mubr.bf16.mxu0 0
      %3699 = vmatmul.mubr.bf16.gmra.mxu0 %v3587
      %v3700 = vpop.f32.mrf.mxu0
      %v3701 = vadd.f32 %v3641, %v3700
      %v3702 = vpop.f32.mrf.mxu0
      %v3703 = vpop.f32.mrf.mxu0
      %v3704 = vpop.f32.mrf.mxu0
      %3705 = vdwg.mxu0
      %v3706 = vmax.f32 %v3701, 0.0
      %3707 = vst.msk [vmem:[#allocation6 + $0x9] sm:$0x1] %vm3630, %v3706
      %s3708 = scalar_lea.vmem %s13, 64
      %v3709 = vld [vmem:[%s3708] sm:$0xf]
      %v3710 = vld [vmem:[%s3708 + $0x4] sm:$0xf]
      %v3711 = vld [vmem:[%s3708 + $0x8] sm:$0xf]
      %v3712 = vld [vmem:[%s3708 + $0xc] sm:$0xf]
      %v3713 = vld [vmem:[%s3708 + $0x10] sm:$0xf]
      %v3714 = vld [vmem:[%s3708 + $0x14] sm:$0xf]
      %v3715 = vld [vmem:[%s3708 + $0x18] sm:$0xf]
      %v3716 = vld [vmem:[%s3708 + $0x1c] sm:$0xf]
      %v3717 = vld [vmem:[%s14] sm:$0x1]
      %v3726 = vunpack.c.l.b16 %v3709
      %v3727 = vunpack.c.l.b16 %v3710
      %v3728 = vunpack.c.l.b16 %v3711
      %v3729 = vunpack.c.l.b16 %v3712
      %v3730 = vunpack.c.l.b16 %v3713
      %v3731 = vunpack.c.l.b16 %v3714
      %v3732 = vunpack.c.l.b16 %v3715
      %v3733 = vunpack.c.l.b16 %v3716
      %v3734 = vpack.c.b16 %v3727, %v3726
      %v3735 = vpack.c.b16 %v3729, %v3728
      %v3736 = vpack.c.b16 %v3731, %v3730
      %v3737 = vpack.c.b16 %v3733, %v3732
      %3742 = vmatprep.subr.bf16.mxu0 0
      %3743 = vmatpush1.bf16.msra.mxu0 0
      %3744 = vmatprep.subr.bf16.mxu0 0
      %3745 = vmatpush1.bf16.msra.mxu0 0
      %3746 = vmatprep.subr.bf16.mxu0 0
      %3747 = vmatpush1.bf16.msra.mxu0 0
      %3748 = vmatprep.subr.bf16.mxu0 0
      %3749 = vmatpush1.bf16.msra.mxu0 0
      %3750 = vmatprep.subr.bf16.mxu0 0
      %3751 = vmatpush1.bf16.msra.mxu0 %v3737
      %3752 = vmatprep.subr.bf16.mxu0 0
      %3753 = vmatpush1.bf16.msra.mxu0 %v3736
      %3754 = vmatprep.subr.bf16.mxu0 0
      %3755 = vmatpush1.bf16.msra.mxu0 %v3735
      %3756 = vmatprep.subr.bf16.mxu0 0
      %3757 = vmatpush1.bf16.msra.mxu0 %v3734
      %3758 = vmatprep.subr.bf16.mxu0 0
      %3759 = vmatpush2.bf16.msra.mxu0 0
      %3760 = vmatprep.subr.bf16.mxu0 0
      %3761 = vmatpush2.bf16.msra.mxu0 0
      %3762 = vmatprep.subr.bf16.mxu0 0
      %3763 = vmatpush2.bf16.msra.mxu0 0
      %3764 = vmatprep.subr.bf16.mxu0 0
      %3765 = vmatpush2.bf16.msra.mxu0 0
      %3766 = vmatprep.subr.bf16.mxu0 0
      %3767 = vmatpush2.bf16.msra.mxu0 0
      %3768 = vmatprep.subr.bf16.mxu0 0
      %3769 = vmatpush2.bf16.msra.mxu0 0
      %3770 = vmatprep.subr.bf16.mxu0 0
      %3771 = vmatpush2.bf16.msra.mxu0 0
      %3772 = vmatprep.subr.bf16.mxu0 0
      %3773 = vmatpush2.bf16.msra.mxu0 0
      %3774 = vmatprep.mubr.bf16.mxu0 0
      %3775 = vmatmul.mubr.bf16.gmra.mxu0 %v3587
      %v3776 = vpop.f32.mrf.mxu0
      %v3777 = vadd.f32 %v3717, %v3776
      %v3778 = vpop.f32.mrf.mxu0
      %v3779 = vpop.f32.mrf.mxu0
      %v3780 = vpop.f32.mrf.mxu0
      %3781 = vdwg.mxu0
      %v3782 = vmax.f32 %v3777, 0.0
      %3783 = vst.msk [vmem:[#allocation6 + $0xa] sm:$0x1] %vm3630, %v3782
      %s3784 = scalar_lea.vmem %s13, 96
      %v3785 = vld [vmem:[%s3784] sm:$0xf]
      %v3786 = vld [vmem:[%s3784 + $0x4] sm:$0xf]
      %v3787 = vld [vmem:[%s3784 + $0x8] sm:$0xf]
      %v3788 = vld [vmem:[%s3784 + $0xc] sm:$0xf]
      %v3789 = vld [vmem:[%s3784 + $0x10] sm:$0xf]
      %v3790 = vld [vmem:[%s3784 + $0x14] sm:$0xf]
      %v3791 = vld [vmem:[%s3784 + $0x18] sm:$0xf]
      %v3792 = vld [vmem:[%s3784 + $0x1c] sm:$0xf]
      %v3793 = vld [vmem:[%s14] sm:$0x1]
      %v3802 = vunpack.c.l.b16 %v3785
      %v3803 = vunpack.c.l.b16 %v3786
      %v3804 = vunpack.c.l.b16 %v3787
      %v3805 = vunpack.c.l.b16 %v3788
      %v3806 = vunpack.c.l.b16 %v3789
      %v3807 = vunpack.c.l.b16 %v3790
      %v3808 = vunpack.c.l.b16 %v3791
      %v3809 = vunpack.c.l.b16 %v3792
      %v3810 = vpack.c.b16 %v3803, %v3802
      %v3811 = vpack.c.b16 %v3805, %v3804
      %v3812 = vpack.c.b16 %v3807, %v3806
      %v3813 = vpack.c.b16 %v3809, %v3808
      %3818 = vmatprep.subr.bf16.mxu0 0
      %3819 = vmatpush1.bf16.msra.mxu0 0
      %3820 = vmatprep.subr.bf16.mxu0 0
      %3821 = vmatpush1.bf16.msra.mxu0 0
      %3822 = vmatprep.subr.bf16.mxu0 0
      %3823 = vmatpush1.bf16.msra.mxu0 0
      %3824 = vmatprep.subr.bf16.mxu0 0
      %3825 = vmatpush1.bf16.msra.mxu0 0
      %3826 = vmatprep.subr.bf16.mxu0 0
      %3827 = vmatpush1.bf16.msra.mxu0 %v3813
      %3828 = vmatprep.subr.bf16.mxu0 0
      %3829 = vmatpush1.bf16.msra.mxu0 %v3812
      %3830 = vmatprep.subr.bf16.mxu0 0
      %3831 = vmatpush1.bf16.msra.mxu0 %v3811
      %3832 = vmatprep.subr.bf16.mxu0 0
      %3833 = vmatpush1.bf16.msra.mxu0 %v3810
      %3834 = vmatprep.subr.bf16.mxu0 0
      %3835 = vmatpush2.bf16.msra.mxu0 0
      %3836 = vmatprep.subr.bf16.mxu0 0
      %3837 = vmatpush2.bf16.msra.mxu0 0
      %3838 = vmatprep.subr.bf16.mxu0 0
      %3839 = vmatpush2.bf16.msra.mxu0 0
      %3840 = vmatprep.subr.bf16.mxu0 0
      %3841 = vmatpush2.bf16.msra.mxu0 0
      %3842 = vmatprep.subr.bf16.mxu0 0
      %3843 = vmatpush2.bf16.msra.mxu0 0
      %3844 = vmatprep.subr.bf16.mxu0 0
      %3845 = vmatpush2.bf16.msra.mxu0 0
      %3846 = vmatprep.subr.bf16.mxu0 0
      %3847 = vmatpush2.bf16.msra.mxu0 0
      %3848 = vmatprep.subr.bf16.mxu0 0
      %3849 = vmatpush2.bf16.msra.mxu0 0
      %3850 = vmatprep.mubr.bf16.mxu0 0
      %3851 = vmatmul.mubr.bf16.gmra.mxu0 %v3587
      %v3852 = vpop.f32.mrf.mxu0
      %v3853 = vadd.f32 %v3793, %v3852
      %v3854 = vpop.f32.mrf.mxu0
      %v3855 = vpop.f32.mrf.mxu0
      %v3856 = vpop.f32.mrf.mxu0
      %3857 = vdwg.mxu0
      %v3858 = vmax.f32 %v3853, 0.0
      %3859 = vst.msk [vmem:[#allocation6 + $0xb] sm:$0x1] %vm3630, %v3858
      %s3860 = scalar_lea.vmem %s13, 128
      %v3861 = vld [vmem:[%s3860] sm:$0xf]
      %v3862 = vld [vmem:[%s3860 + $0x4] sm:$0xf]
      %v3863 = vld [vmem:[%s3860 + $0x8] sm:$0xf]
      %v3864 = vld [vmem:[%s3860 + $0xc] sm:$0xf]
      %v3865 = vld [vmem:[%s3860 + $0x10] sm:$0xf]
      %v3866 = vld [vmem:[%s3860 + $0x14] sm:$0xf]
      %v3867 = vld [vmem:[%s3860 + $0x18] sm:$0xf]
      %v3868 = vld [vmem:[%s3860 + $0x1c] sm:$0xf]
      %v3869 = vld [vmem:[%s14] sm:$0x1]
      %v3878 = vunpack.c.l.b16 %v3861
      %v3879 = vunpack.c.l.b16 %v3862
      %v3880 = vunpack.c.l.b16 %v3863
      %v3881 = vunpack.c.l.b16 %v3864
      %v3882 = vunpack.c.l.b16 %v3865
      %v3883 = vunpack.c.l.b16 %v3866
      %v3884 = vunpack.c.l.b16 %v3867
      %v3885 = vunpack.c.l.b16 %v3868
      %v3886 = vpack.c.b16 %v3879, %v3878
      %v3887 = vpack.c.b16 %v3881, %v3880
      %v3888 = vpack.c.b16 %v3883, %v3882
      %v3889 = vpack.c.b16 %v3885, %v3884
      %3894 = vmatprep.subr.bf16.mxu0 0
      %3895 = vmatpush1.bf16.msra.mxu0 0
      %3896 = vmatprep.subr.bf16.mxu0 0
      %3897 = vmatpush1.bf16.msra.mxu0 0
      %3898 = vmatprep.subr.bf16.mxu0 0
      %3899 = vmatpush1.bf16.msra.mxu0 0
      %3900 = vmatprep.subr.bf16.mxu0 0
      %3901 = vmatpush1.bf16.msra.mxu0 0
      %3902 = vmatprep.subr.bf16.mxu0 0
      %3903 = vmatpush1.bf16.msra.mxu0 %v3889
      %3904 = vmatprep.subr.bf16.mxu0 0
      %3905 = vmatpush1.bf16.msra.mxu0 %v3888
      %3906 = vmatprep.subr.bf16.mxu0 0
      %3907 = vmatpush1.bf16.msra.mxu0 %v3887
      %3908 = vmatprep.subr.bf16.mxu0 0
      %3909 = vmatpush1.bf16.msra.mxu0 %v3886
      %3910 = vmatprep.subr.bf16.mxu0 0
      %3911 = vmatpush2.bf16.msra.mxu0 0
      %3912 = vmatprep.subr.bf16.mxu0 0
      %3913 = vmatpush2.bf16.msra.mxu0 0
      %3914 = vmatprep.subr.bf16.mxu0 0
      %3915 = vmatpush2.bf16.msra.mxu0 0
      %3916 = vmatprep.subr.bf16.mxu0 0
      %3917 = vmatpush2.bf16.msra.mxu0 0
      %3918 = vmatprep.subr.bf16.mxu0 0
      %3919 = vmatpush2.bf16.msra.mxu0 0
      %3920 = vmatprep.subr.bf16.mxu0 0
      %3921 = vmatpush2.bf16.msra.mxu0 0
      %3922 = vmatprep.subr.bf16.mxu0 0
      %3923 = vmatpush2.bf16.msra.mxu0 0
      %3924 = vmatprep.subr.bf16.mxu0 0
      %3925 = vmatpush2.bf16.msra.mxu0 0
      %3926 = vmatprep.mubr.bf16.mxu0 0
      %3927 = vmatmul.mubr.bf16.gmra.mxu0 %v3587
      %v3928 = vpop.f32.mrf.mxu0
      %v3929 = vadd.f32 %v3869, %v3928
      %v3930 = vpop.f32.mrf.mxu0
      %v3931 = vpop.f32.mrf.mxu0
      %v3932 = vpop.f32.mrf.mxu0
      %3933 = vdwg.mxu0
      %v3934 = vmax.f32 %v3929, 0.0
      %3935 = vst.msk [vmem:[#allocation6 + $0xc] sm:$0x1] %vm3630, %v3934
      %v3936 = vld [vmem:[#allocation6] sm:$0xff]
      %v3937 = vld [vmem:[#allocation6 + $0x8] sm:$0x1f]
      %v3938 = vpack.c.bf16 %v3937, %v3936
      %v3939 = vld [vmem:[%s15] sm:$0xf]
      %v3940 = vld [vmem:[%s15 + $0x4] sm:$0xf]
      %v3941 = vld [vmem:[%s15 + $0x8] sm:$0xf]
      %v3942 = vld [vmem:[%s15 + $0xc] sm:$0xf]
      %v3943 = vld [vmem:[%s15 + $0x10] sm:$0xf]
      %v3944 = vld [vmem:[%s15 + $0x14] sm:$0xf]
      %v3945 = vld [vmem:[%s15 + $0x18] sm:$0xf]
      %v3946 = vld [vmem:[%s15 + $0x1c] sm:$0xf]
      %v3947 = vld [vmem:[%s15 + $0x20] sm:$0xf]
      %v3948 = vld [vmem:[%s15 + $0x24] sm:$0xf]
      %v3949 = vld [vmem:[#allocation6 + $0x1] sm:$0xff]
      %v3950 = vld [vmem:[#allocation6 + $0x9] sm:$0x1f]
      %v3951 = vpack.c.bf16 %v3950, %v3949
      %s3952 = scalar_lea.vmem %s15, 40
      %v3953 = vld [vmem:[%s3952] sm:$0xf]
      %v3954 = vld [vmem:[%s3952 + $0x4] sm:$0xf]
      %v3955 = vld [vmem:[%s3952 + $0x8] sm:$0xf]
      %v3956 = vld [vmem:[%s3952 + $0xc] sm:$0xf]
      %v3957 = vld [vmem:[%s3952 + $0x10] sm:$0xf]
      %v3958 = vld [vmem:[%s3952 + $0x14] sm:$0xf]
      %v3959 = vld [vmem:[%s3952 + $0x18] sm:$0xf]
      %v3960 = vld [vmem:[%s3952 + $0x1c] sm:$0xf]
      %v3961 = vld [vmem:[%s3952 + $0x20] sm:$0xf]
      %v3962 = vld [vmem:[%s3952 + $0x24] sm:$0xf]
      %v3973 = vunpack.c.l.b16 %v3953
      %v3974 = vunpack.c.l.b16 %v3954
      %v3975 = vunpack.c.l.b16 %v3955
      %v3976 = vunpack.c.l.b16 %v3956
      %v3977 = vunpack.c.l.b16 %v3957
      %v3978 = vunpack.c.l.b16 %v3958
      %v3979 = vunpack.c.l.b16 %v3959
      %v3980 = vunpack.c.l.b16 %v3960
      %v3981 = vunpack.c.l.b16 %v3961
      %v3982 = vunpack.c.l.b16 %v3962
      %v3983 = vpack.c.b16 %v3974, %v3973
      %v3984 = vpack.c.b16 %v3976, %v3975
      %v3985 = vpack.c.b16 %v3978, %v3977
      %v3986 = vpack.c.b16 %v3980, %v3979
      %v3987 = vpack.c.b16 %v3982, %v3981
      %v3994 = vsel %vm1395, %v3951, 0
      %3996 = vmatprep.subr.bf16.mxu0 0
      %3997 = vmatpush1.bf16.msra.mxu0 0
      %3998 = vmatprep.subr.bf16.mxu0 0
      %3999 = vmatpush1.bf16.msra.mxu0 0
      %4000 = vmatprep.subr.bf16.mxu0 0
      %4001 = vmatpush1.bf16.msra.mxu0 0
      %4002 = vmatprep.subr.bf16.mxu0 0
      %4003 = vmatpush1.bf16.msra.mxu0 %v3987
      %4004 = vmatprep.subr.bf16.mxu0 0
      %4005 = vmatpush1.bf16.msra.mxu0 %v3986
      %4006 = vmatprep.subr.bf16.mxu0 0
      %4007 = vmatpush1.bf16.msra.mxu0 %v3985
      %4008 = vmatprep.subr.bf16.mxu0 0
      %4009 = vmatpush1.bf16.msra.mxu0 %v3984
      %4010 = vmatprep.subr.bf16.mxu0 0
      %4011 = vmatpush1.bf16.msra.mxu0 %v3983
      %4012 = vmatprep.subr.bf16.mxu0 0
      %4013 = vmatpush2.bf16.msra.mxu0 0
      %4014 = vmatprep.subr.bf16.mxu0 0
      %4015 = vmatpush2.bf16.msra.mxu0 0
      %4016 = vmatprep.subr.bf16.mxu0 0
      %4017 = vmatpush2.bf16.msra.mxu0 0
      %4018 = vmatprep.subr.bf16.mxu0 0
      %4019 = vmatpush2.bf16.msra.mxu0 0
      %4020 = vmatprep.subr.bf16.mxu0 0
      %4021 = vmatpush2.bf16.msra.mxu0 0
      %4022 = vmatprep.subr.bf16.mxu0 0
      %4023 = vmatpush2.bf16.msra.mxu0 0
      %4024 = vmatprep.subr.bf16.mxu0 0
      %4025 = vmatpush2.bf16.msra.mxu0 0
      %4026 = vmatprep.subr.bf16.mxu0 0
      %4027 = vmatpush2.bf16.msra.mxu0 0
      %4028 = vmatprep.mubr.bf16.mxu0 0
      %4029 = vmatmul.mubr.bf16.gmra.mxu0 %v3994
      %v4030 = vpop.f32.mrf.mxu0
      %v4031 = vadd.f32 0.0, %v4030
      %v4032 = vpop.f32.mrf.mxu0
      %v4033 = vpop.f32.mrf.mxu0
      %v4034 = vadd.f32 0.0, %v4033
      %v4035 = vpop.f32.mrf.mxu0
      %4036 = vdwg.mxu0
      %v4047 = vunpack.c.l.b16 %v3939
      %v4048 = vunpack.c.l.b16 %v3940
      %v4049 = vunpack.c.l.b16 %v3941
      %v4050 = vunpack.c.l.b16 %v3942
      %v4051 = vunpack.c.l.b16 %v3943
      %v4052 = vunpack.c.l.b16 %v3944
      %v4053 = vunpack.c.l.b16 %v3945
      %v4054 = vunpack.c.l.b16 %v3946
      %v4055 = vunpack.c.l.b16 %v3947
      %v4056 = vunpack.c.l.b16 %v3948
      %v4057 = vpack.c.b16 %v4048, %v4047
      %v4058 = vpack.c.b16 %v4050, %v4049
      %v4059 = vpack.c.b16 %v4052, %v4051
      %v4060 = vpack.c.b16 %v4054, %v4053
      %v4061 = vpack.c.b16 %v4056, %v4055
      %v4068 = vsel %vm1395, %v3938, 0
      %4070 = vmatprep.subr.bf16.mxu0 0
      %4071 = vmatpush1.bf16.msra.mxu0 0
      %4072 = vmatprep.subr.bf16.mxu0 0
      %4073 = vmatpush1.bf16.msra.mxu0 0
      %4074 = vmatprep.subr.bf16.mxu0 0
      %4075 = vmatpush1.bf16.msra.mxu0 0
      %4076 = vmatprep.subr.bf16.mxu0 0
      %4077 = vmatpush1.bf16.msra.mxu0 %v4061
      %4078 = vmatprep.subr.bf16.mxu0 0
      %4079 = vmatpush1.bf16.msra.mxu0 %v4060
      %4080 = vmatprep.subr.bf16.mxu0 0
      %4081 = vmatpush1.bf16.msra.mxu0 %v4059
      %4082 = vmatprep.subr.bf16.mxu0 0
      %4083 = vmatpush1.bf16.msra.mxu0 %v4058
      %4084 = vmatprep.subr.bf16.mxu0 0
      %4085 = vmatpush1.bf16.msra.mxu0 %v4057
      %4086 = vmatprep.subr.bf16.mxu0 0
      %4087 = vmatpush2.bf16.msra.mxu0 0
      %4088 = vmatprep.subr.bf16.mxu0 0
      %4089 = vmatpush2.bf16.msra.mxu0 0
      %4090 = vmatprep.subr.bf16.mxu0 0
      %4091 = vmatpush2.bf16.msra.mxu0 0
      %4092 = vmatprep.subr.bf16.mxu0 0
      %4093 = vmatpush2.bf16.msra.mxu0 0
      %4094 = vmatprep.subr.bf16.mxu0 0
      %4095 = vmatpush2.bf16.msra.mxu0 0
      %4096 = vmatprep.subr.bf16.mxu0 0
      %4097 = vmatpush2.bf16.msra.mxu0 0
      %4098 = vmatprep.subr.bf16.mxu0 0
      %4099 = vmatpush2.bf16.msra.mxu0 0
      %4100 = vmatprep.subr.bf16.mxu0 0
      %4101 = vmatpush2.bf16.msra.mxu0 0
      %4102 = vmatprep.mubr.bf16.mxu0 0
      %4103 = vmatmul.mubr.bf16.gmra.mxu0 %v4068
      %v4104 = vpop.f32.mrf.mxu0
      %v4105 = vadd.f32 %v4031, %v4104
      %v4106 = vpop.f32.mrf.mxu0
      %v4107 = vpop.f32.mrf.mxu0
      %v4108 = vadd.f32 %v4034, %v4107
      %v4109 = vpop.f32.mrf.mxu0
      %4110 = vdwg.mxu0
      %v4111 = vld [vmem:[#allocation6 + $0x2] sm:$0xff]
      %v4112 = vld [vmem:[#allocation6 + $0xa] sm:$0x1f]
      %v4113 = vpack.c.bf16 %v4112, %v4111
      %s4114 = scalar_lea.vmem %s15, 80
      %v4115 = vld [vmem:[%s4114] sm:$0xf]
      %v4116 = vld [vmem:[%s4114 + $0x4] sm:$0xf]
      %v4117 = vld [vmem:[%s4114 + $0x8] sm:$0xf]
      %v4118 = vld [vmem:[%s4114 + $0xc] sm:$0xf]
      %v4119 = vld [vmem:[%s4114 + $0x10] sm:$0xf]
      %v4120 = vld [vmem:[%s4114 + $0x14] sm:$0xf]
      %v4121 = vld [vmem:[%s4114 + $0x18] sm:$0xf]
      %v4122 = vld [vmem:[%s4114 + $0x1c] sm:$0xf]
      %v4123 = vld [vmem:[%s4114 + $0x20] sm:$0xf]
      %v4124 = vld [vmem:[%s4114 + $0x24] sm:$0xf]
      %v4135 = vunpack.c.l.b16 %v4115
      %v4136 = vunpack.c.l.b16 %v4116
      %v4137 = vunpack.c.l.b16 %v4117
      %v4138 = vunpack.c.l.b16 %v4118
      %v4139 = vunpack.c.l.b16 %v4119
      %v4140 = vunpack.c.l.b16 %v4120
      %v4141 = vunpack.c.l.b16 %v4121
      %v4142 = vunpack.c.l.b16 %v4122
      %v4143 = vunpack.c.l.b16 %v4123
      %v4144 = vunpack.c.l.b16 %v4124
      %v4145 = vpack.c.b16 %v4136, %v4135
      %v4146 = vpack.c.b16 %v4138, %v4137
      %v4147 = vpack.c.b16 %v4140, %v4139
      %v4148 = vpack.c.b16 %v4142, %v4141
      %v4149 = vpack.c.b16 %v4144, %v4143
      %v4156 = vsel %vm1395, %v4113, 0
      %4158 = vmatprep.subr.bf16.mxu0 0
      %4159 = vmatpush1.bf16.msra.mxu0 0
      %4160 = vmatprep.subr.bf16.mxu0 0
      %4161 = vmatpush1.bf16.msra.mxu0 0
      %4162 = vmatprep.subr.bf16.mxu0 0
      %4163 = vmatpush1.bf16.msra.mxu0 0
      %4164 = vmatprep.subr.bf16.mxu0 0
      %4165 = vmatpush1.bf16.msra.mxu0 %v4149
      %4166 = vmatprep.subr.bf16.mxu0 0
      %4167 = vmatpush1.bf16.msra.mxu0 %v4148
      %4168 = vmatprep.subr.bf16.mxu0 0
      %4169 = vmatpush1.bf16.msra.mxu0 %v4147
      %4170 = vmatprep.subr.bf16.mxu0 0
      %4171 = vmatpush1.bf16.msra.mxu0 %v4146
      %4172 = vmatprep.subr.bf16.mxu0 0
      %4173 = vmatpush1.bf16.msra.mxu0 %v4145
      %4174 = vmatprep.subr.bf16.mxu0 0
      %4175 = vmatpush2.bf16.msra.mxu0 0
      %4176 = vmatprep.subr.bf16.mxu0 0
      %4177 = vmatpush2.bf16.msra.mxu0 0
      %4178 = vmatprep.subr.bf16.mxu0 0
      %4179 = vmatpush2.bf16.msra.mxu0 0
      %4180 = vmatprep.subr.bf16.mxu0 0
      %4181 = vmatpush2.bf16.msra.mxu0 0
      %4182 = vmatprep.subr.bf16.mxu0 0
      %4183 = vmatpush2.bf16.msra.mxu0 0
      %4184 = vmatprep.subr.bf16.mxu0 0
      %4185 = vmatpush2.bf16.msra.mxu0 0
      %4186 = vmatprep.subr.bf16.mxu0 0
      %4187 = vmatpush2.bf16.msra.mxu0 0
      %4188 = vmatprep.subr.bf16.mxu0 0
      %4189 = vmatpush2.bf16.msra.mxu0 0
      %4190 = vmatprep.mubr.bf16.mxu0 0
      %4191 = vmatmul.mubr.bf16.gmra.mxu0 %v4156
      %v4192 = vpop.f32.mrf.mxu0
      %v4193 = vadd.f32 0.0, %v4192
      %v4194 = vpop.f32.mrf.mxu0
      %v4195 = vpop.f32.mrf.mxu0
      %v4196 = vadd.f32 0.0, %v4195
      %v4197 = vpop.f32.mrf.mxu0
      %4198 = vdwg.mxu0
      %v4199 = vadd.f32 %v4105, %v4193
      %v4200 = vadd.f32 %v4108, %v4196
      %v4201 = vld [vmem:[#allocation6 + $0x3] sm:$0xff]
      %v4202 = vld [vmem:[#allocation6 + $0xb] sm:$0x1f]
      %v4203 = vpack.c.bf16 %v4202, %v4201
      %s4204 = scalar_lea.vmem %s15, 120
      %v4205 = vld [vmem:[%s4204] sm:$0xf]
      %v4206 = vld [vmem:[%s4204 + $0x4] sm:$0xf]
      %v4207 = vld [vmem:[%s4204 + $0x8] sm:$0xf]
      %v4208 = vld [vmem:[%s4204 + $0xc] sm:$0xf]
      %v4209 = vld [vmem:[%s4204 + $0x10] sm:$0xf]
      %v4210 = vld [vmem:[%s4204 + $0x14] sm:$0xf]
      %v4211 = vld [vmem:[%s4204 + $0x18] sm:$0xf]
      %v4212 = vld [vmem:[%s4204 + $0x1c] sm:$0xf]
      %v4213 = vld [vmem:[%s4204 + $0x20] sm:$0xf]
      %v4214 = vld [vmem:[%s4204 + $0x24] sm:$0xf]
      %v4225 = vunpack.c.l.b16 %v4205
      %v4226 = vunpack.c.l.b16 %v4206
      %v4227 = vunpack.c.l.b16 %v4207
      %v4228 = vunpack.c.l.b16 %v4208
      %v4229 = vunpack.c.l.b16 %v4209
      %v4230 = vunpack.c.l.b16 %v4210
      %v4231 = vunpack.c.l.b16 %v4211
      %v4232 = vunpack.c.l.b16 %v4212
      %v4233 = vunpack.c.l.b16 %v4213
      %v4234 = vunpack.c.l.b16 %v4214
      %v4235 = vpack.c.b16 %v4226, %v4225
      %v4236 = vpack.c.b16 %v4228, %v4227
      %v4237 = vpack.c.b16 %v4230, %v4229
      %v4238 = vpack.c.b16 %v4232, %v4231
      %v4239 = vpack.c.b16 %v4234, %v4233
      %v4246 = vsel %vm1395, %v4203, 0
      %4248 = vmatprep.subr.bf16.mxu0 0
      %4249 = vmatpush1.bf16.msra.mxu0 0
      %4250 = vmatprep.subr.bf16.mxu0 0
      %4251 = vmatpush1.bf16.msra.mxu0 0
      %4252 = vmatprep.subr.bf16.mxu0 0
      %4253 = vmatpush1.bf16.msra.mxu0 0
      %4254 = vmatprep.subr.bf16.mxu0 0
      %4255 = vmatpush1.bf16.msra.mxu0 %v4239
      %4256 = vmatprep.subr.bf16.mxu0 0
      %4257 = vmatpush1.bf16.msra.mxu0 %v4238
      %4258 = vmatprep.subr.bf16.mxu0 0
      %4259 = vmatpush1.bf16.msra.mxu0 %v4237
      %4260 = vmatprep.subr.bf16.mxu0 0
      %4261 = vmatpush1.bf16.msra.mxu0 %v4236
      %4262 = vmatprep.subr.bf16.mxu0 0
      %4263 = vmatpush1.bf16.msra.mxu0 %v4235
      %4264 = vmatprep.subr.bf16.mxu0 0
      %4265 = vmatpush2.bf16.msra.mxu0 0
      %4266 = vmatprep.subr.bf16.mxu0 0
      %4267 = vmatpush2.bf16.msra.mxu0 0
      %4268 = vmatprep.subr.bf16.mxu0 0
      %4269 = vmatpush2.bf16.msra.mxu0 0
      %4270 = vmatprep.subr.bf16.mxu0 0
      %4271 = vmatpush2.bf16.msra.mxu0 0
      %4272 = vmatprep.subr.bf16.mxu0 0
      %4273 = vmatpush2.bf16.msra.mxu0 0
      %4274 = vmatprep.subr.bf16.mxu0 0
      %4275 = vmatpush2.bf16.msra.mxu0 0
      %4276 = vmatprep.subr.bf16.mxu0 0
      %4277 = vmatpush2.bf16.msra.mxu0 0
      %4278 = vmatprep.subr.bf16.mxu0 0
      %4279 = vmatpush2.bf16.msra.mxu0 0
      %4280 = vmatprep.mubr.bf16.mxu0 0
      %4281 = vmatmul.mubr.bf16.gmra.mxu0 %v4246
      %v4282 = vpop.f32.mrf.mxu0
      %v4283 = vadd.f32 0.0, %v4282
      %v4284 = vpop.f32.mrf.mxu0
      %v4285 = vpop.f32.mrf.mxu0
      %v4286 = vadd.f32 0.0, %v4285
      %v4287 = vpop.f32.mrf.mxu0
      %4288 = vdwg.mxu0
      %v4289 = vadd.f32 %v4199, %v4283
      %v4290 = vadd.f32 %v4200, %v4286
      %v4291 = vld [vmem:[#allocation6 + $0x4] sm:$0xff]
      %v4292 = vld [vmem:[#allocation6 + $0xc] sm:$0x1f]
      %v4293 = vpack.c.bf16 %v4292, %v4291
      %s4294 = scalar_lea.vmem %s15, 160
      %v4295 = vld [vmem:[%s4294] sm:$0xf]
      %v4296 = vld [vmem:[%s4294 + $0x4] sm:$0xf]
      %v4297 = vld [vmem:[%s4294 + $0x8] sm:$0xf]
      %v4298 = vld [vmem:[%s4294 + $0xc] sm:$0xf]
      %v4299 = vld [vmem:[%s4294 + $0x10] sm:$0xf]
      %v4300 = vld [vmem:[%s4294 + $0x14] sm:$0xf]
      %v4301 = vld [vmem:[%s4294 + $0x18] sm:$0xf]
      %v4302 = vld [vmem:[%s4294 + $0x1c] sm:$0xf]
      %v4303 = vld [vmem:[%s4294 + $0x20] sm:$0xf]
      %v4304 = vld [vmem:[%s4294 + $0x24] sm:$0xf]
      %v4315 = vunpack.c.l.b16 %v4295
      %v4316 = vunpack.c.l.b16 %v4296
      %v4317 = vunpack.c.l.b16 %v4297
      %v4318 = vunpack.c.l.b16 %v4298
      %v4319 = vunpack.c.l.b16 %v4299
      %v4320 = vunpack.c.l.b16 %v4300
      %v4321 = vunpack.c.l.b16 %v4301
      %v4322 = vunpack.c.l.b16 %v4302
      %v4323 = vunpack.c.l.b16 %v4303
      %v4324 = vunpack.c.l.b16 %v4304
      %v4325 = vpack.c.b16 %v4316, %v4315
      %v4326 = vpack.c.b16 %v4318, %v4317
      %v4327 = vpack.c.b16 %v4320, %v4319
      %v4328 = vpack.c.b16 %v4322, %v4321
      %v4329 = vpack.c.b16 %v4324, %v4323
      %v4336 = vsel %vm1395, %v4293, 0
      %4338 = vmatprep.subr.bf16.mxu0 0
      %4339 = vmatpush1.bf16.msra.mxu0 0
      %4340 = vmatprep.subr.bf16.mxu0 0
      %4341 = vmatpush1.bf16.msra.mxu0 0
      %4342 = vmatprep.subr.bf16.mxu0 0
      %4343 = vmatpush1.bf16.msra.mxu0 0
      %4344 = vmatprep.subr.bf16.mxu0 0
      %4345 = vmatpush1.bf16.msra.mxu0 %v4329
      %4346 = vmatprep.subr.bf16.mxu0 0
      %4347 = vmatpush1.bf16.msra.mxu0 %v4328
      %4348 = vmatprep.subr.bf16.mxu0 0
      %4349 = vmatpush1.bf16.msra.mxu0 %v4327
      %4350 = vmatprep.subr.bf16.mxu0 0
      %4351 = vmatpush1.bf16.msra.mxu0 %v4326
      %4352 = vmatprep.subr.bf16.mxu0 0
      %4353 = vmatpush1.bf16.msra.mxu0 %v4325
      %4354 = vmatprep.subr.bf16.mxu0 0
      %4355 = vmatpush2.bf16.msra.mxu0 0
      %4356 = vmatprep.subr.bf16.mxu0 0
      %4357 = vmatpush2.bf16.msra.mxu0 0
      %4358 = vmatprep.subr.bf16.mxu0 0
      %4359 = vmatpush2.bf16.msra.mxu0 0
      %4360 = vmatprep.subr.bf16.mxu0 0
      %4361 = vmatpush2.bf16.msra.mxu0 0
      %4362 = vmatprep.subr.bf16.mxu0 0
      %4363 = vmatpush2.bf16.msra.mxu0 0
      %4364 = vmatprep.subr.bf16.mxu0 0
      %4365 = vmatpush2.bf16.msra.mxu0 0
      %4366 = vmatprep.subr.bf16.mxu0 0
      %4367 = vmatpush2.bf16.msra.mxu0 0
      %4368 = vmatprep.subr.bf16.mxu0 0
      %4369 = vmatpush2.bf16.msra.mxu0 0
      %4370 = vmatprep.mubr.bf16.mxu0 0
      %4371 = vmatmul.mubr.bf16.gmra.mxu0 %v4336
      %v4372 = vpop.f32.mrf.mxu0
      %v4373 = vadd.f32 0.0, %v4372
      %v4374 = vpop.f32.mrf.mxu0
      %v4375 = vpop.f32.mrf.mxu0
      %v4376 = vadd.f32 0.0, %v4375
      %v4377 = vpop.f32.mrf.mxu0
      %4378 = vdwg.mxu0
      %v4379 = vadd.f32 %v4289, %v4373
      %v4380 = vadd.f32 %v4290, %v4376
      %v4381 = vld [vmem:[#allocation6 + $0x5] sm:$0xff]
      %v4382 = vld [vmem:[#allocation6 + $0xd] sm:$0x1f]
      %v4383 = vpack.c.bf16 %v4382, %v4381
      %s4384 = scalar_lea.vmem %s15, 200
      %v4385 = vld [vmem:[%s4384] sm:$0xf]
      %v4386 = vld [vmem:[%s4384 + $0x4] sm:$0xf]
      %v4387 = vld [vmem:[%s4384 + $0x8] sm:$0xf]
      %v4388 = vld [vmem:[%s4384 + $0xc] sm:$0xf]
      %v4389 = vld [vmem:[%s4384 + $0x10] sm:$0xf]
      %v4390 = vld [vmem:[%s4384 + $0x14] sm:$0xf]
      %v4391 = vld [vmem:[%s4384 + $0x18] sm:$0xf]
      %v4392 = vld [vmem:[%s4384 + $0x1c] sm:$0xf]
      %v4393 = vld [vmem:[%s4384 + $0x20] sm:$0xf]
      %v4394 = vld [vmem:[%s4384 + $0x24] sm:$0xf]
      %v4405 = vunpack.c.l.b16 %v4385
      %v4406 = vunpack.c.l.b16 %v4386
      %v4407 = vunpack.c.l.b16 %v4387
      %v4408 = vunpack.c.l.b16 %v4388
      %v4409 = vunpack.c.l.b16 %v4389
      %v4410 = vunpack.c.l.b16 %v4390
      %v4411 = vunpack.c.l.b16 %v4391
      %v4412 = vunpack.c.l.b16 %v4392
      %v4413 = vunpack.c.l.b16 %v4393
      %v4414 = vunpack.c.l.b16 %v4394
      %v4415 = vpack.c.b16 %v4406, %v4405
      %v4416 = vpack.c.b16 %v4408, %v4407
      %v4417 = vpack.c.b16 %v4410, %v4409
      %v4418 = vpack.c.b16 %v4412, %v4411
      %v4419 = vpack.c.b16 %v4414, %v4413
      %v4426 = vsel %vm1395, %v4383, 0
      %4428 = vmatprep.subr.bf16.mxu0 0
      %4429 = vmatpush1.bf16.msra.mxu0 0
      %4430 = vmatprep.subr.bf16.mxu0 0
      %4431 = vmatpush1.bf16.msra.mxu0 0
      %4432 = vmatprep.subr.bf16.mxu0 0
      %4433 = vmatpush1.bf16.msra.mxu0 0
      %4434 = vmatprep.subr.bf16.mxu0 0
      %4435 = vmatpush1.bf16.msra.mxu0 %v4419
      %4436 = vmatprep.subr.bf16.mxu0 0
      %4437 = vmatpush1.bf16.msra.mxu0 %v4418
      %4438 = vmatprep.subr.bf16.mxu0 0
      %4439 = vmatpush1.bf16.msra.mxu0 %v4417
      %4440 = vmatprep.subr.bf16.mxu0 0
      %4441 = vmatpush1.bf16.msra.mxu0 %v4416
      %4442 = vmatprep.subr.bf16.mxu0 0
      %4443 = vmatpush1.bf16.msra.mxu0 %v4415
      %4444 = vmatprep.subr.bf16.mxu0 0
      %4445 = vmatpush2.bf16.msra.mxu0 0
      %4446 = vmatprep.subr.bf16.mxu0 0
      %4447 = vmatpush2.bf16.msra.mxu0 0
      %4448 = vmatprep.subr.bf16.mxu0 0
      %4449 = vmatpush2.bf16.msra.mxu0 0
      %4450 = vmatprep.subr.bf16.mxu0 0
      %4451 = vmatpush2.bf16.msra.mxu0 0
      %4452 = vmatprep.subr.bf16.mxu0 0
      %4453 = vmatpush2.bf16.msra.mxu0 0
      %4454 = vmatprep.subr.bf16.mxu0 0
      %4455 = vmatpush2.bf16.msra.mxu0 0
      %4456 = vmatprep.subr.bf16.mxu0 0
      %4457 = vmatpush2.bf16.msra.mxu0 0
      %4458 = vmatprep.subr.bf16.mxu0 0
      %4459 = vmatpush2.bf16.msra.mxu0 0
      %4460 = vmatprep.mubr.bf16.mxu0 0
      %4461 = vmatmul.mubr.bf16.gmra.mxu0 %v4426
      %v4462 = vpop.f32.mrf.mxu0
      %v4463 = vadd.f32 0.0, %v4462
      %v4464 = vpop.f32.mrf.mxu0
      %v4465 = vpop.f32.mrf.mxu0
      %v4466 = vadd.f32 0.0, %v4465
      %v4467 = vpop.f32.mrf.mxu0
      %4468 = vdwg.mxu0
      %v4469 = vadd.f32 %v4379, %v4463
      %v4470 = vadd.f32 %v4380, %v4466
      %v4471 = vld [vmem:[#allocation6 + $0x6] sm:$0xff]
      %v4472 = vld [vmem:[#allocation6 + $0xe] sm:$0x1f]
      %v4473 = vpack.c.bf16 %v4472, %v4471
      %s4474 = scalar_lea.vmem %s15, 240
      %v4475 = vld [vmem:[%s4474] sm:$0xf]
      %v4476 = vld [vmem:[%s4474 + $0x4] sm:$0xf]
      %v4477 = vld [vmem:[%s4474 + $0x8] sm:$0xf]
      %v4478 = vld [vmem:[%s4474 + $0xc] sm:$0xf]
      %v4479 = vld [vmem:[%s4474 + $0x10] sm:$0xf]
      %v4480 = vld [vmem:[%s4474 + $0x14] sm:$0xf]
      %v4481 = vld [vmem:[%s4474 + $0x18] sm:$0xf]
      %v4482 = vld [vmem:[%s4474 + $0x1c] sm:$0xf]
      %v4483 = vld [vmem:[%s4474 + $0x20] sm:$0xf]
      %v4484 = vld [vmem:[%s4474 + $0x24] sm:$0xf]
      %v4495 = vunpack.c.l.b16 %v4475
      %v4496 = vunpack.c.l.b16 %v4476
      %v4497 = vunpack.c.l.b16 %v4477
      %v4498 = vunpack.c.l.b16 %v4478
      %v4499 = vunpack.c.l.b16 %v4479
      %v4500 = vunpack.c.l.b16 %v4480
      %v4501 = vunpack.c.l.b16 %v4481
      %v4502 = vunpack.c.l.b16 %v4482
      %v4503 = vunpack.c.l.b16 %v4483
      %v4504 = vunpack.c.l.b16 %v4484
      %v4505 = vpack.c.b16 %v4496, %v4495
      %v4506 = vpack.c.b16 %v4498, %v4497
      %v4507 = vpack.c.b16 %v4500, %v4499
      %v4508 = vpack.c.b16 %v4502, %v4501
      %v4509 = vpack.c.b16 %v4504, %v4503
      %v4516 = vsel %vm1395, %v4473, 0
      %4518 = vmatprep.subr.bf16.mxu0 0
      %4519 = vmatpush1.bf16.msra.mxu0 0
      %4520 = vmatprep.subr.bf16.mxu0 0
      %4521 = vmatpush1.bf16.msra.mxu0 0
      %4522 = vmatprep.subr.bf16.mxu0 0
      %4523 = vmatpush1.bf16.msra.mxu0 0
      %4524 = vmatprep.subr.bf16.mxu0 0
      %4525 = vmatpush1.bf16.msra.mxu0 %v4509
      %4526 = vmatprep.subr.bf16.mxu0 0
      %4527 = vmatpush1.bf16.msra.mxu0 %v4508
      %4528 = vmatprep.subr.bf16.mxu0 0
      %4529 = vmatpush1.bf16.msra.mxu0 %v4507
      %4530 = vmatprep.subr.bf16.mxu0 0
      %4531 = vmatpush1.bf16.msra.mxu0 %v4506
      %4532 = vmatprep.subr.bf16.mxu0 0
      %4533 = vmatpush1.bf16.msra.mxu0 %v4505
      %4534 = vmatprep.subr.bf16.mxu0 0
      %4535 = vmatpush2.bf16.msra.mxu0 0
      %4536 = vmatprep.subr.bf16.mxu0 0
      %4537 = vmatpush2.bf16.msra.mxu0 0
      %4538 = vmatprep.subr.bf16.mxu0 0
      %4539 = vmatpush2.bf16.msra.mxu0 0
      %4540 = vmatprep.subr.bf16.mxu0 0
      %4541 = vmatpush2.bf16.msra.mxu0 0
      %4542 = vmatprep.subr.bf16.mxu0 0
      %4543 = vmatpush2.bf16.msra.mxu0 0
      %4544 = vmatprep.subr.bf16.mxu0 0
      %4545 = vmatpush2.bf16.msra.mxu0 0
      %4546 = vmatprep.subr.bf16.mxu0 0
      %4547 = vmatpush2.bf16.msra.mxu0 0
      %4548 = vmatprep.subr.bf16.mxu0 0
      %4549 = vmatpush2.bf16.msra.mxu0 0
      %4550 = vmatprep.mubr.bf16.mxu0 0
      %4551 = vmatmul.mubr.bf16.gmra.mxu0 %v4516
      %v4552 = vpop.f32.mrf.mxu0
      %v4553 = vadd.f32 0.0, %v4552
      %v4554 = vpop.f32.mrf.mxu0
      %v4555 = vpop.f32.mrf.mxu0
      %v4556 = vadd.f32 0.0, %v4555
      %v4557 = vpop.f32.mrf.mxu0
      %4558 = vdwg.mxu0
      %v4559 = vadd.f32 %v4469, %v4553
      %v4560 = vadd.f32 %v4470, %v4556
      %v4561 = vld [vmem:[#allocation6 + $0x7] sm:$0xff]
      %v4562 = vld [vmem:[#allocation6 + $0xf] sm:$0x1f]
      %v4563 = vpack.c.bf16 %v4562, %v4561
      %s4564 = scalar_lea.vmem %s15, 280
      %v4565 = vld [vmem:[%s4564] sm:$0xf]
      %v4566 = vld [vmem:[%s4564 + $0x4] sm:$0xf]
      %v4567 = vld [vmem:[%s4564 + $0x8] sm:$0xf]
      %v4568 = vld [vmem:[%s4564 + $0xc] sm:$0xf]
      %v4569 = vld [vmem:[%s4564 + $0x10] sm:$0xf]
      %v4570 = vld [vmem:[%s4564 + $0x14] sm:$0xf]
      %v4571 = vld [vmem:[%s4564 + $0x18] sm:$0xf]
      %v4572 = vld [vmem:[%s4564 + $0x1c] sm:$0xf]
      %v4573 = vld [vmem:[%s4564 + $0x20] sm:$0xf]
      %v4574 = vld [vmem:[%s4564 + $0x24] sm:$0xf]
      %v4585 = vunpack.c.l.b16 %v4565
      %v4586 = vunpack.c.l.b16 %v4566
      %v4587 = vunpack.c.l.b16 %v4567
      %v4588 = vunpack.c.l.b16 %v4568
      %v4589 = vunpack.c.l.b16 %v4569
      %v4590 = vunpack.c.l.b16 %v4570
      %v4591 = vunpack.c.l.b16 %v4571
      %v4592 = vunpack.c.l.b16 %v4572
      %v4593 = vunpack.c.l.b16 %v4573
      %v4594 = vunpack.c.l.b16 %v4574
      %v4595 = vpack.c.b16 %v4586, %v4585
      %v4596 = vpack.c.b16 %v4588, %v4587
      %v4597 = vpack.c.b16 %v4590, %v4589
      %v4598 = vpack.c.b16 %v4592, %v4591
      %v4599 = vpack.c.b16 %v4594, %v4593
      %v4606 = vsel %vm1395, %v4563, 0
      %4608 = vmatprep.subr.bf16.mxu0 0
      %4609 = vmatpush1.bf16.msra.mxu0 0
      %4610 = vmatprep.subr.bf16.mxu0 0
      %4611 = vmatpush1.bf16.msra.mxu0 0
      %4612 = vmatprep.subr.bf16.mxu0 0
      %4613 = vmatpush1.bf16.msra.mxu0 0
      %4614 = vmatprep.subr.bf16.mxu0 0
      %4615 = vmatpush1.bf16.msra.mxu0 %v4599
      %4616 = vmatprep.subr.bf16.mxu0 0
      %4617 = vmatpush1.bf16.msra.mxu0 %v4598
      %4618 = vmatprep.subr.bf16.mxu0 0
      %4619 = vmatpush1.bf16.msra.mxu0 %v4597
      %4620 = vmatprep.subr.bf16.mxu0 0
      %4621 = vmatpush1.bf16.msra.mxu0 %v4596
      %4622 = vmatprep.subr.bf16.mxu0 0
      %4623 = vmatpush1.bf16.msra.mxu0 %v4595
      %4624 = vmatprep.subr.bf16.mxu0 0
      %4625 = vmatpush2.bf16.msra.mxu0 0
      %4626 = vmatprep.subr.bf16.mxu0 0
      %4627 = vmatpush2.bf16.msra.mxu0 0
      %4628 = vmatprep.subr.bf16.mxu0 0
      %4629 = vmatpush2.bf16.msra.mxu0 0
      %4630 = vmatprep.subr.bf16.mxu0 0
      %4631 = vmatpush2.bf16.msra.mxu0 0
      %4632 = vmatprep.subr.bf16.mxu0 0
      %4633 = vmatpush2.bf16.msra.mxu0 0
      %4634 = vmatprep.subr.bf16.mxu0 0
      %4635 = vmatpush2.bf16.msra.mxu0 0
      %4636 = vmatprep.subr.bf16.mxu0 0
      %4637 = vmatpush2.bf16.msra.mxu0 0
      %4638 = vmatprep.subr.bf16.mxu0 0
      %4639 = vmatpush2.bf16.msra.mxu0 0
      %4640 = vmatprep.mubr.bf16.mxu0 0
      %4641 = vmatmul.mubr.bf16.gmra.mxu0 %v4606
      %v4642 = vpop.f32.mrf.mxu0
      %v4643 = vadd.f32 0.0, %v4642
      %v4644 = vpop.f32.mrf.mxu0
      %v4645 = vpop.f32.mrf.mxu0
      %v4646 = vadd.f32 0.0, %v4645
      %v4647 = vpop.f32.mrf.mxu0
      %4648 = vdwg.mxu0
      %v4649 = vadd.f32 %v4559, %v4643
      %v4650 = vadd.f32 %v4560, %v4646
      %v4651 = vld [vmem:[#allocation6 + $0x8] sm:$0xff]
      %v4652 = vld [vmem:[#allocation6 + $0x10] sm:$0x1f]
      %v4653 = vpack.c.bf16 %v4652, %v4651
      %s4654 = scalar_lea.vmem %s15, 320
      %v4655 = vld [vmem:[%s4654] sm:$0xf]
      %v4656 = vld [vmem:[%s4654 + $0x4] sm:$0xf]
      %v4657 = vld [vmem:[%s4654 + $0x8] sm:$0xf]
      %v4658 = vld [vmem:[%s4654 + $0xc] sm:$0xf]
      %v4659 = vld [vmem:[%s4654 + $0x10] sm:$0xf]
      %v4660 = vld [vmem:[%s4654 + $0x14] sm:$0xf]
      %v4661 = vld [vmem:[%s4654 + $0x18] sm:$0xf]
      %v4662 = vld [vmem:[%s4654 + $0x1c] sm:$0xf]
      %v4663 = vld [vmem:[%s4654 + $0x20] sm:$0xf]
      %v4664 = vld [vmem:[%s4654 + $0x24] sm:$0xf]
      %v4675 = vunpack.c.l.b16 %v4655
      %v4676 = vunpack.c.l.b16 %v4656
      %v4677 = vunpack.c.l.b16 %v4657
      %v4678 = vunpack.c.l.b16 %v4658
      %v4679 = vunpack.c.l.b16 %v4659
      %v4680 = vunpack.c.l.b16 %v4660
      %v4681 = vunpack.c.l.b16 %v4661
      %v4682 = vunpack.c.l.b16 %v4662
      %v4683 = vunpack.c.l.b16 %v4663
      %v4684 = vunpack.c.l.b16 %v4664
      %v4685 = vpack.c.b16 %v4676, %v4675
      %v4686 = vpack.c.b16 %v4678, %v4677
      %v4687 = vpack.c.b16 %v4680, %v4679
      %v4688 = vpack.c.b16 %v4682, %v4681
      %v4689 = vpack.c.b16 %v4684, %v4683
      %v4696 = vsel %vm1395, %v4653, 0
      %4698 = vmatprep.subr.bf16.mxu0 0
      %4699 = vmatpush1.bf16.msra.mxu0 0
      %4700 = vmatprep.subr.bf16.mxu0 0
      %4701 = vmatpush1.bf16.msra.mxu0 0
      %4702 = vmatprep.subr.bf16.mxu0 0
      %4703 = vmatpush1.bf16.msra.mxu0 0
      %4704 = vmatprep.subr.bf16.mxu0 0
      %4705 = vmatpush1.bf16.msra.mxu0 %v4689
      %4706 = vmatprep.subr.bf16.mxu0 0
      %4707 = vmatpush1.bf16.msra.mxu0 %v4688
      %4708 = vmatprep.subr.bf16.mxu0 0
      %4709 = vmatpush1.bf16.msra.mxu0 %v4687
      %4710 = vmatprep.subr.bf16.mxu0 0
      %4711 = vmatpush1.bf16.msra.mxu0 %v4686
      %4712 = vmatprep.subr.bf16.mxu0 0
      %4713 = vmatpush1.bf16.msra.mxu0 %v4685
      %4714 = vmatprep.subr.bf16.mxu0 0
      %4715 = vmatpush2.bf16.msra.mxu0 0
      %4716 = vmatprep.subr.bf16.mxu0 0
      %4717 = vmatpush2.bf16.msra.mxu0 0
      %4718 = vmatprep.subr.bf16.mxu0 0
      %4719 = vmatpush2.bf16.msra.mxu0 0
      %4720 = vmatprep.subr.bf16.mxu0 0
      %4721 = vmatpush2.bf16.msra.mxu0 0
      %4722 = vmatprep.subr.bf16.mxu0 0
      %4723 = vmatpush2.bf16.msra.mxu0 0
      %4724 = vmatprep.subr.bf16.mxu0 0
      %4725 = vmatpush2.bf16.msra.mxu0 0
      %4726 = vmatprep.subr.bf16.mxu0 0
      %4727 = vmatpush2.bf16.msra.mxu0 0
      %4728 = vmatprep.subr.bf16.mxu0 0
      %4729 = vmatpush2.bf16.msra.mxu0 0
      %4730 = vmatprep.mubr.bf16.mxu0 0
      %4731 = vmatmul.mubr.bf16.gmra.mxu0 %v4696
      %v4732 = vpop.f32.mrf.mxu0
      %v4733 = vadd.f32 0.0, %v4732
      %v4734 = vpop.f32.mrf.mxu0
      %v4735 = vpop.f32.mrf.mxu0
      %v4736 = vadd.f32 0.0, %v4735
      %v4737 = vpop.f32.mrf.mxu0
      %4738 = vdwg.mxu0
      %v4739 = vadd.f32 %v4649, %v4733
      %v4740 = vadd.f32 %v4650, %v4736
      %v4741 = vld [vmem:[%s16] sm:$0x1]
      %v4743 = vlaneseq
      %v4744 = vshrl.u32 %v4743, 7
      %v4745 = vsub.s32 0, %v4744
      %v4746 = vrot.slane %v4741, %v4745
      %v4748 = vadd.f32 %v4739, %v4746
      %v4749 = vadd.f32 %v4740, %v4746
      %v4750 = vmax.f32 %v4748, 0.0
      %v4751 = vmax.f32 %v4749, 0.0
      %vm4752 = vcmask 424960
      %4753 = vst.msk [vmem:[#allocation7] sm:$0xff] %vm4752, 0.0
      %4754 = vst.msk [vmem:[#allocation7 + $0x8] sm:$0xff] %vm4752, 0.0
      %4755 = vst.msk [vmem:[#allocation7 + $0x10] sm:$0xff] %vm4752, 0.0
      %vm4756 = vcmask 419840
      %4757 = vst.msk [vmem:[#allocation7 + $0x18] sm:$0x7] %vm4756, 0.0
      %4758 = vst.msk [vmem:[#allocation7 + $0x7] sm:$0xff] %vm4752, %v4750
      %vm4759 = vcmask 421888
      %4760 = vst.msk [vmem:[#allocation7 + $0xf] sm:$0x1f] %vm4759, %v4751
      %v4761 = vld [vmem:[#allocation7] sm:$0xff]
      %v4762 = vld [vmem:[#allocation7 + $0x8] sm:$0xff]
      %v4763 = vld [vmem:[#allocation7 + $0x10] sm:$0xf]
      %v4764 = vpack.c.bf16 %v4762, %v4761
      %v4765 = vpack.c.bf16 %v4763, %v4763
      %v4766 = vld [vmem:[%s17] sm:$0xf]
      %v4767 = vld [vmem:[%s17 + $0x4] sm:$0xf]
      %v4768 = vld [vmem:[%s17 + $0x8] sm:$0xf]
      %v4769 = vld [vmem:[%s17 + $0xc] sm:$0xf]
      %v4770 = vld [vmem:[%s17 + $0x10] sm:$0xf]
      %v4771 = vld [vmem:[%s17 + $0x14] sm:$0xf]
      %v4772 = vld [vmem:[%s17 + $0x18] sm:$0x3]
      %v4773 = vld [vmem:[#allocation7 + $0x1] sm:$0xff]
      %v4774 = vld [vmem:[#allocation7 + $0x9] sm:$0xff]
      %v4775 = vld [vmem:[#allocation7 + $0x11] sm:$0xf]
      %v4776 = vpack.c.bf16 %v4774, %v4773
      %v4777 = vpack.c.bf16 %v4775, %v4775
      %s4778 = scalar_lea.vmem %s17, 28
      %v4779 = vld [vmem:[%s4778] sm:$0xf]
      %v4780 = vld [vmem:[%s4778 + $0x4] sm:$0xf]
      %v4781 = vld [vmem:[%s4778 + $0x8] sm:$0xf]
      %v4782 = vld [vmem:[%s4778 + $0xc] sm:$0xf]
      %v4783 = vld [vmem:[%s4778 + $0x10] sm:$0xf]
      %v4784 = vld [vmem:[%s4778 + $0x14] sm:$0xf]
      %v4785 = vld [vmem:[%s4778 + $0x18] sm:$0x3]
      %v4793 = vunpack.c.l.b16 %v4779
      %v4794 = vunpack.c.l.b16 %v4780
      %v4795 = vunpack.c.l.b16 %v4781
      %v4796 = vunpack.c.l.b16 %v4782
      %v4797 = vunpack.c.l.b16 %v4783
      %v4798 = vunpack.c.l.b16 %v4784
      %v4799 = vunpack.c.l.b16 %v4785
      %v4800 = vpack.c.b16 %v4794, %v4793
      %v4801 = vpack.c.b16 %v4796, %v4795
      %v4802 = vpack.c.b16 %v4798, %v4797
      %v4803 = vpack.c.b16 %v4799, %v4799
      %v4808 = vsel %vm4752, %v4776, 0
      %v4811 = vsel %vm4752, %v4777, 0
      %vm4813 = vcmask 1041408
      %v4815 = vsel %vm4813, %v4803, 0
      %4817 = vmatprep.subr.bf16.mxu0 0
      %4818 = vmatpush1.bf16.msra.mxu0 0
      %4819 = vmatprep.subr.bf16.mxu0 0
      %4820 = vmatpush1.bf16.msra.mxu0 0
      %4821 = vmatprep.subr.bf16.mxu0 0
      %4822 = vmatpush1.bf16.msra.mxu0 0
      %4823 = vmatprep.subr.bf16.mxu0 0
      %4824 = vmatpush1.bf16.msra.mxu0 0
      %4825 = vmatprep.subr.bf16.mxu0 0
      %4826 = vmatpush1.bf16.msra.mxu0 %v4815
      %4827 = vmatprep.subr.bf16.mxu0 0
      %4828 = vmatpush1.bf16.msra.mxu0 %v4802
      %4829 = vmatprep.subr.bf16.mxu0 0
      %4830 = vmatpush1.bf16.msra.mxu0 %v4801
      %4831 = vmatprep.subr.bf16.mxu0 0
      %4832 = vmatpush1.bf16.msra.mxu0 %v4800
      %4833 = vmatprep.subr.bf16.mxu0 0
      %4834 = vmatpush2.bf16.msra.mxu0 0
      %4835 = vmatprep.subr.bf16.mxu0 0
      %4836 = vmatpush2.bf16.msra.mxu0 0
      %4837 = vmatprep.subr.bf16.mxu0 0
      %4838 = vmatpush2.bf16.msra.mxu0 0
      %4839 = vmatprep.subr.bf16.mxu0 0
      %4840 = vmatpush2.bf16.msra.mxu0 0
      %4841 = vmatprep.subr.bf16.mxu0 0
      %4842 = vmatpush2.bf16.msra.mxu0 0
      %4843 = vmatprep.subr.bf16.mxu0 0
      %4844 = vmatpush2.bf16.msra.mxu0 0
      %4845 = vmatprep.subr.bf16.mxu0 0
      %4846 = vmatpush2.bf16.msra.mxu0 0
      %4847 = vmatprep.subr.bf16.mxu0 0
      %4848 = vmatpush2.bf16.msra.mxu0 0
      %4849 = vmatprep.mubr.bf16.mxu0 0
      %4850 = vmatmul.mubr.bf16.gmra.mxu0 %v4808
      %v4851 = vpop.f32.mrf.mxu0
      %v4852 = vadd.f32 0.0, %v4851
      %v4853 = vpop.f32.mrf.mxu0
      %v4854 = vpop.f32.mrf.mxu0
      %v4855 = vadd.f32 0.0, %v4854
      %v4856 = vpop.f32.mrf.mxu0
      %4857 = vmatprep.mubr.bf16.mxu0 0
      %4858 = vmatmul.mubr.bf16.gmra.mxu0 %v4811
      %v4859 = vpop.f32.mrf.mxu0
      %v4860 = vadd.f32 0.0, %v4859
      %v4861 = vpop.f32.mrf.mxu0
      %v4862 = vpop.f32.mrf.mxu0
      %v4863 = vpop.f32.mrf.mxu0
      %4864 = vdwg.mxu0
      %v4872 = vunpack.c.l.b16 %v4766
      %v4873 = vunpack.c.l.b16 %v4767
      %v4874 = vunpack.c.l.b16 %v4768
      %v4875 = vunpack.c.l.b16 %v4769
      %v4876 = vunpack.c.l.b16 %v4770
      %v4877 = vunpack.c.l.b16 %v4771
      %v4878 = vunpack.c.l.b16 %v4772
      %v4879 = vpack.c.b16 %v4873, %v4872
      %v4880 = vpack.c.b16 %v4875, %v4874
      %v4881 = vpack.c.b16 %v4877, %v4876
      %v4882 = vpack.c.b16 %v4878, %v4878
      %v4887 = vsel %vm4752, %v4764, 0
      %v4890 = vsel %vm4752, %v4765, 0
      %v4893 = vsel %vm4813, %v4882, 0
      %4895 = vmatprep.subr.bf16.mxu0 0
      %4896 = vmatpush1.bf16.msra.mxu0 0
      %4897 = vmatprep.subr.bf16.mxu0 0
      %4898 = vmatpush1.bf16.msra.mxu0 0
      %4899 = vmatprep.subr.bf16.mxu0 0
      %4900 = vmatpush1.bf16.msra.mxu0 0
      %4901 = vmatprep.subr.bf16.mxu0 0
      %4902 = vmatpush1.bf16.msra.mxu0 0
      %4903 = vmatprep.subr.bf16.mxu0 0
      %4904 = vmatpush1.bf16.msra.mxu0 %v4893
      %4905 = vmatprep.subr.bf16.mxu0 0
      %4906 = vmatpush1.bf16.msra.mxu0 %v4881
      %4907 = vmatprep.subr.bf16.mxu0 0
      %4908 = vmatpush1.bf16.msra.mxu0 %v4880
      %4909 = vmatprep.subr.bf16.mxu0 0
      %4910 = vmatpush1.bf16.msra.mxu0 %v4879
      %4911 = vmatprep.subr.bf16.mxu0 0
      %4912 = vmatpush2.bf16.msra.mxu0 0
      %4913 = vmatprep.subr.bf16.mxu0 0
      %4914 = vmatpush2.bf16.msra.mxu0 0
      %4915 = vmatprep.subr.bf16.mxu0 0
      %4916 = vmatpush2.bf16.msra.mxu0 0
      %4917 = vmatprep.subr.bf16.mxu0 0
      %4918 = vmatpush2.bf16.msra.mxu0 0
      %4919 = vmatprep.subr.bf16.mxu0 0
      %4920 = vmatpush2.bf16.msra.mxu0 0
      %4921 = vmatprep.subr.bf16.mxu0 0
      %4922 = vmatpush2.bf16.msra.mxu0 0
      %4923 = vmatprep.subr.bf16.mxu0 0
      %4924 = vmatpush2.bf16.msra.mxu0 0
      %4925 = vmatprep.subr.bf16.mxu0 0
      %4926 = vmatpush2.bf16.msra.mxu0 0
      %4927 = vmatprep.mubr.bf16.mxu0 0
      %4928 = vmatmul.mubr.bf16.gmra.mxu0 %v4887
      %v4929 = vpop.f32.mrf.mxu0
      %v4930 = vadd.f32 %v4852, %v4929
      %v4931 = vpop.f32.mrf.mxu0
      %v4932 = vpop.f32.mrf.mxu0
      %v4933 = vadd.f32 %v4855, %v4932
      %v4934 = vpop.f32.mrf.mxu0
      %4935 = vmatprep.mubr.bf16.mxu0 0
      %4936 = vmatmul.mubr.bf16.gmra.mxu0 %v4890
      %v4937 = vpop.f32.mrf.mxu0
      %v4938 = vadd.f32 %v4860, %v4937
      %v4939 = vpop.f32.mrf.mxu0
      %v4940 = vpop.f32.mrf.mxu0
      %v4941 = vpop.f32.mrf.mxu0
      %4942 = vdwg.mxu0
      %v4943 = vld [vmem:[#allocation7 + $0x2] sm:$0xff]
      %v4944 = vld [vmem:[#allocation7 + $0xa] sm:$0xff]
      %v4945 = vld [vmem:[#allocation7 + $0x12] sm:$0xf]
      %v4946 = vpack.c.bf16 %v4944, %v4943
      %v4947 = vpack.c.bf16 %v4945, %v4945
      %s4948 = scalar_lea.vmem %s17, 56
      %v4949 = vld [vmem:[%s4948] sm:$0xf]
      %v4950 = vld [vmem:[%s4948 + $0x4] sm:$0xf]
      %v4951 = vld [vmem:[%s4948 + $0x8] sm:$0xf]
      %v4952 = vld [vmem:[%s4948 + $0xc] sm:$0xf]
      %v4953 = vld [vmem:[%s4948 + $0x10] sm:$0xf]
      %v4954 = vld [vmem:[%s4948 + $0x14] sm:$0xf]
      %v4955 = vld [vmem:[%s4948 + $0x18] sm:$0x3]
      %v4963 = vunpack.c.l.b16 %v4949
      %v4964 = vunpack.c.l.b16 %v4950
      %v4965 = vunpack.c.l.b16 %v4951
      %v4966 = vunpack.c.l.b16 %v4952
      %v4967 = vunpack.c.l.b16 %v4953
      %v4968 = vunpack.c.l.b16 %v4954
      %v4969 = vunpack.c.l.b16 %v4955
      %v4970 = vpack.c.b16 %v4964, %v4963
      %v4971 = vpack.c.b16 %v4966, %v4965
      %v4972 = vpack.c.b16 %v4968, %v4967
      %v4973 = vpack.c.b16 %v4969, %v4969
      %v4978 = vsel %vm4752, %v4946, 0
      %v4981 = vsel %vm4752, %v4947, 0
      %v4984 = vsel %vm4813, %v4973, 0
      %4986 = vmatprep.subr.bf16.mxu0 0
      %4987 = vmatpush1.bf16.msra.mxu0 0
      %4988 = vmatprep.subr.bf16.mxu0 0
      %4989 = vmatpush1.bf16.msra.mxu0 0
      %4990 = vmatprep.subr.bf16.mxu0 0
      %4991 = vmatpush1.bf16.msra.mxu0 0
      %4992 = vmatprep.subr.bf16.mxu0 0
      %4993 = vmatpush1.bf16.msra.mxu0 0
      %4994 = vmatprep.subr.bf16.mxu0 0
      %4995 = vmatpush1.bf16.msra.mxu0 %v4984
      %4996 = vmatprep.subr.bf16.mxu0 0
      %4997 = vmatpush1.bf16.msra.mxu0 %v4972
      %4998 = vmatprep.subr.bf16.mxu0 0
      %4999 = vmatpush1.bf16.msra.mxu0 %v4971
      %5000 = vmatprep.subr.bf16.mxu0 0
      %5001 = vmatpush1.bf16.msra.mxu0 %v4970
      %5002 = vmatprep.subr.bf16.mxu0 0
      %5003 = vmatpush2.bf16.msra.mxu0 0
      %5004 = vmatprep.subr.bf16.mxu0 0
      %5005 = vmatpush2.bf16.msra.mxu0 0
      %5006 = vmatprep.subr.bf16.mxu0 0
      %5007 = vmatpush2.bf16.msra.mxu0 0
      %5008 = vmatprep.subr.bf16.mxu0 0
      %5009 = vmatpush2.bf16.msra.mxu0 0
      %5010 = vmatprep.subr.bf16.mxu0 0
      %5011 = vmatpush2.bf16.msra.mxu0 0
      %5012 = vmatprep.subr.bf16.mxu0 0
      %5013 = vmatpush2.bf16.msra.mxu0 0
      %5014 = vmatprep.subr.bf16.mxu0 0
      %5015 = vmatpush2.bf16.msra.mxu0 0
      %5016 = vmatprep.subr.bf16.mxu0 0
      %5017 = vmatpush2.bf16.msra.mxu0 0
      %5018 = vmatprep.mubr.bf16.mxu0 0
      %5019 = vmatmul.mubr.bf16.gmra.mxu0 %v4978
      %v5020 = vpop.f32.mrf.mxu0
      %v5021 = vadd.f32 0.0, %v5020
      %v5022 = vpop.f32.mrf.mxu0
      %v5023 = vpop.f32.mrf.mxu0
      %v5024 = vadd.f32 0.0, %v5023
      %v5025 = vpop.f32.mrf.mxu0
      %5026 = vmatprep.mubr.bf16.mxu0 0
      %5027 = vmatmul.mubr.bf16.gmra.mxu0 %v4981
      %v5028 = vpop.f32.mrf.mxu0
      %v5029 = vadd.f32 0.0, %v5028
      %v5030 = vpop.f32.mrf.mxu0
      %v5031 = vpop.f32.mrf.mxu0
      %v5032 = vpop.f32.mrf.mxu0
      %5033 = vdwg.mxu0
      %v5034 = vadd.f32 %v4930, %v5021
      %v5035 = vadd.f32 %v4933, %v5024
      %v5036 = vadd.f32 %v4938, %v5029
      %v5037 = vld [vmem:[#allocation7 + $0x3] sm:$0xff]
      %v5038 = vld [vmem:[#allocation7 + $0xb] sm:$0xff]
      %v5039 = vld [vmem:[#allocation7 + $0x13] sm:$0xf]
      %v5040 = vpack.c.bf16 %v5038, %v5037
      %v5041 = vpack.c.bf16 %v5039, %v5039
      %s5042 = scalar_lea.vmem %s17, 84
      %v5043 = vld [vmem:[%s5042] sm:$0xf]
      %v5044 = vld [vmem:[%s5042 + $0x4] sm:$0xf]
      %v5045 = vld [vmem:[%s5042 + $0x8] sm:$0xf]
      %v5046 = vld [vmem:[%s5042 + $0xc] sm:$0xf]
      %v5047 = vld [vmem:[%s5042 + $0x10] sm:$0xf]
      %v5048 = vld [vmem:[%s5042 + $0x14] sm:$0xf]
      %v5049 = vld [vmem:[%s5042 + $0x18] sm:$0x3]
      %v5057 = vunpack.c.l.b16 %v5043
      %v5058 = vunpack.c.l.b16 %v5044
      %v5059 = vunpack.c.l.b16 %v5045
      %v5060 = vunpack.c.l.b16 %v5046
      %v5061 = vunpack.c.l.b16 %v5047
      %v5062 = vunpack.c.l.b16 %v5048
      %v5063 = vunpack.c.l.b16 %v5049
      %v5064 = vpack.c.b16 %v5058, %v5057
      %v5065 = vpack.c.b16 %v5060, %v5059
      %v5066 = vpack.c.b16 %v5062, %v5061
      %v5067 = vpack.c.b16 %v5063, %v5063
      %v5072 = vsel %vm4752, %v5040, 0
      %v5075 = vsel %vm4752, %v5041, 0
      %v5078 = vsel %vm4813, %v5067, 0
      %5080 = vmatprep.subr.bf16.mxu0 0
      %5081 = vmatpush1.bf16.msra.mxu0 0
      %5082 = vmatprep.subr.bf16.mxu0 0
      %5083 = vmatpush1.bf16.msra.mxu0 0
      %5084 = vmatprep.subr.bf16.mxu0 0
      %5085 = vmatpush1.bf16.msra.mxu0 0
      %5086 = vmatprep.subr.bf16.mxu0 0
      %5087 = vmatpush1.bf16.msra.mxu0 0
      %5088 = vmatprep.subr.bf16.mxu0 0
      %5089 = vmatpush1.bf16.msra.mxu0 %v5078
      %5090 = vmatprep.subr.bf16.mxu0 0
      %5091 = vmatpush1.bf16.msra.mxu0 %v5066
      %5092 = vmatprep.subr.bf16.mxu0 0
      %5093 = vmatpush1.bf16.msra.mxu0 %v5065
      %5094 = vmatprep.subr.bf16.mxu0 0
      %5095 = vmatpush1.bf16.msra.mxu0 %v5064
      %5096 = vmatprep.subr.bf16.mxu0 0
      %5097 = vmatpush2.bf16.msra.mxu0 0
      %5098 = vmatprep.subr.bf16.mxu0 0
      %5099 = vmatpush2.bf16.msra.mxu0 0
      %5100 = vmatprep.subr.bf16.mxu0 0
      %5101 = vmatpush2.bf16.msra.mxu0 0
      %5102 = vmatprep.subr.bf16.mxu0 0
      %5103 = vmatpush2.bf16.msra.mxu0 0
      %5104 = vmatprep.subr.bf16.mxu0 0
      %5105 = vmatpush2.bf16.msra.mxu0 0
      %5106 = vmatprep.subr.bf16.mxu0 0
      %5107 = vmatpush2.bf16.msra.mxu0 0
      %5108 = vmatprep.subr.bf16.mxu0 0
      %5109 = vmatpush2.bf16.msra.mxu0 0
      %5110 = vmatprep.subr.bf16.mxu0 0
      %5111 = vmatpush2.bf16.msra.mxu0 0
      %5112 = vmatprep.mubr.bf16.mxu0 0
      %5113 = vmatmul.mubr.bf16.gmra.mxu0 %v5072
      %v5114 = vpop.f32.mrf.mxu0
      %v5115 = vadd.f32 0.0, %v5114
      %v5116 = vpop.f32.mrf.mxu0
      %v5117 = vpop.f32.mrf.mxu0
      %v5118 = vadd.f32 0.0, %v5117
      %v5119 = vpop.f32.mrf.mxu0
      %5120 = vmatprep.mubr.bf16.mxu0 0
      %5121 = vmatmul.mubr.bf16.gmra.mxu0 %v5075
      %v5122 = vpop.f32.mrf.mxu0
      %v5123 = vadd.f32 0.0, %v5122
      %v5124 = vpop.f32.mrf.mxu0
      %v5125 = vpop.f32.mrf.mxu0
      %v5126 = vpop.f32.mrf.mxu0
      %5127 = vdwg.mxu0
      %v5128 = vadd.f32 %v5034, %v5115
      %v5129 = vadd.f32 %v5035, %v5118
      %v5130 = vadd.f32 %v5036, %v5123
      %v5131 = vld [vmem:[#allocation7 + $0x4] sm:$0xff]
      %v5132 = vld [vmem:[#allocation7 + $0xc] sm:$0xff]
      %v5133 = vld [vmem:[#allocation7 + $0x14] sm:$0xf]
      %v5134 = vpack.c.bf16 %v5132, %v5131
      %v5135 = vpack.c.bf16 %v5133, %v5133
      %s5136 = scalar_lea.vmem %s17, 112
      %v5137 = vld [vmem:[%s5136] sm:$0xf]
      %v5138 = vld [vmem:[%s5136 + $0x4] sm:$0xf]
      %v5139 = vld [vmem:[%s5136 + $0x8] sm:$0xf]
      %v5140 = vld [vmem:[%s5136 + $0xc] sm:$0xf]
      %v5141 = vld [vmem:[%s5136 + $0x10] sm:$0xf]
      %v5142 = vld [vmem:[%s5136 + $0x14] sm:$0xf]
      %v5143 = vld [vmem:[%s5136 + $0x18] sm:$0x3]
      %v5151 = vunpack.c.l.b16 %v5137
      %v5152 = vunpack.c.l.b16 %v5138
      %v5153 = vunpack.c.l.b16 %v5139
      %v5154 = vunpack.c.l.b16 %v5140
      %v5155 = vunpack.c.l.b16 %v5141
      %v5156 = vunpack.c.l.b16 %v5142
      %v5157 = vunpack.c.l.b16 %v5143
      %v5158 = vpack.c.b16 %v5152, %v5151
      %v5159 = vpack.c.b16 %v5154, %v5153
      %v5160 = vpack.c.b16 %v5156, %v5155
      %v5161 = vpack.c.b16 %v5157, %v5157
      %v5166 = vsel %vm4752, %v5134, 0
      %v5169 = vsel %vm4752, %v5135, 0
      %v5172 = vsel %vm4813, %v5161, 0
      %5174 = vmatprep.subr.bf16.mxu0 0
      %5175 = vmatpush1.bf16.msra.mxu0 0
      %5176 = vmatprep.subr.bf16.mxu0 0
      %5177 = vmatpush1.bf16.msra.mxu0 0
      %5178 = vmatprep.subr.bf16.mxu0 0
      %5179 = vmatpush1.bf16.msra.mxu0 0
      %5180 = vmatprep.subr.bf16.mxu0 0
      %5181 = vmatpush1.bf16.msra.mxu0 0
      %5182 = vmatprep.subr.bf16.mxu0 0
      %5183 = vmatpush1.bf16.msra.mxu0 %v5172
      %5184 = vmatprep.subr.bf16.mxu0 0
      %5185 = vmatpush1.bf16.msra.mxu0 %v5160
      %5186 = vmatprep.subr.bf16.mxu0 0
      %5187 = vmatpush1.bf16.msra.mxu0 %v5159
      %5188 = vmatprep.subr.bf16.mxu0 0
      %5189 = vmatpush1.bf16.msra.mxu0 %v5158
      %5190 = vmatprep.subr.bf16.mxu0 0
      %5191 = vmatpush2.bf16.msra.mxu0 0
      %5192 = vmatprep.subr.bf16.mxu0 0
      %5193 = vmatpush2.bf16.msra.mxu0 0
      %5194 = vmatprep.subr.bf16.mxu0 0
      %5195 = vmatpush2.bf16.msra.mxu0 0
      %5196 = vmatprep.subr.bf16.mxu0 0
      %5197 = vmatpush2.bf16.msra.mxu0 0
      %5198 = vmatprep.subr.bf16.mxu0 0
      %5199 = vmatpush2.bf16.msra.mxu0 0
      %5200 = vmatprep.subr.bf16.mxu0 0
      %5201 = vmatpush2.bf16.msra.mxu0 0
      %5202 = vmatprep.subr.bf16.mxu0 0
      %5203 = vmatpush2.bf16.msra.mxu0 0
      %5204 = vmatprep.subr.bf16.mxu0 0
      %5205 = vmatpush2.bf16.msra.mxu0 0
      %5206 = vmatprep.mubr.bf16.mxu0 0
      %5207 = vmatmul.mubr.bf16.gmra.mxu0 %v5166
      %v5208 = vpop.f32.mrf.mxu0
      %v5209 = vadd.f32 0.0, %v5208
      %v5210 = vpop.f32.mrf.mxu0
      %v5211 = vpop.f32.mrf.mxu0
      %v5212 = vadd.f32 0.0, %v5211
      %v5213 = vpop.f32.mrf.mxu0
      %5214 = vmatprep.mubr.bf16.mxu0 0
      %5215 = vmatmul.mubr.bf16.gmra.mxu0 %v5169
      %v5216 = vpop.f32.mrf.mxu0
      %v5217 = vadd.f32 0.0, %v5216
      %v5218 = vpop.f32.mrf.mxu0
      %v5219 = vpop.f32.mrf.mxu0
      %v5220 = vpop.f32.mrf.mxu0
      %5221 = vdwg.mxu0
      %v5222 = vadd.f32 %v5128, %v5209
      %v5223 = vadd.f32 %v5129, %v5212
      %v5224 = vadd.f32 %v5130, %v5217
      %v5225 = vld [vmem:[#allocation7 + $0x5] sm:$0xff]
      %v5226 = vld [vmem:[#allocation7 + $0xd] sm:$0xff]
      %v5227 = vld [vmem:[#allocation7 + $0x15] sm:$0xf]
      %v5228 = vpack.c.bf16 %v5226, %v5225
      %v5229 = vpack.c.bf16 %v5227, %v5227
      %s5230 = scalar_lea.vmem %s17, 140
      %v5231 = vld [vmem:[%s5230] sm:$0xf]
      %v5232 = vld [vmem:[%s5230 + $0x4] sm:$0xf]
      %v5233 = vld [vmem:[%s5230 + $0x8] sm:$0xf]
      %v5234 = vld [vmem:[%s5230 + $0xc] sm:$0xf]
      %v5235 = vld [vmem:[%s5230 + $0x10] sm:$0xf]
      %v5236 = vld [vmem:[%s5230 + $0x14] sm:$0xf]
      %v5237 = vld [vmem:[%s5230 + $0x18] sm:$0x3]
      %v5245 = vunpack.c.l.b16 %v5231
      %v5246 = vunpack.c.l.b16 %v5232
      %v5247 = vunpack.c.l.b16 %v5233
      %v5248 = vunpack.c.l.b16 %v5234
      %v5249 = vunpack.c.l.b16 %v5235
      %v5250 = vunpack.c.l.b16 %v5236
      %v5251 = vunpack.c.l.b16 %v5237
      %v5252 = vpack.c.b16 %v5246, %v5245
      %v5253 = vpack.c.b16 %v5248, %v5247
      %v5254 = vpack.c.b16 %v5250, %v5249
      %v5255 = vpack.c.b16 %v5251, %v5251
      %v5260 = vsel %vm4752, %v5228, 0
      %v5263 = vsel %vm4752, %v5229, 0
      %v5266 = vsel %vm4813, %v5255, 0
      %5268 = vmatprep.subr.bf16.mxu0 0
      %5269 = vmatpush1.bf16.msra.mxu0 0
      %5270 = vmatprep.subr.bf16.mxu0 0
      %5271 = vmatpush1.bf16.msra.mxu0 0
      %5272 = vmatprep.subr.bf16.mxu0 0
      %5273 = vmatpush1.bf16.msra.mxu0 0
      %5274 = vmatprep.subr.bf16.mxu0 0
      %5275 = vmatpush1.bf16.msra.mxu0 0
      %5276 = vmatprep.subr.bf16.mxu0 0
      %5277 = vmatpush1.bf16.msra.mxu0 %v5266
      %5278 = vmatprep.subr.bf16.mxu0 0
      %5279 = vmatpush1.bf16.msra.mxu0 %v5254
      %5280 = vmatprep.subr.bf16.mxu0 0
      %5281 = vmatpush1.bf16.msra.mxu0 %v5253
      %5282 = vmatprep.subr.bf16.mxu0 0
      %5283 = vmatpush1.bf16.msra.mxu0 %v5252
      %5284 = vmatprep.subr.bf16.mxu0 0
      %5285 = vmatpush2.bf16.msra.mxu0 0
      %5286 = vmatprep.subr.bf16.mxu0 0
      %5287 = vmatpush2.bf16.msra.mxu0 0
      %5288 = vmatprep.subr.bf16.mxu0 0
      %5289 = vmatpush2.bf16.msra.mxu0 0
      %5290 = vmatprep.subr.bf16.mxu0 0
      %5291 = vmatpush2.bf16.msra.mxu0 0
      %5292 = vmatprep.subr.bf16.mxu0 0
      %5293 = vmatpush2.bf16.msra.mxu0 0
      %5294 = vmatprep.subr.bf16.mxu0 0
      %5295 = vmatpush2.bf16.msra.mxu0 0
      %5296 = vmatprep.subr.bf16.mxu0 0
      %5297 = vmatpush2.bf16.msra.mxu0 0
      %5298 = vmatprep.subr.bf16.mxu0 0
      %5299 = vmatpush2.bf16.msra.mxu0 0
      %5300 = vmatprep.mubr.bf16.mxu0 0
      %5301 = vmatmul.mubr.bf16.gmra.mxu0 %v5260
      %v5302 = vpop.f32.mrf.mxu0
      %v5303 = vadd.f32 0.0, %v5302
      %v5304 = vpop.f32.mrf.mxu0
      %v5305 = vpop.f32.mrf.mxu0
      %v5306 = vadd.f32 0.0, %v5305
      %v5307 = vpop.f32.mrf.mxu0
      %5308 = vmatprep.mubr.bf16.mxu0 0
      %5309 = vmatmul.mubr.bf16.gmra.mxu0 %v5263
      %v5310 = vpop.f32.mrf.mxu0
      %v5311 = vadd.f32 0.0, %v5310
      %v5312 = vpop.f32.mrf.mxu0
      %v5313 = vpop.f32.mrf.mxu0
      %v5314 = vpop.f32.mrf.mxu0
      %5315 = vdwg.mxu0
      %v5316 = vadd.f32 %v5222, %v5303
      %v5317 = vadd.f32 %v5223, %v5306
      %v5318 = vadd.f32 %v5224, %v5311
      %v5319 = vld [vmem:[#allocation7 + $0x6] sm:$0xff]
      %v5320 = vld [vmem:[#allocation7 + $0xe] sm:$0xff]
      %v5321 = vld [vmem:[#allocation7 + $0x16] sm:$0xf]
      %v5322 = vpack.c.bf16 %v5320, %v5319
      %v5323 = vpack.c.bf16 %v5321, %v5321
      %s5324 = scalar_lea.vmem %s17, 168
      %v5325 = vld [vmem:[%s5324] sm:$0xf]
      %v5326 = vld [vmem:[%s5324 + $0x4] sm:$0xf]
      %v5327 = vld [vmem:[%s5324 + $0x8] sm:$0xf]
      %v5328 = vld [vmem:[%s5324 + $0xc] sm:$0xf]
      %v5329 = vld [vmem:[%s5324 + $0x10] sm:$0xf]
      %v5330 = vld [vmem:[%s5324 + $0x14] sm:$0xf]
      %v5331 = vld [vmem:[%s5324 + $0x18] sm:$0x3]
      %v5339 = vunpack.c.l.b16 %v5325
      %v5340 = vunpack.c.l.b16 %v5326
      %v5341 = vunpack.c.l.b16 %v5327
      %v5342 = vunpack.c.l.b16 %v5328
      %v5343 = vunpack.c.l.b16 %v5329
      %v5344 = vunpack.c.l.b16 %v5330
      %v5345 = vunpack.c.l.b16 %v5331
      %v5346 = vpack.c.b16 %v5340, %v5339
      %v5347 = vpack.c.b16 %v5342, %v5341
      %v5348 = vpack.c.b16 %v5344, %v5343
      %v5349 = vpack.c.b16 %v5345, %v5345
      %v5354 = vsel %vm4752, %v5322, 0
      %v5357 = vsel %vm4752, %v5323, 0
      %v5360 = vsel %vm4813, %v5349, 0
      %5362 = vmatprep.subr.bf16.mxu0 0
      %5363 = vmatpush1.bf16.msra.mxu0 0
      %5364 = vmatprep.subr.bf16.mxu0 0
      %5365 = vmatpush1.bf16.msra.mxu0 0
      %5366 = vmatprep.subr.bf16.mxu0 0
      %5367 = vmatpush1.bf16.msra.mxu0 0
      %5368 = vmatprep.subr.bf16.mxu0 0
      %5369 = vmatpush1.bf16.msra.mxu0 0
      %5370 = vmatprep.subr.bf16.mxu0 0
      %5371 = vmatpush1.bf16.msra.mxu0 %v5360
      %5372 = vmatprep.subr.bf16.mxu0 0
      %5373 = vmatpush1.bf16.msra.mxu0 %v5348
      %5374 = vmatprep.subr.bf16.mxu0 0
      %5375 = vmatpush1.bf16.msra.mxu0 %v5347
      %5376 = vmatprep.subr.bf16.mxu0 0
      %5377 = vmatpush1.bf16.msra.mxu0 %v5346
      %5378 = vmatprep.subr.bf16.mxu0 0
      %5379 = vmatpush2.bf16.msra.mxu0 0
      %5380 = vmatprep.subr.bf16.mxu0 0
      %5381 = vmatpush2.bf16.msra.mxu0 0
      %5382 = vmatprep.subr.bf16.mxu0 0
      %5383 = vmatpush2.bf16.msra.mxu0 0
      %5384 = vmatprep.subr.bf16.mxu0 0
      %5385 = vmatpush2.bf16.msra.mxu0 0
      %5386 = vmatprep.subr.bf16.mxu0 0
      %5387 = vmatpush2.bf16.msra.mxu0 0
      %5388 = vmatprep.subr.bf16.mxu0 0
      %5389 = vmatpush2.bf16.msra.mxu0 0
      %5390 = vmatprep.subr.bf16.mxu0 0
      %5391 = vmatpush2.bf16.msra.mxu0 0
      %5392 = vmatprep.subr.bf16.mxu0 0
      %5393 = vmatpush2.bf16.msra.mxu0 0
      %5394 = vmatprep.mubr.bf16.mxu0 0
      %5395 = vmatmul.mubr.bf16.gmra.mxu0 %v5354
      %v5396 = vpop.f32.mrf.mxu0
      %v5397 = vadd.f32 0.0, %v5396
      %v5398 = vpop.f32.mrf.mxu0
      %v5399 = vpop.f32.mrf.mxu0
      %v5400 = vadd.f32 0.0, %v5399
      %v5401 = vpop.f32.mrf.mxu0
      %5402 = vmatprep.mubr.bf16.mxu0 0
      %5403 = vmatmul.mubr.bf16.gmra.mxu0 %v5357
      %v5404 = vpop.f32.mrf.mxu0
      %v5405 = vadd.f32 0.0, %v5404
      %v5406 = vpop.f32.mrf.mxu0
      %v5407 = vpop.f32.mrf.mxu0
      %v5408 = vpop.f32.mrf.mxu0
      %5409 = vdwg.mxu0
      %v5410 = vadd.f32 %v5316, %v5397
      %v5411 = vadd.f32 %v5317, %v5400
      %v5412 = vadd.f32 %v5318, %v5405
      %v5413 = vld [vmem:[#allocation7 + $0x7] sm:$0xff]
      %v5414 = vld [vmem:[#allocation7 + $0xf] sm:$0xff]
      %v5415 = vld [vmem:[#allocation7 + $0x17] sm:$0xf]
      %v5416 = vpack.c.bf16 %v5414, %v5413
      %v5417 = vpack.c.bf16 %v5415, %v5415
      %s5418 = scalar_lea.vmem %s17, 196
      %v5419 = vld [vmem:[%s5418] sm:$0xf]
      %v5420 = vld [vmem:[%s5418 + $0x4] sm:$0xf]
      %v5421 = vld [vmem:[%s5418 + $0x8] sm:$0xf]
      %v5422 = vld [vmem:[%s5418 + $0xc] sm:$0xf]
      %v5423 = vld [vmem:[%s5418 + $0x10] sm:$0xf]
      %v5424 = vld [vmem:[%s5418 + $0x14] sm:$0xf]
      %v5425 = vld [vmem:[%s5418 + $0x18] sm:$0x3]
      %v5433 = vunpack.c.l.b16 %v5419
      %v5434 = vunpack.c.l.b16 %v5420
      %v5435 = vunpack.c.l.b16 %v5421
      %v5436 = vunpack.c.l.b16 %v5422
      %v5437 = vunpack.c.l.b16 %v5423
      %v5438 = vunpack.c.l.b16 %v5424
      %v5439 = vunpack.c.l.b16 %v5425
      %v5440 = vpack.c.b16 %v5434, %v5433
      %v5441 = vpack.c.b16 %v5436, %v5435
      %v5442 = vpack.c.b16 %v5438, %v5437
      %v5443 = vpack.c.b16 %v5439, %v5439
      %v5448 = vsel %vm4752, %v5416, 0
      %v5451 = vsel %vm4752, %v5417, 0
      %v5454 = vsel %vm4813, %v5443, 0
      %5456 = vmatprep.subr.bf16.mxu0 0
      %5457 = vmatpush1.bf16.msra.mxu0 0
      %5458 = vmatprep.subr.bf16.mxu0 0
      %5459 = vmatpush1.bf16.msra.mxu0 0
      %5460 = vmatprep.subr.bf16.mxu0 0
      %5461 = vmatpush1.bf16.msra.mxu0 0
      %5462 = vmatprep.subr.bf16.mxu0 0
      %5463 = vmatpush1.bf16.msra.mxu0 0
      %5464 = vmatprep.subr.bf16.mxu0 0
      %5465 = vmatpush1.bf16.msra.mxu0 %v5454
      %5466 = vmatprep.subr.bf16.mxu0 0
      %5467 = vmatpush1.bf16.msra.mxu0 %v5442
      %5468 = vmatprep.subr.bf16.mxu0 0
      %5469 = vmatpush1.bf16.msra.mxu0 %v5441
      %5470 = vmatprep.subr.bf16.mxu0 0
      %5471 = vmatpush1.bf16.msra.mxu0 %v5440
      %5472 = vmatprep.subr.bf16.mxu0 0
      %5473 = vmatpush2.bf16.msra.mxu0 0
      %5474 = vmatprep.subr.bf16.mxu0 0
      %5475 = vmatpush2.bf16.msra.mxu0 0
      %5476 = vmatprep.subr.bf16.mxu0 0
      %5477 = vmatpush2.bf16.msra.mxu0 0
      %5478 = vmatprep.subr.bf16.mxu0 0
      %5479 = vmatpush2.bf16.msra.mxu0 0
      %5480 = vmatprep.subr.bf16.mxu0 0
      %5481 = vmatpush2.bf16.msra.mxu0 0
      %5482 = vmatprep.subr.bf16.mxu0 0
      %5483 = vmatpush2.bf16.msra.mxu0 0
      %5484 = vmatprep.subr.bf16.mxu0 0
      %5485 = vmatpush2.bf16.msra.mxu0 0
      %5486 = vmatprep.subr.bf16.mxu0 0
      %5487 = vmatpush2.bf16.msra.mxu0 0
      %5488 = vmatprep.mubr.bf16.mxu0 0
      %5489 = vmatmul.mubr.bf16.gmra.mxu0 %v5448
      %v5490 = vpop.f32.mrf.mxu0
      %v5491 = vadd.f32 0.0, %v5490
      %v5492 = vpop.f32.mrf.mxu0
      %v5493 = vpop.f32.mrf.mxu0
      %v5494 = vadd.f32 0.0, %v5493
      %v5495 = vpop.f32.mrf.mxu0
      %5496 = vmatprep.mubr.bf16.mxu0 0
      %5497 = vmatmul.mubr.bf16.gmra.mxu0 %v5451
      %v5498 = vpop.f32.mrf.mxu0
      %v5499 = vadd.f32 0.0, %v5498
      %v5500 = vpop.f32.mrf.mxu0
      %v5501 = vpop.f32.mrf.mxu0
      %v5502 = vpop.f32.mrf.mxu0
      %5503 = vdwg.mxu0
      %v5504 = vadd.f32 %v5410, %v5491
      %v5505 = vadd.f32 %v5411, %v5494
      %v5506 = vadd.f32 %v5412, %v5499
      %v5507 = vld [vmem:[%s18] sm:$0x1]
      %v5509 = vlaneseq
      %v5510 = vshrl.u32 %v5509, 7
      %v5511 = vsub.s32 0, %v5510
      %v5512 = vrot.slane %v5507, %v5511
      %v5514 = vadd.f32 %v5504, %v5512
      %v5515 = vadd.f32 %v5505, %v5512
      %v5516 = vadd.f32 %v5506, %v5512
      %v5517 = vmax.f32 %v5514, 0.0
      %v5518 = vmax.f32 %v5515, 0.0
      %v5519 = vmax.f32 %v5516, 0.0
      %vm5520 = vcmask 326656
      %5521 = vst.msk [vmem:[#allocation8] sm:$0xff] %vm5520, 0.0
      %5522 = vst.msk [vmem:[#allocation8 + $0x8] sm:$0xff] %vm5520, 0.0
      %5523 = vst.msk [vmem:[#allocation8 + $0x10] sm:$0xff] %vm5520, 0.0
      %5524 = vst.msk [vmem:[#allocation8 + $0x18] sm:$0xff] %vm5520, 0.0
      %vm5525 = vcmask 322560
      %5526 = vst.msk [vmem:[#allocation8 + $0x20] sm:$0xf] %vm5525, 0.0
      %5527 = vst.msk [vmem:[#allocation8 + $0x8] sm:$0xff] %vm5520, %v5517
      %5528 = vst.msk [vmem:[#allocation8 + $0x10] sm:$0xff] %vm5520, %v5518
      %5529 = vst.msk [vmem:[#allocation8 + $0x18] sm:$0xf] %vm5525, %v5519
      %v5530 = vld [vmem:[#allocation8] sm:$0xff]
      %v5531 = vld [vmem:[#allocation8 + $0x8] sm:$0xff]
      %v5532 = vld [vmem:[#allocation8 + $0x10] sm:$0xff]
      %v5533 = vld [vmem:[#allocation8 + $0x18] sm:$0xf]
      %v5534 = vpack.c.bf16 %v5531, %v5530
      %v5535 = vpack.c.bf16 %v5533, %v5532
      %v5536 = vld [vmem:[%s19] sm:$0xf]
      %v5537 = vld [vmem:[%s19 + $0x4] sm:$0xf]
      %v5538 = vld [vmem:[%s19 + $0x8] sm:$0xf]
      %v5539 = vld [vmem:[%s19 + $0xc] sm:$0xf]
      %v5540 = vld [vmem:[%s19 + $0x10] sm:$0xf]
      %v5541 = vld [vmem:[#allocation8 + $0x1] sm:$0xff]
      %v5542 = vld [vmem:[#allocation8 + $0x9] sm:$0xff]
      %v5543 = vld [vmem:[#allocation8 + $0x11] sm:$0xff]
      %v5544 = vld [vmem:[#allocation8 + $0x19] sm:$0xf]
      %v5545 = vpack.c.bf16 %v5542, %v5541
      %v5546 = vpack.c.bf16 %v5544, %v5543
      %s5547 = scalar_lea.vmem %s19, 20
      %v5548 = vld [vmem:[%s5547] sm:$0xf]
      %v5549 = vld [vmem:[%s5547 + $0x4] sm:$0xf]
      %v5550 = vld [vmem:[%s5547 + $0x8] sm:$0xf]
      %v5551 = vld [vmem:[%s5547 + $0xc] sm:$0xf]
      %v5552 = vld [vmem:[%s5547 + $0x10] sm:$0xf]
      %v5558 = vunpack.c.l.b16 %v5548
      %v5559 = vunpack.c.l.b16 %v5549
      %v5560 = vunpack.c.l.b16 %v5550
      %v5561 = vunpack.c.l.b16 %v5551
      %v5562 = vunpack.c.l.b16 %v5552
      %v5563 = vpack.c.b16 %v5559, %v5558
      %v5564 = vpack.c.b16 %v5561, %v5560
      %v5565 = vpack.c.b16 %v5562, %v5562
      %v5569 = vsel %vm5520, %v5545, 0
      %v5572 = vsel %vm5520, %v5546, 0
      %vm5574 = vcmask 1043456
      %v5576 = vsel %vm5574, %v5565, 0
      %5578 = vmatprep.subr.bf16.mxu0 0
      %5579 = vmatpush1.bf16.msra.mxu0 0
      %5580 = vmatprep.subr.bf16.mxu0 0
      %5581 = vmatpush1.bf16.msra.mxu0 0
      %5582 = vmatprep.subr.bf16.mxu0 0
      %5583 = vmatpush1.bf16.msra.mxu0 0
      %5584 = vmatprep.subr.bf16.mxu0 0
      %5585 = vmatpush1.bf16.msra.mxu0 0
      %5586 = vmatprep.subr.bf16.mxu0 0
      %5587 = vmatpush1.bf16.msra.mxu0 0
      %5588 = vmatprep.subr.bf16.mxu0 0
      %5589 = vmatpush1.bf16.msra.mxu0 %v5576
      %5590 = vmatprep.subr.bf16.mxu0 0
      %5591 = vmatpush1.bf16.msra.mxu0 %v5564
      %5592 = vmatprep.subr.bf16.mxu0 0
      %5593 = vmatpush1.bf16.msra.mxu0 %v5563
      %5594 = vmatprep.subr.bf16.mxu0 0
      %5595 = vmatpush2.bf16.msra.mxu0 0
      %5596 = vmatprep.subr.bf16.mxu0 0
      %5597 = vmatpush2.bf16.msra.mxu0 0
      %5598 = vmatprep.subr.bf16.mxu0 0
      %5599 = vmatpush2.bf16.msra.mxu0 0
      %5600 = vmatprep.subr.bf16.mxu0 0
      %5601 = vmatpush2.bf16.msra.mxu0 0
      %5602 = vmatprep.subr.bf16.mxu0 0
      %5603 = vmatpush2.bf16.msra.mxu0 0
      %5604 = vmatprep.subr.bf16.mxu0 0
      %5605 = vmatpush2.bf16.msra.mxu0 0
      %5606 = vmatprep.subr.bf16.mxu0 0
      %5607 = vmatpush2.bf16.msra.mxu0 0
      %5608 = vmatprep.subr.bf16.mxu0 0
      %5609 = vmatpush2.bf16.msra.mxu0 0
      %5610 = vmatprep.mubr.bf16.mxu0 0
      %5611 = vmatmul.mubr.bf16.gmra.mxu0 %v5569
      %v5612 = vpop.f32.mrf.mxu0
      %v5613 = vadd.f32 0.0, %v5612
      %v5614 = vpop.f32.mrf.mxu0
      %v5615 = vpop.f32.mrf.mxu0
      %v5616 = vadd.f32 0.0, %v5615
      %v5617 = vpop.f32.mrf.mxu0
      %5618 = vmatprep.mubr.bf16.mxu0 0
      %5619 = vmatmul.mubr.bf16.gmra.mxu0 %v5572
      %v5620 = vpop.f32.mrf.mxu0
      %v5621 = vadd.f32 0.0, %v5620
      %v5622 = vpop.f32.mrf.mxu0
      %v5623 = vpop.f32.mrf.mxu0
      %v5624 = vadd.f32 0.0, %v5623
      %v5625 = vpop.f32.mrf.mxu0
      %5626 = vdwg.mxu0
      %v5632 = vunpack.c.l.b16 %v5536
      %v5633 = vunpack.c.l.b16 %v5537
      %v5634 = vunpack.c.l.b16 %v5538
      %v5635 = vunpack.c.l.b16 %v5539
      %v5636 = vunpack.c.l.b16 %v5540
      %v5637 = vpack.c.b16 %v5633, %v5632
      %v5638 = vpack.c.b16 %v5635, %v5634
      %v5639 = vpack.c.b16 %v5636, %v5636
      %v5643 = vsel %vm5520, %v5534, 0
      %v5646 = vsel %vm5520, %v5535, 0
      %v5649 = vsel %vm5574, %v5639, 0
      %5651 = vmatprep.subr.bf16.mxu0 0
      %5652 = vmatpush1.bf16.msra.mxu0 0
      %5653 = vmatprep.subr.bf16.mxu0 0
      %5654 = vmatpush1.bf16.msra.mxu0 0
      %5655 = vmatprep.subr.bf16.mxu0 0
      %5656 = vmatpush1.bf16.msra.mxu0 0
      %5657 = vmatprep.subr.bf16.mxu0 0
      %5658 = vmatpush1.bf16.msra.mxu0 0
      %5659 = vmatprep.subr.bf16.mxu0 0
      %5660 = vmatpush1.bf16.msra.mxu0 0
      %5661 = vmatprep.subr.bf16.mxu0 0
      %5662 = vmatpush1.bf16.msra.mxu0 %v5649
      %5663 = vmatprep.subr.bf16.mxu0 0
      %5664 = vmatpush1.bf16.msra.mxu0 %v5638
      %5665 = vmatprep.subr.bf16.mxu0 0
      %5666 = vmatpush1.bf16.msra.mxu0 %v5637
      %5667 = vmatprep.subr.bf16.mxu0 0
      %5668 = vmatpush2.bf16.msra.mxu0 0
      %5669 = vmatprep.subr.bf16.mxu0 0
      %5670 = vmatpush2.bf16.msra.mxu0 0
      %5671 = vmatprep.subr.bf16.mxu0 0
      %5672 = vmatpush2.bf16.msra.mxu0 0
      %5673 = vmatprep.subr.bf16.mxu0 0
      %5674 = vmatpush2.bf16.msra.mxu0 0
      %5675 = vmatprep.subr.bf16.mxu0 0
      %5676 = vmatpush2.bf16.msra.mxu0 0
      %5677 = vmatprep.subr.bf16.mxu0 0
      %5678 = vmatpush2.bf16.msra.mxu0 0
      %5679 = vmatprep.subr.bf16.mxu0 0
      %5680 = vmatpush2.bf16.msra.mxu0 0
      %5681 = vmatprep.subr.bf16.mxu0 0
      %5682 = vmatpush2.bf16.msra.mxu0 0
      %5683 = vmatprep.mubr.bf16.mxu0 0
      %5684 = vmatmul.mubr.bf16.gmra.mxu0 %v5643
      %v5685 = vpop.f32.mrf.mxu0
      %v5686 = vadd.f32 %v5613, %v5685
      %v5687 = vpop.f32.mrf.mxu0
      %v5688 = vpop.f32.mrf.mxu0
      %v5689 = vadd.f32 %v5616, %v5688
      %v5690 = vpop.f32.mrf.mxu0
      %5691 = vmatprep.mubr.bf16.mxu0 0
      %5692 = vmatmul.mubr.bf16.gmra.mxu0 %v5646
      %v5693 = vpop.f32.mrf.mxu0
      %v5694 = vadd.f32 %v5621, %v5693
      %v5695 = vpop.f32.mrf.mxu0
      %v5696 = vpop.f32.mrf.mxu0
      %v5697 = vadd.f32 %v5624, %v5696
      %v5698 = vpop.f32.mrf.mxu0
      %5699 = vdwg.mxu0
      %v5700 = vld [vmem:[#allocation8 + $0x2] sm:$0xff]
      %v5701 = vld [vmem:[#allocation8 + $0xa] sm:$0xff]
      %v5702 = vld [vmem:[#allocation8 + $0x12] sm:$0xff]
      %v5703 = vld [vmem:[#allocation8 + $0x1a] sm:$0xf]
      %v5704 = vpack.c.bf16 %v5701, %v5700
      %v5705 = vpack.c.bf16 %v5703, %v5702
      %s5706 = scalar_lea.vmem %s19, 40
      %v5707 = vld [vmem:[%s5706] sm:$0xf]
      %v5708 = vld [vmem:[%s5706 + $0x4] sm:$0xf]
      %v5709 = vld [vmem:[%s5706 + $0x8] sm:$0xf]
      %v5710 = vld [vmem:[%s5706 + $0xc] sm:$0xf]
      %v5711 = vld [vmem:[%s5706 + $0x10] sm:$0xf]
      %v5717 = vunpack.c.l.b16 %v5707
      %v5718 = vunpack.c.l.b16 %v5708
      %v5719 = vunpack.c.l.b16 %v5709
      %v5720 = vunpack.c.l.b16 %v5710
      %v5721 = vunpack.c.l.b16 %v5711
      %v5722 = vpack.c.b16 %v5718, %v5717
      %v5723 = vpack.c.b16 %v5720, %v5719
      %v5724 = vpack.c.b16 %v5721, %v5721
      %v5728 = vsel %vm5520, %v5704, 0
      %v5731 = vsel %vm5520, %v5705, 0
      %v5734 = vsel %vm5574, %v5724, 0
      %5736 = vmatprep.subr.bf16.mxu0 0
      %5737 = vmatpush1.bf16.msra.mxu0 0
      %5738 = vmatprep.subr.bf16.mxu0 0
      %5739 = vmatpush1.bf16.msra.mxu0 0
      %5740 = vmatprep.subr.bf16.mxu0 0
      %5741 = vmatpush1.bf16.msra.mxu0 0
      %5742 = vmatprep.subr.bf16.mxu0 0
      %5743 = vmatpush1.bf16.msra.mxu0 0
      %5744 = vmatprep.subr.bf16.mxu0 0
      %5745 = vmatpush1.bf16.msra.mxu0 0
      %5746 = vmatprep.subr.bf16.mxu0 0
      %5747 = vmatpush1.bf16.msra.mxu0 %v5734
      %5748 = vmatprep.subr.bf16.mxu0 0
      %5749 = vmatpush1.bf16.msra.mxu0 %v5723
      %5750 = vmatprep.subr.bf16.mxu0 0
      %5751 = vmatpush1.bf16.msra.mxu0 %v5722
      %5752 = vmatprep.subr.bf16.mxu0 0
      %5753 = vmatpush2.bf16.msra.mxu0 0
      %5754 = vmatprep.subr.bf16.mxu0 0
      %5755 = vmatpush2.bf16.msra.mxu0 0
      %5756 = vmatprep.subr.bf16.mxu0 0
      %5757 = vmatpush2.bf16.msra.mxu0 0
      %5758 = vmatprep.subr.bf16.mxu0 0
      %5759 = vmatpush2.bf16.msra.mxu0 0
      %5760 = vmatprep.subr.bf16.mxu0 0
      %5761 = vmatpush2.bf16.msra.mxu0 0
      %5762 = vmatprep.subr.bf16.mxu0 0
      %5763 = vmatpush2.bf16.msra.mxu0 0
      %5764 = vmatprep.subr.bf16.mxu0 0
      %5765 = vmatpush2.bf16.msra.mxu0 0
      %5766 = vmatprep.subr.bf16.mxu0 0
      %5767 = vmatpush2.bf16.msra.mxu0 0
      %5768 = vmatprep.mubr.bf16.mxu0 0
      %5769 = vmatmul.mubr.bf16.gmra.mxu0 %v5728
      %v5770 = vpop.f32.mrf.mxu0
      %v5771 = vadd.f32 0.0, %v5770
      %v5772 = vpop.f32.mrf.mxu0
      %v5773 = vpop.f32.mrf.mxu0
      %v5774 = vadd.f32 0.0, %v5773
      %v5775 = vpop.f32.mrf.mxu0
      %5776 = vmatprep.mubr.bf16.mxu0 0
      %5777 = vmatmul.mubr.bf16.gmra.mxu0 %v5731
      %v5778 = vpop.f32.mrf.mxu0
      %v5779 = vadd.f32 0.0, %v5778
      %v5780 = vpop.f32.mrf.mxu0
      %v5781 = vpop.f32.mrf.mxu0
      %v5782 = vadd.f32 0.0, %v5781
      %v5783 = vpop.f32.mrf.mxu0
      %5784 = vdwg.mxu0
      %v5785 = vadd.f32 %v5686, %v5771
      %v5786 = vadd.f32 %v5689, %v5774
      %v5787 = vadd.f32 %v5694, %v5779
      %v5788 = vadd.f32 %v5697, %v5782
      %v5789 = vld [vmem:[#allocation8 + $0x3] sm:$0xff]
      %v5790 = vld [vmem:[#allocation8 + $0xb] sm:$0xff]
      %v5791 = vld [vmem:[#allocation8 + $0x13] sm:$0xff]
      %v5792 = vld [vmem:[#allocation8 + $0x1b] sm:$0xf]
      %v5793 = vpack.c.bf16 %v5790, %v5789
      %v5794 = vpack.c.bf16 %v5792, %v5791
      %s5795 = scalar_lea.vmem %s19, 60
      %v5796 = vld [vmem:[%s5795] sm:$0xf]
      %v5797 = vld [vmem:[%s5795 + $0x4] sm:$0xf]
      %v5798 = vld [vmem:[%s5795 + $0x8] sm:$0xf]
      %v5799 = vld [vmem:[%s5795 + $0xc] sm:$0xf]
      %v5800 = vld [vmem:[%s5795 + $0x10] sm:$0xf]
      %v5806 = vunpack.c.l.b16 %v5796
      %v5807 = vunpack.c.l.b16 %v5797
      %v5808 = vunpack.c.l.b16 %v5798
      %v5809 = vunpack.c.l.b16 %v5799
      %v5810 = vunpack.c.l.b16 %v5800
      %v5811 = vpack.c.b16 %v5807, %v5806
      %v5812 = vpack.c.b16 %v5809, %v5808
      %v5813 = vpack.c.b16 %v5810, %v5810
      %v5817 = vsel %vm5520, %v5793, 0
      %v5820 = vsel %vm5520, %v5794, 0
      %v5823 = vsel %vm5574, %v5813, 0
      %5825 = vmatprep.subr.bf16.mxu0 0
      %5826 = vmatpush1.bf16.msra.mxu0 0
      %5827 = vmatprep.subr.bf16.mxu0 0
      %5828 = vmatpush1.bf16.msra.mxu0 0
      %5829 = vmatprep.subr.bf16.mxu0 0
      %5830 = vmatpush1.bf16.msra.mxu0 0
      %5831 = vmatprep.subr.bf16.mxu0 0
      %5832 = vmatpush1.bf16.msra.mxu0 0
      %5833 = vmatprep.subr.bf16.mxu0 0
      %5834 = vmatpush1.bf16.msra.mxu0 0
      %5835 = vmatprep.subr.bf16.mxu0 0
      %5836 = vmatpush1.bf16.msra.mxu0 %v5823
      %5837 = vmatprep.subr.bf16.mxu0 0
      %5838 = vmatpush1.bf16.msra.mxu0 %v5812
      %5839 = vmatprep.subr.bf16.mxu0 0
      %5840 = vmatpush1.bf16.msra.mxu0 %v5811
      %5841 = vmatprep.subr.bf16.mxu0 0
      %5842 = vmatpush2.bf16.msra.mxu0 0
      %5843 = vmatprep.subr.bf16.mxu0 0
      %5844 = vmatpush2.bf16.msra.mxu0 0
      %5845 = vmatprep.subr.bf16.mxu0 0
      %5846 = vmatpush2.bf16.msra.mxu0 0
      %5847 = vmatprep.subr.bf16.mxu0 0
      %5848 = vmatpush2.bf16.msra.mxu0 0
      %5849 = vmatprep.subr.bf16.mxu0 0
      %5850 = vmatpush2.bf16.msra.mxu0 0
      %5851 = vmatprep.subr.bf16.mxu0 0
      %5852 = vmatpush2.bf16.msra.mxu0 0
      %5853 = vmatprep.subr.bf16.mxu0 0
      %5854 = vmatpush2.bf16.msra.mxu0 0
      %5855 = vmatprep.subr.bf16.mxu0 0
      %5856 = vmatpush2.bf16.msra.mxu0 0
      %5857 = vmatprep.mubr.bf16.mxu0 0
      %5858 = vmatmul.mubr.bf16.gmra.mxu0 %v5817
      %v5859 = vpop.f32.mrf.mxu0
      %v5860 = vadd.f32 0.0, %v5859
      %v5861 = vpop.f32.mrf.mxu0
      %v5862 = vpop.f32.mrf.mxu0
      %v5863 = vadd.f32 0.0, %v5862
      %v5864 = vpop.f32.mrf.mxu0
      %5865 = vmatprep.mubr.bf16.mxu0 0
      %5866 = vmatmul.mubr.bf16.gmra.mxu0 %v5820
      %v5867 = vpop.f32.mrf.mxu0
      %v5868 = vadd.f32 0.0, %v5867
      %v5869 = vpop.f32.mrf.mxu0
      %v5870 = vpop.f32.mrf.mxu0
      %v5871 = vadd.f32 0.0, %v5870
      %v5872 = vpop.f32.mrf.mxu0
      %5873 = vdwg.mxu0
      %v5874 = vadd.f32 %v5785, %v5860
      %v5875 = vadd.f32 %v5786, %v5863
      %v5876 = vadd.f32 %v5787, %v5868
      %v5877 = vadd.f32 %v5788, %v5871
      %v5878 = vld [vmem:[#allocation8 + $0x4] sm:$0xff]
      %v5879 = vld [vmem:[#allocation8 + $0xc] sm:$0xff]
      %v5880 = vld [vmem:[#allocation8 + $0x14] sm:$0xff]
      %v5881 = vld [vmem:[#allocation8 + $0x1c] sm:$0xf]
      %v5882 = vpack.c.bf16 %v5879, %v5878
      %v5883 = vpack.c.bf16 %v5881, %v5880
      %s5884 = scalar_lea.vmem %s19, 80
      %v5885 = vld [vmem:[%s5884] sm:$0xf]
      %v5886 = vld [vmem:[%s5884 + $0x4] sm:$0xf]
      %v5887 = vld [vmem:[%s5884 + $0x8] sm:$0xf]
      %v5888 = vld [vmem:[%s5884 + $0xc] sm:$0xf]
      %v5889 = vld [vmem:[%s5884 + $0x10] sm:$0xf]
      %v5895 = vunpack.c.l.b16 %v5885
      %v5896 = vunpack.c.l.b16 %v5886
      %v5897 = vunpack.c.l.b16 %v5887
      %v5898 = vunpack.c.l.b16 %v5888
      %v5899 = vunpack.c.l.b16 %v5889
      %v5900 = vpack.c.b16 %v5896, %v5895
      %v5901 = vpack.c.b16 %v5898, %v5897
      %v5902 = vpack.c.b16 %v5899, %v5899
      %v5906 = vsel %vm5520, %v5882, 0
      %v5909 = vsel %vm5520, %v5883, 0
      %v5912 = vsel %vm5574, %v5902, 0
      %5914 = vmatprep.subr.bf16.mxu0 0
      %5915 = vmatpush1.bf16.msra.mxu0 0
      %5916 = vmatprep.subr.bf16.mxu0 0
      %5917 = vmatpush1.bf16.msra.mxu0 0
      %5918 = vmatprep.subr.bf16.mxu0 0
      %5919 = vmatpush1.bf16.msra.mxu0 0
      %5920 = vmatprep.subr.bf16.mxu0 0
      %5921 = vmatpush1.bf16.msra.mxu0 0
      %5922 = vmatprep.subr.bf16.mxu0 0
      %5923 = vmatpush1.bf16.msra.mxu0 0
      %5924 = vmatprep.subr.bf16.mxu0 0
      %5925 = vmatpush1.bf16.msra.mxu0 %v5912
      %5926 = vmatprep.subr.bf16.mxu0 0
      %5927 = vmatpush1.bf16.msra.mxu0 %v5901
      %5928 = vmatprep.subr.bf16.mxu0 0
      %5929 = vmatpush1.bf16.msra.mxu0 %v5900
      %5930 = vmatprep.subr.bf16.mxu0 0
      %5931 = vmatpush2.bf16.msra.mxu0 0
      %5932 = vmatprep.subr.bf16.mxu0 0
      %5933 = vmatpush2.bf16.msra.mxu0 0
      %5934 = vmatprep.subr.bf16.mxu0 0
      %5935 = vmatpush2.bf16.msra.mxu0 0
      %5936 = vmatprep.subr.bf16.mxu0 0
      %5937 = vmatpush2.bf16.msra.mxu0 0
      %5938 = vmatprep.subr.bf16.mxu0 0
      %5939 = vmatpush2.bf16.msra.mxu0 0
      %5940 = vmatprep.subr.bf16.mxu0 0
      %5941 = vmatpush2.bf16.msra.mxu0 0
      %5942 = vmatprep.subr.bf16.mxu0 0
      %5943 = vmatpush2.bf16.msra.mxu0 0
      %5944 = vmatprep.subr.bf16.mxu0 0
      %5945 = vmatpush2.bf16.msra.mxu0 0
      %5946 = vmatprep.mubr.bf16.mxu0 0
      %5947 = vmatmul.mubr.bf16.gmra.mxu0 %v5906
      %v5948 = vpop.f32.mrf.mxu0
      %v5949 = vadd.f32 0.0, %v5948
      %v5950 = vpop.f32.mrf.mxu0
      %v5951 = vpop.f32.mrf.mxu0
      %v5952 = vadd.f32 0.0, %v5951
      %v5953 = vpop.f32.mrf.mxu0
      %5954 = vmatprep.mubr.bf16.mxu0 0
      %5955 = vmatmul.mubr.bf16.gmra.mxu0 %v5909
      %v5956 = vpop.f32.mrf.mxu0
      %v5957 = vadd.f32 0.0, %v5956
      %v5958 = vpop.f32.mrf.mxu0
      %v5959 = vpop.f32.mrf.mxu0
      %v5960 = vadd.f32 0.0, %v5959
      %v5961 = vpop.f32.mrf.mxu0
      %5962 = vdwg.mxu0
      %v5963 = vadd.f32 %v5874, %v5949
      %v5964 = vadd.f32 %v5875, %v5952
      %v5965 = vadd.f32 %v5876, %v5957
      %v5966 = vadd.f32 %v5877, %v5960
      %v5967 = vld [vmem:[#allocation8 + $0x5] sm:$0xff]
      %v5968 = vld [vmem:[#allocation8 + $0xd] sm:$0xff]
      %v5969 = vld [vmem:[#allocation8 + $0x15] sm:$0xff]
      %v5970 = vld [vmem:[#allocation8 + $0x1d] sm:$0xf]
      %v5971 = vpack.c.bf16 %v5968, %v5967
      %v5972 = vpack.c.bf16 %v5970, %v5969
      %s5973 = scalar_lea.vmem %s19, 100
      %v5974 = vld [vmem:[%s5973] sm:$0xf]
      %v5975 = vld [vmem:[%s5973 + $0x4] sm:$0xf]
      %v5976 = vld [vmem:[%s5973 + $0x8] sm:$0xf]
      %v5977 = vld [vmem:[%s5973 + $0xc] sm:$0xf]
      %v5978 = vld [vmem:[%s5973 + $0x10] sm:$0xf]
      %v5984 = vunpack.c.l.b16 %v5974
      %v5985 = vunpack.c.l.b16 %v5975
      %v5986 = vunpack.c.l.b16 %v5976
      %v5987 = vunpack.c.l.b16 %v5977
      %v5988 = vunpack.c.l.b16 %v5978
      %v5989 = vpack.c.b16 %v5985, %v5984
      %v5990 = vpack.c.b16 %v5987, %v5986
      %v5991 = vpack.c.b16 %v5988, %v5988
      %v5995 = vsel %vm5520, %v5971, 0
      %v5998 = vsel %vm5520, %v5972, 0
      %v6001 = vsel %vm5574, %v5991, 0
      %6003 = vmatprep.subr.bf16.mxu0 0
      %6004 = vmatpush1.bf16.msra.mxu0 0
      %6005 = vmatprep.subr.bf16.mxu0 0
      %6006 = vmatpush1.bf16.msra.mxu0 0
      %6007 = vmatprep.subr.bf16.mxu0 0
      %6008 = vmatpush1.bf16.msra.mxu0 0
      %6009 = vmatprep.subr.bf16.mxu0 0
      %6010 = vmatpush1.bf16.msra.mxu0 0
      %6011 = vmatprep.subr.bf16.mxu0 0
      %6012 = vmatpush1.bf16.msra.mxu0 0
      %6013 = vmatprep.subr.bf16.mxu0 0
      %6014 = vmatpush1.bf16.msra.mxu0 %v6001
      %6015 = vmatprep.subr.bf16.mxu0 0
      %6016 = vmatpush1.bf16.msra.mxu0 %v5990
      %6017 = vmatprep.subr.bf16.mxu0 0
      %6018 = vmatpush1.bf16.msra.mxu0 %v5989
      %6019 = vmatprep.subr.bf16.mxu0 0
      %6020 = vmatpush2.bf16.msra.mxu0 0
      %6021 = vmatprep.subr.bf16.mxu0 0
      %6022 = vmatpush2.bf16.msra.mxu0 0
      %6023 = vmatprep.subr.bf16.mxu0 0
      %6024 = vmatpush2.bf16.msra.mxu0 0
      %6025 = vmatprep.subr.bf16.mxu0 0
      %6026 = vmatpush2.bf16.msra.mxu0 0
      %6027 = vmatprep.subr.bf16.mxu0 0
      %6028 = vmatpush2.bf16.msra.mxu0 0
      %6029 = vmatprep.subr.bf16.mxu0 0
      %6030 = vmatpush2.bf16.msra.mxu0 0
      %6031 = vmatprep.subr.bf16.mxu0 0
      %6032 = vmatpush2.bf16.msra.mxu0 0
      %6033 = vmatprep.subr.bf16.mxu0 0
      %6034 = vmatpush2.bf16.msra.mxu0 0
      %6035 = vmatprep.mubr.bf16.mxu0 0
      %6036 = vmatmul.mubr.bf16.gmra.mxu0 %v5995
      %v6037 = vpop.f32.mrf.mxu0
      %v6038 = vadd.f32 0.0, %v6037
      %v6039 = vpop.f32.mrf.mxu0
      %v6040 = vpop.f32.mrf.mxu0
      %v6041 = vadd.f32 0.0, %v6040
      %v6042 = vpop.f32.mrf.mxu0
      %6043 = vmatprep.mubr.bf16.mxu0 0
      %6044 = vmatmul.mubr.bf16.gmra.mxu0 %v5998
      %v6045 = vpop.f32.mrf.mxu0
      %v6046 = vadd.f32 0.0, %v6045
      %v6047 = vpop.f32.mrf.mxu0
      %v6048 = vpop.f32.mrf.mxu0
      %v6049 = vadd.f32 0.0, %v6048
      %v6050 = vpop.f32.mrf.mxu0
      %6051 = vdwg.mxu0
      %v6052 = vadd.f32 %v5963, %v6038
      %v6053 = vadd.f32 %v5964, %v6041
      %v6054 = vadd.f32 %v5965, %v6046
      %v6055 = vadd.f32 %v5966, %v6049
      %v6056 = vld [vmem:[#allocation8 + $0x6] sm:$0xff]
      %v6057 = vld [vmem:[#allocation8 + $0xe] sm:$0xff]
      %v6058 = vld [vmem:[#allocation8 + $0x16] sm:$0xff]
      %v6059 = vld [vmem:[#allocation8 + $0x1e] sm:$0xf]
      %v6060 = vpack.c.bf16 %v6057, %v6056
      %v6061 = vpack.c.bf16 %v6059, %v6058
      %s6062 = scalar_lea.vmem %s19, 120
      %v6063 = vld [vmem:[%s6062] sm:$0xf]
      %v6064 = vld [vmem:[%s6062 + $0x4] sm:$0xf]
      %v6065 = vld [vmem:[%s6062 + $0x8] sm:$0xf]
      %v6066 = vld [vmem:[%s6062 + $0xc] sm:$0xf]
      %v6067 = vld [vmem:[%s6062 + $0x10] sm:$0xf]
      %v6073 = vunpack.c.l.b16 %v6063
      %v6074 = vunpack.c.l.b16 %v6064
      %v6075 = vunpack.c.l.b16 %v6065
      %v6076 = vunpack.c.l.b16 %v6066
      %v6077 = vunpack.c.l.b16 %v6067
      %v6078 = vpack.c.b16 %v6074, %v6073
      %v6079 = vpack.c.b16 %v6076, %v6075
      %v6080 = vpack.c.b16 %v6077, %v6077
      %v6084 = vsel %vm5520, %v6060, 0
      %v6087 = vsel %vm5520, %v6061, 0
      %v6090 = vsel %vm5574, %v6080, 0
      %6092 = vmatprep.subr.bf16.mxu0 0
      %6093 = vmatpush1.bf16.msra.mxu0 0
      %6094 = vmatprep.subr.bf16.mxu0 0
      %6095 = vmatpush1.bf16.msra.mxu0 0
      %6096 = vmatprep.subr.bf16.mxu0 0
      %6097 = vmatpush1.bf16.msra.mxu0 0
      %6098 = vmatprep.subr.bf16.mxu0 0
      %6099 = vmatpush1.bf16.msra.mxu0 0
      %6100 = vmatprep.subr.bf16.mxu0 0
      %6101 = vmatpush1.bf16.msra.mxu0 0
      %6102 = vmatprep.subr.bf16.mxu0 0
      %6103 = vmatpush1.bf16.msra.mxu0 %v6090
      %6104 = vmatprep.subr.bf16.mxu0 0
      %6105 = vmatpush1.bf16.msra.mxu0 %v6079
      %6106 = vmatprep.subr.bf16.mxu0 0
      %6107 = vmatpush1.bf16.msra.mxu0 %v6078
      %6108 = vmatprep.subr.bf16.mxu0 0
      %6109 = vmatpush2.bf16.msra.mxu0 0
      %6110 = vmatprep.subr.bf16.mxu0 0
      %6111 = vmatpush2.bf16.msra.mxu0 0
      %6112 = vmatprep.subr.bf16.mxu0 0
      %6113 = vmatpush2.bf16.msra.mxu0 0
      %6114 = vmatprep.subr.bf16.mxu0 0
      %6115 = vmatpush2.bf16.msra.mxu0 0
      %6116 = vmatprep.subr.bf16.mxu0 0
      %6117 = vmatpush2.bf16.msra.mxu0 0
      %6118 = vmatprep.subr.bf16.mxu0 0
      %6119 = vmatpush2.bf16.msra.mxu0 0
      %6120 = vmatprep.subr.bf16.mxu0 0
      %6121 = vmatpush2.bf16.msra.mxu0 0
      %6122 = vmatprep.subr.bf16.mxu0 0
      %6123 = vmatpush2.bf16.msra.mxu0 0
      %6124 = vmatprep.mubr.bf16.mxu0 0
      %6125 = vmatmul.mubr.bf16.gmra.mxu0 %v6084
      %v6126 = vpop.f32.mrf.mxu0
      %v6127 = vadd.f32 0.0, %v6126
      %v6128 = vpop.f32.mrf.mxu0
      %v6129 = vpop.f32.mrf.mxu0
      %v6130 = vadd.f32 0.0, %v6129
      %v6131 = vpop.f32.mrf.mxu0
      %6132 = vmatprep.mubr.bf16.mxu0 0
      %6133 = vmatmul.mubr.bf16.gmra.mxu0 %v6087
      %v6134 = vpop.f32.mrf.mxu0
      %v6135 = vadd.f32 0.0, %v6134
      %v6136 = vpop.f32.mrf.mxu0
      %v6137 = vpop.f32.mrf.mxu0
      %v6138 = vadd.f32 0.0, %v6137
      %v6139 = vpop.f32.mrf.mxu0
      %6140 = vdwg.mxu0
      %v6141 = vadd.f32 %v6052, %v6127
      %v6142 = vadd.f32 %v6053, %v6130
      %v6143 = vadd.f32 %v6054, %v6135
      %v6144 = vadd.f32 %v6055, %v6138
      %v6145 = vld [vmem:[#allocation8 + $0x7] sm:$0xff]
      %v6146 = vld [vmem:[#allocation8 + $0xf] sm:$0xff]
      %v6147 = vld [vmem:[#allocation8 + $0x17] sm:$0xff]
      %v6148 = vld [vmem:[#allocation8 + $0x1f] sm:$0xf]
      %v6149 = vpack.c.bf16 %v6146, %v6145
      %v6150 = vpack.c.bf16 %v6148, %v6147
      %s6151 = scalar_lea.vmem %s19, 140
      %v6152 = vld [vmem:[%s6151] sm:$0xf]
      %v6153 = vld [vmem:[%s6151 + $0x4] sm:$0xf]
      %v6154 = vld [vmem:[%s6151 + $0x8] sm:$0xf]
      %v6155 = vld [vmem:[%s6151 + $0xc] sm:$0xf]
      %v6156 = vld [vmem:[%s6151 + $0x10] sm:$0xf]
      %v6162 = vunpack.c.l.b16 %v6152
      %v6163 = vunpack.c.l.b16 %v6153
      %v6164 = vunpack.c.l.b16 %v6154
      %v6165 = vunpack.c.l.b16 %v6155
      %v6166 = vunpack.c.l.b16 %v6156
      %v6167 = vpack.c.b16 %v6163, %v6162
      %v6168 = vpack.c.b16 %v6165, %v6164
      %v6169 = vpack.c.b16 %v6166, %v6166
      %v6173 = vsel %vm5520, %v6149, 0
      %v6176 = vsel %vm5520, %v6150, 0
      %v6179 = vsel %vm5574, %v6169, 0
      %6181 = vmatprep.subr.bf16.mxu0 0
      %6182 = vmatpush1.bf16.msra.mxu0 0
      %6183 = vmatprep.subr.bf16.mxu0 0
      %6184 = vmatpush1.bf16.msra.mxu0 0
      %6185 = vmatprep.subr.bf16.mxu0 0
      %6186 = vmatpush1.bf16.msra.mxu0 0
      %6187 = vmatprep.subr.bf16.mxu0 0
      %6188 = vmatpush1.bf16.msra.mxu0 0
      %6189 = vmatprep.subr.bf16.mxu0 0
      %6190 = vmatpush1.bf16.msra.mxu0 0
      %6191 = vmatprep.subr.bf16.mxu0 0
      %6192 = vmatpush1.bf16.msra.mxu0 %v6179
      %6193 = vmatprep.subr.bf16.mxu0 0
      %6194 = vmatpush1.bf16.msra.mxu0 %v6168
      %6195 = vmatprep.subr.bf16.mxu0 0
      %6196 = vmatpush1.bf16.msra.mxu0 %v6167
      %6197 = vmatprep.subr.bf16.mxu0 0
      %6198 = vmatpush2.bf16.msra.mxu0 0
      %6199 = vmatprep.subr.bf16.mxu0 0
      %6200 = vmatpush2.bf16.msra.mxu0 0
      %6201 = vmatprep.subr.bf16.mxu0 0
      %6202 = vmatpush2.bf16.msra.mxu0 0
      %6203 = vmatprep.subr.bf16.mxu0 0
      %6204 = vmatpush2.bf16.msra.mxu0 0
      %6205 = vmatprep.subr.bf16.mxu0 0
      %6206 = vmatpush2.bf16.msra.mxu0 0
      %6207 = vmatprep.subr.bf16.mxu0 0
      %6208 = vmatpush2.bf16.msra.mxu0 0
      %6209 = vmatprep.subr.bf16.mxu0 0
      %6210 = vmatpush2.bf16.msra.mxu0 0
      %6211 = vmatprep.subr.bf16.mxu0 0
      %6212 = vmatpush2.bf16.msra.mxu0 0
      %6213 = vmatprep.mubr.bf16.mxu0 0
      %6214 = vmatmul.mubr.bf16.gmra.mxu0 %v6173
      %v6215 = vpop.f32.mrf.mxu0
      %v6216 = vadd.f32 0.0, %v6215
      %v6217 = vpop.f32.mrf.mxu0
      %v6218 = vpop.f32.mrf.mxu0
      %v6219 = vadd.f32 0.0, %v6218
      %v6220 = vpop.f32.mrf.mxu0
      %6221 = vmatprep.mubr.bf16.mxu0 0
      %6222 = vmatmul.mubr.bf16.gmra.mxu0 %v6176
      %v6223 = vpop.f32.mrf.mxu0
      %v6224 = vadd.f32 0.0, %v6223
      %v6225 = vpop.f32.mrf.mxu0
      %v6226 = vpop.f32.mrf.mxu0
      %v6227 = vadd.f32 0.0, %v6226
      %v6228 = vpop.f32.mrf.mxu0
      %6229 = vdwg.mxu0
      %v6230 = vadd.f32 %v6141, %v6216
      %v6231 = vadd.f32 %v6142, %v6219
      %v6232 = vadd.f32 %v6143, %v6224
      %v6233 = vadd.f32 %v6144, %v6227
      %v6234 = vld [vmem:[#allocation8 + $0x8] sm:$0xff]
      %v6235 = vld [vmem:[#allocation8 + $0x10] sm:$0xff]
      %v6236 = vld [vmem:[#allocation8 + $0x18] sm:$0xff]
      %v6237 = vld [vmem:[#allocation8 + $0x20] sm:$0xf]
      %v6238 = vpack.c.bf16 %v6235, %v6234
      %v6239 = vpack.c.bf16 %v6237, %v6236
      %s6240 = scalar_lea.vmem %s19, 160
      %v6241 = vld [vmem:[%s6240] sm:$0xf]
      %v6242 = vld [vmem:[%s6240 + $0x4] sm:$0xf]
      %v6243 = vld [vmem:[%s6240 + $0x8] sm:$0xf]
      %v6244 = vld [vmem:[%s6240 + $0xc] sm:$0xf]
      %v6245 = vld [vmem:[%s6240 + $0x10] sm:$0xf]
      %v6251 = vunpack.c.l.b16 %v6241
      %v6252 = vunpack.c.l.b16 %v6242
      %v6253 = vunpack.c.l.b16 %v6243
      %v6254 = vunpack.c.l.b16 %v6244
      %v6255 = vunpack.c.l.b16 %v6245
      %v6256 = vpack.c.b16 %v6252, %v6251
      %v6257 = vpack.c.b16 %v6254, %v6253
      %v6258 = vpack.c.b16 %v6255, %v6255
      %v6262 = vsel %vm5520, %v6238, 0
      %v6265 = vsel %vm5520, %v6239, 0
      %v6268 = vsel %vm5574, %v6258, 0
      %6270 = vmatprep.subr.bf16.mxu0 0
      %6271 = vmatpush1.bf16.msra.mxu0 0
      %6272 = vmatprep.subr.bf16.mxu0 0
      %6273 = vmatpush1.bf16.msra.mxu0 0
      %6274 = vmatprep.subr.bf16.mxu0 0
      %6275 = vmatpush1.bf16.msra.mxu0 0
      %6276 = vmatprep.subr.bf16.mxu0 0
      %6277 = vmatpush1.bf16.msra.mxu0 0
      %6278 = vmatprep.subr.bf16.mxu0 0
      %6279 = vmatpush1.bf16.msra.mxu0 0
      %6280 = vmatprep.subr.bf16.mxu0 0
      %6281 = vmatpush1.bf16.msra.mxu0 %v6268
      %6282 = vmatprep.subr.bf16.mxu0 0
      %6283 = vmatpush1.bf16.msra.mxu0 %v6257
      %6284 = vmatprep.subr.bf16.mxu0 0
      %6285 = vmatpush1.bf16.msra.mxu0 %v6256
      %6286 = vmatprep.subr.bf16.mxu0 0
      %6287 = vmatpush2.bf16.msra.mxu0 0
      %6288 = vmatprep.subr.bf16.mxu0 0
      %6289 = vmatpush2.bf16.msra.mxu0 0
      %6290 = vmatprep.subr.bf16.mxu0 0
      %6291 = vmatpush2.bf16.msra.mxu0 0
      %6292 = vmatprep.subr.bf16.mxu0 0
      %6293 = vmatpush2.bf16.msra.mxu0 0
      %6294 = vmatprep.subr.bf16.mxu0 0
      %6295 = vmatpush2.bf16.msra.mxu0 0
      %6296 = vmatprep.subr.bf16.mxu0 0
      %6297 = vmatpush2.bf16.msra.mxu0 0
      %6298 = vmatprep.subr.bf16.mxu0 0
      %6299 = vmatpush2.bf16.msra.mxu0 0
      %6300 = vmatprep.subr.bf16.mxu0 0
      %6301 = vmatpush2.bf16.msra.mxu0 0
      %6302 = vmatprep.mubr.bf16.mxu0 0
      %6303 = vmatmul.mubr.bf16.gmra.mxu0 %v6262
      %v6304 = vpop.f32.mrf.mxu0
      %v6305 = vadd.f32 0.0, %v6304
      %v6306 = vpop.f32.mrf.mxu0
      %v6307 = vpop.f32.mrf.mxu0
      %v6308 = vadd.f32 0.0, %v6307
      %v6309 = vpop.f32.mrf.mxu0
      %6310 = vmatprep.mubr.bf16.mxu0 0
      %6311 = vmatmul.mubr.bf16.gmra.mxu0 %v6265
      %v6312 = vpop.f32.mrf.mxu0
      %v6313 = vadd.f32 0.0, %v6312
      %v6314 = vpop.f32.mrf.mxu0
      %v6315 = vpop.f32.mrf.mxu0
      %v6316 = vadd.f32 0.0, %v6315
      %v6317 = vpop.f32.mrf.mxu0
      %6318 = vdwg.mxu0
      %v6319 = vadd.f32 %v6230, %v6305
      %v6320 = vadd.f32 %v6231, %v6308
      %v6321 = vadd.f32 %v6232, %v6313
      %v6322 = vadd.f32 %v6233, %v6316
      %v6323 = vld [vmem:[%s20] sm:$0x1]
      %v6325 = vlaneseq
      %v6326 = vshrl.u32 %v6325, 7
      %v6327 = vsub.s32 0, %v6326
      %v6328 = vrot.slane %v6323, %v6327
      %v6330 = vadd.f32 %v6319, %v6328
      %v6331 = vadd.f32 %v6320, %v6328
      %v6332 = vadd.f32 %v6321, %v6328
      %v6333 = vadd.f32 %v6322, %v6328
      %6334 = vst.msk [vmem:[%s656] sm:$0xff] %vm688, %v6330
      %6335 = vst.msk [vmem:[%s656 + $0x8] sm:$0xff] %vm688, %v6331
      %6336 = vst.msk [vmem:[%s656 + $0x10] sm:$0xff] %vm688, %v6332
      %vm6337 = vcmask 224256
      %6338 = vst.msk [vmem:[%s656 + $0x18] sm:$0xf] %vm6337, %v6333
      %p6339 = scmp.lt.s32.totalorder %s32, 1
      %s6340 = scalar_select %p6339, %s32, 1
      %s6341 = smul.addr %s6340, 4
      %s6342 = smul.addr %s6341, 8
      %s6343 = scalar_lea.vmem %s21, %s6342
      // Predicated region
      $region105: #{autoencoder_forward.1} parent=103 // pred_check
        %p6344 = pneg %p496
      $region106: #{autoencoder_forward.1} parent=103 // pred_check_branch
        %6346 = sbr.rel (%p6344) target = $region108
      $region107: #{autoencoder_forward.1} parent=103 // pred_region
        _
      $region108: #{autoencoder_forward.1} parent=103 // pred_fallthru
        _
    $region104: #{autoencoder_forward.1} parent=5 // pred_fallthru
      _
    %p6347 = scmp.le.s32.totalorder 2, %s27
    // Predicated region
    $region109: #{autoencoder_forward.1} parent=5 // pred_check
      %p6348 = pneg %p6347
    $region110: #{autoencoder_forward.1} parent=5 // pred_check_branch
      %6350 = sbr.rel (%p6348) target = $region112
    $region111: #{autoencoder_forward.1} parent=5 // pred_region
      %s6351 = ssub.s32 %s27, 2
      // Predicated region
      $region113: #{autoencoder_forward.1} parent=111 // pred_check
        %p6352 = pneg %p502
      $region114: #{autoencoder_forward.1} parent=111 // pred_check_branch
        %6354 = sbr.rel (%p6352) target = $region116
      $region115: #{autoencoder_forward.1} parent=111 // pred_region
        %p6355 = scmp.lt.s32.totalorder %s33, 1
        %s6356 = scalar_select %p6355, %s33, 1
        %s6357 = smul.addr %s6356, 4
        %s6358 = smul.addr %s6357, 8
        %s6359 = scalar_lea.vmem %s21, %s6358
      $region116: #{autoencoder_forward.1} parent=111 // pred_fallthru
        _
    $region112: #{autoencoder_forward.1} parent=5 // pred_fallthru
      _
  $region6: #{autoencoder_forward.1} parent=0 // loop_footer
    %s31 = sadd.s32 1, %s27
  $region7: #{autoencoder_forward.1} parent=0 // loop_footer_branch
    %26 = sbr.rel target = $region3
  $region8: #{autoencoder_forward.1} parent=0 // loop_exit
    _

</llo_original>
